<compile_context>
chip_gen: v5e
topology: v5e:2x2
jax: 0.10.0
libtpu: 0.0.40
codegen_flags: <defaults>
</compile_context>

<pallas_src>
import functools
import math

import jax
import jax.numpy as jnp
from jax.experimental import pallas as pl
from jax.experimental.pallas import tpu as pltpu

_BF16 = jnp.bfloat16
_EPS = 1e-5


# ----------------------------- in-kernel helpers -----------------------------

def _layernorm(x, gamma, beta, eps=_EPS):
    mu = jnp.mean(x, axis=-1, keepdims=True)
    var = jnp.mean(jnp.square(x - mu), axis=-1, keepdims=True)
    return (x - mu) * jax.lax.rsqrt(var + eps) * gamma + beta


def _erf(x):
    # Abramowitz & Stegun 7.1.26, |abs err| < 1.5e-7: exact-GELU semantics.
    # TODO(synk): on v5e (no bf16 VPU/EUP) switch to tanh-GELU to cut VALU ops.
    a1, a2, a3, a4, a5 = (0.254829592, -0.284496736, 1.421413741,
                          -1.453152027, 1.061405429)
    p = 0.3275911
    sgn = jnp.where(x >= 0.0, 1.0, -1.0)
    ax = jnp.abs(x)
    t = 1.0 / (1.0 + p * ax)
    poly = ((((a5 * t + a4) * t + a3) * t + a2) * t + a1) * t
    return sgn * (1.0 - poly * jnp.exp(-ax * ax))


def _gelu(x):
    return 0.5 * x * (1.0 + _erf(x * 0.7071067811865476))


def _silu(x):
    return x * jax.nn.sigmoid(x)


def _mm(a, w):
    # Activation cast to bf16 at the MXU; weights are pre-cast bf16 at init.
    return jnp.dot(a.astype(_BF16), w, preferred_element_type=jnp.float32)


def _round_up(n, m):
    return ((n + m - 1) // m) * m


def _largest_divisor_le(n, cap):
    t = min(cap, n)
    while n % t:
        t -= 1
    return t


# ----------------------------- stem kernel -----------------------------

def _stem_kernel(x_ref, w1_ref, b1_ref, g_ref, be_ref, w2_ref, b2_ref, o_ref):
    h = _mm(x_ref[...], w1_ref[...]) + b1_ref[...]
    h = _gelu(_layernorm(h, g_ref[...], be_ref[...]))
    o_ref[...] = _mm(h, w2_ref[...]) + b2_ref[...]      # Dropout = identity


def stem(x, p):
    B, T, Din = x.shape
    D = p["stem_w1"].shape[1]
    M = B * T
    # Row tile: cap at 512, pad M up to a tile multiple (padded rows discarded).
    tm = min(512, _round_up(M, 8))
    Mp = _round_up(M, tm)
    x2 = x.reshape(M, Din)
    if Mp != M:
        x2 = jnp.pad(x2, ((0, Mp - M), (0, 0)))
    out = pl.pallas_call(
        _stem_kernel,
        out_shape=jax.ShapeDtypeStruct((Mp, D), jnp.float32),
        grid=(Mp // tm,),
        in_specs=[pl.BlockSpec((tm, Din), lambda i: (i, 0)),
                  pl.BlockSpec((Din, D), lambda i: (0, 0)),
                  pl.BlockSpec((1, D), lambda i: (0, 0)),
                  pl.BlockSpec((1, D), lambda i: (0, 0)),
                  pl.BlockSpec((1, D), lambda i: (0, 0)),
                  pl.BlockSpec((D, D), lambda i: (0, 0)),
                  pl.BlockSpec((1, D), lambda i: (0, 0))],
        out_specs=pl.BlockSpec((tm, D), lambda i: (i, 0)),
        compiler_params=pltpu.CompilerParams(dimension_semantics=("parallel",)),
    )(x2, p["stem_w1"], p["stem_b1"], p["stem_ln_g"], p["stem_ln_b"],
      p["stem_w2"], p["stem_b2"])
    return out[:M].reshape(B, T, D)


# ----------------------------- fused temporal block -----------------------------

def _block_kernel(x_ref, wcv_ref, bcv_ref, plg_ref, plb_ref, pw_ref, pb_ref,
                  ng_ref, nb_ref, wf_ref, bf_ref, ow_ref, ob_ref, rp_hbm,
                  o_ref, rp_buf, rp_sem, *, num_heads, head_dim, expansion):
    H, hd, E = num_heads, head_dim, expansion
    x = x_ref[0]                                        # (T, D) f32
    T, D = x.shape

    # Stream the (T, T) rel-pos bias per head from HBM, double-buffered, so
    # only 2*T*T*4 bytes are VMEM-resident instead of the whole (H, T, T).
    def _rp_copy(h, slot):
        return pltpu.make_async_copy(rp_hbm.at[h], rp_buf.at[slot],
                                     rp_sem.at[slot])
    _rp_copy(0, 0).start()          # overlaps with the LayerNorm + QKV matmul

    # ---------------- attention path ----------------
    xn = _layernorm(x, ng_ref[...], nb_ref[...])
    # Fused [q | k | v | gate] matmul.  (The reference's per-query edge bias is
    # constant along the key axis and cancels exactly in softmax => removed.)
    y = _mm(xn, wf_ref[...]) + bf_ref[...]              # (T, 4D) f32
    q = y[:, 0:D]
    k = y[:, D:2 * D]
    v = y[:, 2 * D:3 * D]
    gate = jax.nn.sigmoid(y[:, 3 * D:4 * D])            # (T, D) f32
    inv_scale = 1.0 / math.sqrt(hd)
    q_bf = (q * inv_scale).astype(_BF16)                # fold 1/sqrt(hd) into q
    k_bf = k.astype(_BF16)
    v_bf = v.astype(_BF16)

    head_outs = []
    for hh in range(H):
        slot = hh & 1
        _rp_copy(hh, slot).wait()
        if hh + 1 < H:
            _rp_copy(hh + 1, 1 - slot).start()          # prefetch next head bias
        sl = slice(hh * hd, (hh + 1) * hd)
        s = jax.lax.dot_general(q_bf[:, sl], k_bf[:, sl],
                                (((1,), (1,)), ((), ())),
                                preferred_element_type=jnp.float32)  # (T, T)
        s = s + rp_buf[slot]
        s = s - jnp.max(s, axis=-1, keepdims=True)
        p = jnp.exp(s)
        p = p * pl.reciprocal(jnp.sum(p, axis=-1, keepdims=True), approx=True)
        head_outs.append(_mm(p, v_bf[:, sl]) * gate[:, sl])          # (T, hd)
    # ONE K=D output projection over the concatenated heads (instead of H
    # K=head_dim matmuls plus accumulator adds).
    attn_out = _mm(jnp.concatenate(head_outs, axis=-1), ow_ref[...]) + ob_ref[...]
    # TODO(synk): for very long T (one (T,T) tile too large), switch the
    # per-head softmax to an online/flash form tiled over KV.

    # ---------------- conv path ----------------
    # Conv1d(D, E*D, k=3, padding=1, groups=D): zero padding via roll + mask.
    row = jax.lax.broadcasted_iota(jnp.int32, (T, D), 0)
    xm1 = jnp.where(row >= 1, pltpu.roll(x, shift=1, axis=0), 0.0)        # x[t-1]
    xp1 = jnp.where(row < T - 1, pltpu.roll(x, shift=T - 1, axis=0), 0.0)  # x[t+1]
    wcv = wcv_ref[...]                                  # (3, E, D), tap-major
    bcv = bcv_ref[...]                                  # (E, D)
    plg = plg_ref[...]                                  # (E, D)
    plb = plb_ref[...]

    def _piece(e):                                      # (T, D) e-major slab
        return (bcv[e:e + 1, :] + xm1 * wcv[0, e:e + 1, :]
                + x * wcv[1, e:e + 1, :] + xp1 * wcv[2, e:e + 1, :])

    # LayerNorm over the E*D channels via running sum / sum-of-squares, so the
    # (T, E*D) concat (and its bf16 copy) is never materialized.
    s1 = jnp.zeros((T, 1), jnp.float32)
    s2 = jnp.zeros((T, 1), jnp.float32)
    for e in range(E):
        pe = _piece(e)
        s1 = s1 + jnp.sum(pe, axis=-1, keepdims=True)
        s2 = s2 + jnp.sum(pe * pe, axis=-1, keepdims=True)
    n = float(E * D)
    mu = s1 / n
    inv = jax.lax.rsqrt(jnp.maximum(s2 / n - mu * mu, 0.0) + _EPS)
    conv_out = jnp.zeros((T, D), jnp.float32)
    for e in range(E):
        he = _gelu((_piece(e) - mu) * inv * plg[e:e + 1, :] + plb[e:e + 1, :])
        conv_out = conv_out + _mm(he, pw_ref[e])        # per-slab projection
    conv_out = conv_out + pb_ref[...]

    # Dropout(0.1) is identity at inference.
    o_ref[0] = conv_out + attn_out + x
    # TODO(synk): process Bb>1 batch elements per grid step on v6e/v5e to
    # amortize per-step overhead and rel-pos re-fetch across the batch.


def _block_vmem_bytes(T, D, E, H):
    f32, bf16 = 4, 2
    io = 2 * 2 * T * D * f32                              # x / out double buffers
    weights = 2 * ((3 * E * D + E * D + 2 * E * D + 10 * D) * f32
                   + (E * D * D + 4 * D * D + D * D) * bf16)
    rp = 2 * T * T * f32                                   # streamed per-head bias
    inter = (8 * T * D + 3 * T * T) * f32                  # y/qkv/gate/concat + score/prob
    return io + weights + rp + inter


def _vmem_limit(est_bytes):
    # Default scoped VMEM is 16 MiB (v5e) / 32 MiB (v6e, v7x).  Raise it with
    # 2x headroom over the component estimate, capped at v7x's 64 MiB.
    return int(min(max(2 * est_bytes, 32 * 1024 * 1024), 64 * 1024 * 1024))


def temporal_block(x, bp, rel_bias, num_heads):
    B, T, D = x.shape
    E = bp["bconv"].shape[0]
    hd = D // num_heads
    kernel = functools.partial(_block_kernel, num_heads=num_heads,
                               head_dim=hd, expansion=E)
    return pl.pallas_call(
        kernel,
        out_shape=jax.ShapeDtypeStruct((B, T, D), jnp.float32),
        grid=(B,),
        in_specs=[
            pl.BlockSpec((1, T, D), lambda b: (b, 0, 0)),      # x
            pl.BlockSpec((3, E, D), lambda b: (0, 0, 0)),      # conv weight taps
            pl.BlockSpec((E, D), lambda b: (0, 0)),            # conv bias
            pl.BlockSpec((E, D), lambda b: (0, 0)),            # proj LN gamma
            pl.BlockSpec((E, D), lambda b: (0, 0)),            # proj LN beta
            pl.BlockSpec((E, D, D), lambda b: (0, 0, 0)),      # proj W (bf16)
            pl.BlockSpec((1, D), lambda b: (0, 0)),            # proj b
            pl.BlockSpec((1, D), lambda b: (0, 0)),            # norm gamma
            pl.BlockSpec((1, D), lambda b: (0, 0)),            # norm beta
            pl.BlockSpec((D, 4 * D), lambda b: (0, 0)),        # [q|k|v|gate] W (bf16)
            pl.BlockSpec((1, 4 * D), lambda b: (0, 0)),        # fused bias
            pl.BlockSpec((D, D), lambda b: (0, 0)),            # out-proj W (bf16)
            pl.BlockSpec((1, D), lambda b: (0, 0)),            # out-proj b
            pl.BlockSpec(memory_space=pl.ANY),                 # rel-pos (H,T,T), HBM
        ],
        out_specs=pl.BlockSpec((1, T, D), lambda b: (b, 0, 0)),
        scratch_shapes=[pltpu.VMEM((2, T, T), jnp.float32),    # rel-pos ring buffer
                        pltpu.SemaphoreType.DMA((2,))],
        compiler_params=pltpu.CompilerParams(
            dimension_semantics=("parallel",),
            vmem_limit_bytes=_vmem_limit(_block_vmem_bytes(T, D, E, num_heads))),
    )(x, bp["wconv"], bp["bconv"], bp["proj_ln_g"], bp["proj_ln_b"],
      bp["proj_w"], bp["proj_b"], bp["norm_g"], bp["norm_b"],
      bp["w_fused"], bp["b_fused"], bp["out_w"], bp["out_b"], rel_bias)


# ----------------------------- decoder kernel -----------------------------

def _decoder_kernel(x_ref, w1_ref, b1_ref, w2_ref, b2_ref, o_ref):
    x = x_ref[...]                                      # (Bb, T, D)
    pooled = jnp.mean(x, axis=1) + jnp.max(x, axis=1)   # mean(dim=1) + amax(dim=1)
    h = _silu(_mm(pooled, w1_ref[...]) + b1_ref[...])
    o_ref[...] = _mm(h, w2_ref[...]) + b2_ref[...]


def decoder(x, p):
    B, T, D = x.shape
    Dh = p["dec_w1"].shape[1]
    P = p["dec_w2"].shape[1]
    bb = _largest_divisor_le(B, 8)                      # batch tile
    return pl.pallas_call(
        _decoder_kernel,
        out_shape=jax.ShapeDtypeStruct((B, P), jnp.float32),
        grid=(B // bb,),
        in_specs=[pl.BlockSpec((bb, T, D), lambda i: (i, 0, 0)),
                  pl.BlockSpec((D, Dh), lambda i: (0, 0)),
                  pl.BlockSpec((1, Dh), lambda i: (0, 0)),
                  pl.BlockSpec((Dh, P), lambda i: (0, 0)),
                  pl.BlockSpec((1, P), lambda i: (0, 0))],
        out_specs=pl.BlockSpec((bb, P), lambda i: (i, 0)),
        compiler_params=pltpu.CompilerParams(dimension_semantics=("parallel",)),
    )(x, p["dec_w1"], p["dec_b1"], p["dec_w2"], p["dec_b2"])


# ----------------------------- model -----------------------------

def precompute_rel_bias(params, T):
    # TODO(synk): nn.Embedding gather stays in XLA glue; hoisted here so it runs
    # ONCE at setup (per layer) instead of on every forward call.
    idx = jnp.arange(T)
    rel_idx = jnp.clip(idx[:, None] - idx[None, :], -255, 255) + 255     # (T, T)
    return [jnp.transpose(bp["relpos"][rel_idx], (2, 0, 1))              # (H, T, T)
            for bp in params["blocks"]]


def hierarchical_temporal_net(x, params, rel_biases, num_heads=8):
    x = stem(x, params)
    for bp, rb in zip(params["blocks"], rel_biases):
        x = temporal_block(x, bp, rb, num_heads)
    return decoder(x, params)


# ----------------------------- params -----------------------------

def init_params(key, input_dim, d_model, pred_steps, num_layers,
                num_heads=8, expansion=4):
    D, E, H = d_model, expansion, num_heads
    keys = iter(jax.random.split(key, 8 + 8 * num_layers))

    def dense(fan_in, fan_out, dtype=_BF16):
        w = jax.random.normal(next(keys), (fan_in, fan_out), jnp.float32) * 0.05
        return w.astype(dtype)                       # matmul weights pre-cast bf16

    p = {
        "stem_w1": dense(input_dim, D), "stem_b1": jnp.zeros((1, D)),
        "stem_ln_g": jnp.ones((1, D)), "stem_ln_b": jnp.zeros((1, D)),
        "stem_w2": dense(D, D), "stem_b2": jnp.zeros((1, D)),
    }

    # Kernel conv output uses e-major channel order (e*D + c); torch uses
    # (c*E + e).  Permute LN / projection parameters once so in-kernel math is
    # identical to the torch layout.
    j = jnp.arange(E * D)
    perm = (j % D) * E + (j // D)

    blocks = []
    for _ in range(num_layers):
        # "torch-layout" raw params: conv_w[k, c, e] == W_torch[c*E+e, 0, k]
        conv_w = jax.random.normal(next(keys), (3, D, E), jnp.float32) * 0.05
        conv_b = jnp.zeros((D, E))
        proj_ln_g = jnp.ones((E * D,))               # torch channel order (c*E+e)
        proj_ln_b = jnp.zeros((E * D,))
        proj_w = dense(E * D, D, jnp.float32)        # rows in torch channel order
        qkv_w = dense(D, 3 * D, jnp.float32); qkv_b = jnp.zeros((3 * D,))
        gate_w = dense(D, D, jnp.float32); gate_b = jnp.zeros((D,))
        # NOTE: the reference's edge_update branch is mathematically dead at
        # inference (per-query constant cancels in softmax) -> not instantiated.
        blocks.append({
            "wconv": jnp.transpose(conv_w, (0, 2, 1)),             # (3, E, D) f32
            "bconv": conv_b.T,                                     # (E, D) f32
            "proj_ln_g": proj_ln_g[perm].reshape(E, D),
            "proj_ln_b": proj_ln_b[perm].reshape(E, D),
            "proj_w": proj_w[perm, :].reshape(E, D, D).astype(_BF16),
            "proj_b": jnp.zeros((1, D)),
            "norm_g": jnp.ones((1, D)), "norm_b": jnp.zeros((1, D)),
            "w_fused": jnp.concatenate([qkv_w, gate_w], axis=1).astype(_BF16),
            "b_fused": jnp.concatenate([qkv_b, gate_b]).reshape(1, 4 * D),
            "out_w": dense(D, D), "out_b": jnp.zeros((1, D)),
            "relpos": jax.random.normal(next(keys), (512, H), jnp.float32) * 0.05,
        })
    p["blocks"] = blocks
    p["dec_w1"] = dense(D, 4 * D); p["dec_b1"] = jnp.zeros((1, 4 * D))
    p["dec_w2"] = dense(4 * D, pred_steps); p["dec_b2"] = jnp.zeros((1, pred_steps))
    return p


if __name__ == "__main__":
    B, T, input_dim = 2, 8, 4
    d_model, pred_steps, num_layers, num_heads = 32, 7, 2, 8

    key = jax.random.PRNGKey(0)
    pkey, xkey = jax.random.split(key)
    params = init_params(pkey, input_dim, d_model, pred_steps, num_layers,
                         num_heads=num_heads)
    x = jax.random.normal(xkey, (B, T, input_dim), jnp.float32)

    # Per-layer (H, T, T) relative-position bias, computed once (not per call).
    rel_biases = precompute_rel_bias(params, T)

    fwd = jax.jit(functools.partial(hierarchical_temporal_net,
                                    num_heads=num_heads))
    out = jax.block_until_ready(fwd(x, params, rel_biases))
    assert out.shape == (B, pred_steps), out.shape
    assert bool(jnp.all(jnp.isfinite(out)))
    print("KERNEL_OK")
</pallas_src>

<mosaic_0001>
module attributes {stable_mosaic.version = 11 : i64} {
  func.func @_stem_kernel(%arg0: i32, %arg1: memref<16x4xf32, #tpu.memory_space<vmem>>, %arg2: memref<4x32xbf16, #tpu.memory_space<vmem>>, %arg3: memref<1x32xf32, #tpu.memory_space<vmem>>, %arg4: memref<1x32xf32, #tpu.memory_space<vmem>>, %arg5: memref<1x32xf32, #tpu.memory_space<vmem>>, %arg6: memref<32x32xbf16, #tpu.memory_space<vmem>>, %arg7: memref<1x32xf32, #tpu.memory_space<vmem>>, %arg8: memref<16x32xf32, #tpu.memory_space<vmem>>) attributes {dimension_semantics = [#tpu.dimension_semantics<parallel>], iteration_bounds = array<i64: 1>, scalar_prefetch = 0 : i64, scratch_operands = 0 : i64, tpu.core_type = #tpu.core_type<tc>, window_params = [{transform_indices = @transform_0, window_bounds = array<i64: 16, 4>}, {pipeline_mode = #tpu.pipeline_mode<synchronous>, transform_indices = @transform_1, window_bounds = array<i64: 4, 32>}, {pipeline_mode = #tpu.pipeline_mode<synchronous>, transform_indices = @transform_2, window_bounds = array<i64: 1, 32>}, {pipeline_mode = #tpu.pipeline_mode<synchronous>, transform_indices = @transform_3, window_bounds = array<i64: 1, 32>}, {pipeline_mode = #tpu.pipeline_mode<synchronous>, transform_indices = @transform_4, window_bounds = array<i64: 1, 32>}, {pipeline_mode = #tpu.pipeline_mode<synchronous>, transform_indices = @transform_5, window_bounds = array<i64: 32, 32>}, {pipeline_mode = #tpu.pipeline_mode<synchronous>, transform_indices = @transform_6, window_bounds = array<i64: 1, 32>}, {transform_indices = @transform_7, window_bounds = array<i64: 16, 32>}]} {
    %c0 = arith.constant 0 : index
    %c0_0 = arith.constant 0 : index
    %0 = vector.load %arg1[%c0, %c0_0] : memref<16x4xf32, #tpu.memory_space<vmem>>, vector<16x4xf32>
    %c0_1 = arith.constant 0 : index
    %c0_2 = arith.constant 0 : index
    %1 = vector.load %arg2[%c0_1, %c0_2] : memref<4x32xbf16, #tpu.memory_space<vmem>>, vector<4x32xbf16>
    %2 = arith.truncf %0 : vector<16x4xf32> to vector<16x4xbf16>
    %cst = arith.constant dense<0.000000e+00> : vector<16x32xf32>
    %3 = tpu.matmul %2, %1, %cst {dimension_numbers = #tpu.dot_dimension_numbers<[1], [0], [0], [1], [0, 0, 1, 1], [], []>} : vector<16x4xbf16>, vector<4x32xbf16>, vector<16x32xf32> -> vector<16x32xf32>
    %c0_3 = arith.constant 0 : index
    %c0_4 = arith.constant 0 : index
    %4 = vector.load %arg3[%c0_3, %c0_4] : memref<1x32xf32, #tpu.memory_space<vmem>>, vector<1x32xf32>
    %5 = vector.broadcast %4 : vector<1x32xf32> to vector<16x32xf32>
    %6 = arith.addf %3, %5 : vector<16x32xf32>
    %c0_5 = arith.constant 0 : index
    %c0_6 = arith.constant 0 : index
    %7 = vector.load %arg4[%c0_5, %c0_6] : memref<1x32xf32, #tpu.memory_space<vmem>>, vector<1x32xf32>
    %c0_7 = arith.constant 0 : index
    %c0_8 = arith.constant 0 : index
    %8 = vector.load %arg5[%c0_7, %c0_8] : memref<1x32xf32, #tpu.memory_space<vmem>>, vector<1x32xf32>
    %cst_9 = arith.constant dense<0.000000e+00> : vector<16xf32>
    %9 = vector.multi_reduction <add>, %6, %cst_9 [1] : vector<16x32xf32> to vector<16xf32>
    %10 = vector.shape_cast %9 : vector<16xf32> to vector<16x1xf32>
    %cst_10 = arith.constant 3.200000e+01 : f32
    %11 = vector.broadcast %cst_10 : f32 to vector<16x1xf32>
    %12 = arith.divf %10, %11 : vector<16x1xf32>
    %13 = vector.broadcast %12 : vector<16x1xf32> to vector<16x32xf32>
    %14 = arith.subf %6, %13 : vector<16x32xf32>
    %15 = arith.mulf %14, %14 : vector<16x32xf32>
    %cst_11 = arith.constant dense<0.000000e+00> : vector<16xf32>
    %16 = vector.multi_reduction <add>, %15, %cst_11 [1] : vector<16x32xf32> to vector<16xf32>
    %17 = vector.shape_cast %16 : vector<16xf32> to vector<16x1xf32>
    %cst_12 = arith.constant 3.200000e+01 : f32
    %18 = vector.broadcast %cst_12 : f32 to vector<16x1xf32>
    %19 = arith.divf %17, %18 : vector<16x1xf32>
    %20 = vector.broadcast %12 : vector<16x1xf32> to vector<16x32xf32>
    %21 = arith.subf %6, %20 : vector<16x32xf32>
    %cst_13 = arith.constant 9.99999974E-6 : f32
    %22 = vector.broadcast %cst_13 : f32 to vector<16x1xf32>
    %23 = arith.addf %19, %22 : vector<16x1xf32>
    %24 = math.rsqrt %23 : vector<16x1xf32>
    %25 = vector.broadcast %24 : vector<16x1xf32> to vector<16x32xf32>
    %26 = arith.mulf %21, %25 : vector<16x32xf32>
    %27 = vector.broadcast %7 : vector<1x32xf32> to vector<16x32xf32>
    %28 = arith.mulf %26, %27 : vector<16x32xf32>
    %29 = vector.broadcast %8 : vector<1x32xf32> to vector<16x32xf32>
    %30 = arith.addf %28, %29 : vector<16x32xf32>
    %cst_14 = arith.constant 5.000000e-01 : f32
    %31 = vector.broadcast %cst_14 : f32 to vector<16x32xf32>
    %32 = arith.mulf %31, %30 : vector<16x32xf32>
    %cst_15 = arith.constant 0.707106769 : f32
    %33 = vector.broadcast %cst_15 : f32 to vector<16x32xf32>
    %34 = arith.mulf %30, %33 : vector<16x32xf32>
    %cst_16 = arith.constant 0.000000e+00 : f32
    %35 = vector.broadcast %cst_16 : f32 to vector<16x32xf32>
    %36 = arith.cmpf oge, %34, %35 : vector<16x32xf32>
    %cst_17 = arith.constant 1.000000e+00 : f32
    %cst_18 = arith.constant -1.000000e+00 : f32
    %37 = vector.broadcast %cst_17 : f32 to vector<16x32xf32>
    %38 = vector.broadcast %cst_18 : f32 to vector<16x32xf32>
    %39 = arith.select %36, %37, %38 : vector<16x32xi1>, vector<16x32xf32>
    %40 = math.absf %34 : vector<16x32xf32>
    %cst_19 = arith.constant 0.327591091 : f32
    %41 = vector.broadcast %cst_19 : f32 to vector<16x32xf32>
    %42 = arith.mulf %41, %40 : vector<16x32xf32>
    %cst_20 = arith.constant 1.000000e+00 : f32
    %43 = vector.broadcast %cst_20 : f32 to vector<16x32xf32>
    %44 = arith.addf %43, %42 : vector<16x32xf32>
    %cst_21 = arith.constant 1.000000e+00 : f32
    %45 = vector.broadcast %cst_21 : f32 to vector<16x32xf32>
    %46 = arith.divf %45, %44 : vector<16x32xf32>
    %cst_22 = arith.constant 1.06140542 : f32
    %47 = vector.broadcast %cst_22 : f32 to vector<16x32xf32>
    %48 = arith.mulf %47, %46 : vector<16x32xf32>
    %cst_23 = arith.constant -1.45315206 : f32
    %49 = vector.broadcast %cst_23 : f32 to vector<16x32xf32>
    %50 = arith.addf %48, %49 : vector<16x32xf32>
    %51 = arith.mulf %50, %46 : vector<16x32xf32>
    %cst_24 = arith.constant 1.42141378 : f32
    %52 = vector.broadcast %cst_24 : f32 to vector<16x32xf32>
    %53 = arith.addf %51, %52 : vector<16x32xf32>
    %54 = arith.mulf %53, %46 : vector<16x32xf32>
    %cst_25 = arith.constant -0.284496725 : f32
    %55 = vector.broadcast %cst_25 : f32 to vector<16x32xf32>
    %56 = arith.addf %54, %55 : vector<16x32xf32>
    %57 = arith.mulf %56, %46 : vector<16x32xf32>
    %cst_26 = arith.constant 0.254829586 : f32
    %58 = vector.broadcast %cst_26 : f32 to vector<16x32xf32>
    %59 = arith.addf %57, %58 : vector<16x32xf32>
    %60 = arith.mulf %59, %46 : vector<16x32xf32>
    %cst_27 = arith.constant 0.000000e+00 : f32
    %61 = vector.broadcast %cst_27 : f32 to vector<16x32xf32>
    %62 = arith.subf %61, %40 : vector<16x32xf32>
    %63 = arith.mulf %62, %40 : vector<16x32xf32>
    %64 = math.exp %63 : vector<16x32xf32>
    %65 = arith.mulf %60, %64 : vector<16x32xf32>
    %cst_28 = arith.constant 1.000000e+00 : f32
    %66 = vector.broadcast %cst_28 : f32 to vector<16x32xf32>
    %67 = arith.subf %66, %65 : vector<16x32xf32>
    %68 = arith.mulf %39, %67 : vector<16x32xf32>
    %cst_29 = arith.constant 1.000000e+00 : f32
    %69 = vector.broadcast %cst_29 : f32 to vector<16x32xf32>
    %70 = arith.addf %69, %68 : vector<16x32xf32>
    %71 = arith.mulf %32, %70 : vector<16x32xf32>
    %c0_30 = arith.constant 0 : index
    %c0_31 = arith.constant 0 : index
    %72 = vector.load %arg6[%c0_30, %c0_31] : memref<32x32xbf16, #tpu.memory_space<vmem>>, vector<32x32xbf16>
    %73 = arith.truncf %71 : vector<16x32xf32> to vector<16x32xbf16>
    %cst_32 = arith.constant dense<0.000000e+00> : vector<16x32xf32>
    %74 = tpu.matmul %73, %72, %cst_32 {dimension_numbers = #tpu.dot_dimension_numbers<[1], [0], [0], [1], [0, 0, 1, 1], [], []>} : vector<16x32xbf16>, vector<32x32xbf16>, vector<16x32xf32> -> vector<16x32xf32>
    %c0_33 = arith.constant 0 : index
    %c0_34 = arith.constant 0 : index
    %75 = vector.load %arg7[%c0_33, %c0_34] : memref<1x32xf32, #tpu.memory_space<vmem>>, vector<1x32xf32>
    %76 = vector.broadcast %75 : vector<1x32xf32> to vector<16x32xf32>
    %77 = arith.addf %74, %76 : vector<16x32xf32>
    %c0_35 = arith.constant 0 : index
    %c0_36 = arith.constant 0 : index
    %78 = vector.load %arg8[%c0_35, %c0_36] : memref<16x32xf32, #tpu.memory_space<vmem>>, vector<16x32xf32>
    tpu.vector_store %arg8[%c0_35, %c0_36], %77 {strides = array<i32>} : memref<16x32xf32, #tpu.memory_space<vmem>>, vector<16x32xf32>,
    return
  }
  func.func @transform_0(%arg0: i32) -> (i32, i32) {
    %c0_i32 = arith.constant 0 : i32
    %c0_i32_0 = arith.constant 0 : i32
    return %arg0, %c0_i32 : i32, i32
  }
  func.func @transform_1(%arg0: i32) -> (i32, i32) {
    %c0_i32 = arith.constant 0 : i32
    %c0_i32_0 = arith.constant 0 : i32
    %c0_i32_1 = arith.constant 0 : i32
    return %c0_i32, %c0_i32_0 : i32, i32
  }
  func.func @transform_2(%arg0: i32) -> (i32, i32) {
    %c0_i32 = arith.constant 0 : i32
    %c0_i32_0 = arith.constant 0 : i32
    %c0_i32_1 = arith.constant 0 : i32
    return %c0_i32, %c0_i32_0 : i32, i32
  }
  func.func @transform_3(%arg0: i32) -> (i32, i32) {
    %c0_i32 = arith.constant 0 : i32
    %c0_i32_0 = arith.constant 0 : i32
    %c0_i32_1 = arith.constant 0 : i32
    return %c0_i32, %c0_i32_0 : i32, i32
  }
  func.func @transform_4(%arg0: i32) -> (i32, i32) {
    %c0_i32 = arith.constant 0 : i32
    %c0_i32_0 = arith.constant 0 : i32
    %c0_i32_1 = arith.constant 0 : i32
    return %c0_i32, %c0_i32_0 : i32, i32
  }
  func.func @transform_5(%arg0: i32) -> (i32, i32) {
    %c0_i32 = arith.constant 0 : i32
    %c0_i32_0 = arith.constant 0 : i32
    %c0_i32_1 = arith.constant 0 : i32
    return %c0_i32, %c0_i32_0 : i32, i32
  }
  func.func @transform_6(%arg0: i32) -> (i32, i32) {
    %c0_i32 = arith.constant 0 : i32
    %c0_i32_0 = arith.constant 0 : i32
    %c0_i32_1 = arith.constant 0 : i32
    return %c0_i32, %c0_i32_0 : i32, i32
  }
  func.func @transform_7(%arg0: i32) -> (i32, i32) {
    %c0_i32 = arith.constant 0 : i32
    %c0_i32_0 = arith.constant 0 : i32
    return %arg0, %c0_i32 : i32, i32
  }
}

module attributes {stable_mosaic.version = 11 : i64} {
  func.func @_block_kernel(%arg0: i32, %arg1: memref<1x8x32xf32, #tpu.memory_space<vmem>>, %arg2: memref<3x4x32xf32, #tpu.memory_space<vmem>>, %arg3: memref<4x32xf32, #tpu.memory_space<vmem>>, %arg4: memref<4x32xf32, #tpu.memory_space<vmem>>, %arg5: memref<4x32xf32, #tpu.memory_space<vmem>>, %arg6: memref<4x32x32xbf16, #tpu.memory_space<vmem>>, %arg7: memref<1x32xf32, #tpu.memory_space<vmem>>, %arg8: memref<1x32xf32, #tpu.memory_space<vmem>>, %arg9: memref<1x32xf32, #tpu.memory_space<vmem>>, %arg10: memref<32x128xbf16, #tpu.memory_space<vmem>>, %arg11: memref<1x128xf32, #tpu.memory_space<vmem>>, %arg12: memref<32x32xbf16, #tpu.memory_space<vmem>>, %arg13: memref<1x32xf32, #tpu.memory_space<vmem>>, %arg14: memref<8x8x8xf32, #tpu.memory_space<any>>, %arg15: memref<1x8x32xf32, #tpu.memory_space<vmem>>, %arg16: memref<2x8x8xf32, #tpu.memory_space<vmem>>, %arg17: memref<2x!tpu.dma_semaphore, #tpu.memory_space<semaphore_mem>>) attributes {dimension_semantics = [#tpu.dimension_semantics<parallel>], iteration_bounds = array<i64: 2>, scalar_prefetch = 0 : i64, scratch_operands = 2 : i64, tpu.core_type = #tpu.core_type<tc>, window_params = [{transform_indices = @transform_0, window_bounds = array<i64: 1, 8, 32>}, {pipeline_mode = #tpu.pipeline_mode<synchronous>, transform_indices = @transform_1, window_bounds = array<i64: 3, 4, 32>}, {pipeline_mode = #tpu.pipeline_mode<synchronous>, transform_indices = @transform_2, window_bounds = array<i64: 4, 32>}, {pipeline_mode = #tpu.pipeline_mode<synchronous>, transform_indices = @transform_3, window_bounds = array<i64: 4, 32>}, {pipeline_mode = #tpu.pipeline_mode<synchronous>, transform_indices = @transform_4, window_bounds = array<i64: 4, 32>}, {pipeline_mode = #tpu.pipeline_mode<synchronous>, transform_indices = @transform_5, window_bounds = array<i64: 4, 32, 32>}, {pipeline_mode = #tpu.pipeline_mode<synchronous>, transform_indices = @transform_6, window_bounds = array<i64: 1, 32>}, {pipeline_mode = #tpu.pipeline_mode<synchronous>, transform_indices = @transform_7, window_bounds = array<i64: 1, 32>}, {pipeline_mode = #tpu.pipeline_mode<synchronous>, transform_indices = @transform_8, window_bounds = array<i64: 1, 32>}, {pipeline_mode = #tpu.pipeline_mode<synchronous>, transform_indices = @transform_9, window_bounds = array<i64: 32, 128>}, {pipeline_mode = #tpu.pipeline_mode<synchronous>, transform_indices = @transform_10, window_bounds = array<i64: 1, 128>}, {pipeline_mode = #tpu.pipeline_mode<synchronous>, transform_indices = @transform_11, window_bounds = array<i64: 32, 32>}, {pipeline_mode = #tpu.pipeline_mode<synchronous>, transform_indices = @transform_12, window_bounds = array<i64: 1, 32>}, {}, {transform_indices = @transform_14, window_bounds = array<i64: 1, 8, 32>}]} {
    %c0 = arith.constant 0 : index
    %c0_0 = arith.constant 0 : index
    %c0_1 = arith.constant 0 : index
    %0 = vector.load %arg1[%c0, %c0_0, %c0_1] : memref<1x8x32xf32, #tpu.memory_space<vmem>>, vector<1x8x32xf32>
    %1 = vector.shape_cast %0 : vector<1x8x32xf32> to vector<8x32xf32>
    %c0_i32 = arith.constant 0 : i32
    %c0_i32_2 = arith.constant 0 : i32
    %c0_i32_3 = arith.constant 0 : i32
    %c0_i32_4 = arith.constant 0 : i32
    %c0_i32_5 = arith.constant 0 : i32
    %2 = tpu.memref_slice %arg14[%c0_i32, %c0_i32_4, %c0_i32_5] : memref<8x8x8xf32, #tpu.memory_space<any>> -> memref<1x8x8xf32, #tpu.memory_space<any>>
    %3 = tpu.memref_squeeze %2 : memref<1x8x8xf32, #tpu.memory_space<any>> -> memref<8x8xf32, #tpu.memory_space<any>>
    %c0_i32_6 = arith.constant 0 : i32
    %c0_i32_7 = arith.constant 0 : i32
    %4 = tpu.memref_slice %arg16[%c0_i32_2, %c0_i32_6, %c0_i32_7] : memref<2x8x8xf32, #tpu.memory_space<vmem>> -> memref<1x8x8xf32, #tpu.memory_space<vmem>>
    %5 = tpu.memref_squeeze %4 : memref<1x8x8xf32, #tpu.memory_space<vmem>> -> memref<8x8xf32, #tpu.memory_space<vmem>>
    %6 = tpu.memref_slice %arg17[%c0_i32_3] : memref<2x!tpu.dma_semaphore, #tpu.memory_space<semaphore_mem>> -> memref<1x!tpu.dma_semaphore, #tpu.memory_space<semaphore_mem>>
    %7 = tpu.memref_squeeze %6 : memref<1x!tpu.dma_semaphore, #tpu.memory_space<semaphore_mem>> -> memref<!tpu.dma_semaphore, #tpu.memory_space<semaphore_mem>>
    tpu.enqueue_dma source(%3 : memref<8x8xf32, #tpu.memory_space<any>>) target(%5 : memref<8x8xf32, #tpu.memory_space<vmem>>) target_semaphore(%7 : memref<!tpu.dma_semaphore, #tpu.memory_space<semaphore_mem>>)
    %c0_8 = arith.constant 0 : index
    %c0_9 = arith.constant 0 : index
    %8 = vector.load %arg8[%c0_8, %c0_9] : memref<1x32xf32, #tpu.memory_space<vmem>>, vector<1x32xf32>
    %c0_10 = arith.constant 0 : index
    %c0_11 = arith.constant 0 : index
    %9 = vector.load %arg9[%c0_10, %c0_11] : memref<1x32xf32, #tpu.memory_space<vmem>>, vector<1x32xf32>
    %cst = arith.constant dense<0.000000e+00> : vector<8xf32>
    %10 = vector.multi_reduction <add>, %1, %cst [1] : vector<8x32xf32> to vector<8xf32>
    %11 = vector.shape_cast %10 : vector<8xf32> to vector<8x1xf32>
    %cst_12 = arith.constant 3.200000e+01 : f32
    %12 = vector.broadcast %cst_12 : f32 to vector<8x1xf32>
    %13 = arith.divf %11, %12 : vector<8x1xf32>
    %14 = vector.broadcast %13 : vector<8x1xf32> to vector<8x32xf32>
    %15 = arith.subf %1, %14 : vector<8x32xf32>
    %16 = arith.mulf %15, %15 : vector<8x32xf32>
    %cst_13 = arith.constant dense<0.000000e+00> : vector<8xf32>
    %17 = vector.multi_reduction <add>, %16, %cst_13 [1] : vector<8x32xf32> to vector<8xf32>
    %18 = vector.shape_cast %17 : vector<8xf32> to vector<8x1xf32>
    %cst_14 = arith.constant 3.200000e+01 : f32
    %19 = vector.broadcast %cst_14 : f32 to vector<8x1xf32>
    %20 = arith.divf %18, %19 : vector<8x1xf32>
    %21 = vector.broadcast %13 : vector<8x1xf32> to vector<8x32xf32>
    %22 = arith.subf %1, %21 : vector<8x32xf32>
    %cst_15 = arith.constant 9.99999974E-6 : f32
    %23 = vector.broadcast %cst_15 : f32 to vector<8x1xf32>
    %24 = arith.addf %20, %23 : vector<8x1xf32>
    %25 = math.rsqrt %24 : vector<8x1xf32>
    %26 = vector.broadcast %25 : vector<8x1xf32> to vector<8x32xf32>
    %27 = arith.mulf %22, %26 : vector<8x32xf32>
    %28 = vector.broadcast %8 : vector<1x32xf32> to vector<8x32xf32>
    %29 = arith.mulf %27, %28 : vector<8x32xf32>
    %30 = vector.broadcast %9 : vector<1x32xf32> to vector<8x32xf32>
    %31 = arith.addf %29, %30 : vector<8x32xf32>
    %c0_16 = arith.constant 0 : index
    %c0_17 = arith.constant 0 : index
    %32 = vector.load %arg10[%c0_16, %c0_17] : memref<32x128xbf16, #tpu.memory_space<vmem>>, vector<32x128xbf16>
    %33 = arith.truncf %31 : vector<8x32xf32> to vector<8x32xbf16>
    %cst_18 = arith.constant dense<0.000000e+00> : vector<8x128xf32>
    %34 = tpu.matmul %33, %32, %cst_18 {dimension_numbers = #tpu.dot_dimension_numbers<[1], [0], [0], [1], [0, 0, 1, 1], [], []>} : vector<8x32xbf16>, vector<32x128xbf16>, vector<8x128xf32> -> vector<8x128xf32>
    %c0_19 = arith.constant 0 : index
    %c0_20 = arith.constant 0 : index
    %35 = vector.load %arg11[%c0_19, %c0_20] : memref<1x128xf32, #tpu.memory_space<vmem>>, vector<1x128xf32>
    %36 = vector.broadcast %35 : vector<1x128xf32> to vector<8x128xf32>
    %37 = arith.addf %34, %36 : vector<8x128xf32>
    %38 = vector.extract_strided_slice %37 {offsets = [0, 0], sizes = [8, 32], strides = [1, 1]} : vector<8x128xf32> to vector<8x32xf32>
    %39 = vector.extract_strided_slice %37 {offsets = [0, 32], sizes = [8, 32], strides = [1, 1]} : vector<8x128xf32> to vector<8x32xf32>
    %40 = vector.extract_strided_slice %37 {offsets = [0, 64], sizes = [8, 32], strides = [1, 1]} : vector<8x128xf32> to vector<8x32xf32>
    %41 = vector.extract_strided_slice %37 {offsets = [0, 96], sizes = [8, 32], strides = [1, 1]} : vector<8x128xf32> to vector<8x32xf32>
    %42 = arith.negf %41 : vector<8x32xf32>
    %43 = math.exp %42 : vector<8x32xf32>
    %cst_21 = arith.constant 1.000000e+00 : f32
    %44 = vector.broadcast %cst_21 : f32 to vector<8x32xf32>
    %45 = arith.addf %44, %43 : vector<8x32xf32>
    %46 = arith.divf %44, %45 : vector<8x32xf32>
    %cst_22 = arith.constant 5.000000e-01 : f32
    %47 = vector.broadcast %cst_22 : f32 to vector<8x32xf32>
    %48 = arith.mulf %38, %47 : vector<8x32xf32>
    %49 = arith.truncf %48 : vector<8x32xf32> to vector<8x32xbf16>
    %50 = arith.truncf %39 : vector<8x32xf32> to vector<8x32xbf16>
    %51 = arith.truncf %40 : vector<8x32xf32> to vector<8x32xbf16>
    %c0_i32_23 = arith.constant 0 : i32
    %c0_i32_24 = arith.constant 0 : i32
    %c0_i32_25 = arith.constant 0 : i32
    %c0_i32_26 = arith.constant 0 : i32
    %c0_i32_27 = arith.constant 0 : i32
    %52 = tpu.memref_slice %arg14[%c0_i32_23, %c0_i32_26, %c0_i32_27] : memref<8x8x8xf32, #tpu.memory_space<any>> -> memref<1x8x8xf32, #tpu.memory_space<any>>
    %53 = tpu.memref_squeeze %52 : memref<1x8x8xf32, #tpu.memory_space<any>> -> memref<8x8xf32, #tpu.memory_space<any>>
    %c0_i32_28 = arith.constant 0 : i32
    %c0_i32_29 = arith.constant 0 : i32
    %54 = tpu.memref_slice %arg16[%c0_i32_24, %c0_i32_28, %c0_i32_29] : memref<2x8x8xf32, #tpu.memory_space<vmem>> -> memref<1x8x8xf32, #tpu.memory_space<vmem>>
    %55 = tpu.memref_squeeze %54 : memref<1x8x8xf32, #tpu.memory_space<vmem>> -> memref<8x8xf32, #tpu.memory_space<vmem>>
    %56 = tpu.memref_slice %arg17[%c0_i32_25] : memref<2x!tpu.dma_semaphore, #tpu.memory_space<semaphore_mem>> -> memref<1x!tpu.dma_semaphore, #tpu.memory_space<semaphore_mem>>
    %57 = tpu.memref_squeeze %56 : memref<1x!tpu.dma_semaphore, #tpu.memory_space<semaphore_mem>> -> memref<!tpu.dma_semaphore, #tpu.memory_space<semaphore_mem>>
    tpu.wait_dma2 semaphore(%57 : memref<!tpu.dma_semaphore, #tpu.memory_space<semaphore_mem>>) src(%53 : memref<8x8xf32, #tpu.memory_space<any>>) dst(%55 : memref<8x8xf32, #tpu.memory_space<vmem>>)
    %c1_i32 = arith.constant 1 : i32
    %c1_i32_30 = arith.constant 1 : i32
    %c1_i32_31 = arith.constant 1 : i32
    %c0_i32_32 = arith.constant 0 : i32
    %c0_i32_33 = arith.constant 0 : i32
    %58 = tpu.memref_slice %arg14[%c1_i32, %c0_i32_32, %c0_i32_33] : memref<8x8x8xf32, #tpu.memory_space<any>> -> memref<1x8x8xf32, #tpu.memory_space<any>>
    %59 = tpu.memref_squeeze %58 : memref<1x8x8xf32, #tpu.memory_space<any>> -> memref<8x8xf32, #tpu.memory_space<any>>
    %c0_i32_34 = arith.constant 0 : i32
    %c0_i32_35 = arith.constant 0 : i32
    %60 = tpu.memref_slice %arg16[%c1_i32_30, %c0_i32_34, %c0_i32_35] : memref<2x8x8xf32, #tpu.memory_space<vmem>> -> memref<1x8x8xf32, #tpu.memory_space<vmem>>
    %61 = tpu.memref_squeeze %60 : memref<1x8x8xf32, #tpu.memory_space<vmem>> -> memref<8x8xf32, #tpu.memory_space<vmem>>
    %62 = tpu.memref_slice %arg17[%c1_i32_31] : memref<2x!tpu.dma_semaphore, #tpu.memory_space<semaphore_mem>> -> memref<1x!tpu.dma_semaphore, #tpu.memory_space<semaphore_mem>>
    %63 = tpu.memref_squeeze %62 : memref<1x!tpu.dma_semaphore, #tpu.memory_space<semaphore_mem>> -> memref<!tpu.dma_semaphore, #tpu.memory_space<semaphore_mem>>
    tpu.enqueue_dma source(%59 : memref<8x8xf32, #tpu.memory_space<any>>) target(%61 : memref<8x8xf32, #tpu.memory_space<vmem>>) target_semaphore(%63 : memref<!tpu.dma_semaphore, #tpu.memory_space<semaphore_mem>>)
    %64 = vector.extract_strided_slice %49 {offsets = [0, 0], sizes = [8, 4], strides = [1, 1]} : vector<8x32xbf16> to vector<8x4xbf16>
    %65 = vector.extract_strided_slice %50 {offsets = [0, 0], sizes = [8, 4], strides = [1, 1]} : vector<8x32xbf16> to vector<8x4xbf16>
    %cst_36 = arith.constant dense<0.000000e+00> : vector<8x8xf32>
    %66 = tpu.matmul %64, %65, %cst_36 {dimension_numbers = #tpu.dot_dimension_numbers<[1], [1], [0], [0], [0, 0, 1, 0], [], []>} : vector<8x4xbf16>, vector<8x4xbf16>, vector<8x8xf32> -> vector<8x8xf32>
    %c0_37 = arith.constant 0 : index
    %c0_38 = arith.constant 0 : index
    %c0_39 = arith.constant 0 : index
    %67 = vector.load %arg16[%c0_37, %c0_38, %c0_39] : memref<2x8x8xf32, #tpu.memory_space<vmem>>, vector<1x8x8xf32>
    %68 = vector.shape_cast %67 : vector<1x8x8xf32> to vector<8x8xf32>
    %69 = arith.addf %66, %68 : vector<8x8xf32>
    %cst_40 = arith.constant dense<0xFF800000> : vector<8xf32>
    %70 = vector.multi_reduction <maximumf>, %69, %cst_40 [1] : vector<8x8xf32> to vector<8xf32>
    %71 = vector.shape_cast %70 : vector<8xf32> to vector<8x1xf32>
    %72 = vector.broadcast %71 : vector<8x1xf32> to vector<8x8xf32>
    %73 = arith.subf %69, %72 : vector<8x8xf32>
    %74 = math.exp %73 : vector<8x8xf32>
    %cst_41 = arith.constant dense<0.000000e+00> : vector<8xf32>
    %75 = vector.multi_reduction <add>, %74, %cst_41 [1] : vector<8x8xf32> to vector<8xf32>
    %76 = vector.shape_cast %75 : vector<8xf32> to vector<8x1xf32>
    %77 = tpu.reciprocal %76 {approx = true} : vector<8x1xf32> -> vector<8x1xf32>
    %78 = vector.broadcast %77 : vector<8x1xf32> to vector<8x8xf32>
    %79 = arith.mulf %74, %78 : vector<8x8xf32>
    %80 = vector.extract_strided_slice %51 {offsets = [0, 0], sizes = [8, 4], strides = [1, 1]} : vector<8x32xbf16> to vector<8x4xbf16>
    %81 = arith.truncf %79 : vector<8x8xf32> to vector<8x8xbf16>
    %cst_42 = arith.constant dense<0.000000e+00> : vector<8x4xf32>
    %82 = tpu.matmul %81, %80, %cst_42 {dimension_numbers = #tpu.dot_dimension_numbers<[1], [0], [0], [1], [0, 0, 1, 1], [], []>} : vector<8x8xbf16>, vector<8x4xbf16>, vector<8x4xf32> -> vector<8x4xf32>
    %83 = vector.extract_strided_slice %46 {offsets = [0, 0], sizes = [8, 4], strides = [1, 1]} : vector<8x32xf32> to vector<8x4xf32>
    %84 = arith.mulf %82, %83 : vector<8x4xf32>
    %c1_i32_43 = arith.constant 1 : i32
    %c1_i32_44 = arith.constant 1 : i32
    %c1_i32_45 = arith.constant 1 : i32
    %c0_i32_46 = arith.constant 0 : i32
    %c0_i32_47 = arith.constant 0 : i32
    %85 = tpu.memref_slice %arg14[%c1_i32_43, %c0_i32_46, %c0_i32_47] : memref<8x8x8xf32, #tpu.memory_space<any>> -> memref<1x8x8xf32, #tpu.memory_space<any>>
    %86 = tpu.memref_squeeze %85 : memref<1x8x8xf32, #tpu.memory_space<any>> -> memref<8x8xf32, #tpu.memory_space<any>>
    %c0_i32_48 = arith.constant 0 : i32
    %c0_i32_49 = arith.constant 0 : i32
    %87 = tpu.memref_slice %arg16[%c1_i32_44, %c0_i32_48, %c0_i32_49] : memref<2x8x8xf32, #tpu.memory_space<vmem>> -> memref<1x8x8xf32, #tpu.memory_space<vmem>>
    %88 = tpu.memref_squeeze %87 : memref<1x8x8xf32, #tpu.memory_space<vmem>> -> memref<8x8xf32, #tpu.memory_space<vmem>>
    %89 = tpu.memref_slice %arg17[%c1_i32_45] : memref<2x!tpu.dma_semaphore, #tpu.memory_space<semaphore_mem>> -> memref<1x!tpu.dma_semaphore, #tpu.memory_space<semaphore_mem>>
    %90 = tpu.memref_squeeze %89 : memref<1x!tpu.dma_semaphore, #tpu.memory_space<semaphore_mem>> -> memref<!tpu.dma_semaphore, #tpu.memory_space<semaphore_mem>>
    tpu.wait_dma2 semaphore(%90 : memref<!tpu.dma_semaphore, #tpu.memory_space<semaphore_mem>>) src(%86 : memref<8x8xf32, #tpu.memory_space<any>>) dst(%88 : memref<8x8xf32, #tpu.memory_space<vmem>>)
    %c2_i32 = arith.constant 2 : i32
    %c0_i32_50 = arith.constant 0 : i32
    %c0_i32_51 = arith.constant 0 : i32
    %c0_i32_52 = arith.constant 0 : i32
    %c0_i32_53 = arith.constant 0 : i32
    %91 = tpu.memref_slice %arg14[%c2_i32, %c0_i32_52, %c0_i32_53] : memref<8x8x8xf32, #tpu.memory_space<any>> -> memref<1x8x8xf32, #tpu.memory_space<any>>
    %92 = tpu.memref_squeeze %91 : memref<1x8x8xf32, #tpu.memory_space<any>> -> memref<8x8xf32, #tpu.memory_space<any>>
    %c0_i32_54 = arith.constant 0 : i32
    %c0_i32_55 = arith.constant 0 : i32
    %93 = tpu.memref_slice %arg16[%c0_i32_50, %c0_i32_54, %c0_i32_55] : memref<2x8x8xf32, #tpu.memory_space<vmem>> -> memref<1x8x8xf32, #tpu.memory_space<vmem>>
    %94 = tpu.memref_squeeze %93 : memref<1x8x8xf32, #tpu.memory_space<vmem>> -> memref<8x8xf32, #tpu.memory_space<vmem>>
    %95 = tpu.memref_slice %arg17[%c0_i32_51] : memref<2x!tpu.dma_semaphore, #tpu.memory_space<semaphore_mem>> -> memref<1x!tpu.dma_semaphore, #tpu.memory_space<semaphore_mem>>
    %96 = tpu.memref_squeeze %95 : memref<1x!tpu.dma_semaphore, #tpu.memory_space<semaphore_mem>> -> memref<!tpu.dma_semaphore, #tpu.memory_space<semaphore_mem>>
    tpu.enqueue_dma source(%92 : memref<8x8xf32, #tpu.memory_space<any>>) target(%94 : memref<8x8xf32, #tpu.memory_space<vmem>>) target_semaphore(%96 : memref<!tpu.dma_semaphore, #tpu.memory_space<semaphore_mem>>)
    %97 = vector.extract_strided_slice %49 {offsets = [0, 4], sizes = [8, 4], strides = [1, 1]} : vector<8x32xbf16> to vector<8x4xbf16>
    %98 = vector.extract_strided_slice %50 {offsets = [0, 4], sizes = [8, 4], strides = [1, 1]} : vector<8x32xbf16> to vector<8x4xbf16>
    %cst_56 = arith.constant dense<0.000000e+00> : vector<8x8xf32>
    %99 = tpu.matmul %97, %98, %cst_56 {dimension_numbers = #tpu.dot_dimension_numbers<[1], [1], [0], [0], [0, 0, 1, 0], [], []>} : vector<8x4xbf16>, vector<8x4xbf16>, vector<8x8xf32> -> vector<8x8xf32>
    %c1 = arith.constant 1 : index
    %c0_57 = arith.constant 0 : index
    %c0_58 = arith.constant 0 : index
    %100 = vector.load %arg16[%c1, %c0_57, %c0_58] : memref<2x8x8xf32, #tpu.memory_space<vmem>>, vector<1x8x8xf32>
    %101 = vector.shape_cast %100 : vector<1x8x8xf32> to vector<8x8xf32>
    %102 = arith.addf %99, %101 : vector<8x8xf32>
    %cst_59 = arith.constant dense<0xFF800000> : vector<8xf32>
    %103 = vector.multi_reduction <maximumf>, %102, %cst_59 [1] : vector<8x8xf32> to vector<8xf32>
    %104 = vector.shape_cast %103 : vector<8xf32> to vector<8x1xf32>
    %105 = vector.broadcast %104 : vector<8x1xf32> to vector<8x8xf32>
    %106 = arith.subf %102, %105 : vector<8x8xf32>
    %107 = math.exp %106 : vector<8x8xf32>
    %cst_60 = arith.constant dense<0.000000e+00> : vector<8xf32>
    %108 = vector.multi_reduction <add>, %107, %cst_60 [1] : vector<8x8xf32> to vector<8xf32>
    %109 = vector.shape_cast %108 : vector<8xf32> to vector<8x1xf32>
    %110 = tpu.reciprocal %109 {approx = true} : vector<8x1xf32> -> vector<8x1xf32>
    %111 = vector.broadcast %110 : vector<8x1xf32> to vector<8x8xf32>
    %112 = arith.mulf %107, %111 : vector<8x8xf32>
    %113 = vector.extract_strided_slice %51 {offsets = [0, 4], sizes = [8, 4], strides = [1, 1]} : vector<8x32xbf16> to vector<8x4xbf16>
    %114 = arith.truncf %112 : vector<8x8xf32> to vector<8x8xbf16>
    %cst_61 = arith.constant dense<0.000000e+00> : vector<8x4xf32>
    %115 = tpu.matmul %114, %113, %cst_61 {dimension_numbers = #tpu.dot_dimension_numbers<[1], [0], [0], [1], [0, 0, 1, 1], [], []>} : vector<8x8xbf16>, vector<8x4xbf16>, vector<8x4xf32> -> vector<8x4xf32>
    %116 = vector.extract_strided_slice %46 {offsets = [0, 4], sizes = [8, 4], strides = [1, 1]} : vector<8x32xf32> to vector<8x4xf32>
    %117 = arith.mulf %115, %116 : vector<8x4xf32>
    %c2_i32_62 = arith.constant 2 : i32
    %c0_i32_63 = arith.constant 0 : i32
    %c0_i32_64 = arith.constant 0 : i32
    %c0_i32_65 = arith.constant 0 : i32
    %c0_i32_66 = arith.constant 0 : i32
    %118 = tpu.memref_slice %arg14[%c2_i32_62, %c0_i32_65, %c0_i32_66] : memref<8x8x8xf32, #tpu.memory_space<any>> -> memref<1x8x8xf32, #tpu.memory_space<any>>
    %119 = tpu.memref_squeeze %118 : memref<1x8x8xf32, #tpu.memory_space<any>> -> memref<8x8xf32, #tpu.memory_space<any>>
    %c0_i32_67 = arith.constant 0 : i32
    %c0_i32_68 = arith.constant 0 : i32
    %120 = tpu.memref_slice %arg16[%c0_i32_63, %c0_i32_67, %c0_i32_68] : memref<2x8x8xf32, #tpu.memory_space<vmem>> -> memref<1x8x8xf32, #tpu.memory_space<vmem>>
    %121 = tpu.memref_squeeze %120 : memref<1x8x8xf32, #tpu.memory_space<vmem>> -> memref<8x8xf32, #tpu.memory_space<vmem>>
    %122 = tpu.memref_slice %arg17[%c0_i32_64] : memref<2x!tpu.dma_semaphore, #tpu.memory_space<semaphore_mem>> -> memref<1x!tpu.dma_semaphore, #tpu.memory_space<semaphore_mem>>
    %123 = tpu.memref_squeeze %122 : memref<1x!tpu.dma_semaphore, #tpu.memory_space<semaphore_mem>> -> memref<!tpu.dma_semaphore, #tpu.memory_space<semaphore_mem>>
    tpu.wait_dma2 semaphore(%123 : memref<!tpu.dma_semaphore, #tpu.memory_space<semaphore_mem>>) src(%119 : memref<8x8xf32, #tpu.memory_space<any>>) dst(%121 : memref<8x8xf32, #tpu.memory_space<vmem>>)
    %c3_i32 = arith.constant 3 : i32
    %c1_i32_69 = arith.constant 1 : i32
    %c1_i32_70 = arith.constant 1 : i32
    %c0_i32_71 = arith.constant 0 : i32
    %c0_i32_72 = arith.constant 0 : i32
    %124 = tpu.memref_slice %arg14[%c3_i32, %c0_i32_71, %c0_i32_72] : memref<8x8x8xf32, #tpu.memory_space<any>> -> memref<1x8x8xf32, #tpu.memory_space<any>>
    %125 = tpu.memref_squeeze %124 : memref<1x8x8xf32, #tpu.memory_space<any>> -> memref<8x8xf32, #tpu.memory_space<any>>
    %c0_i32_73 = arith.constant 0 : i32
    %c0_i32_74 = arith.constant 0 : i32
    %126 = tpu.memref_slice %arg16[%c1_i32_69, %c0_i32_73, %c0_i32_74] : memref<2x8x8xf32, #tpu.memory_space<vmem>> -> memref<1x8x8xf32, #tpu.memory_space<vmem>>
    %127 = tpu.memref_squeeze %126 : memref<1x8x8xf32, #tpu.memory_space<vmem>> -> memref<8x8xf32, #tpu.memory_space<vmem>>
    %128 = tpu.memref_slice %arg17[%c1_i32_70] : memref<2x!tpu.dma_semaphore, #tpu.memory_space<semaphore_mem>> -> memref<1x!tpu.dma_semaphore, #tpu.memory_space<semaphore_mem>>
    %129 = tpu.memref_squeeze %128 : memref<1x!tpu.dma_semaphore, #tpu.memory_space<semaphore_mem>> -> memref<!tpu.dma_semaphore, #tpu.memory_space<semaphore_mem>>
    tpu.enqueue_dma source(%125 : memref<8x8xf32, #tpu.memory_space<any>>) target(%127 : memref<8x8xf32, #tpu.memory_space<vmem>>) target_semaphore(%129 : memref<!tpu.dma_semaphore, #tpu.memory_space<semaphore_mem>>)
    %130 = vector.extract_strided_slice %49 {offsets = [0, 8], sizes = [8, 4], strides = [1, 1]} : vector<8x32xbf16> to vector<8x4xbf16>
    %131 = vector.extract_strided_slice %50 {offsets = [0, 8], sizes = [8, 4], strides = [1, 1]} : vector<8x32xbf16> to vector<8x4xbf16>
    %cst_75 = arith.constant dense<0.000000e+00> : vector<8x8xf32>
    %132 = tpu.matmul %130, %131, %cst_75 {dimension_numbers = #tpu.dot_dimension_numbers<[1], [1], [0], [0], [0, 0, 1, 0], [], []>} : vector<8x4xbf16>, vector<8x4xbf16>, vector<8x8xf32> -> vector<8x8xf32>
    %c0_76 = arith.constant 0 : index
    %c0_77 = arith.constant 0 : index
    %c0_78 = arith.constant 0 : index
    %133 = vector.load %arg16[%c0_76, %c0_77, %c0_78] : memref<2x8x8xf32, #tpu.memory_space<vmem>>, vector<1x8x8xf32>
    %134 = vector.shape_cast %133 : vector<1x8x8xf32> to vector<8x8xf32>
    %135 = arith.addf %132, %134 : vector<8x8xf32>
    %cst_79 = arith.constant dense<0xFF800000> : vector<8xf32>
    %136 = vector.multi_reduction <maximumf>, %135, %cst_79 [1] : vector<8x8xf32> to vector<8xf32>
    %137 = vector.shape_cast %136 : vector<8xf32> to vector<8x1xf32>
    %138 = vector.broadcast %137 : vector<8x1xf32> to vector<8x8xf32>
    %139 = arith.subf %135, %138 : vector<8x8xf32>
    %140 = math.exp %139 : vector<8x8xf32>
    %cst_80 = arith.constant dense<0.000000e+00> : vector<8xf32>
    %141 = vector.multi_reduction <add>, %140, %cst_80 [1] : vector<8x8xf32> to vector<8xf32>
    %142 = vector.shape_cast %141 : vector<8xf32> to vector<8x1xf32>
    %143 = tpu.reciprocal %142 {approx = true} : vector<8x1xf32> -> vector<8x1xf32>
    %144 = vector.broadcast %143 : vector<8x1xf32> to vector<8x8xf32>
    %145 = arith.mulf %140, %144 : vector<8x8xf32>
    %146 = vector.extract_strided_slice %51 {offsets = [0, 8], sizes = [8, 4], strides = [1, 1]} : vector<8x32xbf16> to vector<8x4xbf16>
    %147 = arith.truncf %145 : vector<8x8xf32> to vector<8x8xbf16>
    %cst_81 = arith.constant dense<0.000000e+00> : vector<8x4xf32>
    %148 = tpu.matmul %147, %146, %cst_81 {dimension_numbers = #tpu.dot_dimension_numbers<[1], [0], [0], [1], [0, 0, 1, 1], [], []>} : vector<8x8xbf16>, vector<8x4xbf16>, vector<8x4xf32> -> vector<8x4xf32>
    %149 = vector.extract_strided_slice %46 {offsets = [0, 8], sizes = [8, 4], strides = [1, 1]} : vector<8x32xf32> to vector<8x4xf32>
    %150 = arith.mulf %148, %149 : vector<8x4xf32>
    %c3_i32_82 = arith.constant 3 : i32
    %c1_i32_83 = arith.constant 1 : i32
    %c1_i32_84 = arith.constant 1 : i32
    %c0_i32_85 = arith.constant 0 : i32
    %c0_i32_86 = arith.constant 0 : i32
    %151 = tpu.memref_slice %arg14[%c3_i32_82, %c0_i32_85, %c0_i32_86] : memref<8x8x8xf32, #tpu.memory_space<any>> -> memref<1x8x8xf32, #tpu.memory_space<any>>
    %152 = tpu.memref_squeeze %151 : memref<1x8x8xf32, #tpu.memory_space<any>> -> memref<8x8xf32, #tpu.memory_space<any>>
    %c0_i32_87 = arith.constant 0 : i32
    %c0_i32_88 = arith.constant 0 : i32
    %153 = tpu.memref_slice %arg16[%c1_i32_83, %c0_i32_87, %c0_i32_88] : memref<2x8x8xf32, #tpu.memory_space<vmem>> -> memref<1x8x8xf32, #tpu.memory_space<vmem>>
    %154 = tpu.memref_squeeze %153 : memref<1x8x8xf32, #tpu.memory_space<vmem>> -> memref<8x8xf32, #tpu.memory_space<vmem>>
    %155 = tpu.memref_slice %arg17[%c1_i32_84] : memref<2x!tpu.dma_semaphore, #tpu.memory_space<semaphore_mem>> -> memref<1x!tpu.dma_semaphore, #tpu.memory_space<semaphore_mem>>
    %156 = tpu.memref_squeeze %155 : memref<1x!tpu.dma_semaphore, #tpu.memory_space<semaphore_mem>> -> memref<!tpu.dma_semaphore, #tpu.memory_space<semaphore_mem>>
    tpu.wait_dma2 semaphore(%156 : memref<!tpu.dma_semaphore, #tpu.memory_space<semaphore_mem>>) src(%152 : memref<8x8xf32, #tpu.memory_space<any>>) dst(%154 : memref<8x8xf32, #tpu.memory_space<vmem>>)
    %c4_i32 = arith.constant 4 : i32
    %c0_i32_89 = arith.constant 0 : i32
    %c0_i32_90 = arith.constant 0 : i32
    %c0_i32_91 = arith.constant 0 : i32
    %c0_i32_92 = arith.constant 0 : i32
    %157 = tpu.memref_slice %arg14[%c4_i32, %c0_i32_91, %c0_i32_92] : memref<8x8x8xf32, #tpu.memory_space<any>> -> memref<1x8x8xf32, #tpu.memory_space<any>>
    %158 = tpu.memref_squeeze %157 : memref<1x8x8xf32, #tpu.memory_space<any>> -> memref<8x8xf32, #tpu.memory_space<any>>
    %c0_i32_93 = arith.constant 0 : i32
    %c0_i32_94 = arith.constant 0 : i32
    %159 = tpu.memref_slice %arg16[%c0_i32_89, %c0_i32_93, %c0_i32_94] : memref<2x8x8xf32, #tpu.memory_space<vmem>> -> memref<1x8x8xf32, #tpu.memory_space<vmem>>
    %160 = tpu.memref_squeeze %159 : memref<1x8x8xf32, #tpu.memory_space<vmem>> -> memref<8x8xf32, #tpu.memory_space<vmem>>
    %161 = tpu.memref_slice %arg17[%c0_i32_90] : memref<2x!tpu.dma_semaphore, #tpu.memory_space<semaphore_mem>> -> memref<1x!tpu.dma_semaphore, #tpu.memory_space<semaphore_mem>>
    %162 = tpu.memref_squeeze %161 : memref<1x!tpu.dma_semaphore, #tpu.memory_space<semaphore_mem>> -> memref<!tpu.dma_semaphore, #tpu.memory_space<semaphore_mem>>
    tpu.enqueue_dma source(%158 : memref<8x8xf32, #tpu.memory_space<any>>) target(%160 : memref<8x8xf32, #tpu.memory_space<vmem>>) target_semaphore(%162 : memref<!tpu.dma_semaphore, #tpu.memory_space<semaphore_mem>>)
    %163 = vector.extract_strided_slice %49 {offsets = [0, 12], sizes = [8, 4], strides = [1, 1]} : vector<8x32xbf16> to vector<8x4xbf16>
    %164 = vector.extract_strided_slice %50 {offsets = [0, 12], sizes = [8, 4], strides = [1, 1]} : vector<8x32xbf16> to vector<8x4xbf16>
    %cst_95 = arith.constant dense<0.000000e+00> : vector<8x8xf32>
    %165 = tpu.matmul %163, %164, %cst_95 {dimension_numbers = #tpu.dot_dimension_numbers<[1], [1], [0], [0], [0, 0, 1, 0], [], []>} : vector<8x4xbf16>, vector<8x4xbf16>, vector<8x8xf32> -> vector<8x8xf32>
    %c1_96 = arith.constant 1 : index
    %c0_97 = arith.constant 0 : index
    %c0_98 = arith.constant 0 : index
    %166 = vector.load %arg16[%c1_96, %c0_97, %c0_98] : memref<2x8x8xf32, #tpu.memory_space<vmem>>, vector<1x8x8xf32>
    %167 = vector.shape_cast %166 : vector<1x8x8xf32> to vector<8x8xf32>
    %168 = arith.addf %165, %167 : vector<8x8xf32>
    %cst_99 = arith.constant dense<0xFF800000> : vector<8xf32>
    %169 = vector.multi_reduction <maximumf>, %168, %cst_99 [1] : vector<8x8xf32> to vector<8xf32>
    %170 = vector.shape_cast %169 : vector<8xf32> to vector<8x1xf32>
    %171 = vector.broadcast %170 : vector<8x1xf32> to vector<8x8xf32>
    %172 = arith.subf %168, %171 : vector<8x8xf32>
    %173 = math.exp %172 : vector<8x8xf32>
    %cst_100 = arith.constant dense<0.000000e+00> : vector<8xf32>
    %174 = vector.multi_reduction <add>, %173, %cst_100 [1] : vector<8x8xf32> to vector<8xf32>
    %175 = vector.shape_cast %174 : vector<8xf32> to vector<8x1xf32>
    %176 = tpu.reciprocal %175 {approx = true} : vector<8x1xf32> -> vector<8x1xf32>
    %177 = vector.broadcast %176 : vector<8x1xf32> to vector<8x8xf32>
    %178 = arith.mulf %173, %177 : vector<8x8xf32>
    %179 = vector.extract_strided_slice %51 {offsets = [0, 12], sizes = [8, 4], strides = [1, 1]} : vector<8x32xbf16> to vector<8x4xbf16>
    %180 = arith.truncf %178 : vector<8x8xf32> to vector<8x8xbf16>
    %cst_101 = arith.constant dense<0.000000e+00> : vector<8x4xf32>
    %181 = tpu.matmul %180, %179, %cst_101 {dimension_numbers = #tpu.dot_dimension_numbers<[1], [0], [0], [1], [0, 0, 1, 1], [], []>} : vector<8x8xbf16>, vector<8x4xbf16>, vector<8x4xf32> -> vector<8x4xf32>
    %182 = vector.extract_strided_slice %46 {offsets = [0, 12], sizes = [8, 4], strides = [1, 1]} : vector<8x32xf32> to vector<8x4xf32>
    %183 = arith.mulf %181, %182 : vector<8x4xf32>
    %c4_i32_102 = arith.constant 4 : i32
    %c0_i32_103 = arith.constant 0 : i32
    %c0_i32_104 = arith.constant 0 : i32
    %c0_i32_105 = arith.constant 0 : i32
    %c0_i32_106 = arith.constant 0 : i32
    %184 = tpu.memref_slice %arg14[%c4_i32_102, %c0_i32_105, %c0_i32_106] : memref<8x8x8xf32, #tpu.memory_space<any>> -> memref<1x8x8xf32, #tpu.memory_space<any>>
    %185 = tpu.memref_squeeze %184 : memref<1x8x8xf32, #tpu.memory_space<any>> -> memref<8x8xf32, #tpu.memory_space<any>>
    %c0_i32_107 = arith.constant 0 : i32
    %c0_i32_108 = arith.constant 0 : i32
    %186 = tpu.memref_slice %arg16[%c0_i32_103, %c0_i32_107, %c0_i32_108] : memref<2x8x8xf32, #tpu.memory_space<vmem>> -> memref<1x8x8xf32, #tpu.memory_space<vmem>>
    %187 = tpu.memref_squeeze %186 : memref<1x8x8xf32, #tpu.memory_space<vmem>> -> memref<8x8xf32, #tpu.memory_space<vmem>>
    %188 = tpu.memref_slice %arg17[%c0_i32_104] : memref<2x!tpu.dma_semaphore, #tpu.memory_space<semaphore_mem>> -> memref<1x!tpu.dma_semaphore, #tpu.memory_space<semaphore_mem>>
    %189 = tpu.memref_squeeze %188 : memref<1x!tpu.dma_semaphore, #tpu.memory_space<semaphore_mem>> -> memref<!tpu.dma_semaphore, #tpu.memory_space<semaphore_mem>>
    tpu.wait_dma2 semaphore(%189 : memref<!tpu.dma_semaphore, #tpu.memory_space<semaphore_mem>>) src(%185 : memref<8x8xf32, #tpu.memory_space<any>>) dst(%187 : memref<8x8xf32, #tpu.memory_space<vmem>>)
    %c5_i32 = arith.constant 5 : i32
    %c1_i32_109 = arith.constant 1 : i32
    %c1_i32_110 = arith.constant 1 : i32
    %c0_i32_111 = arith.constant 0 : i32
    %c0_i32_112 = arith.constant 0 : i32
    %190 = tpu.memref_slice %arg14[%c5_i32, %c0_i32_111, %c0_i32_112] : memref<8x8x8xf32, #tpu.memory_space<any>> -> memref<1x8x8xf32, #tpu.memory_space<any>>
    %191 = tpu.memref_squeeze %190 : memref<1x8x8xf32, #tpu.memory_space<any>> -> memref<8x8xf32, #tpu.memory_space<any>>
    %c0_i32_113 = arith.constant 0 : i32
    %c0_i32_114 = arith.constant 0 : i32
    %192 = tpu.memref_slice %arg16[%c1_i32_109, %c0_i32_113, %c0_i32_114] : memref<2x8x8xf32, #tpu.memory_space<vmem>> -> memref<1x8x8xf32, #tpu.memory_space<vmem>>
    %193 = tpu.memref_squeeze %192 : memref<1x8x8xf32, #tpu.memory_space<vmem>> -> memref<8x8xf32, #tpu.memory_space<vmem>>
    %194 = tpu.memref_slice %arg17[%c1_i32_110] : memref<2x!tpu.dma_semaphore, #tpu.memory_space<semaphore_mem>> -> memref<1x!tpu.dma_semaphore, #tpu.memory_space<semaphore_mem>>
    %195 = tpu.memref_squeeze %194 : memref<1x!tpu.dma_semaphore, #tpu.memory_space<semaphore_mem>> -> memref<!tpu.dma_semaphore, #tpu.memory_space<semaphore_mem>>
    tpu.enqueue_dma source(%191 : memref<8x8xf32, #tpu.memory_space<any>>) target(%193 : memref<8x8xf32, #tpu.memory_space<vmem>>) target_semaphore(%195 : memref<!tpu.dma_semaphore, #tpu.memory_space<semaphore_mem>>)
    %196 = vector.extract_strided_slice %49 {offsets = [0, 16], sizes = [8, 4], strides = [1, 1]} : vector<8x32xbf16> to vector<8x4xbf16>
    %197 = vector.extract_strided_slice %50 {offsets = [0, 16], sizes = [8, 4], strides = [1, 1]} : vector<8x32xbf16> to vector<8x4xbf16>
    %cst_115 = arith.constant dense<0.000000e+00> : vector<8x8xf32>
    %198 = tpu.matmul %196, %197, %cst_115 {dimension_numbers = #tpu.dot_dimension_numbers<[1], [1], [0], [0], [0, 0, 1, 0], [], []>} : vector<8x4xbf16>, vector<8x4xbf16>, vector<8x8xf32> -> vector<8x8xf32>
    %c0_116 = arith.constant 0 : index
    %c0_117 = arith.constant 0 : index
    %c0_118 = arith.constant 0 : index
    %199 = vector.load %arg16[%c0_116, %c0_117, %c0_118] : memref<2x8x8xf32, #tpu.memory_space<vmem>>, vector<1x8x8xf32>
    %200 = vector.shape_cast %199 : vector<1x8x8xf32> to vector<8x8xf32>
    %201 = arith.addf %198, %200 : vector<8x8xf32>
    %cst_119 = arith.constant dense<0xFF800000> : vector<8xf32>
    %202 = vector.multi_reduction <maximumf>, %201, %cst_119 [1] : vector<8x8xf32> to vector<8xf32>
    %203 = vector.shape_cast %202 : vector<8xf32> to vector<8x1xf32>
    %204 = vector.broadcast %203 : vector<8x1xf32> to vector<8x8xf32>
    %205 = arith.subf %201, %204 : vector<8x8xf32>
    %206 = math.exp %205 : vector<8x8xf32>
    %cst_120 = arith.constant dense<0.000000e+00> : vector<8xf32>
    %207 = vector.multi_reduction <add>, %206, %cst_120 [1] : vector<8x8xf32> to vector<8xf32>
    %208 = vector.shape_cast %207 : vector<8xf32> to vector<8x1xf32>
    %209 = tpu.reciprocal %208 {approx = true} : vector<8x1xf32> -> vector<8x1xf32>
    %210 = vector.broadcast %209 : vector<8x1xf32> to vector<8x8xf32>
    %211 = arith.mulf %206, %210 : vector<8x8xf32>
    %212 = vector.extract_strided_slice %51 {offsets = [0, 16], sizes = [8, 4], strides = [1, 1]} : vector<8x32xbf16> to vector<8x4xbf16>
    %213 = arith.truncf %211 : vector<8x8xf32> to vector<8x8xbf16>
    %cst_121 = arith.constant dense<0.000000e+00> : vector<8x4xf32>
    %214 = tpu.matmul %213, %212, %cst_121 {dimension_numbers = #tpu.dot_dimension_numbers<[1], [0], [0], [1], [0, 0, 1, 1], [], []>} : vector<8x8xbf16>, vector<8x4xbf16>, vector<8x4xf32> -> vector<8x4xf32>
    %215 = vector.extract_strided_slice %46 {offsets = [0, 16], sizes = [8, 4], strides = [1, 1]} : vector<8x32xf32> to vector<8x4xf32>
    %216 = arith.mulf %214, %215 : vector<8x4xf32>
    %c5_i32_122 = arith.constant 5 : i32
    %c1_i32_123 = arith.constant 1 : i32
    %c1_i32_124 = arith.constant 1 : i32
    %c0_i32_125 = arith.constant 0 : i32
    %c0_i32_126 = arith.constant 0 : i32
    %217 = tpu.memref_slice %arg14[%c5_i32_122, %c0_i32_125, %c0_i32_126] : memref<8x8x8xf32, #tpu.memory_space<any>> -> memref<1x8x8xf32, #tpu.memory_space<any>>
    %218 = tpu.memref_squeeze %217 : memref<1x8x8xf32, #tpu.memory_space<any>> -> memref<8x8xf32, #tpu.memory_space<any>>
    %c0_i32_127 = arith.constant 0 : i32
    %c0_i32_128 = arith.constant 0 : i32
    %219 = tpu.memref_slice %arg16[%c1_i32_123, %c0_i32_127, %c0_i32_128] : memref<2x8x8xf32, #tpu.memory_space<vmem>> -> memref<1x8x8xf32, #tpu.memory_space<vmem>>
    %220 = tpu.memref_squeeze %219 : memref<1x8x8xf32, #tpu.memory_space<vmem>> -> memref<8x8xf32, #tpu.memory_space<vmem>>
    %221 = tpu.memref_slice %arg17[%c1_i32_124] : memref<2x!tpu.dma_semaphore, #tpu.memory_space<semaphore_mem>> -> memref<1x!tpu.dma_semaphore, #tpu.memory_space<semaphore_mem>>
    %222 = tpu.memref_squeeze %221 : memref<1x!tpu.dma_semaphore, #tpu.memory_space<semaphore_mem>> -> memref<!tpu.dma_semaphore, #tpu.memory_space<semaphore_mem>>
    tpu.wait_dma2 semaphore(%222 : memref<!tpu.dma_semaphore, #tpu.memory_space<semaphore_mem>>) src(%218 : memref<8x8xf32, #tpu.memory_space<any>>) dst(%220 : memref<8x8xf32, #tpu.memory_space<vmem>>)
    %c6_i32 = arith.constant 6 : i32
    %c0_i32_129 = arith.constant 0 : i32
    %c0_i32_130 = arith.constant 0 : i32
    %c0_i32_131 = arith.constant 0 : i32
    %c0_i32_132 = arith.constant 0 : i32
    %223 = tpu.memref_slice %arg14[%c6_i32, %c0_i32_131, %c0_i32_132] : memref<8x8x8xf32, #tpu.memory_space<any>> -> memref<1x8x8xf32, #tpu.memory_space<any>>
    %224 = tpu.memref_squeeze %223 : memref<1x8x8xf32, #tpu.memory_space<any>> -> memref<8x8xf32, #tpu.memory_space<any>>
    %c0_i32_133 = arith.constant 0 : i32
    %c0_i32_134 = arith.constant 0 : i32
    %225 = tpu.memref_slice %arg16[%c0_i32_129, %c0_i32_133, %c0_i32_134] : memref<2x8x8xf32, #tpu.memory_space<vmem>> -> memref<1x8x8xf32, #tpu.memory_space<vmem>>
    %226 = tpu.memref_squeeze %225 : memref<1x8x8xf32, #tpu.memory_space<vmem>> -> memref<8x8xf32, #tpu.memory_space<vmem>>
    %227 = tpu.memref_slice %arg17[%c0_i32_130] : memref<2x!tpu.dma_semaphore, #tpu.memory_space<semaphore_mem>> -> memref<1x!tpu.dma_semaphore, #tpu.memory_space<semaphore_mem>>
    %228 = tpu.memref_squeeze %227 : memref<1x!tpu.dma_semaphore, #tpu.memory_space<semaphore_mem>> -> memref<!tpu.dma_semaphore, #tpu.memory_space<semaphore_mem>>
    tpu.enqueue_dma source(%224 : memref<8x8xf32, #tpu.memory_space<any>>) target(%226 : memref<8x8xf32, #tpu.memory_space<vmem>>) target_semaphore(%228 : memref<!tpu.dma_semaphore, #tpu.memory_space<semaphore_mem>>)
    %229 = vector.extract_strided_slice %49 {offsets = [0, 20], sizes = [8, 4], strides = [1, 1]} : vector<8x32xbf16> to vector<8x4xbf16>
    %230 = vector.extract_strided_slice %50 {offsets = [0, 20], sizes = [8, 4], strides = [1, 1]} : vector<8x32xbf16> to vector<8x4xbf16>
    %cst_135 = arith.constant dense<0.000000e+00> : vector<8x8xf32>
    %231 = tpu.matmul %229, %230, %cst_135 {dimension_numbers = #tpu.dot_dimension_numbers<[1], [1], [0], [0], [0, 0, 1, 0], [], []>} : vector<8x4xbf16>, vector<8x4xbf16>, vector<8x8xf32> -> vector<8x8xf32>
    %c1_136 = arith.constant 1 : index
    %c0_137 = arith.constant 0 : index
    %c0_138 = arith.constant 0 : index
    %232 = vector.load %arg16[%c1_136, %c0_137, %c0_138] : memref<2x8x8xf32, #tpu.memory_space<vmem>>, vector<1x8x8xf32>
    %233 = vector.shape_cast %232 : vector<1x8x8xf32> to vector<8x8xf32>
    %234 = arith.addf %231, %233 : vector<8x8xf32>
    %cst_139 = arith.constant dense<0xFF800000> : vector<8xf32>
    %235 = vector.multi_reduction <maximumf>, %234, %cst_139 [1] : vector<8x8xf32> to vector<8xf32>
    %236 = vector.shape_cast %235 : vector<8xf32> to vector<8x1xf32>
    %237 = vector.broadcast %236 : vector<8x1xf32> to vector<8x8xf32>
    %238 = arith.subf %234, %237 : vector<8x8xf32>
    %239 = math.exp %238 : vector<8x8xf32>
    %cst_140 = arith.constant dense<0.000000e+00> : vector<8xf32>
    %240 = vector.multi_reduction <add>, %239, %cst_140 [1] : vector<8x8xf32> to vector<8xf32>
    %241 = vector.shape_cast %240 : vector<8xf32> to vector<8x1xf32>
    %242 = tpu.reciprocal %241 {approx = true} : vector<8x1xf32> -> vector<8x1xf32>
    %243 = vector.broadcast %242 : vector<8x1xf32> to vector<8x8xf32>
    %244 = arith.mulf %239, %243 : vector<8x8xf32>
    %245 = vector.extract_strided_slice %51 {offsets = [0, 20], sizes = [8, 4], strides = [1, 1]} : vector<8x32xbf16> to vector<8x4xbf16>
    %246 = arith.truncf %244 : vector<8x8xf32> to vector<8x8xbf16>
    %cst_141 = arith.constant dense<0.000000e+00> : vector<8x4xf32>
    %247 = tpu.matmul %246, %245, %cst_141 {dimension_numbers = #tpu.dot_dimension_numbers<[1], [0], [0], [1], [0, 0, 1, 1], [], []>} : vector<8x8xbf16>, vector<8x4xbf16>, vector<8x4xf32> -> vector<8x4xf32>
    %248 = vector.extract_strided_slice %46 {offsets = [0, 20], sizes = [8, 4], strides = [1, 1]} : vector<8x32xf32> to vector<8x4xf32>
    %249 = arith.mulf %247, %248 : vector<8x4xf32>
    %c6_i32_142 = arith.constant 6 : i32
    %c0_i32_143 = arith.constant 0 : i32
    %c0_i32_144 = arith.constant 0 : i32
    %c0_i32_145 = arith.constant 0 : i32
    %c0_i32_146 = arith.constant 0 : i32
    %250 = tpu.memref_slice %arg14[%c6_i32_142, %c0_i32_145, %c0_i32_146] : memref<8x8x8xf32, #tpu.memory_space<any>> -> memref<1x8x8xf32, #tpu.memory_space<any>>
    %251 = tpu.memref_squeeze %250 : memref<1x8x8xf32, #tpu.memory_space<any>> -> memref<8x8xf32, #tpu.memory_space<any>>
    %c0_i32_147 = arith.constant 0 : i32
    %c0_i32_148 = arith.constant 0 : i32
    %252 = tpu.memref_slice %arg16[%c0_i32_143, %c0_i32_147, %c0_i32_148] : memref<2x8x8xf32, #tpu.memory_space<vmem>> -> memref<1x8x8xf32, #tpu.memory_space<vmem>>
    %253 = tpu.memref_squeeze %252 : memref<1x8x8xf32, #tpu.memory_space<vmem>> -> memref<8x8xf32, #tpu.memory_space<vmem>>
    %254 = tpu.memref_slice %arg17[%c0_i32_144] : memref<2x!tpu.dma_semaphore, #tpu.memory_space<semaphore_mem>> -> memref<1x!tpu.dma_semaphore, #tpu.memory_space<semaphore_mem>>
    %255 = tpu.memref_squeeze %254 : memref<1x!tpu.dma_semaphore, #tpu.memory_space<semaphore_mem>> -> memref<!tpu.dma_semaphore, #tpu.memory_space<semaphore_mem>>
    tpu.wait_dma2 semaphore(%255 : memref<!tpu.dma_semaphore, #tpu.memory_space<semaphore_mem>>) src(%251 : memref<8x8xf32, #tpu.memory_space<any>>) dst(%253 : memref<8x8xf32, #tpu.memory_space<vmem>>)
    %c7_i32 = arith.constant 7 : i32
    %c1_i32_149 = arith.constant 1 : i32
    %c1_i32_150 = arith.constant 1 : i32
    %c0_i32_151 = arith.constant 0 : i32
    %c0_i32_152 = arith.constant 0 : i32
    %256 = tpu.memref_slice %arg14[%c7_i32, %c0_i32_151, %c0_i32_152] : memref<8x8x8xf32, #tpu.memory_space<any>> -> memref<1x8x8xf32, #tpu.memory_space<any>>
    %257 = tpu.memref_squeeze %256 : memref<1x8x8xf32, #tpu.memory_space<any>> -> memref<8x8xf32, #tpu.memory_space<any>>
    %c0_i32_153 = arith.constant 0 : i32
    %c0_i32_154 = arith.constant 0 : i32
    %258 = tpu.memref_slice %arg16[%c1_i32_149, %c0_i32_153, %c0_i32_154] : memref<2x8x8xf32, #tpu.memory_space<vmem>> -> memref<1x8x8xf32, #tpu.memory_space<vmem>>
    %259 = tpu.memref_squeeze %258 : memref<1x8x8xf32, #tpu.memory_space<vmem>> -> memref<8x8xf32, #tpu.memory_space<vmem>>
    %260 = tpu.memref_slice %arg17[%c1_i32_150] : memref<2x!tpu.dma_semaphore, #tpu.memory_space<semaphore_mem>> -> memref<1x!tpu.dma_semaphore, #tpu.memory_space<semaphore_mem>>
    %261 = tpu.memref_squeeze %260 : memref<1x!tpu.dma_semaphore, #tpu.memory_space<semaphore_mem>> -> memref<!tpu.dma_semaphore, #tpu.memory_space<semaphore_mem>>
    tpu.enqueue_dma source(%257 : memref<8x8xf32, #tpu.memory_space<any>>) target(%259 : memref<8x8xf32, #tpu.memory_space<vmem>>) target_semaphore(%261 : memref<!tpu.dma_semaphore, #tpu.memory_space<semaphore_mem>>)
    %262 = vector.extract_strided_slice %49 {offsets = [0, 24], sizes = [8, 4], strides = [1, 1]} : vector<8x32xbf16> to vector<8x4xbf16>
    %263 = vector.extract_strided_slice %50 {offsets = [0, 24], sizes = [8, 4], strides = [1, 1]} : vector<8x32xbf16> to vector<8x4xbf16>
    %cst_155 = arith.constant dense<0.000000e+00> : vector<8x8xf32>
    %264 = tpu.matmul %262, %263, %cst_155 {dimension_numbers = #tpu.dot_dimension_numbers<[1], [1], [0], [0], [0, 0, 1, 0], [], []>} : vector<8x4xbf16>, vector<8x4xbf16>, vector<8x8xf32> -> vector<8x8xf32>
    %c0_156 = arith.constant 0 : index
    %c0_157 = arith.constant 0 : index
    %c0_158 = arith.constant 0 : index
    %265 = vector.load %arg16[%c0_156, %c0_157, %c0_158] : memref<2x8x8xf32, #tpu.memory_space<vmem>>, vector<1x8x8xf32>
    %266 = vector.shape_cast %265 : vector<1x8x8xf32> to vector<8x8xf32>
    %267 = arith.addf %264, %266 : vector<8x8xf32>
    %cst_159 = arith.constant dense<0xFF800000> : vector<8xf32>
    %268 = vector.multi_reduction <maximumf>, %267, %cst_159 [1] : vector<8x8xf32> to vector<8xf32>
    %269 = vector.shape_cast %268 : vector<8xf32> to vector<8x1xf32>
    %270 = vector.broadcast %269 : vector<8x1xf32> to vector<8x8xf32>
    %271 = arith.subf %267, %270 : vector<8x8xf32>
    %272 = math.exp %271 : vector<8x8xf32>
    %cst_160 = arith.constant dense<0.000000e+00> : vector<8xf32>
    %273 = vector.multi_reduction <add>, %272, %cst_160 [1] : vector<8x8xf32> to vector<8xf32>
    %274 = vector.shape_cast %273 : vector<8xf32> to vector<8x1xf32>
    %275 = tpu.reciprocal %274 {approx = true} : vector<8x1xf32> -> vector<8x1xf32>
    %276 = vector.broadcast %275 : vector<8x1xf32> to vector<8x8xf32>
    %277 = arith.mulf %272, %276 : vector<8x8xf32>
    %278 = vector.extract_strided_slice %51 {offsets = [0, 24], sizes = [8, 4], strides = [1, 1]} : vector<8x32xbf16> to vector<8x4xbf16>
    %279 = arith.truncf %277 : vector<8x8xf32> to vector<8x8xbf16>
    %cst_161 = arith.constant dense<0.000000e+00> : vector<8x4xf32>
    %280 = tpu.matmul %279, %278, %cst_161 {dimension_numbers = #tpu.dot_dimension_numbers<[1], [0], [0], [1], [0, 0, 1, 1], [], []>} : vector<8x8xbf16>, vector<8x4xbf16>, vector<8x4xf32> -> vector<8x4xf32>
    %281 = vector.extract_strided_slice %46 {offsets = [0, 24], sizes = [8, 4], strides = [1, 1]} : vector<8x32xf32> to vector<8x4xf32>
    %282 = arith.mulf %280, %281 : vector<8x4xf32>
    %c7_i32_162 = arith.constant 7 : i32
    %c1_i32_163 = arith.constant 1 : i32
    %c1_i32_164 = arith.constant 1 : i32
    %c0_i32_165 = arith.constant 0 : i32
    %c0_i32_166 = arith.constant 0 : i32
    %283 = tpu.memref_slice %arg14[%c7_i32_162, %c0_i32_165, %c0_i32_166] : memref<8x8x8xf32, #tpu.memory_space<any>> -> memref<1x8x8xf32, #tpu.memory_space<any>>
    %284 = tpu.memref_squeeze %283 : memref<1x8x8xf32, #tpu.memory_space<any>> -> memref<8x8xf32, #tpu.memory_space<any>>
    %c0_i32_167 = arith.constant 0 : i32
    %c0_i32_168 = arith.constant 0 : i32
    %285 = tpu.memref_slice %arg16[%c1_i32_163, %c0_i32_167, %c0_i32_168] : memref<2x8x8xf32, #tpu.memory_space<vmem>> -> memref<1x8x8xf32, #tpu.memory_space<vmem>>
    %286 = tpu.memref_squeeze %285 : memref<1x8x8xf32, #tpu.memory_space<vmem>> -> memref<8x8xf32, #tpu.memory_space<vmem>>
    %287 = tpu.memref_slice %arg17[%c1_i32_164] : memref<2x!tpu.dma_semaphore, #tpu.memory_space<semaphore_mem>> -> memref<1x!tpu.dma_semaphore, #tpu.memory_space<semaphore_mem>>
    %288 = tpu.memref_squeeze %287 : memref<1x!tpu.dma_semaphore, #tpu.memory_space<semaphore_mem>> -> memref<!tpu.dma_semaphore, #tpu.memory_space<semaphore_mem>>
    tpu.wait_dma2 semaphore(%288 : memref<!tpu.dma_semaphore, #tpu.memory_space<semaphore_mem>>) src(%284 : memref<8x8xf32, #tpu.memory_space<any>>) dst(%286 : memref<8x8xf32, #tpu.memory_space<vmem>>)
    %289 = vector.extract_strided_slice %49 {offsets = [0, 28], sizes = [8, 4], strides = [1, 1]} : vector<8x32xbf16> to vector<8x4xbf16>
    %290 = vector.extract_strided_slice %50 {offsets = [0, 28], sizes = [8, 4], strides = [1, 1]} : vector<8x32xbf16> to vector<8x4xbf16>
    %cst_169 = arith.constant dense<0.000000e+00> : vector<8x8xf32>
    %291 = tpu.matmul %289, %290, %cst_169 {dimension_numbers = #tpu.dot_dimension_numbers<[1], [1], [0], [0], [0, 0, 1, 0], [], []>} : vector<8x4xbf16>, vector<8x4xbf16>, vector<8x8xf32> -> vector<8x8xf32>
    %c1_170 = arith.constant 1 : index
    %c0_171 = arith.constant 0 : index
    %c0_172 = arith.constant 0 : index
    %292 = vector.load %arg16[%c1_170, %c0_171, %c0_172] : memref<2x8x8xf32, #tpu.memory_space<vmem>>, vector<1x8x8xf32>
    %293 = vector.shape_cast %292 : vector<1x8x8xf32> to vector<8x8xf32>
    %294 = arith.addf %291, %293 : vector<8x8xf32>
    %cst_173 = arith.constant dense<0xFF800000> : vector<8xf32>
    %295 = vector.multi_reduction <maximumf>, %294, %cst_173 [1] : vector<8x8xf32> to vector<8xf32>
    %296 = vector.shape_cast %295 : vector<8xf32> to vector<8x1xf32>
    %297 = vector.broadcast %296 : vector<8x1xf32> to vector<8x8xf32>
    %298 = arith.subf %294, %297 : vector<8x8xf32>
    %299 = math.exp %298 : vector<8x8xf32>
    %cst_174 = arith.constant dense<0.000000e+00> : vector<8xf32>
    %300 = vector.multi_reduction <add>, %299, %cst_174 [1] : vector<8x8xf32> to vector<8xf32>
    %301 = vector.shape_cast %300 : vector<8xf32> to vector<8x1xf32>
    %302 = tpu.reciprocal %301 {approx = true} : vector<8x1xf32> -> vector<8x1xf32>
    %303 = vector.broadcast %302 : vector<8x1xf32> to vector<8x8xf32>
    %304 = arith.mulf %299, %303 : vector<8x8xf32>
    %305 = vector.extract_strided_slice %51 {offsets = [0, 28], sizes = [8, 4], strides = [1, 1]} : vector<8x32xbf16> to vector<8x4xbf16>
    %306 = arith.truncf %304 : vector<8x8xf32> to vector<8x8xbf16>
    %cst_175 = arith.constant dense<0.000000e+00> : vector<8x4xf32>
    %307 = tpu.matmul %306, %305, %cst_175 {dimension_numbers = #tpu.dot_dimension_numbers<[1], [0], [0], [1], [0, 0, 1, 1], [], []>} : vector<8x8xbf16>, vector<8x4xbf16>, vector<8x4xf32> -> vector<8x4xf32>
    %308 = vector.extract_strided_slice %46 {offsets = [0, 28], sizes = [8, 4], strides = [1, 1]} : vector<8x32xf32> to vector<8x4xf32>
    %309 = arith.mulf %307, %308 : vector<8x4xf32>
    %310 = tpu.concatenate %84, %117, %150, %183, %216, %249, %282, %309 in 1 : vector<8x4xf32>, vector<8x4xf32>, vector<8x4xf32>, vector<8x4xf32>, vector<8x4xf32>, vector<8x4xf32>, vector<8x4xf32>, vector<8x4xf32> -> vector<8x32xf32>
    %c0_176 = arith.constant 0 : index
    %c0_177 = arith.constant 0 : index
    %311 = vector.load %arg12[%c0_176, %c0_177] : memref<32x32xbf16, #tpu.memory_space<vmem>>, vector<32x32xbf16>
    %312 = arith.truncf %310 : vector<8x32xf32> to vector<8x32xbf16>
    %cst_178 = arith.constant dense<0.000000e+00> : vector<8x32xf32>
    %313 = tpu.matmul %312, %311, %cst_178 {dimension_numbers = #tpu.dot_dimension_numbers<[1], [0], [0], [1], [0, 0, 1, 1], [], []>} : vector<8x32xbf16>, vector<32x32xbf16>, vector<8x32xf32> -> vector<8x32xf32>
    %c0_179 = arith.constant 0 : index
    %c0_180 = arith.constant 0 : index
    %314 = vector.load %arg13[%c0_179, %c0_180] : memref<1x32xf32, #tpu.memory_space<vmem>>, vector<1x32xf32>
    %315 = vector.broadcast %314 : vector<1x32xf32> to vector<8x32xf32>
    %316 = arith.addf %313, %315 : vector<8x32xf32>
    %317 = tpu.iota {dimensions = array<i32: 0>} : vector<8x32xi32>
    %c1_i32_181 = arith.constant 1 : i32
    %318 = vector.broadcast %c1_i32_181 : i32 to vector<8x32xi32>
    %319 = arith.cmpi sge, %317, %318 : vector<8x32xi32>
    %c1_i32_182 = arith.constant 1 : i32
    %320 = tpu.dynamic_rotate %1 by %c1_i32_182 dim 0 : vector<8x32xf32>, i32 -> vector<8x32xf32>
    %cst_183 = arith.constant 0.000000e+00 : f32
    %321 = vector.broadcast %cst_183 : f32 to vector<8x32xf32>
    %322 = arith.select %319, %320, %321 : vector<8x32xi1>, vector<8x32xf32>
    %c7_i32_184 = arith.constant 7 : i32
    %323 = vector.broadcast %c7_i32_184 : i32 to vector<8x32xi32>
    %324 = arith.cmpi slt, %317, %323 : vector<8x32xi32>
    %c7_i32_185 = arith.constant 7 : i32
    %325 = tpu.dynamic_rotate %1 by %c7_i32_185 dim 0 : vector<8x32xf32>, i32 -> vector<8x32xf32>
    %cst_186 = arith.constant 0.000000e+00 : f32
    %326 = vector.broadcast %cst_186 : f32 to vector<8x32xf32>
    %327 = arith.select %324, %325, %326 : vector<8x32xi1>, vector<8x32xf32>
    %c0_187 = arith.constant 0 : index
    %c0_188 = arith.constant 0 : index
    %c0_189 = arith.constant 0 : index
    %328 = vector.load %arg2[%c0_187, %c0_188, %c0_189] : memref<3x4x32xf32, #tpu.memory_space<vmem>>, vector<3x4x32xf32>
    %c0_190 = arith.constant 0 : index
    %c0_191 = arith.constant 0 : index
    %329 = vector.load %arg3[%c0_190, %c0_191] : memref<4x32xf32, #tpu.memory_space<vmem>>, vector<4x32xf32>
    %c0_192 = arith.constant 0 : index
    %c0_193 = arith.constant 0 : index
    %330 = vector.load %arg4[%c0_192, %c0_193] : memref<4x32xf32, #tpu.memory_space<vmem>>, vector<4x32xf32>
    %c0_194 = arith.constant 0 : index
    %c0_195 = arith.constant 0 : index
    %331 = vector.load %arg5[%c0_194, %c0_195] : memref<4x32xf32, #tpu.memory_space<vmem>>, vector<4x32xf32>
    %cst_196 = arith.constant 0.000000e+00 : f32
    %332 = vector.broadcast %cst_196 : f32 to vector<8x1xf32>
    %cst_197 = arith.constant 0.000000e+00 : f32
    %333 = vector.broadcast %cst_197 : f32 to vector<8x1xf32>
    %334 = vector.extract_strided_slice %329 {offsets = [0, 0], sizes = [1, 32], strides = [1, 1]} : vector<4x32xf32> to vector<1x32xf32>
    %335 = vector.extract_strided_slice %328 {offsets = [0, 0, 0], sizes = [1, 1, 32], strides = [1, 1, 1]} : vector<3x4x32xf32> to vector<1x1x32xf32>
    %336 = vector.shape_cast %335 : vector<1x1x32xf32> to vector<1x32xf32>
    %337 = vector.broadcast %336 : vector<1x32xf32> to vector<8x32xf32>
    %338 = arith.mulf %322, %337 : vector<8x32xf32>
    %339 = vector.broadcast %334 : vector<1x32xf32> to vector<8x32xf32>
    %340 = arith.addf %339, %338 : vector<8x32xf32>
    %341 = vector.extract_strided_slice %328 {offsets = [1, 0, 0], sizes = [1, 1, 32], strides = [1, 1, 1]} : vector<3x4x32xf32> to vector<1x1x32xf32>
    %342 = vector.shape_cast %341 : vector<1x1x32xf32> to vector<1x32xf32>
    %343 = vector.broadcast %342 : vector<1x32xf32> to vector<8x32xf32>
    %344 = arith.mulf %1, %343 : vector<8x32xf32>
    %345 = arith.addf %340, %344 : vector<8x32xf32>
    %346 = vector.extract_strided_slice %328 {offsets = [2, 0, 0], sizes = [1, 1, 32], strides = [1, 1, 1]} : vector<3x4x32xf32> to vector<1x1x32xf32>
    %347 = vector.shape_cast %346 : vector<1x1x32xf32> to vector<1x32xf32>
    %348 = vector.broadcast %347 : vector<1x32xf32> to vector<8x32xf32>
    %349 = arith.mulf %327, %348 : vector<8x32xf32>
    %350 = arith.addf %345, %349 : vector<8x32xf32>
    %cst_198 = arith.constant dense<0.000000e+00> : vector<8xf32>
    %351 = vector.multi_reduction <add>, %350, %cst_198 [1] : vector<8x32xf32> to vector<8xf32>
    %352 = vector.shape_cast %351 : vector<8xf32> to vector<8x1xf32>
    %353 = arith.addf %332, %352 : vector<8x1xf32>
    %354 = arith.mulf %350, %350 : vector<8x32xf32>
    %cst_199 = arith.constant dense<0.000000e+00> : vector<8xf32>
    %355 = vector.multi_reduction <add>, %354, %cst_199 [1] : vector<8x32xf32> to vector<8xf32>
    %356 = vector.shape_cast %355 : vector<8xf32> to vector<8x1xf32>
    %357 = arith.addf %333, %356 : vector<8x1xf32>
    %358 = vector.extract_strided_slice %329 {offsets = [1, 0], sizes = [1, 32], strides = [1, 1]} : vector<4x32xf32> to vector<1x32xf32>
    %359 = vector.extract_strided_slice %328 {offsets = [0, 1, 0], sizes = [1, 1, 32], strides = [1, 1, 1]} : vector<3x4x32xf32> to vector<1x1x32xf32>
    %360 = vector.shape_cast %359 : vector<1x1x32xf32> to vector<1x32xf32>
    %361 = vector.broadcast %360 : vector<1x32xf32> to vector<8x32xf32>
    %362 = arith.mulf %322, %361 : vector<8x32xf32>
    %363 = vector.broadcast %358 : vector<1x32xf32> to vector<8x32xf32>
    %364 = arith.addf %363, %362 : vector<8x32xf32>
    %365 = vector.extract_strided_slice %328 {offsets = [1, 1, 0], sizes = [1, 1, 32], strides = [1, 1, 1]} : vector<3x4x32xf32> to vector<1x1x32xf32>
    %366 = vector.shape_cast %365 : vector<1x1x32xf32> to vector<1x32xf32>
    %367 = vector.broadcast %366 : vector<1x32xf32> to vector<8x32xf32>
    %368 = arith.mulf %1, %367 : vector<8x32xf32>
    %369 = arith.addf %364, %368 : vector<8x32xf32>
    %370 = vector.extract_strided_slice %328 {offsets = [2, 1, 0], sizes = [1, 1, 32], strides = [1, 1, 1]} : vector<3x4x32xf32> to vector<1x1x32xf32>
    %371 = vector.shape_cast %370 : vector<1x1x32xf32> to vector<1x32xf32>
    %372 = vector.broadcast %371 : vector<1x32xf32> to vector<8x32xf32>
    %373 = arith.mulf %327, %372 : vector<8x32xf32>
    %374 = arith.addf %369, %373 : vector<8x32xf32>
    %cst_200 = arith.constant dense<0.000000e+00> : vector<8xf32>
    %375 = vector.multi_reduction <add>, %374, %cst_200 [1] : vector<8x32xf32> to vector<8xf32>
    %376 = vector.shape_cast %375 : vector<8xf32> to vector<8x1xf32>
    %377 = arith.addf %353, %376 : vector<8x1xf32>
    %378 = arith.mulf %374, %374 : vector<8x32xf32>
    %cst_201 = arith.constant dense<0.000000e+00> : vector<8xf32>
    %379 = vector.multi_reduction <add>, %378, %cst_201 [1] : vector<8x32xf32> to vector<8xf32>
    %380 = vector.shape_cast %379 : vector<8xf32> to vector<8x1xf32>
    %381 = arith.addf %357, %380 : vector<8x1xf32>
    %382 = vector.extract_strided_slice %329 {offsets = [2, 0], sizes = [1, 32], strides = [1, 1]} : vector<4x32xf32> to vector<1x32xf32>
    %383 = vector.extract_strided_slice %328 {offsets = [0, 2, 0], sizes = [1, 1, 32], strides = [1, 1, 1]} : vector<3x4x32xf32> to vector<1x1x32xf32>
    %384 = vector.shape_cast %383 : vector<1x1x32xf32> to vector<1x32xf32>
    %385 = vector.broadcast %384 : vector<1x32xf32> to vector<8x32xf32>
    %386 = arith.mulf %322, %385 : vector<8x32xf32>
    %387 = vector.broadcast %382 : vector<1x32xf32> to vector<8x32xf32>
    %388 = arith.addf %387, %386 : vector<8x32xf32>
    %389 = vector.extract_strided_slice %328 {offsets = [1, 2, 0], sizes = [1, 1, 32], strides = [1, 1, 1]} : vector<3x4x32xf32> to vector<1x1x32xf32>
    %390 = vector.shape_cast %389 : vector<1x1x32xf32> to vector<1x32xf32>
    %391 = vector.broadcast %390 : vector<1x32xf32> to vector<8x32xf32>
    %392 = arith.mulf %1, %391 : vector<8x32xf32>
    %393 = arith.addf %388, %392 : vector<8x32xf32>
    %394 = vector.extract_strided_slice %328 {offsets = [2, 2, 0], sizes = [1, 1, 32], strides = [1, 1, 1]} : vector<3x4x32xf32> to vector<1x1x32xf32>
    %395 = vector.shape_cast %394 : vector<1x1x32xf32> to vector<1x32xf32>
    %396 = vector.broadcast %395 : vector<1x32xf32> to vector<8x32xf32>
    %397 = arith.mulf %327, %396 : vector<8x32xf32>
    %398 = arith.addf %393, %397 : vector<8x32xf32>
    %cst_202 = arith.constant dense<0.000000e+00> : vector<8xf32>
    %399 = vector.multi_reduction <add>, %398, %cst_202 [1] : vector<8x32xf32> to vector<8xf32>
    %400 = vector.shape_cast %399 : vector<8xf32> to vector<8x1xf32>
    %401 = arith.addf %377, %400 : vector<8x1xf32>
    %402 = arith.mulf %398, %398 : vector<8x32xf32>
    %cst_203 = arith.constant dense<0.000000e+00> : vector<8xf32>
    %403 = vector.multi_reduction <add>, %402, %cst_203 [1] : vector<8x32xf32> to vector<8xf32>
    %404 = vector.shape_cast %403 : vector<8xf32> to vector<8x1xf32>
    %405 = arith.addf %381, %404 : vector<8x1xf32>
    %406 = vector.extract_strided_slice %329 {offsets = [3, 0], sizes = [1, 32], strides = [1, 1]} : vector<4x32xf32> to vector<1x32xf32>
    %407 = vector.extract_strided_slice %328 {offsets = [0, 3, 0], sizes = [1, 1, 32], strides = [1, 1, 1]} : vector<3x4x32xf32> to vector<1x1x32xf32>
    %408 = vector.shape_cast %407 : vector<1x1x32xf32> to vector<1x32xf32>
    %409 = vector.broadcast %408 : vector<1x32xf32> to vector<8x32xf32>
    %410 = arith.mulf %322, %409 : vector<8x32xf32>
    %411 = vector.broadcast %406 : vector<1x32xf32> to vector<8x32xf32>
    %412 = arith.addf %411, %410 : vector<8x32xf32>
    %413 = vector.extract_strided_slice %328 {offsets = [1, 3, 0], sizes = [1, 1, 32], strides = [1, 1, 1]} : vector<3x4x32xf32> to vector<1x1x32xf32>
    %414 = vector.shape_cast %413 : vector<1x1x32xf32> to vector<1x32xf32>
    %415 = vector.broadcast %414 : vector<1x32xf32> to vector<8x32xf32>
    %416 = arith.mulf %1, %415 : vector<8x32xf32>
    %417 = arith.addf %412, %416 : vector<8x32xf32>
    %418 = vector.extract_strided_slice %328 {offsets = [2, 3, 0], sizes = [1, 1, 32], strides = [1, 1, 1]} : vector<3x4x32xf32> to vector<1x1x32xf32>
    %419 = vector.shape_cast %418 : vector<1x1x32xf32> to vector<1x32xf32>
    %420 = vector.broadcast %419 : vector<1x32xf32> to vector<8x32xf32>
    %421 = arith.mulf %327, %420 : vector<8x32xf32>
    %422 = arith.addf %417, %421 : vector<8x32xf32>
    %cst_204 = arith.constant dense<0.000000e+00> : vector<8xf32>
    %423 = vector.multi_reduction <add>, %422, %cst_204 [1] : vector<8x32xf32> to vector<8xf32>
    %424 = vector.shape_cast %423 : vector<8xf32> to vector<8x1xf32>
    %425 = arith.addf %401, %424 : vector<8x1xf32>
    %426 = arith.mulf %422, %422 : vector<8x32xf32>
    %cst_205 = arith.constant dense<0.000000e+00> : vector<8xf32>
    %427 = vector.multi_reduction <add>, %426, %cst_205 [1] : vector<8x32xf32> to vector<8xf32>
    %428 = vector.shape_cast %427 : vector<8xf32> to vector<8x1xf32>
    %429 = arith.addf %405, %428 : vector<8x1xf32>
    %cst_206 = arith.constant 1.280000e+02 : f32
    %430 = vector.broadcast %cst_206 : f32 to vector<8x1xf32>
    %431 = arith.divf %425, %430 : vector<8x1xf32>
    %cst_207 = arith.constant 1.280000e+02 : f32
    %432 = vector.broadcast %cst_207 : f32 to vector<8x1xf32>
    %433 = arith.divf %429, %432 : vector<8x1xf32>
    %434 = arith.mulf %431, %431 : vector<8x1xf32>
    %435 = arith.subf %433, %434 : vector<8x1xf32>
    %cst_208 = arith.constant 0.000000e+00 : f32
    %436 = vector.broadcast %cst_208 : f32 to vector<8x1xf32>
    %437 = arith.maximumf %435, %436 : vector<8x1xf32>
    %cst_209 = arith.constant 9.99999974E-6 : f32
    %438 = vector.broadcast %cst_209 : f32 to vector<8x1xf32>
    %439 = arith.addf %437, %438 : vector<8x1xf32>
    %440 = math.rsqrt %439 : vector<8x1xf32>
    %cst_210 = arith.constant 0.000000e+00 : f32
    %441 = vector.broadcast %cst_210 : f32 to vector<8x32xf32>
    %442 = vector.extract_strided_slice %329 {offsets = [0, 0], sizes = [1, 32], strides = [1, 1]} : vector<4x32xf32> to vector<1x32xf32>
    %443 = vector.extract_strided_slice %328 {offsets = [0, 0, 0], sizes = [1, 1, 32], strides = [1, 1, 1]} : vector<3x4x32xf32> to vector<1x1x32xf32>
    %444 = vector.shape_cast %443 : vector<1x1x32xf32> to vector<1x32xf32>
    %445 = vector.broadcast %444 : vector<1x32xf32> to vector<8x32xf32>
    %446 = arith.mulf %322, %445 : vector<8x32xf32>
    %447 = vector.broadcast %442 : vector<1x32xf32> to vector<8x32xf32>
    %448 = arith.addf %447, %446 : vector<8x32xf32>
    %449 = vector.extract_strided_slice %328 {offsets = [1, 0, 0], sizes = [1, 1, 32], strides = [1, 1, 1]} : vector<3x4x32xf32> to vector<1x1x32xf32>
    %450 = vector.shape_cast %449 : vector<1x1x32xf32> to vector<1x32xf32>
    %451 = vector.broadcast %450 : vector<1x32xf32> to vector<8x32xf32>
    %452 = arith.mulf %1, %451 : vector<8x32xf32>
    %453 = arith.addf %448, %452 : vector<8x32xf32>
    %454 = vector.extract_strided_slice %328 {offsets = [2, 0, 0], sizes = [1, 1, 32], strides = [1, 1, 1]} : vector<3x4x32xf32> to vector<1x1x32xf32>
    %455 = vector.shape_cast %454 : vector<1x1x32xf32> to vector<1x32xf32>
    %456 = vector.broadcast %455 : vector<1x32xf32> to vector<8x32xf32>
    %457 = arith.mulf %327, %456 : vector<8x32xf32>
    %458 = arith.addf %453, %457 : vector<8x32xf32>
    %459 = vector.broadcast %431 : vector<8x1xf32> to vector<8x32xf32>
    %460 = arith.subf %458, %459 : vector<8x32xf32>
    %461 = vector.broadcast %440 : vector<8x1xf32> to vector<8x32xf32>
    %462 = arith.mulf %460, %461 : vector<8x32xf32>
    %463 = vector.extract_strided_slice %330 {offsets = [0, 0], sizes = [1, 32], strides = [1, 1]} : vector<4x32xf32> to vector<1x32xf32>
    %464 = vector.broadcast %463 : vector<1x32xf32> to vector<8x32xf32>
    %465 = arith.mulf %462, %464 : vector<8x32xf32>
    %466 = vector.extract_strided_slice %331 {offsets = [0, 0], sizes = [1, 32], strides = [1, 1]} : vector<4x32xf32> to vector<1x32xf32>
    %467 = vector.broadcast %466 : vector<1x32xf32> to vector<8x32xf32>
    %468 = arith.addf %465, %467 : vector<8x32xf32>
    %cst_211 = arith.constant 5.000000e-01 : f32
    %469 = vector.broadcast %cst_211 : f32 to vector<8x32xf32>
    %470 = arith.mulf %469, %468 : vector<8x32xf32>
    %cst_212 = arith.constant 0.707106769 : f32
    %471 = vector.broadcast %cst_212 : f32 to vector<8x32xf32>
    %472 = arith.mulf %468, %471 : vector<8x32xf32>
    %cst_213 = arith.constant 0.000000e+00 : f32
    %473 = vector.broadcast %cst_213 : f32 to vector<8x32xf32>
    %474 = arith.cmpf oge, %472, %473 : vector<8x32xf32>
    %cst_214 = arith.constant 1.000000e+00 : f32
    %cst_215 = arith.constant -1.000000e+00 : f32
    %475 = vector.broadcast %cst_214 : f32 to vector<8x32xf32>
    %476 = vector.broadcast %cst_215 : f32 to vector<8x32xf32>
    %477 = arith.select %474, %475, %476 : vector<8x32xi1>, vector<8x32xf32>
    %478 = math.absf %472 : vector<8x32xf32>
    %cst_216 = arith.constant 0.327591091 : f32
    %479 = vector.broadcast %cst_216 : f32 to vector<8x32xf32>
    %480 = arith.mulf %479, %478 : vector<8x32xf32>
    %cst_217 = arith.constant 1.000000e+00 : f32
    %481 = vector.broadcast %cst_217 : f32 to vector<8x32xf32>
    %482 = arith.addf %481, %480 : vector<8x32xf32>
    %cst_218 = arith.constant 1.000000e+00 : f32
    %483 = vector.broadcast %cst_218 : f32 to vector<8x32xf32>
    %484 = arith.divf %483, %482 : vector<8x32xf32>
    %cst_219 = arith.constant 1.06140542 : f32
    %485 = vector.broadcast %cst_219 : f32 to vector<8x32xf32>
    %486 = arith.mulf %485, %484 : vector<8x32xf32>
    %cst_220 = arith.constant -1.45315206 : f32
    %487 = vector.broadcast %cst_220 : f32 to vector<8x32xf32>
    %488 = arith.addf %486, %487 : vector<8x32xf32>
    %489 = arith.mulf %488, %484 : vector<8x32xf32>
    %cst_221 = arith.constant 1.42141378 : f32
    %490 = vector.broadcast %cst_221 : f32 to vector<8x32xf32>
    %491 = arith.addf %489, %490 : vector<8x32xf32>
    %492 = arith.mulf %491, %484 : vector<8x32xf32>
    %cst_222 = arith.constant -0.284496725 : f32
    %493 = vector.broadcast %cst_222 : f32 to vector<8x32xf32>
    %494 = arith.addf %492, %493 : vector<8x32xf32>
    %495 = arith.mulf %494, %484 : vector<8x32xf32>
    %cst_223 = arith.constant 0.254829586 : f32
    %496 = vector.broadcast %cst_223 : f32 to vector<8x32xf32>
    %497 = arith.addf %495, %496 : vector<8x32xf32>
    %498 = arith.mulf %497, %484 : vector<8x32xf32>
    %cst_224 = arith.constant 0.000000e+00 : f32
    %499 = vector.broadcast %cst_224 : f32 to vector<8x32xf32>
    %500 = arith.subf %499, %478 : vector<8x32xf32>
    %501 = arith.mulf %500, %478 : vector<8x32xf32>
    %502 = math.exp %501 : vector<8x32xf32>
    %503 = arith.mulf %498, %502 : vector<8x32xf32>
    %cst_225 = arith.constant 1.000000e+00 : f32
    %504 = vector.broadcast %cst_225 : f32 to vector<8x32xf32>
    %505 = arith.subf %504, %503 : vector<8x32xf32>
    %506 = arith.mulf %477, %505 : vector<8x32xf32>
    %cst_226 = arith.constant 1.000000e+00 : f32
    %507 = vector.broadcast %cst_226 : f32 to vector<8x32xf32>
    %508 = arith.addf %507, %506 : vector<8x32xf32>
    %509 = arith.mulf %470, %508 : vector<8x32xf32>
    %c0_227 = arith.constant 0 : index
    %c0_228 = arith.constant 0 : index
    %c0_229 = arith.constant 0 : index
    %510 = vector.load %arg6[%c0_227, %c0_228, %c0_229] : memref<4x32x32xbf16, #tpu.memory_space<vmem>>, vector<1x32x32xbf16>
    %511 = vector.shape_cast %510 : vector<1x32x32xbf16> to vector<32x32xbf16>
    %512 = arith.truncf %509 : vector<8x32xf32> to vector<8x32xbf16>
    %cst_230 = arith.constant dense<0.000000e+00> : vector<8x32xf32>
    %513 = tpu.matmul %512, %511, %cst_230 {dimension_numbers = #tpu.dot_dimension_numbers<[1], [0], [0], [1], [0, 0, 1, 1], [], []>} : vector<8x32xbf16>, vector<32x32xbf16>, vector<8x32xf32> -> vector<8x32xf32>
    %514 = arith.addf %441, %513 : vector<8x32xf32>
    %515 = vector.extract_strided_slice %329 {offsets = [1, 0], sizes = [1, 32], strides = [1, 1]} : vector<4x32xf32> to vector<1x32xf32>
    %516 = vector.extract_strided_slice %328 {offsets = [0, 1, 0], sizes = [1, 1, 32], strides = [1, 1, 1]} : vector<3x4x32xf32> to vector<1x1x32xf32>
    %517 = vector.shape_cast %516 : vector<1x1x32xf32> to vector<1x32xf32>
    %518 = vector.broadcast %517 : vector<1x32xf32> to vector<8x32xf32>
    %519 = arith.mulf %322, %518 : vector<8x32xf32>
    %520 = vector.broadcast %515 : vector<1x32xf32> to vector<8x32xf32>
    %521 = arith.addf %520, %519 : vector<8x32xf32>
    %522 = vector.extract_strided_slice %328 {offsets = [1, 1, 0], sizes = [1, 1, 32], strides = [1, 1, 1]} : vector<3x4x32xf32> to vector<1x1x32xf32>
    %523 = vector.shape_cast %522 : vector<1x1x32xf32> to vector<1x32xf32>
    %524 = vector.broadcast %523 : vector<1x32xf32> to vector<8x32xf32>
    %525 = arith.mulf %1, %524 : vector<8x32xf32>
    %526 = arith.addf %521, %525 : vector<8x32xf32>
    %527 = vector.extract_strided_slice %328 {offsets = [2, 1, 0], sizes = [1, 1, 32], strides = [1, 1, 1]} : vector<3x4x32xf32> to vector<1x1x32xf32>
    %528 = vector.shape_cast %527 : vector<1x1x32xf32> to vector<1x32xf32>
    %529 = vector.broadcast %528 : vector<1x32xf32> to vector<8x32xf32>
    %530 = arith.mulf %327, %529 : vector<8x32xf32>
    %531 = arith.addf %526, %530 : vector<8x32xf32>
    %532 = vector.broadcast %431 : vector<8x1xf32> to vector<8x32xf32>
    %533 = arith.subf %531, %532 : vector<8x32xf32>
    %534 = vector.broadcast %440 : vector<8x1xf32> to vector<8x32xf32>
    %535 = arith.mulf %533, %534 : vector<8x32xf32>
    %536 = vector.extract_strided_slice %330 {offsets = [1, 0], sizes = [1, 32], strides = [1, 1]} : vector<4x32xf32> to vector<1x32xf32>
    %537 = vector.broadcast %536 : vector<1x32xf32> to vector<8x32xf32>
    %538 = arith.mulf %535, %537 : vector<8x32xf32>
    %539 = vector.extract_strided_slice %331 {offsets = [1, 0], sizes = [1, 32], strides = [1, 1]} : vector<4x32xf32> to vector<1x32xf32>
    %540 = vector.broadcast %539 : vector<1x32xf32> to vector<8x32xf32>
    %541 = arith.addf %538, %540 : vector<8x32xf32>
    %cst_231 = arith.constant 5.000000e-01 : f32
    %542 = vector.broadcast %cst_231 : f32 to vector<8x32xf32>
    %543 = arith.mulf %542, %541 : vector<8x32xf32>
    %cst_232 = arith.constant 0.707106769 : f32
    %544 = vector.broadcast %cst_232 : f32 to vector<8x32xf32>
    %545 = arith.mulf %541, %544 : vector<8x32xf32>
    %cst_233 = arith.constant 0.000000e+00 : f32
    %546 = vector.broadcast %cst_233 : f32 to vector<8x32xf32>
    %547 = arith.cmpf oge, %545, %546 : vector<8x32xf32>
    %cst_234 = arith.constant 1.000000e+00 : f32
    %cst_235 = arith.constant -1.000000e+00 : f32
    %548 = vector.broadcast %cst_234 : f32 to vector<8x32xf32>
    %549 = vector.broadcast %cst_235 : f32 to vector<8x32xf32>
    %550 = arith.select %547, %548, %549 : vector<8x32xi1>, vector<8x32xf32>
    %551 = math.absf %545 : vector<8x32xf32>
    %cst_236 = arith.constant 0.327591091 : f32
    %552 = vector.broadcast %cst_236 : f32 to vector<8x32xf32>
    %553 = arith.mulf %552, %551 : vector<8x32xf32>
    %cst_237 = arith.constant 1.000000e+00 : f32
    %554 = vector.broadcast %cst_237 : f32 to vector<8x32xf32>
    %555 = arith.addf %554, %553 : vector<8x32xf32>
    %cst_238 = arith.constant 1.000000e+00 : f32
    %556 = vector.broadcast %cst_238 : f32 to vector<8x32xf32>
    %557 = arith.divf %556, %555 : vector<8x32xf32>
    %cst_239 = arith.constant 1.06140542 : f32
    %558 = vector.broadcast %cst_239 : f32 to vector<8x32xf32>
    %559 = arith.mulf %558, %557 : vector<8x32xf32>
    %cst_240 = arith.constant -1.45315206 : f32
    %560 = vector.broadcast %cst_240 : f32 to vector<8x32xf32>
    %561 = arith.addf %559, %560 : vector<8x32xf32>
    %562 = arith.mulf %561, %557 : vector<8x32xf32>
    %cst_241 = arith.constant 1.42141378 : f32
    %563 = vector.broadcast %cst_241 : f32 to vector<8x32xf32>
    %564 = arith.addf %562, %563 : vector<8x32xf32>
    %565 = arith.mulf %564, %557 : vector<8x32xf32>
    %cst_242 = arith.constant -0.284496725 : f32
    %566 = vector.broadcast %cst_242 : f32 to vector<8x32xf32>
    %567 = arith.addf %565, %566 : vector<8x32xf32>
    %568 = arith.mulf %567, %557 : vector<8x32xf32>
    %cst_243 = arith.constant 0.254829586 : f32
    %569 = vector.broadcast %cst_243 : f32 to vector<8x32xf32>
    %570 = arith.addf %568, %569 : vector<8x32xf32>
    %571 = arith.mulf %570, %557 : vector<8x32xf32>
    %cst_244 = arith.constant 0.000000e+00 : f32
    %572 = vector.broadcast %cst_244 : f32 to vector<8x32xf32>
    %573 = arith.subf %572, %551 : vector<8x32xf32>
    %574 = arith.mulf %573, %551 : vector<8x32xf32>
    %575 = math.exp %574 : vector<8x32xf32>
    %576 = arith.mulf %571, %575 : vector<8x32xf32>
    %cst_245 = arith.constant 1.000000e+00 : f32
    %577 = vector.broadcast %cst_245 : f32 to vector<8x32xf32>
    %578 = arith.subf %577, %576 : vector<8x32xf32>
    %579 = arith.mulf %550, %578 : vector<8x32xf32>
    %cst_246 = arith.constant 1.000000e+00 : f32
    %580 = vector.broadcast %cst_246 : f32 to vector<8x32xf32>
    %581 = arith.addf %580, %579 : vector<8x32xf32>
    %582 = arith.mulf %543, %581 : vector<8x32xf32>
    %c1_247 = arith.constant 1 : index
    %c0_248 = arith.constant 0 : index
    %c0_249 = arith.constant 0 : index
    %583 = vector.load %arg6[%c1_247, %c0_248, %c0_249] : memref<4x32x32xbf16, #tpu.memory_space<vmem>>, vector<1x32x32xbf16>
    %584 = vector.shape_cast %583 : vector<1x32x32xbf16> to vector<32x32xbf16>
    %585 = arith.truncf %582 : vector<8x32xf32> to vector<8x32xbf16>
    %cst_250 = arith.constant dense<0.000000e+00> : vector<8x32xf32>
    %586 = tpu.matmul %585, %584, %cst_250 {dimension_numbers = #tpu.dot_dimension_numbers<[1], [0], [0], [1], [0, 0, 1, 1], [], []>} : vector<8x32xbf16>, vector<32x32xbf16>, vector<8x32xf32> -> vector<8x32xf32>
    %587 = arith.addf %514, %586 : vector<8x32xf32>
    %588 = vector.extract_strided_slice %329 {offsets = [2, 0], sizes = [1, 32], strides = [1, 1]} : vector<4x32xf32> to vector<1x32xf32>
    %589 = vector.extract_strided_slice %328 {offsets = [0, 2, 0], sizes = [1, 1, 32], strides = [1, 1, 1]} : vector<3x4x32xf32> to vector<1x1x32xf32>
    %590 = vector.shape_cast %589 : vector<1x1x32xf32> to vector<1x32xf32>
    %591 = vector.broadcast %590 : vector<1x32xf32> to vector<8x32xf32>
    %592 = arith.mulf %322, %591 : vector<8x32xf32>
    %593 = vector.broadcast %588 : vector<1x32xf32> to vector<8x32xf32>
    %594 = arith.addf %593, %592 : vector<8x32xf32>
    %595 = vector.extract_strided_slice %328 {offsets = [1, 2, 0], sizes = [1, 1, 32], strides = [1, 1, 1]} : vector<3x4x32xf32> to vector<1x1x32xf32>
    %596 = vector.shape_cast %595 : vector<1x1x32xf32> to vector<1x32xf32>
    %597 = vector.broadcast %596 : vector<1x32xf32> to vector<8x32xf32>
    %598 = arith.mulf %1, %597 : vector<8x32xf32>
    %599 = arith.addf %594, %598 : vector<8x32xf32>
    %600 = vector.extract_strided_slice %328 {offsets = [2, 2, 0], sizes = [1, 1, 32], strides = [1, 1, 1]} : vector<3x4x32xf32> to vector<1x1x32xf32>
    %601 = vector.shape_cast %600 : vector<1x1x32xf32> to vector<1x32xf32>
    %602 = vector.broadcast %601 : vector<1x32xf32> to vector<8x32xf32>
    %603 = arith.mulf %327, %602 : vector<8x32xf32>
    %604 = arith.addf %599, %603 : vector<8x32xf32>
    %605 = vector.broadcast %431 : vector<8x1xf32> to vector<8x32xf32>
    %606 = arith.subf %604, %605 : vector<8x32xf32>
    %607 = vector.broadcast %440 : vector<8x1xf32> to vector<8x32xf32>
    %608 = arith.mulf %606, %607 : vector<8x32xf32>
    %609 = vector.extract_strided_slice %330 {offsets = [2, 0], sizes = [1, 32], strides = [1, 1]} : vector<4x32xf32> to vector<1x32xf32>
    %610 = vector.broadcast %609 : vector<1x32xf32> to vector<8x32xf32>
    %611 = arith.mulf %608, %610 : vector<8x32xf32>
    %612 = vector.extract_strided_slice %331 {offsets = [2, 0], sizes = [1, 32], strides = [1, 1]} : vector<4x32xf32> to vector<1x32xf32>
    %613 = vector.broadcast %612 : vector<1x32xf32> to vector<8x32xf32>
    %614 = arith.addf %611, %613 : vector<8x32xf32>
    %cst_251 = arith.constant 5.000000e-01 : f32
    %615 = vector.broadcast %cst_251 : f32 to vector<8x32xf32>
    %616 = arith.mulf %615, %614 : vector<8x32xf32>
    %cst_252 = arith.constant 0.707106769 : f32
    %617 = vector.broadcast %cst_252 : f32 to vector<8x32xf32>
    %618 = arith.mulf %614, %617 : vector<8x32xf32>
    %cst_253 = arith.constant 0.000000e+00 : f32
    %619 = vector.broadcast %cst_253 : f32 to vector<8x32xf32>
    %620 = arith.cmpf oge, %618, %619 : vector<8x32xf32>
    %cst_254 = arith.constant 1.000000e+00 : f32
    %cst_255 = arith.constant -1.000000e+00 : f32
    %621 = vector.broadcast %cst_254 : f32 to vector<8x32xf32>
    %622 = vector.broadcast %cst_255 : f32 to vector<8x32xf32>
    %623 = arith.select %620, %621, %622 : vector<8x32xi1>, vector<8x32xf32>
    %624 = math.absf %618 : vector<8x32xf32>
    %cst_256 = arith.constant 0.327591091 : f32
    %625 = vector.broadcast %cst_256 : f32 to vector<8x32xf32>
    %626 = arith.mulf %625, %624 : vector<8x32xf32>
    %cst_257 = arith.constant 1.000000e+00 : f32
    %627 = vector.broadcast %cst_257 : f32 to vector<8x32xf32>
    %628 = arith.addf %627, %626 : vector<8x32xf32>
    %cst_258 = arith.constant 1.000000e+00 : f32
    %629 = vector.broadcast %cst_258 : f32 to vector<8x32xf32>
    %630 = arith.divf %629, %628 : vector<8x32xf32>
    %cst_259 = arith.constant 1.06140542 : f32
    %631 = vector.broadcast %cst_259 : f32 to vector<8x32xf32>
    %632 = arith.mulf %631, %630 : vector<8x32xf32>
    %cst_260 = arith.constant -1.45315206 : f32
    %633 = vector.broadcast %cst_260 : f32 to vector<8x32xf32>
    %634 = arith.addf %632, %633 : vector<8x32xf32>
    %635 = arith.mulf %634, %630 : vector<8x32xf32>
    %cst_261 = arith.constant 1.42141378 : f32
    %636 = vector.broadcast %cst_261 : f32 to vector<8x32xf32>
    %637 = arith.addf %635, %636 : vector<8x32xf32>
    %638 = arith.mulf %637, %630 : vector<8x32xf32>
    %cst_262 = arith.constant -0.284496725 : f32
    %639 = vector.broadcast %cst_262 : f32 to vector<8x32xf32>
    %640 = arith.addf %638, %639 : vector<8x32xf32>
    %641 = arith.mulf %640, %630 : vector<8x32xf32>
    %cst_263 = arith.constant 0.254829586 : f32
    %642 = vector.broadcast %cst_263 : f32 to vector<8x32xf32>
    %643 = arith.addf %641, %642 : vector<8x32xf32>
    %644 = arith.mulf %643, %630 : vector<8x32xf32>
    %cst_264 = arith.constant 0.000000e+00 : f32
    %645 = vector.broadcast %cst_264 : f32 to vector<8x32xf32>
    %646 = arith.subf %645, %624 : vector<8x32xf32>
    %647 = arith.mulf %646, %624 : vector<8x32xf32>
    %648 = math.exp %647 : vector<8x32xf32>
    %649 = arith.mulf %644, %648 : vector<8x32xf32>
    %cst_265 = arith.constant 1.000000e+00 : f32
    %650 = vector.broadcast %cst_265 : f32 to vector<8x32xf32>
    %651 = arith.subf %650, %649 : vector<8x32xf32>
    %652 = arith.mulf %623, %651 : vector<8x32xf32>
    %cst_266 = arith.constant 1.000000e+00 : f32
    %653 = vector.broadcast %cst_266 : f32 to vector<8x32xf32>
    %654 = arith.addf %653, %652 : vector<8x32xf32>
    %655 = arith.mulf %616, %654 : vector<8x32xf32>
    %c2 = arith.constant 2 : index
    %c0_267 = arith.constant 0 : index
    %c0_268 = arith.constant 0 : index
    %656 = vector.load %arg6[%c2, %c0_267, %c0_268] : memref<4x32x32xbf16, #tpu.memory_space<vmem>>, vector<1x32x32xbf16>
    %657 = vector.shape_cast %656 : vector<1x32x32xbf16> to vector<32x32xbf16>
    %658 = arith.truncf %655 : vector<8x32xf32> to vector<8x32xbf16>
    %cst_269 = arith.constant dense<0.000000e+00> : vector<8x32xf32>
    %659 = tpu.matmul %658, %657, %cst_269 {dimension_numbers = #tpu.dot_dimension_numbers<[1], [0], [0], [1], [0, 0, 1, 1], [], []>} : vector<8x32xbf16>, vector<32x32xbf16>, vector<8x32xf32> -> vector<8x32xf32>
    %660 = arith.addf %587, %659 : vector<8x32xf32>
    %661 = vector.extract_strided_slice %329 {offsets = [3, 0], sizes = [1, 32], strides = [1, 1]} : vector<4x32xf32> to vector<1x32xf32>
    %662 = vector.extract_strided_slice %328 {offsets = [0, 3, 0], sizes = [1, 1, 32], strides = [1, 1, 1]} : vector<3x4x32xf32> to vector<1x1x32xf32>
    %663 = vector.shape_cast %662 : vector<1x1x32xf32> to vector<1x32xf32>
    %664 = vector.broadcast %663 : vector<1x32xf32> to vector<8x32xf32>
    %665 = arith.mulf %322, %664 : vector<8x32xf32>
    %666 = vector.broadcast %661 : vector<1x32xf32> to vector<8x32xf32>
    %667 = arith.addf %666, %665 : vector<8x32xf32>
    %668 = vector.extract_strided_slice %328 {offsets = [1, 3, 0], sizes = [1, 1, 32], strides = [1, 1, 1]} : vector<3x4x32xf32> to vector<1x1x32xf32>
    %669 = vector.shape_cast %668 : vector<1x1x32xf32> to vector<1x32xf32>
    %670 = vector.broadcast %669 : vector<1x32xf32> to vector<8x32xf32>
    %671 = arith.mulf %1, %670 : vector<8x32xf32>
    %672 = arith.addf %667, %671 : vector<8x32xf32>
    %673 = vector.extract_strided_slice %328 {offsets = [2, 3, 0], sizes = [1, 1, 32], strides = [1, 1, 1]} : vector<3x4x32xf32> to vector<1x1x32xf32>
    %674 = vector.shape_cast %673 : vector<1x1x32xf32> to vector<1x32xf32>
    %675 = vector.broadcast %674 : vector<1x32xf32> to vector<8x32xf32>
    %676 = arith.mulf %327, %675 : vector<8x32xf32>
    %677 = arith.addf %672, %676 : vector<8x32xf32>
    %678 = vector.broadcast %431 : vector<8x1xf32> to vector<8x32xf32>
    %679 = arith.subf %677, %678 : vector<8x32xf32>
    %680 = vector.broadcast %440 : vector<8x1xf32> to vector<8x32xf32>
    %681 = arith.mulf %679, %680 : vector<8x32xf32>
    %682 = vector.extract_strided_slice %330 {offsets = [3, 0], sizes = [1, 32], strides = [1, 1]} : vector<4x32xf32> to vector<1x32xf32>
    %683 = vector.broadcast %682 : vector<1x32xf32> to vector<8x32xf32>
    %684 = arith.mulf %681, %683 : vector<8x32xf32>
    %685 = vector.extract_strided_slice %331 {offsets = [3, 0], sizes = [1, 32], strides = [1, 1]} : vector<4x32xf32> to vector<1x32xf32>
    %686 = vector.broadcast %685 : vector<1x32xf32> to vector<8x32xf32>
    %687 = arith.addf %684, %686 : vector<8x32xf32>
    %cst_270 = arith.constant 5.000000e-01 : f32
    %688 = vector.broadcast %cst_270 : f32 to vector<8x32xf32>
    %689 = arith.mulf %688, %687 : vector<8x32xf32>
    %cst_271 = arith.constant 0.707106769 : f32
    %690 = vector.broadcast %cst_271 : f32 to vector<8x32xf32>
    %691 = arith.mulf %687, %690 : vector<8x32xf32>
    %cst_272 = arith.constant 0.000000e+00 : f32
    %692 = vector.broadcast %cst_272 : f32 to vector<8x32xf32>
    %693 = arith.cmpf oge, %691, %692 : vector<8x32xf32>
    %cst_273 = arith.constant 1.000000e+00 : f32
    %cst_274 = arith.constant -1.000000e+00 : f32
    %694 = vector.broadcast %cst_273 : f32 to vector<8x32xf32>
    %695 = vector.broadcast %cst_274 : f32 to vector<8x32xf32>
    %696 = arith.select %693, %694, %695 : vector<8x32xi1>, vector<8x32xf32>
    %697 = math.absf %691 : vector<8x32xf32>
    %cst_275 = arith.constant 0.327591091 : f32
    %698 = vector.broadcast %cst_275 : f32 to vector<8x32xf32>
    %699 = arith.mulf %698, %697 : vector<8x32xf32>
    %cst_276 = arith.constant 1.000000e+00 : f32
    %700 = vector.broadcast %cst_276 : f32 to vector<8x32xf32>
    %701 = arith.addf %700, %699 : vector<8x32xf32>
    %cst_277 = arith.constant 1.000000e+00 : f32
    %702 = vector.broadcast %cst_277 : f32 to vector<8x32xf32>
    %703 = arith.divf %702, %701 : vector<8x32xf32>
    %cst_278 = arith.constant 1.06140542 : f32
    %704 = vector.broadcast %cst_278 : f32 to vector<8x32xf32>
    %705 = arith.mulf %704, %703 : vector<8x32xf32>
    %cst_279 = arith.constant -1.45315206 : f32
    %706 = vector.broadcast %cst_279 : f32 to vector<8x32xf32>
    %707 = arith.addf %705, %706 : vector<8x32xf32>
    %708 = arith.mulf %707, %703 : vector<8x32xf32>
    %cst_280 = arith.constant 1.42141378 : f32
    %709 = vector.broadcast %cst_280 : f32 to vector<8x32xf32>
    %710 = arith.addf %708, %709 : vector<8x32xf32>
    %711 = arith.mulf %710, %703 : vector<8x32xf32>
    %cst_281 = arith.constant -0.284496725 : f32
    %712 = vector.broadcast %cst_281 : f32 to vector<8x32xf32>
    %713 = arith.addf %711, %712 : vector<8x32xf32>
    %714 = arith.mulf %713, %703 : vector<8x32xf32>
    %cst_282 = arith.constant 0.254829586 : f32
    %715 = vector.broadcast %cst_282 : f32 to vector<8x32xf32>
    %716 = arith.addf %714, %715 : vector<8x32xf32>
    %717 = arith.mulf %716, %703 : vector<8x32xf32>
    %cst_283 = arith.constant 0.000000e+00 : f32
    %718 = vector.broadcast %cst_283 : f32 to vector<8x32xf32>
    %719 = arith.subf %718, %697 : vector<8x32xf32>
    %720 = arith.mulf %719, %697 : vector<8x32xf32>
    %721 = math.exp %720 : vector<8x32xf32>
    %722 = arith.mulf %717, %721 : vector<8x32xf32>
    %cst_284 = arith.constant 1.000000e+00 : f32
    %723 = vector.broadcast %cst_284 : f32 to vector<8x32xf32>
    %724 = arith.subf %723, %722 : vector<8x32xf32>
    %725 = arith.mulf %696, %724 : vector<8x32xf32>
    %cst_285 = arith.constant 1.000000e+00 : f32
    %726 = vector.broadcast %cst_285 : f32 to vector<8x32xf32>
    %727 = arith.addf %726, %725 : vector<8x32xf32>
    %728 = arith.mulf %689, %727 : vector<8x32xf32>
    %c3 = arith.constant 3 : index
    %c0_286 = arith.constant 0 : index
    %c0_287 = arith.constant 0 : index
    %729 = vector.load %arg6[%c3, %c0_286, %c0_287] : memref<4x32x32xbf16, #tpu.memory_space<vmem>>, vector<1x32x32xbf16>
    %730 = vector.shape_cast %729 : vector<1x32x32xbf16> to vector<32x32xbf16>
    %731 = arith.truncf %728 : vector<8x32xf32> to vector<8x32xbf16>
    %cst_288 = arith.constant dense<0.000000e+00> : vector<8x32xf32>
    %732 = tpu.matmul %731, %730, %cst_288 {dimension_numbers = #tpu.dot_dimension_numbers<[1], [0], [0], [1], [0, 0, 1, 1], [], []>} : vector<8x32xbf16>, vector<32x32xbf16>, vector<8x32xf32> -> vector<8x32xf32>
    %733 = arith.addf %660, %732 : vector<8x32xf32>
    %c0_289 = arith.constant 0 : index
    %c0_290 = arith.constant 0 : index
    %734 = vector.load %arg7[%c0_289, %c0_290] : memref<1x32xf32, #tpu.memory_space<vmem>>, vector<1x32xf32>
    %735 = vector.broadcast %734 : vector<1x32xf32> to vector<8x32xf32>
    %736 = arith.addf %733, %735 : vector<8x32xf32>
    %737 = arith.addf %736, %316 : vector<8x32xf32>
    %738 = arith.addf %737, %1 : vector<8x32xf32>
    %c0_291 = arith.constant 0 : index
    %c0_292 = arith.constant 0 : index
    %c0_293 = arith.constant 0 : index
    %739 = vector.load %arg15[%c0_291, %c0_292, %c0_293] : memref<1x8x32xf32, #tpu.memory_space<vmem>>, vector<1x8x32xf32>
    %740 = vector.shape_cast %739 : vector<1x8x32xf32> to vector<8x32xf32>
    %741 = vector.shape_cast %738 : vector<8x32xf32> to vector<1x8x32xf32>
    tpu.vector_store %arg15[%c0_291, %c0_292, %c0_293], %741 {strides = array<i32>} : memref<1x8x32xf32, #tpu.memory_space<vmem>>, vector<1x8x32xf32>,
    return
  }
  func.func @transform_0(%arg0: i32) -> (i32, i32, i32) {
    %c0_i32 = arith.constant 0 : i32
    %c0_i32_0 = arith.constant 0 : i32
    %c0_i32_1 = arith.constant 0 : i32
    return %arg0, %c0_i32, %c0_i32_0 : i32, i32, i32
  }
  func.func @transform_1(%arg0: i32) -> (i32, i32, i32) {
    %c0_i32 = arith.constant 0 : i32
    %c0_i32_0 = arith.constant 0 : i32
    %c0_i32_1 = arith.constant 0 : i32
    %c0_i32_2 = arith.constant 0 : i32
    return %c0_i32, %c0_i32_0, %c0_i32_1 : i32, i32, i32
  }
  func.func @transform_2(%arg0: i32) -> (i32, i32) {
    %c0_i32 = arith.constant 0 : i32
    %c0_i32_0 = arith.constant 0 : i32
    %c0_i32_1 = arith.constant 0 : i32
    return %c0_i32, %c0_i32_0 : i32, i32
  }
  func.func @transform_3(%arg0: i32) -> (i32, i32) {
    %c0_i32 = arith.constant 0 : i32
    %c0_i32_0 = arith.constant 0 : i32
    %c0_i32_1 = arith.constant 0 : i32
    return %c0_i32, %c0_i32_0 : i32, i32
  }
  func.func @transform_4(%arg0: i32) -> (i32, i32) {
    %c0_i32 = arith.constant 0 : i32
    %c0_i32_0 = arith.constant 0 : i32
    %c0_i32_1 = arith.constant 0 : i32
    return %c0_i32, %c0_i32_0 : i32, i32
  }
  func.func @transform_5(%arg0: i32) -> (i32, i32, i32) {
    %c0_i32 = arith.constant 0 : i32
    %c0_i32_0 = arith.constant 0 : i32
    %c0_i32_1 = arith.constant 0 : i32
    %c0_i32_2 = arith.constant 0 : i32
    return %c0_i32, %c0_i32_0, %c0_i32_1 : i32, i32, i32
  }
  func.func @transform_6(%arg0: i32) -> (i32, i32) {
    %c0_i32 = arith.constant 0 : i32
    %c0_i32_0 = arith.constant 0 : i32
    %c0_i32_1 = arith.constant 0 : i32
    return %c0_i32, %c0_i32_0 : i32, i32
  }
  func.func @transform_7(%arg0: i32) -> (i32, i32) {
    %c0_i32 = arith.constant 0 : i32
    %c0_i32_0 = arith.constant 0 : i32
    %c0_i32_1 = arith.constant 0 : i32
    return %c0_i32, %c0_i32_0 : i32, i32
  }
  func.func @transform_8(%arg0: i32) -> (i32, i32) {
    %c0_i32 = arith.constant 0 : i32
    %c0_i32_0 = arith.constant 0 : i32
    %c0_i32_1 = arith.constant 0 : i32
    return %c0_i32, %c0_i32_0 : i32, i32
  }
  func.func @transform_9(%arg0: i32) -> (i32, i32) {
    %c0_i32 = arith.constant 0 : i32
    %c0_i32_0 = arith.constant 0 : i32
    %c0_i32_1 = arith.constant 0 : i32
    return %c0_i32, %c0_i32_0 : i32, i32
  }
  func.func @transform_10(%arg0: i32) -> (i32, i32) {
    %c0_i32 = arith.constant 0 : i32
    %c0_i32_0 = arith.constant 0 : i32
    %c0_i32_1 = arith.constant 0 : i32
    return %c0_i32, %c0_i32_0 : i32, i32
  }
  func.func @transform_11(%arg0: i32) -> (i32, i32) {
    %c0_i32 = arith.constant 0 : i32
    %c0_i32_0 = arith.constant 0 : i32
    %c0_i32_1 = arith.constant 0 : i32
    return %c0_i32, %c0_i32_0 : i32, i32
  }
  func.func @transform_12(%arg0: i32) -> (i32, i32) {
    %c0_i32 = arith.constant 0 : i32
    %c0_i32_0 = arith.constant 0 : i32
    %c0_i32_1 = arith.constant 0 : i32
    return %c0_i32, %c0_i32_0 : i32, i32
  }
  func.func @transform_14(%arg0: i32) -> (i32, i32, i32) {
    %c0_i32 = arith.constant 0 : i32
    %c0_i32_0 = arith.constant 0 : i32
    %c0_i32_1 = arith.constant 0 : i32
    return %arg0, %c0_i32, %c0_i32_0 : i32, i32, i32
  }
}

module attributes {stable_mosaic.version = 11 : i64} {
  func.func @_block_kernel(%arg0: i32, %arg1: memref<1x8x32xf32, #tpu.memory_space<vmem>>, %arg2: memref<3x4x32xf32, #tpu.memory_space<vmem>>, %arg3: memref<4x32xf32, #tpu.memory_space<vmem>>, %arg4: memref<4x32xf32, #tpu.memory_space<vmem>>, %arg5: memref<4x32xf32, #tpu.memory_space<vmem>>, %arg6: memref<4x32x32xbf16, #tpu.memory_space<vmem>>, %arg7: memref<1x32xf32, #tpu.memory_space<vmem>>, %arg8: memref<1x32xf32, #tpu.memory_space<vmem>>, %arg9: memref<1x32xf32, #tpu.memory_space<vmem>>, %arg10: memref<32x128xbf16, #tpu.memory_space<vmem>>, %arg11: memref<1x128xf32, #tpu.memory_space<vmem>>, %arg12: memref<32x32xbf16, #tpu.memory_space<vmem>>, %arg13: memref<1x32xf32, #tpu.memory_space<vmem>>, %arg14: memref<8x8x8xf32, #tpu.memory_space<any>>, %arg15: memref<1x8x32xf32, #tpu.memory_space<vmem>>, %arg16: memref<2x8x8xf32, #tpu.memory_space<vmem>>, %arg17: memref<2x!tpu.dma_semaphore, #tpu.memory_space<semaphore_mem>>) attributes {dimension_semantics = [#tpu.dimension_semantics<parallel>], iteration_bounds = array<i64: 2>, scalar_prefetch = 0 : i64, scratch_operands = 2 : i64, tpu.core_type = #tpu.core_type<tc>, window_params = [{transform_indices = @transform_0, window_bounds = array<i64: 1, 8, 32>}, {pipeline_mode = #tpu.pipeline_mode<synchronous>, transform_indices = @transform_1, window_bounds = array<i64: 3, 4, 32>}, {pipeline_mode = #tpu.pipeline_mode<synchronous>, transform_indices = @transform_2, window_bounds = array<i64: 4, 32>}, {pipeline_mode = #tpu.pipeline_mode<synchronous>, transform_indices = @transform_3, window_bounds = array<i64: 4, 32>}, {pipeline_mode = #tpu.pipeline_mode<synchronous>, transform_indices = @transform_4, window_bounds = array<i64: 4, 32>}, {pipeline_mode = #tpu.pipeline_mode<synchronous>, transform_indices = @transform_5, window_bounds = array<i64: 4, 32, 32>}, {pipeline_mode = #tpu.pipeline_mode<synchronous>, transform_indices = @transform_6, window_bounds = array<i64: 1, 32>}, {pipeline_mode = #tpu.pipeline_mode<synchronous>, transform_indices = @transform_7, window_bounds = array<i64: 1, 32>}, {pipeline_mode = #tpu.pipeline_mode<synchronous>, transform_indices = @transform_8, window_bounds = array<i64: 1, 32>}, {pipeline_mode = #tpu.pipeline_mode<synchronous>, transform_indices = @transform_9, window_bounds = array<i64: 32, 128>}, {pipeline_mode = #tpu.pipeline_mode<synchronous>, transform_indices = @transform_10, window_bounds = array<i64: 1, 128>}, {pipeline_mode = #tpu.pipeline_mode<synchronous>, transform_indices = @transform_11, window_bounds = array<i64: 32, 32>}, {pipeline_mode = #tpu.pipeline_mode<synchronous>, transform_indices = @transform_12, window_bounds = array<i64: 1, 32>}, {}, {transform_indices = @transform_14, window_bounds = array<i64: 1, 8, 32>}]} {
    %c0 = arith.constant 0 : index
    %c0_0 = arith.constant 0 : index
    %c0_1 = arith.constant 0 : index
    %0 = vector.load %arg1[%c0, %c0_0, %c0_1] : memref<1x8x32xf32, #tpu.memory_space<vmem>>, vector<1x8x32xf32>
    %1 = vector.shape_cast %0 : vector<1x8x32xf32> to vector<8x32xf32>
    %c0_i32 = arith.constant 0 : i32
    %c0_i32_2 = arith.constant 0 : i32
    %c0_i32_3 = arith.constant 0 : i32
    %c0_i32_4 = arith.constant 0 : i32
    %c0_i32_5 = arith.constant 0 : i32
    %2 = tpu.memref_slice %arg14[%c0_i32, %c0_i32_4, %c0_i32_5] : memref<8x8x8xf32, #tpu.memory_space<any>> -> memref<1x8x8xf32, #tpu.memory_space<any>>
    %3 = tpu.memref_squeeze %2 : memref<1x8x8xf32, #tpu.memory_space<any>> -> memref<8x8xf32, #tpu.memory_space<any>>
    %c0_i32_6 = arith.constant 0 : i32
    %c0_i32_7 = arith.constant 0 : i32
    %4 = tpu.memref_slice %arg16[%c0_i32_2, %c0_i32_6, %c0_i32_7] : memref<2x8x8xf32, #tpu.memory_space<vmem>> -> memref<1x8x8xf32, #tpu.memory_space<vmem>>
    %5 = tpu.memref_squeeze %4 : memref<1x8x8xf32, #tpu.memory_space<vmem>> -> memref<8x8xf32, #tpu.memory_space<vmem>>
    %6 = tpu.memref_slice %arg17[%c0_i32_3] : memref<2x!tpu.dma_semaphore, #tpu.memory_space<semaphore_mem>> -> memref<1x!tpu.dma_semaphore, #tpu.memory_space<semaphore_mem>>
    %7 = tpu.memref_squeeze %6 : memref<1x!tpu.dma_semaphore, #tpu.memory_space<semaphore_mem>> -> memref<!tpu.dma_semaphore, #tpu.memory_space<semaphore_mem>>
    tpu.enqueue_dma source(%3 : memref<8x8xf32, #tpu.memory_space<any>>) target(%5 : memref<8x8xf32, #tpu.memory_space<vmem>>) target_semaphore(%7 : memref<!tpu.dma_semaphore, #tpu.memory_space<semaphore_mem>>)
    %c0_8 = arith.constant 0 : index
    %c0_9 = arith.constant 0 : index
    %8 = vector.load %arg8[%c0_8, %c0_9] : memref<1x32xf32, #tpu.memory_space<vmem>>, vector<1x32xf32>
    %c0_10 = arith.constant 0 : index
    %c0_11 = arith.constant 0 : index
    %9 = vector.load %arg9[%c0_10, %c0_11] : memref<1x32xf32, #tpu.memory_space<vmem>>, vector<1x32xf32>
    %cst = arith.constant dense<0.000000e+00> : vector<8xf32>
    %10 = vector.multi_reduction <add>, %1, %cst [1] : vector<8x32xf32> to vector<8xf32>
    %11 = vector.shape_cast %10 : vector<8xf32> to vector<8x1xf32>
    %cst_12 = arith.constant 3.200000e+01 : f32
    %12 = vector.broadcast %cst_12 : f32 to vector<8x1xf32>
    %13 = arith.divf %11, %12 : vector<8x1xf32>
    %14 = vector.broadcast %13 : vector<8x1xf32> to vector<8x32xf32>
    %15 = arith.subf %1, %14 : vector<8x32xf32>
    %16 = arith.mulf %15, %15 : vector<8x32xf32>
    %cst_13 = arith.constant dense<0.000000e+00> : vector<8xf32>
    %17 = vector.multi_reduction <add>, %16, %cst_13 [1] : vector<8x32xf32> to vector<8xf32>
    %18 = vector.shape_cast %17 : vector<8xf32> to vector<8x1xf32>
    %cst_14 = arith.constant 3.200000e+01 : f32
    %19 = vector.broadcast %cst_14 : f32 to vector<8x1xf32>
    %20 = arith.divf %18, %19 : vector<8x1xf32>
    %21 = vector.broadcast %13 : vector<8x1xf32> to vector<8x32xf32>
    %22 = arith.subf %1, %21 : vector<8x32xf32>
    %cst_15 = arith.constant 9.99999974E-6 : f32
    %23 = vector.broadcast %cst_15 : f32 to vector<8x1xf32>
    %24 = arith.addf %20, %23 : vector<8x1xf32>
    %25 = math.rsqrt %24 : vector<8x1xf32>
    %26 = vector.broadcast %25 : vector<8x1xf32> to vector<8x32xf32>
    %27 = arith.mulf %22, %26 : vector<8x32xf32>
    %28 = vector.broadcast %8 : vector<1x32xf32> to vector<8x32xf32>
    %29 = arith.mulf %27, %28 : vector<8x32xf32>
    %30 = vector.broadcast %9 : vector<1x32xf32> to vector<8x32xf32>
    %31 = arith.addf %29, %30 : vector<8x32xf32>
    %c0_16 = arith.constant 0 : index
    %c0_17 = arith.constant 0 : index
    %32 = vector.load %arg10[%c0_16, %c0_17] : memref<32x128xbf16, #tpu.memory_space<vmem>>, vector<32x128xbf16>
    %33 = arith.truncf %31 : vector<8x32xf32> to vector<8x32xbf16>
    %cst_18 = arith.constant dense<0.000000e+00> : vector<8x128xf32>
    %34 = tpu.matmul %33, %32, %cst_18 {dimension_numbers = #tpu.dot_dimension_numbers<[1], [0], [0], [1], [0, 0, 1, 1], [], []>} : vector<8x32xbf16>, vector<32x128xbf16>, vector<8x128xf32> -> vector<8x128xf32>
    %c0_19 = arith.constant 0 : index
    %c0_20 = arith.constant 0 : index
    %35 = vector.load %arg11[%c0_19, %c0_20] : memref<1x128xf32, #tpu.memory_space<vmem>>, vector<1x128xf32>
    %36 = vector.broadcast %35 : vector<1x128xf32> to vector<8x128xf32>
    %37 = arith.addf %34, %36 : vector<8x128xf32>
    %38 = vector.extract_strided_slice %37 {offsets = [0, 0], sizes = [8, 32], strides = [1, 1]} : vector<8x128xf32> to vector<8x32xf32>
    %39 = vector.extract_strided_slice %37 {offsets = [0, 32], sizes = [8, 32], strides = [1, 1]} : vector<8x128xf32> to vector<8x32xf32>
    %40 = vector.extract_strided_slice %37 {offsets = [0, 64], sizes = [8, 32], strides = [1, 1]} : vector<8x128xf32> to vector<8x32xf32>
    %41 = vector.extract_strided_slice %37 {offsets = [0, 96], sizes = [8, 32], strides = [1, 1]} : vector<8x128xf32> to vector<8x32xf32>
    %42 = arith.negf %41 : vector<8x32xf32>
    %43 = math.exp %42 : vector<8x32xf32>
    %cst_21 = arith.constant 1.000000e+00 : f32
    %44 = vector.broadcast %cst_21 : f32 to vector<8x32xf32>
    %45 = arith.addf %44, %43 : vector<8x32xf32>
    %46 = arith.divf %44, %45 : vector<8x32xf32>
    %cst_22 = arith.constant 5.000000e-01 : f32
    %47 = vector.broadcast %cst_22 : f32 to vector<8x32xf32>
    %48 = arith.mulf %38, %47 : vector<8x32xf32>
    %49 = arith.truncf %48 : vector<8x32xf32> to vector<8x32xbf16>
    %50 = arith.truncf %39 : vector<8x32xf32> to vector<8x32xbf16>
    %51 = arith.truncf %40 : vector<8x32xf32> to vector<8x32xbf16>
    %c0_i32_23 = arith.constant 0 : i32
    %c0_i32_24 = arith.constant 0 : i32
    %c0_i32_25 = arith.constant 0 : i32
    %c0_i32_26 = arith.constant 0 : i32
    %c0_i32_27 = arith.constant 0 : i32
    %52 = tpu.memref_slice %arg14[%c0_i32_23, %c0_i32_26, %c0_i32_27] : memref<8x8x8xf32, #tpu.memory_space<any>> -> memref<1x8x8xf32, #tpu.memory_space<any>>
    %53 = tpu.memref_squeeze %52 : memref<1x8x8xf32, #tpu.memory_space<any>> -> memref<8x8xf32, #tpu.memory_space<any>>
    %c0_i32_28 = arith.constant 0 : i32
    %c0_i32_29 = arith.constant 0 : i32
    %54 = tpu.memref_slice %arg16[%c0_i32_24, %c0_i32_28, %c0_i32_29] : memref<2x8x8xf32, #tpu.memory_space<vmem>> -> memref<1x8x8xf32, #tpu.memory_space<vmem>>
    %55 = tpu.memref_squeeze %54 : memref<1x8x8xf32, #tpu.memory_space<vmem>> -> memref<8x8xf32, #tpu.memory_space<vmem>>
    %56 = tpu.memref_slice %arg17[%c0_i32_25] : memref<2x!tpu.dma_semaphore, #tpu.memory_space<semaphore_mem>> -> memref<1x!tpu.dma_semaphore, #tpu.memory_space<semaphore_mem>>
    %57 = tpu.memref_squeeze %56 : memref<1x!tpu.dma_semaphore, #tpu.memory_space<semaphore_mem>> -> memref<!tpu.dma_semaphore, #tpu.memory_space<semaphore_mem>>
    tpu.wait_dma2 semaphore(%57 : memref<!tpu.dma_semaphore, #tpu.memory_space<semaphore_mem>>) src(%53 : memref<8x8xf32, #tpu.memory_space<any>>) dst(%55 : memref<8x8xf32, #tpu.memory_space<vmem>>)
    %c1_i32 = arith.constant 1 : i32
    %c1_i32_30 = arith.constant 1 : i32
    %c1_i32_31 = arith.constant 1 : i32
    %c0_i32_32 = arith.constant 0 : i32
    %c0_i32_33 = arith.constant 0 : i32
    %58 = tpu.memref_slice %arg14[%c1_i32, %c0_i32_32, %c0_i32_33] : memref<8x8x8xf32, #tpu.memory_space<any>> -> memref<1x8x8xf32, #tpu.memory_space<any>>
    %59 = tpu.memref_squeeze %58 : memref<1x8x8xf32, #tpu.memory_space<any>> -> memref<8x8xf32, #tpu.memory_space<any>>
    %c0_i32_34 = arith.constant 0 : i32
    %c0_i32_35 = arith.constant 0 : i32
    %60 = tpu.memref_slice %arg16[%c1_i32_30, %c0_i32_34, %c0_i32_35] : memref<2x8x8xf32, #tpu.memory_space<vmem>> -> memref<1x8x8xf32, #tpu.memory_space<vmem>>
    %61 = tpu.memref_squeeze %60 : memref<1x8x8xf32, #tpu.memory_space<vmem>> -> memref<8x8xf32, #tpu.memory_space<vmem>>
    %62 = tpu.memref_slice %arg17[%c1_i32_31] : memref<2x!tpu.dma_semaphore, #tpu.memory_space<semaphore_mem>> -> memref<1x!tpu.dma_semaphore, #tpu.memory_space<semaphore_mem>>
    %63 = tpu.memref_squeeze %62 : memref<1x!tpu.dma_semaphore, #tpu.memory_space<semaphore_mem>> -> memref<!tpu.dma_semaphore, #tpu.memory_space<semaphore_mem>>
    tpu.enqueue_dma source(%59 : memref<8x8xf32, #tpu.memory_space<any>>) target(%61 : memref<8x8xf32, #tpu.memory_space<vmem>>) target_semaphore(%63 : memref<!tpu.dma_semaphore, #tpu.memory_space<semaphore_mem>>)
    %64 = vector.extract_strided_slice %49 {offsets = [0, 0], sizes = [8, 4], strides = [1, 1]} : vector<8x32xbf16> to vector<8x4xbf16>
    %65 = vector.extract_strided_slice %50 {offsets = [0, 0], sizes = [8, 4], strides = [1, 1]} : vector<8x32xbf16> to vector<8x4xbf16>
    %cst_36 = arith.constant dense<0.000000e+00> : vector<8x8xf32>
    %66 = tpu.matmul %64, %65, %cst_36 {dimension_numbers = #tpu.dot_dimension_numbers<[1], [1], [0], [0], [0, 0, 1, 0], [], []>} : vector<8x4xbf16>, vector<8x4xbf16>, vector<8x8xf32> -> vector<8x8xf32>
    %c0_37 = arith.constant 0 : index
    %c0_38 = arith.constant 0 : index
    %c0_39 = arith.constant 0 : index
    %67 = vector.load %arg16[%c0_37, %c0_38, %c0_39] : memref<2x8x8xf32, #tpu.memory_space<vmem>>, vector<1x8x8xf32>
    %68 = vector.shape_cast %67 : vector<1x8x8xf32> to vector<8x8xf32>
    %69 = arith.addf %66, %68 : vector<8x8xf32>
    %cst_40 = arith.constant dense<0xFF800000> : vector<8xf32>
    %70 = vector.multi_reduction <maximumf>, %69, %cst_40 [1] : vector<8x8xf32> to vector<8xf32>
    %71 = vector.shape_cast %70 : vector<8xf32> to vector<8x1xf32>
    %72 = vector.broadcast %71 : vector<8x1xf32> to vector<8x8xf32>
    %73 = arith.subf %69, %72 : vector<8x8xf32>
    %74 = math.exp %73 : vector<8x8xf32>
    %cst_41 = arith.constant dense<0.000000e+00> : vector<8xf32>
    %75 = vector.multi_reduction <add>, %74, %cst_41 [1] : vector<8x8xf32> to vector<8xf32>
    %76 = vector.shape_cast %75 : vector<8xf32> to vector<8x1xf32>
    %77 = tpu.reciprocal %76 {approx = true} : vector<8x1xf32> -> vector<8x1xf32>
    %78 = vector.broadcast %77 : vector<8x1xf32> to vector<8x8xf32>
    %79 = arith.mulf %74, %78 : vector<8x8xf32>
    %80 = vector.extract_strided_slice %51 {offsets = [0, 0], sizes = [8, 4], strides = [1, 1]} : vector<8x32xbf16> to vector<8x4xbf16>
    %81 = arith.truncf %79 : vector<8x8xf32> to vector<8x8xbf16>
    %cst_42 = arith.constant dense<0.000000e+00> : vector<8x4xf32>
    %82 = tpu.matmul %81, %80, %cst_42 {dimension_numbers = #tpu.dot_dimension_numbers<[1], [0], [0], [1], [0, 0, 1, 1], [], []>} : vector<8x8xbf16>, vector<8x4xbf16>, vector<8x4xf32> -> vector<8x4xf32>
    %83 = vector.extract_strided_slice %46 {offsets = [0, 0], sizes = [8, 4], strides = [1, 1]} : vector<8x32xf32> to vector<8x4xf32>
    %84 = arith.mulf %82, %83 : vector<8x4xf32>
    %c1_i32_43 = arith.constant 1 : i32
    %c1_i32_44 = arith.constant 1 : i32
    %c1_i32_45 = arith.constant 1 : i32
    %c0_i32_46 = arith.constant 0 : i32
    %c0_i32_47 = arith.constant 0 : i32
    %85 = tpu.memref_slice %arg14[%c1_i32_43, %c0_i32_46, %c0_i32_47] : memref<8x8x8xf32, #tpu.memory_space<any>> -> memref<1x8x8xf32, #tpu.memory_space<any>>
    %86 = tpu.memref_squeeze %85 : memref<1x8x8xf32, #tpu.memory_space<any>> -> memref<8x8xf32, #tpu.memory_space<any>>
    %c0_i32_48 = arith.constant 0 : i32
    %c0_i32_49 = arith.constant 0 : i32
    %87 = tpu.memref_slice %arg16[%c1_i32_44, %c0_i32_48, %c0_i32_49] : memref<2x8x8xf32, #tpu.memory_space<vmem>> -> memref<1x8x8xf32, #tpu.memory_space<vmem>>
    %88 = tpu.memref_squeeze %87 : memref<1x8x8xf32, #tpu.memory_space<vmem>> -> memref<8x8xf32, #tpu.memory_space<vmem>>
    %89 = tpu.memref_slice %arg17[%c1_i32_45] : memref<2x!tpu.dma_semaphore, #tpu.memory_space<semaphore_mem>> -> memref<1x!tpu.dma_semaphore, #tpu.memory_space<semaphore_mem>>
    %90 = tpu.memref_squeeze %89 : memref<1x!tpu.dma_semaphore, #tpu.memory_space<semaphore_mem>> -> memref<!tpu.dma_semaphore, #tpu.memory_space<semaphore_mem>>
    tpu.wait_dma2 semaphore(%90 : memref<!tpu.dma_semaphore, #tpu.memory_space<semaphore_mem>>) src(%86 : memref<8x8xf32, #tpu.memory_space<any>>) dst(%88 : memref<8x8xf32, #tpu.memory_space<vmem>>)
    %c2_i32 = arith.constant 2 : i32
    %c0_i32_50 = arith.constant 0 : i32
    %c0_i32_51 = arith.constant 0 : i32
    %c0_i32_52 = arith.constant 0 : i32
    %c0_i32_53 = arith.constant 0 : i32
    %91 = tpu.memref_slice %arg14[%c2_i32, %c0_i32_52, %c0_i32_53] : memref<8x8x8xf32, #tpu.memory_space<any>> -> memref<1x8x8xf32, #tpu.memory_space<any>>
    %92 = tpu.memref_squeeze %91 : memref<1x8x8xf32, #tpu.memory_space<any>> -> memref<8x8xf32, #tpu.memory_space<any>>
    %c0_i32_54 = arith.constant 0 : i32
    %c0_i32_55 = arith.constant 0 : i32
    %93 = tpu.memref_slice %arg16[%c0_i32_50, %c0_i32_54, %c0_i32_55] : memref<2x8x8xf32, #tpu.memory_space<vmem>> -> memref<1x8x8xf32, #tpu.memory_space<vmem>>
    %94 = tpu.memref_squeeze %93 : memref<1x8x8xf32, #tpu.memory_space<vmem>> -> memref<8x8xf32, #tpu.memory_space<vmem>>
    %95 = tpu.memref_slice %arg17[%c0_i32_51] : memref<2x!tpu.dma_semaphore, #tpu.memory_space<semaphore_mem>> -> memref<1x!tpu.dma_semaphore, #tpu.memory_space<semaphore_mem>>
    %96 = tpu.memref_squeeze %95 : memref<1x!tpu.dma_semaphore, #tpu.memory_space<semaphore_mem>> -> memref<!tpu.dma_semaphore, #tpu.memory_space<semaphore_mem>>
    tpu.enqueue_dma source(%92 : memref<8x8xf32, #tpu.memory_space<any>>) target(%94 : memref<8x8xf32, #tpu.memory_space<vmem>>) target_semaphore(%96 : memref<!tpu.dma_semaphore, #tpu.memory_space<semaphore_mem>>)
    %97 = vector.extract_strided_slice %49 {offsets = [0, 4], sizes = [8, 4], strides = [1, 1]} : vector<8x32xbf16> to vector<8x4xbf16>
    %98 = vector.extract_strided_slice %50 {offsets = [0, 4], sizes = [8, 4], strides = [1, 1]} : vector<8x32xbf16> to vector<8x4xbf16>
    %cst_56 = arith.constant dense<0.000000e+00> : vector<8x8xf32>
    %99 = tpu.matmul %97, %98, %cst_56 {dimension_numbers = #tpu.dot_dimension_numbers<[1], [1], [0], [0], [0, 0, 1, 0], [], []>} : vector<8x4xbf16>, vector<8x4xbf16>, vector<8x8xf32> -> vector<8x8xf32>
    %c1 = arith.constant 1 : index
    %c0_57 = arith.constant 0 : index
    %c0_58 = arith.constant 0 : index
    %100 = vector.load %arg16[%c1, %c0_57, %c0_58] : memref<2x8x8xf32, #tpu.memory_space<vmem>>, vector<1x8x8xf32>
    %101 = vector.shape_cast %100 : vector<1x8x8xf32> to vector<8x8xf32>
    %102 = arith.addf %99, %101 : vector<8x8xf32>
    %cst_59 = arith.constant dense<0xFF800000> : vector<8xf32>
    %103 = vector.multi_reduction <maximumf>, %102, %cst_59 [1] : vector<8x8xf32> to vector<8xf32>
    %104 = vector.shape_cast %103 : vector<8xf32> to vector<8x1xf32>
    %105 = vector.broadcast %104 : vector<8x1xf32> to vector<8x8xf32>
    %106 = arith.subf %102, %105 : vector<8x8xf32>
    %107 = math.exp %106 : vector<8x8xf32>
    %cst_60 = arith.constant dense<0.000000e+00> : vector<8xf32>
    %108 = vector.multi_reduction <add>, %107, %cst_60 [1] : vector<8x8xf32> to vector<8xf32>
    %109 = vector.shape_cast %108 : vector<8xf32> to vector<8x1xf32>
    %110 = tpu.reciprocal %109 {approx = true} : vector<8x1xf32> -> vector<8x1xf32>
    %111 = vector.broadcast %110 : vector<8x1xf32> to vector<8x8xf32>
    %112 = arith.mulf %107, %111 : vector<8x8xf32>
    %113 = vector.extract_strided_slice %51 {offsets = [0, 4], sizes = [8, 4], strides = [1, 1]} : vector<8x32xbf16> to vector<8x4xbf16>
    %114 = arith.truncf %112 : vector<8x8xf32> to vector<8x8xbf16>
    %cst_61 = arith.constant dense<0.000000e+00> : vector<8x4xf32>
    %115 = tpu.matmul %114, %113, %cst_61 {dimension_numbers = #tpu.dot_dimension_numbers<[1], [0], [0], [1], [0, 0, 1, 1], [], []>} : vector<8x8xbf16>, vector<8x4xbf16>, vector<8x4xf32> -> vector<8x4xf32>
    %116 = vector.extract_strided_slice %46 {offsets = [0, 4], sizes = [8, 4], strides = [1, 1]} : vector<8x32xf32> to vector<8x4xf32>
    %117 = arith.mulf %115, %116 : vector<8x4xf32>
    %c2_i32_62 = arith.constant 2 : i32
    %c0_i32_63 = arith.constant 0 : i32
    %c0_i32_64 = arith.constant 0 : i32
    %c0_i32_65 = arith.constant 0 : i32
    %c0_i32_66 = arith.constant 0 : i32
    %118 = tpu.memref_slice %arg14[%c2_i32_62, %c0_i32_65, %c0_i32_66] : memref<8x8x8xf32, #tpu.memory_space<any>> -> memref<1x8x8xf32, #tpu.memory_space<any>>
    %119 = tpu.memref_squeeze %118 : memref<1x8x8xf32, #tpu.memory_space<any>> -> memref<8x8xf32, #tpu.memory_space<any>>
    %c0_i32_67 = arith.constant 0 : i32
    %c0_i32_68 = arith.constant 0 : i32
    %120 = tpu.memref_slice %arg16[%c0_i32_63, %c0_i32_67, %c0_i32_68] : memref<2x8x8xf32, #tpu.memory_space<vmem>> -> memref<1x8x8xf32, #tpu.memory_space<vmem>>
    %121 = tpu.memref_squeeze %120 : memref<1x8x8xf32, #tpu.memory_space<vmem>> -> memref<8x8xf32, #tpu.memory_space<vmem>>
    %122 = tpu.memref_slice %arg17[%c0_i32_64] : memref<2x!tpu.dma_semaphore, #tpu.memory_space<semaphore_mem>> -> memref<1x!tpu.dma_semaphore, #tpu.memory_space<semaphore_mem>>
    %123 = tpu.memref_squeeze %122 : memref<1x!tpu.dma_semaphore, #tpu.memory_space<semaphore_mem>> -> memref<!tpu.dma_semaphore, #tpu.memory_space<semaphore_mem>>
    tpu.wait_dma2 semaphore(%123 : memref<!tpu.dma_semaphore, #tpu.memory_space<semaphore_mem>>) src(%119 : memref<8x8xf32, #tpu.memory_space<any>>) dst(%121 : memref<8x8xf32, #tpu.memory_space<vmem>>)
    %c3_i32 = arith.constant 3 : i32
    %c1_i32_69 = arith.constant 1 : i32
    %c1_i32_70 = arith.constant 1 : i32
    %c0_i32_71 = arith.constant 0 : i32
    %c0_i32_72 = arith.constant 0 : i32
    %124 = tpu.memref_slice %arg14[%c3_i32, %c0_i32_71, %c0_i32_72] : memref<8x8x8xf32, #tpu.memory_space<any>> -> memref<1x8x8xf32, #tpu.memory_space<any>>
    %125 = tpu.memref_squeeze %124 : memref<1x8x8xf32, #tpu.memory_space<any>> -> memref<8x8xf32, #tpu.memory_space<any>>
    %c0_i32_73 = arith.constant 0 : i32
    %c0_i32_74 = arith.constant 0 : i32
    %126 = tpu.memref_slice %arg16[%c1_i32_69, %c0_i32_73, %c0_i32_74] : memref<2x8x8xf32, #tpu.memory_space<vmem>> -> memref<1x8x8xf32, #tpu.memory_space<vmem>>
    %127 = tpu.memref_squeeze %126 : memref<1x8x8xf32, #tpu.memory_space<vmem>> -> memref<8x8xf32, #tpu.memory_space<vmem>>
    %128 = tpu.memref_slice %arg17[%c1_i32_70] : memref<2x!tpu.dma_semaphore, #tpu.memory_space<semaphore_mem>> -> memref<1x!tpu.dma_semaphore, #tpu.memory_space<semaphore_mem>>
    %129 = tpu.memref_squeeze %128 : memref<1x!tpu.dma_semaphore, #tpu.memory_space<semaphore_mem>> -> memref<!tpu.dma_semaphore, #tpu.memory_space<semaphore_mem>>
    tpu.enqueue_dma source(%125 : memref<8x8xf32, #tpu.memory_space<any>>) target(%127 : memref<8x8xf32, #tpu.memory_space<vmem>>) target_semaphore(%129 : memref<!tpu.dma_semaphore, #tpu.memory_space<semaphore_mem>>)
    %130 = vector.extract_strided_slice %49 {offsets = [0, 8], sizes = [8, 4], strides = [1, 1]} : vector<8x32xbf16> to vector<8x4xbf16>
    %131 = vector.extract_strided_slice %50 {offsets = [0, 8], sizes = [8, 4], strides = [1, 1]} : vector<8x32xbf16> to vector<8x4xbf16>
    %cst_75 = arith.constant dense<0.000000e+00> : vector<8x8xf32>
    %132 = tpu.matmul %130, %131, %cst_75 {dimension_numbers = #tpu.dot_dimension_numbers<[1], [1], [0], [0], [0, 0, 1, 0], [], []>} : vector<8x4xbf16>, vector<8x4xbf16>, vector<8x8xf32> -> vector<8x8xf32>
    %c0_76 = arith.constant 0 : index
    %c0_77 = arith.constant 0 : index
    %c0_78 = arith.constant 0 : index
    %133 = vector.load %arg16[%c0_76, %c0_77, %c0_78] : memref<2x8x8xf32, #tpu.memory_space<vmem>>, vector<1x8x8xf32>
    %134 = vector.shape_cast %133 : vector<1x8x8xf32> to vector<8x8xf32>
    %135 = arith.addf %132, %134 : vector<8x8xf32>
    %cst_79 = arith.constant dense<0xFF800000> : vector<8xf32>
    %136 = vector.multi_reduction <maximumf>, %135, %cst_79 [1] : vector<8x8xf32> to vector<8xf32>
    %137 = vector.shape_cast %136 : vector<8xf32> to vector<8x1xf32>
    %138 = vector.broadcast %137 : vector<8x1xf32> to vector<8x8xf32>
    %139 = arith.subf %135, %138 : vector<8x8xf32>
    %140 = math.exp %139 : vector<8x8xf32>
    %cst_80 = arith.constant dense<0.000000e+00> : vector<8xf32>
    %141 = vector.multi_reduction <add>, %140, %cst_80 [1] : vector<8x8xf32> to vector<8xf32>
    %142 = vector.shape_cast %141 : vector<8xf32> to vector<8x1xf32>
    %143 = tpu.reciprocal %142 {approx = true} : vector<8x1xf32> -> vector<8x1xf32>
    %144 = vector.broadcast %143 : vector<8x1xf32> to vector<8x8xf32>
    %145 = arith.mulf %140, %144 : vector<8x8xf32>
    %146 = vector.extract_strided_slice %51 {offsets = [0, 8], sizes = [8, 4], strides = [1, 1]} : vector<8x32xbf16> to vector<8x4xbf16>
    %147 = arith.truncf %145 : vector<8x8xf32> to vector<8x8xbf16>
    %cst_81 = arith.constant dense<0.000000e+00> : vector<8x4xf32>
    %148 = tpu.matmul %147, %146, %cst_81 {dimension_numbers = #tpu.dot_dimension_numbers<[1], [0], [0], [1], [0, 0, 1, 1], [], []>} : vector<8x8xbf16>, vector<8x4xbf16>, vector<8x4xf32> -> vector<8x4xf32>
    %149 = vector.extract_strided_slice %46 {offsets = [0, 8], sizes = [8, 4], strides = [1, 1]} : vector<8x32xf32> to vector<8x4xf32>
    %150 = arith.mulf %148, %149 : vector<8x4xf32>
    %c3_i32_82 = arith.constant 3 : i32
    %c1_i32_83 = arith.constant 1 : i32
    %c1_i32_84 = arith.constant 1 : i32
    %c0_i32_85 = arith.constant 0 : i32
    %c0_i32_86 = arith.constant 0 : i32
    %151 = tpu.memref_slice %arg14[%c3_i32_82, %c0_i32_85, %c0_i32_86] : memref<8x8x8xf32, #tpu.memory_space<any>> -> memref<1x8x8xf32, #tpu.memory_space<any>>
    %152 = tpu.memref_squeeze %151 : memref<1x8x8xf32, #tpu.memory_space<any>> -> memref<8x8xf32, #tpu.memory_space<any>>
    %c0_i32_87 = arith.constant 0 : i32
    %c0_i32_88 = arith.constant 0 : i32
    %153 = tpu.memref_slice %arg16[%c1_i32_83, %c0_i32_87, %c0_i32_88] : memref<2x8x8xf32, #tpu.memory_space<vmem>> -> memref<1x8x8xf32, #tpu.memory_space<vmem>>
    %154 = tpu.memref_squeeze %153 : memref<1x8x8xf32, #tpu.memory_space<vmem>> -> memref<8x8xf32, #tpu.memory_space<vmem>>
    %155 = tpu.memref_slice %arg17[%c1_i32_84] : memref<2x!tpu.dma_semaphore, #tpu.memory_space<semaphore_mem>> -> memref<1x!tpu.dma_semaphore, #tpu.memory_space<semaphore_mem>>
    %156 = tpu.memref_squeeze %155 : memref<1x!tpu.dma_semaphore, #tpu.memory_space<semaphore_mem>> -> memref<!tpu.dma_semaphore, #tpu.memory_space<semaphore_mem>>
    tpu.wait_dma2 semaphore(%156 : memref<!tpu.dma_semaphore, #tpu.memory_space<semaphore_mem>>) src(%152 : memref<8x8xf32, #tpu.memory_space<any>>) dst(%154 : memref<8x8xf32, #tpu.memory_space<vmem>>)
    %c4_i32 = arith.constant 4 : i32
    %c0_i32_89 = arith.constant 0 : i32
    %c0_i32_90 = arith.constant 0 : i32
    %c0_i32_91 = arith.constant 0 : i32
    %c0_i32_92 = arith.constant 0 : i32
    %157 = tpu.memref_slice %arg14[%c4_i32, %c0_i32_91, %c0_i32_92] : memref<8x8x8xf32, #tpu.memory_space<any>> -> memref<1x8x8xf32, #tpu.memory_space<any>>
    %158 = tpu.memref_squeeze %157 : memref<1x8x8xf32, #tpu.memory_space<any>> -> memref<8x8xf32, #tpu.memory_space<any>>
    %c0_i32_93 = arith.constant 0 : i32
    %c0_i32_94 = arith.constant 0 : i32
    %159 = tpu.memref_slice %arg16[%c0_i32_89, %c0_i32_93, %c0_i32_94] : memref<2x8x8xf32, #tpu.memory_space<vmem>> -> memref<1x8x8xf32, #tpu.memory_space<vmem>>
    %160 = tpu.memref_squeeze %159 : memref<1x8x8xf32, #tpu.memory_space<vmem>> -> memref<8x8xf32, #tpu.memory_space<vmem>>
    %161 = tpu.memref_slice %arg17[%c0_i32_90] : memref<2x!tpu.dma_semaphore, #tpu.memory_space<semaphore_mem>> -> memref<1x!tpu.dma_semaphore, #tpu.memory_space<semaphore_mem>>
    %162 = tpu.memref_squeeze %161 : memref<1x!tpu.dma_semaphore, #tpu.memory_space<semaphore_mem>> -> memref<!tpu.dma_semaphore, #tpu.memory_space<semaphore_mem>>
    tpu.enqueue_dma source(%158 : memref<8x8xf32, #tpu.memory_space<any>>) target(%160 : memref<8x8xf32, #tpu.memory_space<vmem>>) target_semaphore(%162 : memref<!tpu.dma_semaphore, #tpu.memory_space<semaphore_mem>>)
    %163 = vector.extract_strided_slice %49 {offsets = [0, 12], sizes = [8, 4], strides = [1, 1]} : vector<8x32xbf16> to vector<8x4xbf16>
    %164 = vector.extract_strided_slice %50 {offsets = [0, 12], sizes = [8, 4], strides = [1, 1]} : vector<8x32xbf16> to vector<8x4xbf16>
    %cst_95 = arith.constant dense<0.000000e+00> : vector<8x8xf32>
    %165 = tpu.matmul %163, %164, %cst_95 {dimension_numbers = #tpu.dot_dimension_numbers<[1], [1], [0], [0], [0, 0, 1, 0], [], []>} : vector<8x4xbf16>, vector<8x4xbf16>, vector<8x8xf32> -> vector<8x8xf32>
    %c1_96 = arith.constant 1 : index
    %c0_97 = arith.constant 0 : index
    %c0_98 = arith.constant 0 : index
    %166 = vector.load %arg16[%c1_96, %c0_97, %c0_98] : memref<2x8x8xf32, #tpu.memory_space<vmem>>, vector<1x8x8xf32>
    %167 = vector.shape_cast %166 : vector<1x8x8xf32> to vector<8x8xf32>
    %168 = arith.addf %165, %167 : vector<8x8xf32>
    %cst_99 = arith.constant dense<0xFF800000> : vector<8xf32>
    %169 = vector.multi_reduction <maximumf>, %168, %cst_99 [1] : vector<8x8xf32> to vector<8xf32>
    %170 = vector.shape_cast %169 : vector<8xf32> to vector<8x1xf32>
    %171 = vector.broadcast %170 : vector<8x1xf32> to vector<8x8xf32>
    %172 = arith.subf %168, %171 : vector<8x8xf32>
    %173 = math.exp %172 : vector<8x8xf32>
    %cst_100 = arith.constant dense<0.000000e+00> : vector<8xf32>
    %174 = vector.multi_reduction <add>, %173, %cst_100 [1] : vector<8x8xf32> to vector<8xf32>
    %175 = vector.shape_cast %174 : vector<8xf32> to vector<8x1xf32>
    %176 = tpu.reciprocal %175 {approx = true} : vector<8x1xf32> -> vector<8x1xf32>
    %177 = vector.broadcast %176 : vector<8x1xf32> to vector<8x8xf32>
    %178 = arith.mulf %173, %177 : vector<8x8xf32>
    %179 = vector.extract_strided_slice %51 {offsets = [0, 12], sizes = [8, 4], strides = [1, 1]} : vector<8x32xbf16> to vector<8x4xbf16>
    %180 = arith.truncf %178 : vector<8x8xf32> to vector<8x8xbf16>
    %cst_101 = arith.constant dense<0.000000e+00> : vector<8x4xf32>
    %181 = tpu.matmul %180, %179, %cst_101 {dimension_numbers = #tpu.dot_dimension_numbers<[1], [0], [0], [1], [0, 0, 1, 1], [], []>} : vector<8x8xbf16>, vector<8x4xbf16>, vector<8x4xf32> -> vector<8x4xf32>
    %182 = vector.extract_strided_slice %46 {offsets = [0, 12], sizes = [8, 4], strides = [1, 1]} : vector<8x32xf32> to vector<8x4xf32>
    %183 = arith.mulf %181, %182 : vector<8x4xf32>
    %c4_i32_102 = arith.constant 4 : i32
    %c0_i32_103 = arith.constant 0 : i32
    %c0_i32_104 = arith.constant 0 : i32
    %c0_i32_105 = arith.constant 0 : i32
    %c0_i32_106 = arith.constant 0 : i32
    %184 = tpu.memref_slice %arg14[%c4_i32_102, %c0_i32_105, %c0_i32_106] : memref<8x8x8xf32, #tpu.memory_space<any>> -> memref<1x8x8xf32, #tpu.memory_space<any>>
    %185 = tpu.memref_squeeze %184 : memref<1x8x8xf32, #tpu.memory_space<any>> -> memref<8x8xf32, #tpu.memory_space<any>>
    %c0_i32_107 = arith.constant 0 : i32
    %c0_i32_108 = arith.constant 0 : i32
    %186 = tpu.memref_slice %arg16[%c0_i32_103, %c0_i32_107, %c0_i32_108] : memref<2x8x8xf32, #tpu.memory_space<vmem>> -> memref<1x8x8xf32, #tpu.memory_space<vmem>>
    %187 = tpu.memref_squeeze %186 : memref<1x8x8xf32, #tpu.memory_space<vmem>> -> memref<8x8xf32, #tpu.memory_space<vmem>>
    %188 = tpu.memref_slice %arg17[%c0_i32_104] : memref<2x!tpu.dma_semaphore, #tpu.memory_space<semaphore_mem>> -> memref<1x!tpu.dma_semaphore, #tpu.memory_space<semaphore_mem>>
    %189 = tpu.memref_squeeze %188 : memref<1x!tpu.dma_semaphore, #tpu.memory_space<semaphore_mem>> -> memref<!tpu.dma_semaphore, #tpu.memory_space<semaphore_mem>>
    tpu.wait_dma2 semaphore(%189 : memref<!tpu.dma_semaphore, #tpu.memory_space<semaphore_mem>>) src(%185 : memref<8x8xf32, #tpu.memory_space<any>>) dst(%187 : memref<8x8xf32, #tpu.memory_space<vmem>>)
    %c5_i32 = arith.constant 5 : i32
    %c1_i32_109 = arith.constant 1 : i32
    %c1_i32_110 = arith.constant 1 : i32
    %c0_i32_111 = arith.constant 0 : i32
    %c0_i32_112 = arith.constant 0 : i32
    %190 = tpu.memref_slice %arg14[%c5_i32, %c0_i32_111, %c0_i32_112] : memref<8x8x8xf32, #tpu.memory_space<any>> -> memref<1x8x8xf32, #tpu.memory_space<any>>
    %191 = tpu.memref_squeeze %190 : memref<1x8x8xf32, #tpu.memory_space<any>> -> memref<8x8xf32, #tpu.memory_space<any>>
    %c0_i32_113 = arith.constant 0 : i32
    %c0_i32_114 = arith.constant 0 : i32
    %192 = tpu.memref_slice %arg16[%c1_i32_109, %c0_i32_113, %c0_i32_114] : memref<2x8x8xf32, #tpu.memory_space<vmem>> -> memref<1x8x8xf32, #tpu.memory_space<vmem>>
    %193 = tpu.memref_squeeze %192 : memref<1x8x8xf32, #tpu.memory_space<vmem>> -> memref<8x8xf32, #tpu.memory_space<vmem>>
    %194 = tpu.memref_slice %arg17[%c1_i32_110] : memref<2x!tpu.dma_semaphore, #tpu.memory_space<semaphore_mem>> -> memref<1x!tpu.dma_semaphore, #tpu.memory_space<semaphore_mem>>
    %195 = tpu.memref_squeeze %194 : memref<1x!tpu.dma_semaphore, #tpu.memory_space<semaphore_mem>> -> memref<!tpu.dma_semaphore, #tpu.memory_space<semaphore_mem>>
    tpu.enqueue_dma source(%191 : memref<8x8xf32, #tpu.memory_space<any>>) target(%193 : memref<8x8xf32, #tpu.memory_space<vmem>>) target_semaphore(%195 : memref<!tpu.dma_semaphore, #tpu.memory_space<semaphore_mem>>)
    %196 = vector.extract_strided_slice %49 {offsets = [0, 16], sizes = [8, 4], strides = [1, 1]} : vector<8x32xbf16> to vector<8x4xbf16>
    %197 = vector.extract_strided_slice %50 {offsets = [0, 16], sizes = [8, 4], strides = [1, 1]} : vector<8x32xbf16> to vector<8x4xbf16>
    %cst_115 = arith.constant dense<0.000000e+00> : vector<8x8xf32>
    %198 = tpu.matmul %196, %197, %cst_115 {dimension_numbers = #tpu.dot_dimension_numbers<[1], [1], [0], [0], [0, 0, 1, 0], [], []>} : vector<8x4xbf16>, vector<8x4xbf16>, vector<8x8xf32> -> vector<8x8xf32>
    %c0_116 = arith.constant 0 : index
    %c0_117 = arith.constant 0 : index
    %c0_118 = arith.constant 0 : index
    %199 = vector.load %arg16[%c0_116, %c0_117, %c0_118] : memref<2x8x8xf32, #tpu.memory_space<vmem>>, vector<1x8x8xf32>
    %200 = vector.shape_cast %199 : vector<1x8x8xf32> to vector<8x8xf32>
    %201 = arith.addf %198, %200 : vector<8x8xf32>
    %cst_119 = arith.constant dense<0xFF800000> : vector<8xf32>
    %202 = vector.multi_reduction <maximumf>, %201, %cst_119 [1] : vector<8x8xf32> to vector<8xf32>
    %203 = vector.shape_cast %202 : vector<8xf32> to vector<8x1xf32>
    %204 = vector.broadcast %203 : vector<8x1xf32> to vector<8x8xf32>
    %205 = arith.subf %201, %204 : vector<8x8xf32>
    %206 = math.exp %205 : vector<8x8xf32>
    %cst_120 = arith.constant dense<0.000000e+00> : vector<8xf32>
    %207 = vector.multi_reduction <add>, %206, %cst_120 [1] : vector<8x8xf32> to vector<8xf32>
    %208 = vector.shape_cast %207 : vector<8xf32> to vector<8x1xf32>
    %209 = tpu.reciprocal %208 {approx = true} : vector<8x1xf32> -> vector<8x1xf32>
    %210 = vector.broadcast %209 : vector<8x1xf32> to vector<8x8xf32>
    %211 = arith.mulf %206, %210 : vector<8x8xf32>
    %212 = vector.extract_strided_slice %51 {offsets = [0, 16], sizes = [8, 4], strides = [1, 1]} : vector<8x32xbf16> to vector<8x4xbf16>
    %213 = arith.truncf %211 : vector<8x8xf32> to vector<8x8xbf16>
    %cst_121 = arith.constant dense<0.000000e+00> : vector<8x4xf32>
    %214 = tpu.matmul %213, %212, %cst_121 {dimension_numbers = #tpu.dot_dimension_numbers<[1], [0], [0], [1], [0, 0, 1, 1], [], []>} : vector<8x8xbf16>, vector<8x4xbf16>, vector<8x4xf32> -> vector<8x4xf32>
    %215 = vector.extract_strided_slice %46 {offsets = [0, 16], sizes = [8, 4], strides = [1, 1]} : vector<8x32xf32> to vector<8x4xf32>
    %216 = arith.mulf %214, %215 : vector<8x4xf32>
    %c5_i32_122 = arith.constant 5 : i32
    %c1_i32_123 = arith.constant 1 : i32
    %c1_i32_124 = arith.constant 1 : i32
    %c0_i32_125 = arith.constant 0 : i32
    %c0_i32_126 = arith.constant 0 : i32
    %217 = tpu.memref_slice %arg14[%c5_i32_122, %c0_i32_125, %c0_i32_126] : memref<8x8x8xf32, #tpu.memory_space<any>> -> memref<1x8x8xf32, #tpu.memory_space<any>>
    %218 = tpu.memref_squeeze %217 : memref<1x8x8xf32, #tpu.memory_space<any>> -> memref<8x8xf32, #tpu.memory_space<any>>
    %c0_i32_127 = arith.constant 0 : i32
    %c0_i32_128 = arith.constant 0 : i32
    %219 = tpu.memref_slice %arg16[%c1_i32_123, %c0_i32_127, %c0_i32_128] : memref<2x8x8xf32, #tpu.memory_space<vmem>> -> memref<1x8x8xf32, #tpu.memory_space<vmem>>
    %220 = tpu.memref_squeeze %219 : memref<1x8x8xf32, #tpu.memory_space<vmem>> -> memref<8x8xf32, #tpu.memory_space<vmem>>
    %221 = tpu.memref_slice %arg17[%c1_i32_124] : memref<2x!tpu.dma_semaphore, #tpu.memory_space<semaphore_mem>> -> memref<1x!tpu.dma_semaphore, #tpu.memory_space<semaphore_mem>>
    %222 = tpu.memref_squeeze %221 : memref<1x!tpu.dma_semaphore, #tpu.memory_space<semaphore_mem>> -> memref<!tpu.dma_semaphore, #tpu.memory_space<semaphore_mem>>
    tpu.wait_dma2 semaphore(%222 : memref<!tpu.dma_semaphore, #tpu.memory_space<semaphore_mem>>) src(%218 : memref<8x8xf32, #tpu.memory_space<any>>) dst(%220 : memref<8x8xf32, #tpu.memory_space<vmem>>)
    %c6_i32 = arith.constant 6 : i32
    %c0_i32_129 = arith.constant 0 : i32
    %c0_i32_130 = arith.constant 0 : i32
    %c0_i32_131 = arith.constant 0 : i32
    %c0_i32_132 = arith.constant 0 : i32
    %223 = tpu.memref_slice %arg14[%c6_i32, %c0_i32_131, %c0_i32_132] : memref<8x8x8xf32, #tpu.memory_space<any>> -> memref<1x8x8xf32, #tpu.memory_space<any>>
    %224 = tpu.memref_squeeze %223 : memref<1x8x8xf32, #tpu.memory_space<any>> -> memref<8x8xf32, #tpu.memory_space<any>>
    %c0_i32_133 = arith.constant 0 : i32
    %c0_i32_134 = arith.constant 0 : i32
    %225 = tpu.memref_slice %arg16[%c0_i32_129, %c0_i32_133, %c0_i32_134] : memref<2x8x8xf32, #tpu.memory_space<vmem>> -> memref<1x8x8xf32, #tpu.memory_space<vmem>>
    %226 = tpu.memref_squeeze %225 : memref<1x8x8xf32, #tpu.memory_space<vmem>> -> memref<8x8xf32, #tpu.memory_space<vmem>>
    %227 = tpu.memref_slice %arg17[%c0_i32_130] : memref<2x!tpu.dma_semaphore, #tpu.memory_space<semaphore_mem>> -> memref<1x!tpu.dma_semaphore, #tpu.memory_space<semaphore_mem>>
    %228 = tpu.memref_squeeze %227 : memref<1x!tpu.dma_semaphore, #tpu.memory_space<semaphore_mem>> -> memref<!tpu.dma_semaphore, #tpu.memory_space<semaphore_mem>>
    tpu.enqueue_dma source(%224 : memref<8x8xf32, #tpu.memory_space<any>>) target(%226 : memref<8x8xf32, #tpu.memory_space<vmem>>) target_semaphore(%228 : memref<!tpu.dma_semaphore, #tpu.memory_space<semaphore_mem>>)
    %229 = vector.extract_strided_slice %49 {offsets = [0, 20], sizes = [8, 4], strides = [1, 1]} : vector<8x32xbf16> to vector<8x4xbf16>
    %230 = vector.extract_strided_slice %50 {offsets = [0, 20], sizes = [8, 4], strides = [1, 1]} : vector<8x32xbf16> to vector<8x4xbf16>
    %cst_135 = arith.constant dense<0.000000e+00> : vector<8x8xf32>
    %231 = tpu.matmul %229, %230, %cst_135 {dimension_numbers = #tpu.dot_dimension_numbers<[1], [1], [0], [0], [0, 0, 1, 0], [], []>} : vector<8x4xbf16>, vector<8x4xbf16>, vector<8x8xf32> -> vector<8x8xf32>
    %c1_136 = arith.constant 1 : index
    %c0_137 = arith.constant 0 : index
    %c0_138 = arith.constant 0 : index
    %232 = vector.load %arg16[%c1_136, %c0_137, %c0_138] : memref<2x8x8xf32, #tpu.memory_space<vmem>>, vector<1x8x8xf32>
    %233 = vector.shape_cast %232 : vector<1x8x8xf32> to vector<8x8xf32>
    %234 = arith.addf %231, %233 : vector<8x8xf32>
    %cst_139 = arith.constant dense<0xFF800000> : vector<8xf32>
    %235 = vector.multi_reduction <maximumf>, %234, %cst_139 [1] : vector<8x8xf32> to vector<8xf32>
    %236 = vector.shape_cast %235 : vector<8xf32> to vector<8x1xf32>
    %237 = vector.broadcast %236 : vector<8x1xf32> to vector<8x8xf32>
    %238 = arith.subf %234, %237 : vector<8x8xf32>
    %239 = math.exp %238 : vector<8x8xf32>
    %cst_140 = arith.constant dense<0.000000e+00> : vector<8xf32>
    %240 = vector.multi_reduction <add>, %239, %cst_140 [1] : vector<8x8xf32> to vector<8xf32>
    %241 = vector.shape_cast %240 : vector<8xf32> to vector<8x1xf32>
    %242 = tpu.reciprocal %241 {approx = true} : vector<8x1xf32> -> vector<8x1xf32>
    %243 = vector.broadcast %242 : vector<8x1xf32> to vector<8x8xf32>
    %244 = arith.mulf %239, %243 : vector<8x8xf32>
    %245 = vector.extract_strided_slice %51 {offsets = [0, 20], sizes = [8, 4], strides = [1, 1]} : vector<8x32xbf16> to vector<8x4xbf16>
    %246 = arith.truncf %244 : vector<8x8xf32> to vector<8x8xbf16>
    %cst_141 = arith.constant dense<0.000000e+00> : vector<8x4xf32>
    %247 = tpu.matmul %246, %245, %cst_141 {dimension_numbers = #tpu.dot_dimension_numbers<[1], [0], [0], [1], [0, 0, 1, 1], [], []>} : vector<8x8xbf16>, vector<8x4xbf16>, vector<8x4xf32> -> vector<8x4xf32>
    %248 = vector.extract_strided_slice %46 {offsets = [0, 20], sizes = [8, 4], strides = [1, 1]} : vector<8x32xf32> to vector<8x4xf32>
    %249 = arith.mulf %247, %248 : vector<8x4xf32>
    %c6_i32_142 = arith.constant 6 : i32
    %c0_i32_143 = arith.constant 0 : i32
    %c0_i32_144 = arith.constant 0 : i32
    %c0_i32_145 = arith.constant 0 : i32
    %c0_i32_146 = arith.constant 0 : i32
    %250 = tpu.memref_slice %arg14[%c6_i32_142, %c0_i32_145, %c0_i32_146] : memref<8x8x8xf32, #tpu.memory_space<any>> -> memref<1x8x8xf32, #tpu.memory_space<any>>
    %251 = tpu.memref_squeeze %250 : memref<1x8x8xf32, #tpu.memory_space<any>> -> memref<8x8xf32, #tpu.memory_space<any>>
    %c0_i32_147 = arith.constant 0 : i32
    %c0_i32_148 = arith.constant 0 : i32
    %252 = tpu.memref_slice %arg16[%c0_i32_143, %c0_i32_147, %c0_i32_148] : memref<2x8x8xf32, #tpu.memory_space<vmem>> -> memref<1x8x8xf32, #tpu.memory_space<vmem>>
    %253 = tpu.memref_squeeze %252 : memref<1x8x8xf32, #tpu.memory_space<vmem>> -> memref<8x8xf32, #tpu.memory_space<vmem>>
    %254 = tpu.memref_slice %arg17[%c0_i32_144] : memref<2x!tpu.dma_semaphore, #tpu.memory_space<semaphore_mem>> -> memref<1x!tpu.dma_semaphore, #tpu.memory_space<semaphore_mem>>
    %255 = tpu.memref_squeeze %254 : memref<1x!tpu.dma_semaphore, #tpu.memory_space<semaphore_mem>> -> memref<!tpu.dma_semaphore, #tpu.memory_space<semaphore_mem>>
    tpu.wait_dma2 semaphore(%255 : memref<!tpu.dma_semaphore, #tpu.memory_space<semaphore_mem>>) src(%251 : memref<8x8xf32, #tpu.memory_space<any>>) dst(%253 : memref<8x8xf32, #tpu.memory_space<vmem>>)
    %c7_i32 = arith.constant 7 : i32
    %c1_i32_149 = arith.constant 1 : i32
    %c1_i32_150 = arith.constant 1 : i32
    %c0_i32_151 = arith.constant 0 : i32
    %c0_i32_152 = arith.constant 0 : i32
    %256 = tpu.memref_slice %arg14[%c7_i32, %c0_i32_151, %c0_i32_152] : memref<8x8x8xf32, #tpu.memory_space<any>> -> memref<1x8x8xf32, #tpu.memory_space<any>>
    %257 = tpu.memref_squeeze %256 : memref<1x8x8xf32, #tpu.memory_space<any>> -> memref<8x8xf32, #tpu.memory_space<any>>
    %c0_i32_153 = arith.constant 0 : i32
    %c0_i32_154 = arith.constant 0 : i32
    %258 = tpu.memref_slice %arg16[%c1_i32_149, %c0_i32_153, %c0_i32_154] : memref<2x8x8xf32, #tpu.memory_space<vmem>> -> memref<1x8x8xf32, #tpu.memory_space<vmem>>
    %259 = tpu.memref_squeeze %258 : memref<1x8x8xf32, #tpu.memory_space<vmem>> -> memref<8x8xf32, #tpu.memory_space<vmem>>
    %260 = tpu.memref_slice %arg17[%c1_i32_150] : memref<2x!tpu.dma_semaphore, #tpu.memory_space<semaphore_mem>> -> memref<1x!tpu.dma_semaphore, #tpu.memory_space<semaphore_mem>>
    %261 = tpu.memref_squeeze %260 : memref<1x!tpu.dma_semaphore, #tpu.memory_space<semaphore_mem>> -> memref<!tpu.dma_semaphore, #tpu.memory_space<semaphore_mem>>
    tpu.enqueue_dma source(%257 : memref<8x8xf32, #tpu.memory_space<any>>) target(%259 : memref<8x8xf32, #tpu.memory_space<vmem>>) target_semaphore(%261 : memref<!tpu.dma_semaphore, #tpu.memory_space<semaphore_mem>>)
    %262 = vector.extract_strided_slice %49 {offsets = [0, 24], sizes = [8, 4], strides = [1, 1]} : vector<8x32xbf16> to vector<8x4xbf16>
    %263 = vector.extract_strided_slice %50 {offsets = [0, 24], sizes = [8, 4], strides = [1, 1]} : vector<8x32xbf16> to vector<8x4xbf16>
    %cst_155 = arith.constant dense<0.000000e+00> : vector<8x8xf32>
    %264 = tpu.matmul %262, %263, %cst_155 {dimension_numbers = #tpu.dot_dimension_numbers<[1], [1], [0], [0], [0, 0, 1, 0], [], []>} : vector<8x4xbf16>, vector<8x4xbf16>, vector<8x8xf32> -> vector<8x8xf32>
    %c0_156 = arith.constant 0 : index
    %c0_157 = arith.constant 0 : index
    %c0_158 = arith.constant 0 : index
    %265 = vector.load %arg16[%c0_156, %c0_157, %c0_158] : memref<2x8x8xf32, #tpu.memory_space<vmem>>, vector<1x8x8xf32>
    %266 = vector.shape_cast %265 : vector<1x8x8xf32> to vector<8x8xf32>
    %267 = arith.addf %264, %266 : vector<8x8xf32>
    %cst_159 = arith.constant dense<0xFF800000> : vector<8xf32>
    %268 = vector.multi_reduction <maximumf>, %267, %cst_159 [1] : vector<8x8xf32> to vector<8xf32>
    %269 = vector.shape_cast %268 : vector<8xf32> to vector<8x1xf32>
    %270 = vector.broadcast %269 : vector<8x1xf32> to vector<8x8xf32>
    %271 = arith.subf %267, %270 : vector<8x8xf32>
    %272 = math.exp %271 : vector<8x8xf32>
    %cst_160 = arith.constant dense<0.000000e+00> : vector<8xf32>
    %273 = vector.multi_reduction <add>, %272, %cst_160 [1] : vector<8x8xf32> to vector<8xf32>
    %274 = vector.shape_cast %273 : vector<8xf32> to vector<8x1xf32>
    %275 = tpu.reciprocal %274 {approx = true} : vector<8x1xf32> -> vector<8x1xf32>
    %276 = vector.broadcast %275 : vector<8x1xf32> to vector<8x8xf32>
    %277 = arith.mulf %272, %276 : vector<8x8xf32>
    %278 = vector.extract_strided_slice %51 {offsets = [0, 24], sizes = [8, 4], strides = [1, 1]} : vector<8x32xbf16> to vector<8x4xbf16>
    %279 = arith.truncf %277 : vector<8x8xf32> to vector<8x8xbf16>
    %cst_161 = arith.constant dense<0.000000e+00> : vector<8x4xf32>
    %280 = tpu.matmul %279, %278, %cst_161 {dimension_numbers = #tpu.dot_dimension_numbers<[1], [0], [0], [1], [0, 0, 1, 1], [], []>} : vector<8x8xbf16>, vector<8x4xbf16>, vector<8x4xf32> -> vector<8x4xf32>
    %281 = vector.extract_strided_slice %46 {offsets = [0, 24], sizes = [8, 4], strides = [1, 1]} : vector<8x32xf32> to vector<8x4xf32>
    %282 = arith.mulf %280, %281 : vector<8x4xf32>
    %c7_i32_162 = arith.constant 7 : i32
    %c1_i32_163 = arith.constant 1 : i32
    %c1_i32_164 = arith.constant 1 : i32
    %c0_i32_165 = arith.constant 0 : i32
    %c0_i32_166 = arith.constant 0 : i32
    %283 = tpu.memref_slice %arg14[%c7_i32_162, %c0_i32_165, %c0_i32_166] : memref<8x8x8xf32, #tpu.memory_space<any>> -> memref<1x8x8xf32, #tpu.memory_space<any>>
    %284 = tpu.memref_squeeze %283 : memref<1x8x8xf32, #tpu.memory_space<any>> -> memref<8x8xf32, #tpu.memory_space<any>>
    %c0_i32_167 = arith.constant 0 : i32
    %c0_i32_168 = arith.constant 0 : i32
    %285 = tpu.memref_slice %arg16[%c1_i32_163, %c0_i32_167, %c0_i32_168] : memref<2x8x8xf32, #tpu.memory_space<vmem>> -> memref<1x8x8xf32, #tpu.memory_space<vmem>>
    %286 = tpu.memref_squeeze %285 : memref<1x8x8xf32, #tpu.memory_space<vmem>> -> memref<8x8xf32, #tpu.memory_space<vmem>>
    %287 = tpu.memref_slice %arg17[%c1_i32_164] : memref<2x!tpu.dma_semaphore, #tpu.memory_space<semaphore_mem>> -> memref<1x!tpu.dma_semaphore, #tpu.memory_space<semaphore_mem>>
    %288 = tpu.memref_squeeze %287 : memref<1x!tpu.dma_semaphore, #tpu.memory_space<semaphore_mem>> -> memref<!tpu.dma_semaphore, #tpu.memory_space<semaphore_mem>>
    tpu.wait_dma2 semaphore(%288 : memref<!tpu.dma_semaphore, #tpu.memory_space<semaphore_mem>>) src(%284 : memref<8x8xf32, #tpu.memory_space<any>>) dst(%286 : memref<8x8xf32, #tpu.memory_space<vmem>>)
    %289 = vector.extract_strided_slice %49 {offsets = [0, 28], sizes = [8, 4], strides = [1, 1]} : vector<8x32xbf16> to vector<8x4xbf16>
    %290 = vector.extract_strided_slice %50 {offsets = [0, 28], sizes = [8, 4], strides = [1, 1]} : vector<8x32xbf16> to vector<8x4xbf16>
    %cst_169 = arith.constant dense<0.000000e+00> : vector<8x8xf32>
    %291 = tpu.matmul %289, %290, %cst_169 {dimension_numbers = #tpu.dot_dimension_numbers<[1], [1], [0], [0], [0, 0, 1, 0], [], []>} : vector<8x4xbf16>, vector<8x4xbf16>, vector<8x8xf32> -> vector<8x8xf32>
    %c1_170 = arith.constant 1 : index
    %c0_171 = arith.constant 0 : index
    %c0_172 = arith.constant 0 : index
    %292 = vector.load %arg16[%c1_170, %c0_171, %c0_172] : memref<2x8x8xf32, #tpu.memory_space<vmem>>, vector<1x8x8xf32>
    %293 = vector.shape_cast %292 : vector<1x8x8xf32> to vector<8x8xf32>
    %294 = arith.addf %291, %293 : vector<8x8xf32>
    %cst_173 = arith.constant dense<0xFF800000> : vector<8xf32>
    %295 = vector.multi_reduction <maximumf>, %294, %cst_173 [1] : vector<8x8xf32> to vector<8xf32>
    %296 = vector.shape_cast %295 : vector<8xf32> to vector<8x1xf32>
    %297 = vector.broadcast %296 : vector<8x1xf32> to vector<8x8xf32>
    %298 = arith.subf %294, %297 : vector<8x8xf32>
    %299 = math.exp %298 : vector<8x8xf32>
    %cst_174 = arith.constant dense<0.000000e+00> : vector<8xf32>
    %300 = vector.multi_reduction <add>, %299, %cst_174 [1] : vector<8x8xf32> to vector<8xf32>
    %301 = vector.shape_cast %300 : vector<8xf32> to vector<8x1xf32>
    %302 = tpu.reciprocal %301 {approx = true} : vector<8x1xf32> -> vector<8x1xf32>
    %303 = vector.broadcast %302 : vector<8x1xf32> to vector<8x8xf32>
    %304 = arith.mulf %299, %303 : vector<8x8xf32>
    %305 = vector.extract_strided_slice %51 {offsets = [0, 28], sizes = [8, 4], strides = [1, 1]} : vector<8x32xbf16> to vector<8x4xbf16>
    %306 = arith.truncf %304 : vector<8x8xf32> to vector<8x8xbf16>
    %cst_175 = arith.constant dense<0.000000e+00> : vector<8x4xf32>
    %307 = tpu.matmul %306, %305, %cst_175 {dimension_numbers = #tpu.dot_dimension_numbers<[1], [0], [0], [1], [0, 0, 1, 1], [], []>} : vector<8x8xbf16>, vector<8x4xbf16>, vector<8x4xf32> -> vector<8x4xf32>
    %308 = vector.extract_strided_slice %46 {offsets = [0, 28], sizes = [8, 4], strides = [1, 1]} : vector<8x32xf32> to vector<8x4xf32>
    %309 = arith.mulf %307, %308 : vector<8x4xf32>
    %310 = tpu.concatenate %84, %117, %150, %183, %216, %249, %282, %309 in 1 : vector<8x4xf32>, vector<8x4xf32>, vector<8x4xf32>, vector<8x4xf32>, vector<8x4xf32>, vector<8x4xf32>, vector<8x4xf32>, vector<8x4xf32> -> vector<8x32xf32>
    %c0_176 = arith.constant 0 : index
    %c0_177 = arith.constant 0 : index
    %311 = vector.load %arg12[%c0_176, %c0_177] : memref<32x32xbf16, #tpu.memory_space<vmem>>, vector<32x32xbf16>
    %312 = arith.truncf %310 : vector<8x32xf32> to vector<8x32xbf16>
    %cst_178 = arith.constant dense<0.000000e+00> : vector<8x32xf32>
    %313 = tpu.matmul %312, %311, %cst_178 {dimension_numbers = #tpu.dot_dimension_numbers<[1], [0], [0], [1], [0, 0, 1, 1], [], []>} : vector<8x32xbf16>, vector<32x32xbf16>, vector<8x32xf32> -> vector<8x32xf32>
    %c0_179 = arith.constant 0 : index
    %c0_180 = arith.constant 0 : index
    %314 = vector.load %arg13[%c0_179, %c0_180] : memref<1x32xf32, #tpu.memory_space<vmem>>, vector<1x32xf32>
    %315 = vector.broadcast %314 : vector<1x32xf32> to vector<8x32xf32>
    %316 = arith.addf %313, %315 : vector<8x32xf32>
    %317 = tpu.iota {dimensions = array<i32: 0>} : vector<8x32xi32>
    %c1_i32_181 = arith.constant 1 : i32
    %318 = vector.broadcast %c1_i32_181 : i32 to vector<8x32xi32>
    %319 = arith.cmpi sge, %317, %318 : vector<8x32xi32>
    %c1_i32_182 = arith.constant 1 : i32
    %320 = tpu.dynamic_rotate %1 by %c1_i32_182 dim 0 : vector<8x32xf32>, i32 -> vector<8x32xf32>
    %cst_183 = arith.constant 0.000000e+00 : f32
    %321 = vector.broadcast %cst_183 : f32 to vector<8x32xf32>
    %322 = arith.select %319, %320, %321 : vector<8x32xi1>, vector<8x32xf32>
    %c7_i32_184 = arith.constant 7 : i32
    %323 = vector.broadcast %c7_i32_184 : i32 to vector<8x32xi32>
    %324 = arith.cmpi slt, %317, %323 : vector<8x32xi32>
    %c7_i32_185 = arith.constant 7 : i32
    %325 = tpu.dynamic_rotate %1 by %c7_i32_185 dim 0 : vector<8x32xf32>, i32 -> vector<8x32xf32>
    %cst_186 = arith.constant 0.000000e+00 : f32
    %326 = vector.broadcast %cst_186 : f32 to vector<8x32xf32>
    %327 = arith.select %324, %325, %326 : vector<8x32xi1>, vector<8x32xf32>
    %c0_187 = arith.constant 0 : index
    %c0_188 = arith.constant 0 : index
    %c0_189 = arith.constant 0 : index
    %328 = vector.load %arg2[%c0_187, %c0_188, %c0_189] : memref<3x4x32xf32, #tpu.memory_space<vmem>>, vector<3x4x32xf32>
    %c0_190 = arith.constant 0 : index
    %c0_191 = arith.constant 0 : index
    %329 = vector.load %arg3[%c0_190, %c0_191] : memref<4x32xf32, #tpu.memory_space<vmem>>, vector<4x32xf32>
    %c0_192 = arith.constant 0 : index
    %c0_193 = arith.constant 0 : index
    %330 = vector.load %arg4[%c0_192, %c0_193] : memref<4x32xf32, #tpu.memory_space<vmem>>, vector<4x32xf32>
    %c0_194 = arith.constant 0 : index
    %c0_195 = arith.constant 0 : index
    %331 = vector.load %arg5[%c0_194, %c0_195] : memref<4x32xf32, #tpu.memory_space<vmem>>, vector<4x32xf32>
    %cst_196 = arith.constant 0.000000e+00 : f32
    %332 = vector.broadcast %cst_196 : f32 to vector<8x1xf32>
    %cst_197 = arith.constant 0.000000e+00 : f32
    %333 = vector.broadcast %cst_197 : f32 to vector<8x1xf32>
    %334 = vector.extract_strided_slice %329 {offsets = [0, 0], sizes = [1, 32], strides = [1, 1]} : vector<4x32xf32> to vector<1x32xf32>
    %335 = vector.extract_strided_slice %328 {offsets = [0, 0, 0], sizes = [1, 1, 32], strides = [1, 1, 1]} : vector<3x4x32xf32> to vector<1x1x32xf32>
    %336 = vector.shape_cast %335 : vector<1x1x32xf32> to vector<1x32xf32>
    %337 = vector.broadcast %336 : vector<1x32xf32> to vector<8x32xf32>
    %338 = arith.mulf %322, %337 : vector<8x32xf32>
    %339 = vector.broadcast %334 : vector<1x32xf32> to vector<8x32xf32>
    %340 = arith.addf %339, %338 : vector<8x32xf32>
    %341 = vector.extract_strided_slice %328 {offsets = [1, 0, 0], sizes = [1, 1, 32], strides = [1, 1, 1]} : vector<3x4x32xf32> to vector<1x1x32xf32>
    %342 = vector.shape_cast %341 : vector<1x1x32xf32> to vector<1x32xf32>
    %343 = vector.broadcast %342 : vector<1x32xf32> to vector<8x32xf32>
    %344 = arith.mulf %1, %343 : vector<8x32xf32>
    %345 = arith.addf %340, %344 : vector<8x32xf32>
    %346 = vector.extract_strided_slice %328 {offsets = [2, 0, 0], sizes = [1, 1, 32], strides = [1, 1, 1]} : vector<3x4x32xf32> to vector<1x1x32xf32>
    %347 = vector.shape_cast %346 : vector<1x1x32xf32> to vector<1x32xf32>
    %348 = vector.broadcast %347 : vector<1x32xf32> to vector<8x32xf32>
    %349 = arith.mulf %327, %348 : vector<8x32xf32>
    %350 = arith.addf %345, %349 : vector<8x32xf32>
    %cst_198 = arith.constant dense<0.000000e+00> : vector<8xf32>
    %351 = vector.multi_reduction <add>, %350, %cst_198 [1] : vector<8x32xf32> to vector<8xf32>
    %352 = vector.shape_cast %351 : vector<8xf32> to vector<8x1xf32>
    %353 = arith.addf %332, %352 : vector<8x1xf32>
    %354 = arith.mulf %350, %350 : vector<8x32xf32>
    %cst_199 = arith.constant dense<0.000000e+00> : vector<8xf32>
    %355 = vector.multi_reduction <add>, %354, %cst_199 [1] : vector<8x32xf32> to vector<8xf32>
    %356 = vector.shape_cast %355 : vector<8xf32> to vector<8x1xf32>
    %357 = arith.addf %333, %356 : vector<8x1xf32>
    %358 = vector.extract_strided_slice %329 {offsets = [1, 0], sizes = [1, 32], strides = [1, 1]} : vector<4x32xf32> to vector<1x32xf32>
    %359 = vector.extract_strided_slice %328 {offsets = [0, 1, 0], sizes = [1, 1, 32], strides = [1, 1, 1]} : vector<3x4x32xf32> to vector<1x1x32xf32>
    %360 = vector.shape_cast %359 : vector<1x1x32xf32> to vector<1x32xf32>
    %361 = vector.broadcast %360 : vector<1x32xf32> to vector<8x32xf32>
    %362 = arith.mulf %322, %361 : vector<8x32xf32>
    %363 = vector.broadcast %358 : vector<1x32xf32> to vector<8x32xf32>
    %364 = arith.addf %363, %362 : vector<8x32xf32>
    %365 = vector.extract_strided_slice %328 {offsets = [1, 1, 0], sizes = [1, 1, 32], strides = [1, 1, 1]} : vector<3x4x32xf32> to vector<1x1x32xf32>
    %366 = vector.shape_cast %365 : vector<1x1x32xf32> to vector<1x32xf32>
    %367 = vector.broadcast %366 : vector<1x32xf32> to vector<8x32xf32>
    %368 = arith.mulf %1, %367 : vector<8x32xf32>
    %369 = arith.addf %364, %368 : vector<8x32xf32>
    %370 = vector.extract_strided_slice %328 {offsets = [2, 1, 0], sizes = [1, 1, 32], strides = [1, 1, 1]} : vector<3x4x32xf32> to vector<1x1x32xf32>
    %371 = vector.shape_cast %370 : vector<1x1x32xf32> to vector<1x32xf32>
    %372 = vector.broadcast %371 : vector<1x32xf32> to vector<8x32xf32>
    %373 = arith.mulf %327, %372 : vector<8x32xf32>
    %374 = arith.addf %369, %373 : vector<8x32xf32>
    %cst_200 = arith.constant dense<0.000000e+00> : vector<8xf32>
    %375 = vector.multi_reduction <add>, %374, %cst_200 [1] : vector<8x32xf32> to vector<8xf32>
    %376 = vector.shape_cast %375 : vector<8xf32> to vector<8x1xf32>
    %377 = arith.addf %353, %376 : vector<8x1xf32>
    %378 = arith.mulf %374, %374 : vector<8x32xf32>
    %cst_201 = arith.constant dense<0.000000e+00> : vector<8xf32>
    %379 = vector.multi_reduction <add>, %378, %cst_201 [1] : vector<8x32xf32> to vector<8xf32>
    %380 = vector.shape_cast %379 : vector<8xf32> to vector<8x1xf32>
    %381 = arith.addf %357, %380 : vector<8x1xf32>
    %382 = vector.extract_strided_slice %329 {offsets = [2, 0], sizes = [1, 32], strides = [1, 1]} : vector<4x32xf32> to vector<1x32xf32>
    %383 = vector.extract_strided_slice %328 {offsets = [0, 2, 0], sizes = [1, 1, 32], strides = [1, 1, 1]} : vector<3x4x32xf32> to vector<1x1x32xf32>
    %384 = vector.shape_cast %383 : vector<1x1x32xf32> to vector<1x32xf32>
    %385 = vector.broadcast %384 : vector<1x32xf32> to vector<8x32xf32>
    %386 = arith.mulf %322, %385 : vector<8x32xf32>
    %387 = vector.broadcast %382 : vector<1x32xf32> to vector<8x32xf32>
    %388 = arith.addf %387, %386 : vector<8x32xf32>
    %389 = vector.extract_strided_slice %328 {offsets = [1, 2, 0], sizes = [1, 1, 32], strides = [1, 1, 1]} : vector<3x4x32xf32> to vector<1x1x32xf32>
    %390 = vector.shape_cast %389 : vector<1x1x32xf32> to vector<1x32xf32>
    %391 = vector.broadcast %390 : vector<1x32xf32> to vector<8x32xf32>
    %392 = arith.mulf %1, %391 : vector<8x32xf32>
    %393 = arith.addf %388, %392 : vector<8x32xf32>
    %394 = vector.extract_strided_slice %328 {offsets = [2, 2, 0], sizes = [1, 1, 32], strides = [1, 1, 1]} : vector<3x4x32xf32> to vector<1x1x32xf32>
    %395 = vector.shape_cast %394 : vector<1x1x32xf32> to vector<1x32xf32>
    %396 = vector.broadcast %395 : vector<1x32xf32> to vector<8x32xf32>
    %397 = arith.mulf %327, %396 : vector<8x32xf32>
    %398 = arith.addf %393, %397 : vector<8x32xf32>
    %cst_202 = arith.constant dense<0.000000e+00> : vector<8xf32>
    %399 = vector.multi_reduction <add>, %398, %cst_202 [1] : vector<8x32xf32> to vector<8xf32>
    %400 = vector.shape_cast %399 : vector<8xf32> to vector<8x1xf32>
    %401 = arith.addf %377, %400 : vector<8x1xf32>
    %402 = arith.mulf %398, %398 : vector<8x32xf32>
    %cst_203 = arith.constant dense<0.000000e+00> : vector<8xf32>
    %403 = vector.multi_reduction <add>, %402, %cst_203 [1] : vector<8x32xf32> to vector<8xf32>
    %404 = vector.shape_cast %403 : vector<8xf32> to vector<8x1xf32>
    %405 = arith.addf %381, %404 : vector<8x1xf32>
    %406 = vector.extract_strided_slice %329 {offsets = [3, 0], sizes = [1, 32], strides = [1, 1]} : vector<4x32xf32> to vector<1x32xf32>
    %407 = vector.extract_strided_slice %328 {offsets = [0, 3, 0], sizes = [1, 1, 32], strides = [1, 1, 1]} : vector<3x4x32xf32> to vector<1x1x32xf32>
    %408 = vector.shape_cast %407 : vector<1x1x32xf32> to vector<1x32xf32>
    %409 = vector.broadcast %408 : vector<1x32xf32> to vector<8x32xf32>
    %410 = arith.mulf %322, %409 : vector<8x32xf32>
    %411 = vector.broadcast %406 : vector<1x32xf32> to vector<8x32xf32>
    %412 = arith.addf %411, %410 : vector<8x32xf32>
    %413 = vector.extract_strided_slice %328 {offsets = [1, 3, 0], sizes = [1, 1, 32], strides = [1, 1, 1]} : vector<3x4x32xf32> to vector<1x1x32xf32>
    %414 = vector.shape_cast %413 : vector<1x1x32xf32> to vector<1x32xf32>
    %415 = vector.broadcast %414 : vector<1x32xf32> to vector<8x32xf32>
    %416 = arith.mulf %1, %415 : vector<8x32xf32>
    %417 = arith.addf %412, %416 : vector<8x32xf32>
    %418 = vector.extract_strided_slice %328 {offsets = [2, 3, 0], sizes = [1, 1, 32], strides = [1, 1, 1]} : vector<3x4x32xf32> to vector<1x1x32xf32>
    %419 = vector.shape_cast %418 : vector<1x1x32xf32> to vector<1x32xf32>
    %420 = vector.broadcast %419 : vector<1x32xf32> to vector<8x32xf32>
    %421 = arith.mulf %327, %420 : vector<8x32xf32>
    %422 = arith.addf %417, %421 : vector<8x32xf32>
    %cst_204 = arith.constant dense<0.000000e+00> : vector<8xf32>
    %423 = vector.multi_reduction <add>, %422, %cst_204 [1] : vector<8x32xf32> to vector<8xf32>
    %424 = vector.shape_cast %423 : vector<8xf32> to vector<8x1xf32>
    %425 = arith.addf %401, %424 : vector<8x1xf32>
    %426 = arith.mulf %422, %422 : vector<8x32xf32>
    %cst_205 = arith.constant dense<0.000000e+00> : vector<8xf32>
    %427 = vector.multi_reduction <add>, %426, %cst_205 [1] : vector<8x32xf32> to vector<8xf32>
    %428 = vector.shape_cast %427 : vector<8xf32> to vector<8x1xf32>
    %429 = arith.addf %405, %428 : vector<8x1xf32>
    %cst_206 = arith.constant 1.280000e+02 : f32
    %430 = vector.broadcast %cst_206 : f32 to vector<8x1xf32>
    %431 = arith.divf %425, %430 : vector<8x1xf32>
    %cst_207 = arith.constant 1.280000e+02 : f32
    %432 = vector.broadcast %cst_207 : f32 to vector<8x1xf32>
    %433 = arith.divf %429, %432 : vector<8x1xf32>
    %434 = arith.mulf %431, %431 : vector<8x1xf32>
    %435 = arith.subf %433, %434 : vector<8x1xf32>
    %cst_208 = arith.constant 0.000000e+00 : f32
    %436 = vector.broadcast %cst_208 : f32 to vector<8x1xf32>
    %437 = arith.maximumf %435, %436 : vector<8x1xf32>
    %cst_209 = arith.constant 9.99999974E-6 : f32
    %438 = vector.broadcast %cst_209 : f32 to vector<8x1xf32>
    %439 = arith.addf %437, %438 : vector<8x1xf32>
    %440 = math.rsqrt %439 : vector<8x1xf32>
    %cst_210 = arith.constant 0.000000e+00 : f32
    %441 = vector.broadcast %cst_210 : f32 to vector<8x32xf32>
    %442 = vector.extract_strided_slice %329 {offsets = [0, 0], sizes = [1, 32], strides = [1, 1]} : vector<4x32xf32> to vector<1x32xf32>
    %443 = vector.extract_strided_slice %328 {offsets = [0, 0, 0], sizes = [1, 1, 32], strides = [1, 1, 1]} : vector<3x4x32xf32> to vector<1x1x32xf32>
    %444 = vector.shape_cast %443 : vector<1x1x32xf32> to vector<1x32xf32>
    %445 = vector.broadcast %444 : vector<1x32xf32> to vector<8x32xf32>
    %446 = arith.mulf %322, %445 : vector<8x32xf32>
    %447 = vector.broadcast %442 : vector<1x32xf32> to vector<8x32xf32>
    %448 = arith.addf %447, %446 : vector<8x32xf32>
    %449 = vector.extract_strided_slice %328 {offsets = [1, 0, 0], sizes = [1, 1, 32], strides = [1, 1, 1]} : vector<3x4x32xf32> to vector<1x1x32xf32>
    %450 = vector.shape_cast %449 : vector<1x1x32xf32> to vector<1x32xf32>
    %451 = vector.broadcast %450 : vector<1x32xf32> to vector<8x32xf32>
    %452 = arith.mulf %1, %451 : vector<8x32xf32>
    %453 = arith.addf %448, %452 : vector<8x32xf32>
    %454 = vector.extract_strided_slice %328 {offsets = [2, 0, 0], sizes = [1, 1, 32], strides = [1, 1, 1]} : vector<3x4x32xf32> to vector<1x1x32xf32>
    %455 = vector.shape_cast %454 : vector<1x1x32xf32> to vector<1x32xf32>
    %456 = vector.broadcast %455 : vector<1x32xf32> to vector<8x32xf32>
    %457 = arith.mulf %327, %456 : vector<8x32xf32>
    %458 = arith.addf %453, %457 : vector<8x32xf32>
    %459 = vector.broadcast %431 : vector<8x1xf32> to vector<8x32xf32>
    %460 = arith.subf %458, %459 : vector<8x32xf32>
    %461 = vector.broadcast %440 : vector<8x1xf32> to vector<8x32xf32>
    %462 = arith.mulf %460, %461 : vector<8x32xf32>
    %463 = vector.extract_strided_slice %330 {offsets = [0, 0], sizes = [1, 32], strides = [1, 1]} : vector<4x32xf32> to vector<1x32xf32>
    %464 = vector.broadcast %463 : vector<1x32xf32> to vector<8x32xf32>
    %465 = arith.mulf %462, %464 : vector<8x32xf32>
    %466 = vector.extract_strided_slice %331 {offsets = [0, 0], sizes = [1, 32], strides = [1, 1]} : vector<4x32xf32> to vector<1x32xf32>
    %467 = vector.broadcast %466 : vector<1x32xf32> to vector<8x32xf32>
    %468 = arith.addf %465, %467 : vector<8x32xf32>
    %cst_211 = arith.constant 5.000000e-01 : f32
    %469 = vector.broadcast %cst_211 : f32 to vector<8x32xf32>
    %470 = arith.mulf %469, %468 : vector<8x32xf32>
    %cst_212 = arith.constant 0.707106769 : f32
    %471 = vector.broadcast %cst_212 : f32 to vector<8x32xf32>
    %472 = arith.mulf %468, %471 : vector<8x32xf32>
    %cst_213 = arith.constant 0.000000e+00 : f32
    %473 = vector.broadcast %cst_213 : f32 to vector<8x32xf32>
    %474 = arith.cmpf oge, %472, %473 : vector<8x32xf32>
    %cst_214 = arith.constant 1.000000e+00 : f32
    %cst_215 = arith.constant -1.000000e+00 : f32
    %475 = vector.broadcast %cst_214 : f32 to vector<8x32xf32>
    %476 = vector.broadcast %cst_215 : f32 to vector<8x32xf32>
    %477 = arith.select %474, %475, %476 : vector<8x32xi1>, vector<8x32xf32>
    %478 = math.absf %472 : vector<8x32xf32>
    %cst_216 = arith.constant 0.327591091 : f32
    %479 = vector.broadcast %cst_216 : f32 to vector<8x32xf32>
    %480 = arith.mulf %479, %478 : vector<8x32xf32>
    %cst_217 = arith.constant 1.000000e+00 : f32
    %481 = vector.broadcast %cst_217 : f32 to vector<8x32xf32>
    %482 = arith.addf %481, %480 : vector<8x32xf32>
    %cst_218 = arith.constant 1.000000e+00 : f32
    %483 = vector.broadcast %cst_218 : f32 to vector<8x32xf32>
    %484 = arith.divf %483, %482 : vector<8x32xf32>
    %cst_219 = arith.constant 1.06140542 : f32
    %485 = vector.broadcast %cst_219 : f32 to vector<8x32xf32>
    %486 = arith.mulf %485, %484 : vector<8x32xf32>
    %cst_220 = arith.constant -1.45315206 : f32
    %487 = vector.broadcast %cst_220 : f32 to vector<8x32xf32>
    %488 = arith.addf %486, %487 : vector<8x32xf32>
    %489 = arith.mulf %488, %484 : vector<8x32xf32>
    %cst_221 = arith.constant 1.42141378 : f32
    %490 = vector.broadcast %cst_221 : f32 to vector<8x32xf32>
    %491 = arith.addf %489, %490 : vector<8x32xf32>
    %492 = arith.mulf %491, %484 : vector<8x32xf32>
    %cst_222 = arith.constant -0.284496725 : f32
    %493 = vector.broadcast %cst_222 : f32 to vector<8x32xf32>
    %494 = arith.addf %492, %493 : vector<8x32xf32>
    %495 = arith.mulf %494, %484 : vector<8x32xf32>
    %cst_223 = arith.constant 0.254829586 : f32
    %496 = vector.broadcast %cst_223 : f32 to vector<8x32xf32>
    %497 = arith.addf %495, %496 : vector<8x32xf32>
    %498 = arith.mulf %497, %484 : vector<8x32xf32>
    %cst_224 = arith.constant 0.000000e+00 : f32
    %499 = vector.broadcast %cst_224 : f32 to vector<8x32xf32>
    %500 = arith.subf %499, %478 : vector<8x32xf32>
    %501 = arith.mulf %500, %478 : vector<8x32xf32>
    %502 = math.exp %501 : vector<8x32xf32>
    %503 = arith.mulf %498, %502 : vector<8x32xf32>
    %cst_225 = arith.constant 1.000000e+00 : f32
    %504 = vector.broadcast %cst_225 : f32 to vector<8x32xf32>
    %505 = arith.subf %504, %503 : vector<8x32xf32>
    %506 = arith.mulf %477, %505 : vector<8x32xf32>
    %cst_226 = arith.constant 1.000000e+00 : f32
    %507 = vector.broadcast %cst_226 : f32 to vector<8x32xf32>
    %508 = arith.addf %507, %506 : vector<8x32xf32>
    %509 = arith.mulf %470, %508 : vector<8x32xf32>
    %c0_227 = arith.constant 0 : index
    %c0_228 = arith.constant 0 : index
    %c0_229 = arith.constant 0 : index
    %510 = vector.load %arg6[%c0_227, %c0_228, %c0_229] : memref<4x32x32xbf16, #tpu.memory_space<vmem>>, vector<1x32x32xbf16>
    %511 = vector.shape_cast %510 : vector<1x32x32xbf16> to vector<32x32xbf16>
    %512 = arith.truncf %509 : vector<8x32xf32> to vector<8x32xbf16>
    %cst_230 = arith.constant dense<0.000000e+00> : vector<8x32xf32>
    %513 = tpu.matmul %512, %511, %cst_230 {dimension_numbers = #tpu.dot_dimension_numbers<[1], [0], [0], [1], [0, 0, 1, 1], [], []>} : vector<8x32xbf16>, vector<32x32xbf16>, vector<8x32xf32> -> vector<8x32xf32>
    %514 = arith.addf %441, %513 : vector<8x32xf32>
    %515 = vector.extract_strided_slice %329 {offsets = [1, 0], sizes = [1, 32], strides = [1, 1]} : vector<4x32xf32> to vector<1x32xf32>
    %516 = vector.extract_strided_slice %328 {offsets = [0, 1, 0], sizes = [1, 1, 32], strides = [1, 1, 1]} : vector<3x4x32xf32> to vector<1x1x32xf32>
    %517 = vector.shape_cast %516 : vector<1x1x32xf32> to vector<1x32xf32>
    %518 = vector.broadcast %517 : vector<1x32xf32> to vector<8x32xf32>
    %519 = arith.mulf %322, %518 : vector<8x32xf32>
    %520 = vector.broadcast %515 : vector<1x32xf32> to vector<8x32xf32>
    %521 = arith.addf %520, %519 : vector<8x32xf32>
    %522 = vector.extract_strided_slice %328 {offsets = [1, 1, 0], sizes = [1, 1, 32], strides = [1, 1, 1]} : vector<3x4x32xf32> to vector<1x1x32xf32>
    %523 = vector.shape_cast %522 : vector<1x1x32xf32> to vector<1x32xf32>
    %524 = vector.broadcast %523 : vector<1x32xf32> to vector<8x32xf32>
    %525 = arith.mulf %1, %524 : vector<8x32xf32>
    %526 = arith.addf %521, %525 : vector<8x32xf32>
    %527 = vector.extract_strided_slice %328 {offsets = [2, 1, 0], sizes = [1, 1, 32], strides = [1, 1, 1]} : vector<3x4x32xf32> to vector<1x1x32xf32>
    %528 = vector.shape_cast %527 : vector<1x1x32xf32> to vector<1x32xf32>
    %529 = vector.broadcast %528 : vector<1x32xf32> to vector<8x32xf32>
    %530 = arith.mulf %327, %529 : vector<8x32xf32>
    %531 = arith.addf %526, %530 : vector<8x32xf32>
    %532 = vector.broadcast %431 : vector<8x1xf32> to vector<8x32xf32>
    %533 = arith.subf %531, %532 : vector<8x32xf32>
    %534 = vector.broadcast %440 : vector<8x1xf32> to vector<8x32xf32>
    %535 = arith.mulf %533, %534 : vector<8x32xf32>
    %536 = vector.extract_strided_slice %330 {offsets = [1, 0], sizes = [1, 32], strides = [1, 1]} : vector<4x32xf32> to vector<1x32xf32>
    %537 = vector.broadcast %536 : vector<1x32xf32> to vector<8x32xf32>
    %538 = arith.mulf %535, %537 : vector<8x32xf32>
    %539 = vector.extract_strided_slice %331 {offsets = [1, 0], sizes = [1, 32], strides = [1, 1]} : vector<4x32xf32> to vector<1x32xf32>
    %540 = vector.broadcast %539 : vector<1x32xf32> to vector<8x32xf32>
    %541 = arith.addf %538, %540 : vector<8x32xf32>
    %cst_231 = arith.constant 5.000000e-01 : f32
    %542 = vector.broadcast %cst_231 : f32 to vector<8x32xf32>
    %543 = arith.mulf %542, %541 : vector<8x32xf32>
    %cst_232 = arith.constant 0.707106769 : f32
    %544 = vector.broadcast %cst_232 : f32 to vector<8x32xf32>
    %545 = arith.mulf %541, %544 : vector<8x32xf32>
    %cst_233 = arith.constant 0.000000e+00 : f32
    %546 = vector.broadcast %cst_233 : f32 to vector<8x32xf32>
    %547 = arith.cmpf oge, %545, %546 : vector<8x32xf32>
    %cst_234 = arith.constant 1.000000e+00 : f32
    %cst_235 = arith.constant -1.000000e+00 : f32
    %548 = vector.broadcast %cst_234 : f32 to vector<8x32xf32>
    %549 = vector.broadcast %cst_235 : f32 to vector<8x32xf32>
    %550 = arith.select %547, %548, %549 : vector<8x32xi1>, vector<8x32xf32>
    %551 = math.absf %545 : vector<8x32xf32>
    %cst_236 = arith.constant 0.327591091 : f32
    %552 = vector.broadcast %cst_236 : f32 to vector<8x32xf32>
    %553 = arith.mulf %552, %551 : vector<8x32xf32>
    %cst_237 = arith.constant 1.000000e+00 : f32
    %554 = vector.broadcast %cst_237 : f32 to vector<8x32xf32>
    %555 = arith.addf %554, %553 : vector<8x32xf32>
    %cst_238 = arith.constant 1.000000e+00 : f32
    %556 = vector.broadcast %cst_238 : f32 to vector<8x32xf32>
    %557 = arith.divf %556, %555 : vector<8x32xf32>
    %cst_239 = arith.constant 1.06140542 : f32
    %558 = vector.broadcast %cst_239 : f32 to vector<8x32xf32>
    %559 = arith.mulf %558, %557 : vector<8x32xf32>
    %cst_240 = arith.constant -1.45315206 : f32
    %560 = vector.broadcast %cst_240 : f32 to vector<8x32xf32>
    %561 = arith.addf %559, %560 : vector<8x32xf32>
    %562 = arith.mulf %561, %557 : vector<8x32xf32>
    %cst_241 = arith.constant 1.42141378 : f32
    %563 = vector.broadcast %cst_241 : f32 to vector<8x32xf32>
    %564 = arith.addf %562, %563 : vector<8x32xf32>
    %565 = arith.mulf %564, %557 : vector<8x32xf32>
    %cst_242 = arith.constant -0.284496725 : f32
    %566 = vector.broadcast %cst_242 : f32 to vector<8x32xf32>
    %567 = arith.addf %565, %566 : vector<8x32xf32>
    %568 = arith.mulf %567, %557 : vector<8x32xf32>
    %cst_243 = arith.constant 0.254829586 : f32
    %569 = vector.broadcast %cst_243 : f32 to vector<8x32xf32>
    %570 = arith.addf %568, %569 : vector<8x32xf32>
    %571 = arith.mulf %570, %557 : vector<8x32xf32>
    %cst_244 = arith.constant 0.000000e+00 : f32
    %572 = vector.broadcast %cst_244 : f32 to vector<8x32xf32>
    %573 = arith.subf %572, %551 : vector<8x32xf32>
    %574 = arith.mulf %573, %551 : vector<8x32xf32>
    %575 = math.exp %574 : vector<8x32xf32>
    %576 = arith.mulf %571, %575 : vector<8x32xf32>
    %cst_245 = arith.constant 1.000000e+00 : f32
    %577 = vector.broadcast %cst_245 : f32 to vector<8x32xf32>
    %578 = arith.subf %577, %576 : vector<8x32xf32>
    %579 = arith.mulf %550, %578 : vector<8x32xf32>
    %cst_246 = arith.constant 1.000000e+00 : f32
    %580 = vector.broadcast %cst_246 : f32 to vector<8x32xf32>
    %581 = arith.addf %580, %579 : vector<8x32xf32>
    %582 = arith.mulf %543, %581 : vector<8x32xf32>
    %c1_247 = arith.constant 1 : index
    %c0_248 = arith.constant 0 : index
    %c0_249 = arith.constant 0 : index
    %583 = vector.load %arg6[%c1_247, %c0_248, %c0_249] : memref<4x32x32xbf16, #tpu.memory_space<vmem>>, vector<1x32x32xbf16>
    %584 = vector.shape_cast %583 : vector<1x32x32xbf16> to vector<32x32xbf16>
    %585 = arith.truncf %582 : vector<8x32xf32> to vector<8x32xbf16>
    %cst_250 = arith.constant dense<0.000000e+00> : vector<8x32xf32>
    %586 = tpu.matmul %585, %584, %cst_250 {dimension_numbers = #tpu.dot_dimension_numbers<[1], [0], [0], [1], [0, 0, 1, 1], [], []>} : vector<8x32xbf16>, vector<32x32xbf16>, vector<8x32xf32> -> vector<8x32xf32>
    %587 = arith.addf %514, %586 : vector<8x32xf32>
    %588 = vector.extract_strided_slice %329 {offsets = [2, 0], sizes = [1, 32], strides = [1, 1]} : vector<4x32xf32> to vector<1x32xf32>
    %589 = vector.extract_strided_slice %328 {offsets = [0, 2, 0], sizes = [1, 1, 32], strides = [1, 1, 1]} : vector<3x4x32xf32> to vector<1x1x32xf32>
    %590 = vector.shape_cast %589 : vector<1x1x32xf32> to vector<1x32xf32>
    %591 = vector.broadcast %590 : vector<1x32xf32> to vector<8x32xf32>
    %592 = arith.mulf %322, %591 : vector<8x32xf32>
    %593 = vector.broadcast %588 : vector<1x32xf32> to vector<8x32xf32>
    %594 = arith.addf %593, %592 : vector<8x32xf32>
    %595 = vector.extract_strided_slice %328 {offsets = [1, 2, 0], sizes = [1, 1, 32], strides = [1, 1, 1]} : vector<3x4x32xf32> to vector<1x1x32xf32>
    %596 = vector.shape_cast %595 : vector<1x1x32xf32> to vector<1x32xf32>
    %597 = vector.broadcast %596 : vector<1x32xf32> to vector<8x32xf32>
    %598 = arith.mulf %1, %597 : vector<8x32xf32>
    %599 = arith.addf %594, %598 : vector<8x32xf32>
    %600 = vector.extract_strided_slice %328 {offsets = [2, 2, 0], sizes = [1, 1, 32], strides = [1, 1, 1]} : vector<3x4x32xf32> to vector<1x1x32xf32>
    %601 = vector.shape_cast %600 : vector<1x1x32xf32> to vector<1x32xf32>
    %602 = vector.broadcast %601 : vector<1x32xf32> to vector<8x32xf32>
    %603 = arith.mulf %327, %602 : vector<8x32xf32>
    %604 = arith.addf %599, %603 : vector<8x32xf32>
    %605 = vector.broadcast %431 : vector<8x1xf32> to vector<8x32xf32>
    %606 = arith.subf %604, %605 : vector<8x32xf32>
    %607 = vector.broadcast %440 : vector<8x1xf32> to vector<8x32xf32>
    %608 = arith.mulf %606, %607 : vector<8x32xf32>
    %609 = vector.extract_strided_slice %330 {offsets = [2, 0], sizes = [1, 32], strides = [1, 1]} : vector<4x32xf32> to vector<1x32xf32>
    %610 = vector.broadcast %609 : vector<1x32xf32> to vector<8x32xf32>
    %611 = arith.mulf %608, %610 : vector<8x32xf32>
    %612 = vector.extract_strided_slice %331 {offsets = [2, 0], sizes = [1, 32], strides = [1, 1]} : vector<4x32xf32> to vector<1x32xf32>
    %613 = vector.broadcast %612 : vector<1x32xf32> to vector<8x32xf32>
    %614 = arith.addf %611, %613 : vector<8x32xf32>
    %cst_251 = arith.constant 5.000000e-01 : f32
    %615 = vector.broadcast %cst_251 : f32 to vector<8x32xf32>
    %616 = arith.mulf %615, %614 : vector<8x32xf32>
    %cst_252 = arith.constant 0.707106769 : f32
    %617 = vector.broadcast %cst_252 : f32 to vector<8x32xf32>
    %618 = arith.mulf %614, %617 : vector<8x32xf32>
    %cst_253 = arith.constant 0.000000e+00 : f32
    %619 = vector.broadcast %cst_253 : f32 to vector<8x32xf32>
    %620 = arith.cmpf oge, %618, %619 : vector<8x32xf32>
    %cst_254 = arith.constant 1.000000e+00 : f32
    %cst_255 = arith.constant -1.000000e+00 : f32
    %621 = vector.broadcast %cst_254 : f32 to vector<8x32xf32>
    %622 = vector.broadcast %cst_255 : f32 to vector<8x32xf32>
    %623 = arith.select %620, %621, %622 : vector<8x32xi1>, vector<8x32xf32>
    %624 = math.absf %618 : vector<8x32xf32>
    %cst_256 = arith.constant 0.327591091 : f32
    %625 = vector.broadcast %cst_256 : f32 to vector<8x32xf32>
    %626 = arith.mulf %625, %624 : vector<8x32xf32>
    %cst_257 = arith.constant 1.000000e+00 : f32
    %627 = vector.broadcast %cst_257 : f32 to vector<8x32xf32>
    %628 = arith.addf %627, %626 : vector<8x32xf32>
    %cst_258 = arith.constant 1.000000e+00 : f32
    %629 = vector.broadcast %cst_258 : f32 to vector<8x32xf32>
    %630 = arith.divf %629, %628 : vector<8x32xf32>
    %cst_259 = arith.constant 1.06140542 : f32
    %631 = vector.broadcast %cst_259 : f32 to vector<8x32xf32>
    %632 = arith.mulf %631, %630 : vector<8x32xf32>
    %cst_260 = arith.constant -1.45315206 : f32
    %633 = vector.broadcast %cst_260 : f32 to vector<8x32xf32>
    %634 = arith.addf %632, %633 : vector<8x32xf32>
    %635 = arith.mulf %634, %630 : vector<8x32xf32>
    %cst_261 = arith.constant 1.42141378 : f32
    %636 = vector.broadcast %cst_261 : f32 to vector<8x32xf32>
    %637 = arith.addf %635, %636 : vector<8x32xf32>
    %638 = arith.mulf %637, %630 : vector<8x32xf32>
    %cst_262 = arith.constant -0.284496725 : f32
    %639 = vector.broadcast %cst_262 : f32 to vector<8x32xf32>
    %640 = arith.addf %638, %639 : vector<8x32xf32>
    %641 = arith.mulf %640, %630 : vector<8x32xf32>
    %cst_263 = arith.constant 0.254829586 : f32
    %642 = vector.broadcast %cst_263 : f32 to vector<8x32xf32>
    %643 = arith.addf %641, %642 : vector<8x32xf32>
    %644 = arith.mulf %643, %630 : vector<8x32xf32>
    %cst_264 = arith.constant 0.000000e+00 : f32
    %645 = vector.broadcast %cst_264 : f32 to vector<8x32xf32>
    %646 = arith.subf %645, %624 : vector<8x32xf32>
    %647 = arith.mulf %646, %624 : vector<8x32xf32>
    %648 = math.exp %647 : vector<8x32xf32>
    %649 = arith.mulf %644, %648 : vector<8x32xf32>
    %cst_265 = arith.constant 1.000000e+00 : f32
    %650 = vector.broadcast %cst_265 : f32 to vector<8x32xf32>
    %651 = arith.subf %650, %649 : vector<8x32xf32>
    %652 = arith.mulf %623, %651 : vector<8x32xf32>
    %cst_266 = arith.constant 1.000000e+00 : f32
    %653 = vector.broadcast %cst_266 : f32 to vector<8x32xf32>
    %654 = arith.addf %653, %652 : vector<8x32xf32>
    %655 = arith.mulf %616, %654 : vector<8x32xf32>
    %c2 = arith.constant 2 : index
    %c0_267 = arith.constant 0 : index
    %c0_268 = arith.constant 0 : index
    %656 = vector.load %arg6[%c2, %c0_267, %c0_268] : memref<4x32x32xbf16, #tpu.memory_space<vmem>>, vector<1x32x32xbf16>
    %657 = vector.shape_cast %656 : vector<1x32x32xbf16> to vector<32x32xbf16>
    %658 = arith.truncf %655 : vector<8x32xf32> to vector<8x32xbf16>
    %cst_269 = arith.constant dense<0.000000e+00> : vector<8x32xf32>
    %659 = tpu.matmul %658, %657, %cst_269 {dimension_numbers = #tpu.dot_dimension_numbers<[1], [0], [0], [1], [0, 0, 1, 1], [], []>} : vector<8x32xbf16>, vector<32x32xbf16>, vector<8x32xf32> -> vector<8x32xf32>
    %660 = arith.addf %587, %659 : vector<8x32xf32>
    %661 = vector.extract_strided_slice %329 {offsets = [3, 0], sizes = [1, 32], strides = [1, 1]} : vector<4x32xf32> to vector<1x32xf32>
    %662 = vector.extract_strided_slice %328 {offsets = [0, 3, 0], sizes = [1, 1, 32], strides = [1, 1, 1]} : vector<3x4x32xf32> to vector<1x1x32xf32>
    %663 = vector.shape_cast %662 : vector<1x1x32xf32> to vector<1x32xf32>
    %664 = vector.broadcast %663 : vector<1x32xf32> to vector<8x32xf32>
    %665 = arith.mulf %322, %664 : vector<8x32xf32>
    %666 = vector.broadcast %661 : vector<1x32xf32> to vector<8x32xf32>
    %667 = arith.addf %666, %665 : vector<8x32xf32>
    %668 = vector.extract_strided_slice %328 {offsets = [1, 3, 0], sizes = [1, 1, 32], strides = [1, 1, 1]} : vector<3x4x32xf32> to vector<1x1x32xf32>
    %669 = vector.shape_cast %668 : vector<1x1x32xf32> to vector<1x32xf32>
    %670 = vector.broadcast %669 : vector<1x32xf32> to vector<8x32xf32>
    %671 = arith.mulf %1, %670 : vector<8x32xf32>
    %672 = arith.addf %667, %671 : vector<8x32xf32>
    %673 = vector.extract_strided_slice %328 {offsets = [2, 3, 0], sizes = [1, 1, 32], strides = [1, 1, 1]} : vector<3x4x32xf32> to vector<1x1x32xf32>
    %674 = vector.shape_cast %673 : vector<1x1x32xf32> to vector<1x32xf32>
    %675 = vector.broadcast %674 : vector<1x32xf32> to vector<8x32xf32>
    %676 = arith.mulf %327, %675 : vector<8x32xf32>
    %677 = arith.addf %672, %676 : vector<8x32xf32>
    %678 = vector.broadcast %431 : vector<8x1xf32> to vector<8x32xf32>
    %679 = arith.subf %677, %678 : vector<8x32xf32>
    %680 = vector.broadcast %440 : vector<8x1xf32> to vector<8x32xf32>
    %681 = arith.mulf %679, %680 : vector<8x32xf32>
    %682 = vector.extract_strided_slice %330 {offsets = [3, 0], sizes = [1, 32], strides = [1, 1]} : vector<4x32xf32> to vector<1x32xf32>
    %683 = vector.broadcast %682 : vector<1x32xf32> to vector<8x32xf32>
    %684 = arith.mulf %681, %683 : vector<8x32xf32>
    %685 = vector.extract_strided_slice %331 {offsets = [3, 0], sizes = [1, 32], strides = [1, 1]} : vector<4x32xf32> to vector<1x32xf32>
    %686 = vector.broadcast %685 : vector<1x32xf32> to vector<8x32xf32>
    %687 = arith.addf %684, %686 : vector<8x32xf32>
    %cst_270 = arith.constant 5.000000e-01 : f32
    %688 = vector.broadcast %cst_270 : f32 to vector<8x32xf32>
    %689 = arith.mulf %688, %687 : vector<8x32xf32>
    %cst_271 = arith.constant 0.707106769 : f32
    %690 = vector.broadcast %cst_271 : f32 to vector<8x32xf32>
    %691 = arith.mulf %687, %690 : vector<8x32xf32>
    %cst_272 = arith.constant 0.000000e+00 : f32
    %692 = vector.broadcast %cst_272 : f32 to vector<8x32xf32>
    %693 = arith.cmpf oge, %691, %692 : vector<8x32xf32>
    %cst_273 = arith.constant 1.000000e+00 : f32
    %cst_274 = arith.constant -1.000000e+00 : f32
    %694 = vector.broadcast %cst_273 : f32 to vector<8x32xf32>
    %695 = vector.broadcast %cst_274 : f32 to vector<8x32xf32>
    %696 = arith.select %693, %694, %695 : vector<8x32xi1>, vector<8x32xf32>
    %697 = math.absf %691 : vector<8x32xf32>
    %cst_275 = arith.constant 0.327591091 : f32
    %698 = vector.broadcast %cst_275 : f32 to vector<8x32xf32>
    %699 = arith.mulf %698, %697 : vector<8x32xf32>
    %cst_276 = arith.constant 1.000000e+00 : f32
    %700 = vector.broadcast %cst_276 : f32 to vector<8x32xf32>
    %701 = arith.addf %700, %699 : vector<8x32xf32>
    %cst_277 = arith.constant 1.000000e+00 : f32
    %702 = vector.broadcast %cst_277 : f32 to vector<8x32xf32>
    %703 = arith.divf %702, %701 : vector<8x32xf32>
    %cst_278 = arith.constant 1.06140542 : f32
    %704 = vector.broadcast %cst_278 : f32 to vector<8x32xf32>
    %705 = arith.mulf %704, %703 : vector<8x32xf32>
    %cst_279 = arith.constant -1.45315206 : f32
    %706 = vector.broadcast %cst_279 : f32 to vector<8x32xf32>
    %707 = arith.addf %705, %706 : vector<8x32xf32>
    %708 = arith.mulf %707, %703 : vector<8x32xf32>
    %cst_280 = arith.constant 1.42141378 : f32
    %709 = vector.broadcast %cst_280 : f32 to vector<8x32xf32>
    %710 = arith.addf %708, %709 : vector<8x32xf32>
    %711 = arith.mulf %710, %703 : vector<8x32xf32>
    %cst_281 = arith.constant -0.284496725 : f32
    %712 = vector.broadcast %cst_281 : f32 to vector<8x32xf32>
    %713 = arith.addf %711, %712 : vector<8x32xf32>
    %714 = arith.mulf %713, %703 : vector<8x32xf32>
    %cst_282 = arith.constant 0.254829586 : f32
    %715 = vector.broadcast %cst_282 : f32 to vector<8x32xf32>
    %716 = arith.addf %714, %715 : vector<8x32xf32>
    %717 = arith.mulf %716, %703 : vector<8x32xf32>
    %cst_283 = arith.constant 0.000000e+00 : f32
    %718 = vector.broadcast %cst_283 : f32 to vector<8x32xf32>
    %719 = arith.subf %718, %697 : vector<8x32xf32>
    %720 = arith.mulf %719, %697 : vector<8x32xf32>
    %721 = math.exp %720 : vector<8x32xf32>
    %722 = arith.mulf %717, %721 : vector<8x32xf32>
    %cst_284 = arith.constant 1.000000e+00 : f32
    %723 = vector.broadcast %cst_284 : f32 to vector<8x32xf32>
    %724 = arith.subf %723, %722 : vector<8x32xf32>
    %725 = arith.mulf %696, %724 : vector<8x32xf32>
    %cst_285 = arith.constant 1.000000e+00 : f32
    %726 = vector.broadcast %cst_285 : f32 to vector<8x32xf32>
    %727 = arith.addf %726, %725 : vector<8x32xf32>
    %728 = arith.mulf %689, %727 : vector<8x32xf32>
    %c3 = arith.constant 3 : index
    %c0_286 = arith.constant 0 : index
    %c0_287 = arith.constant 0 : index
    %729 = vector.load %arg6[%c3, %c0_286, %c0_287] : memref<4x32x32xbf16, #tpu.memory_space<vmem>>, vector<1x32x32xbf16>
    %730 = vector.shape_cast %729 : vector<1x32x32xbf16> to vector<32x32xbf16>
    %731 = arith.truncf %728 : vector<8x32xf32> to vector<8x32xbf16>
    %cst_288 = arith.constant dense<0.000000e+00> : vector<8x32xf32>
    %732 = tpu.matmul %731, %730, %cst_288 {dimension_numbers = #tpu.dot_dimension_numbers<[1], [0], [0], [1], [0, 0, 1, 1], [], []>} : vector<8x32xbf16>, vector<32x32xbf16>, vector<8x32xf32> -> vector<8x32xf32>
    %733 = arith.addf %660, %732 : vector<8x32xf32>
    %c0_289 = arith.constant 0 : index
    %c0_290 = arith.constant 0 : index
    %734 = vector.load %arg7[%c0_289, %c0_290] : memref<1x32xf32, #tpu.memory_space<vmem>>, vector<1x32xf32>
    %735 = vector.broadcast %734 : vector<1x32xf32> to vector<8x32xf32>
    %736 = arith.addf %733, %735 : vector<8x32xf32>
    %737 = arith.addf %736, %316 : vector<8x32xf32>
    %738 = arith.addf %737, %1 : vector<8x32xf32>
    %c0_291 = arith.constant 0 : index
    %c0_292 = arith.constant 0 : index
    %c0_293 = arith.constant 0 : index
    %739 = vector.load %arg15[%c0_291, %c0_292, %c0_293] : memref<1x8x32xf32, #tpu.memory_space<vmem>>, vector<1x8x32xf32>
    %740 = vector.shape_cast %739 : vector<1x8x32xf32> to vector<8x32xf32>
    %741 = vector.shape_cast %738 : vector<8x32xf32> to vector<1x8x32xf32>
    tpu.vector_store %arg15[%c0_291, %c0_292, %c0_293], %741 {strides = array<i32>} : memref<1x8x32xf32, #tpu.memory_space<vmem>>, vector<1x8x32xf32>,
    return
  }
  func.func @transform_0(%arg0: i32) -> (i32, i32, i32) {
    %c0_i32 = arith.constant 0 : i32
    %c0_i32_0 = arith.constant 0 : i32
    %c0_i32_1 = arith.constant 0 : i32
    return %arg0, %c0_i32, %c0_i32_0 : i32, i32, i32
  }
  func.func @transform_1(%arg0: i32) -> (i32, i32, i32) {
    %c0_i32 = arith.constant 0 : i32
    %c0_i32_0 = arith.constant 0 : i32
    %c0_i32_1 = arith.constant 0 : i32
    %c0_i32_2 = arith.constant 0 : i32
    return %c0_i32, %c0_i32_0, %c0_i32_1 : i32, i32, i32
  }
  func.func @transform_2(%arg0: i32) -> (i32, i32) {
    %c0_i32 = arith.constant 0 : i32
    %c0_i32_0 = arith.constant 0 : i32
    %c0_i32_1 = arith.constant 0 : i32
    return %c0_i32, %c0_i32_0 : i32, i32
  }
  func.func @transform_3(%arg0: i32) -> (i32, i32) {
    %c0_i32 = arith.constant 0 : i32
    %c0_i32_0 = arith.constant 0 : i32
    %c0_i32_1 = arith.constant 0 : i32
    return %c0_i32, %c0_i32_0 : i32, i32
  }
  func.func @transform_4(%arg0: i32) -> (i32, i32) {
    %c0_i32 = arith.constant 0 : i32
    %c0_i32_0 = arith.constant 0 : i32
    %c0_i32_1 = arith.constant 0 : i32
    return %c0_i32, %c0_i32_0 : i32, i32
  }
  func.func @transform_5(%arg0: i32) -> (i32, i32, i32) {
    %c0_i32 = arith.constant 0 : i32
    %c0_i32_0 = arith.constant 0 : i32
    %c0_i32_1 = arith.constant 0 : i32
    %c0_i32_2 = arith.constant 0 : i32
    return %c0_i32, %c0_i32_0, %c0_i32_1 : i32, i32, i32
  }
  func.func @transform_6(%arg0: i32) -> (i32, i32) {
    %c0_i32 = arith.constant 0 : i32
    %c0_i32_0 = arith.constant 0 : i32
    %c0_i32_1 = arith.constant 0 : i32
    return %c0_i32, %c0_i32_0 : i32, i32
  }
  func.func @transform_7(%arg0: i32) -> (i32, i32) {
    %c0_i32 = arith.constant 0 : i32
    %c0_i32_0 = arith.constant 0 : i32
    %c0_i32_1 = arith.constant 0 : i32
    return %c0_i32, %c0_i32_0 : i32, i32
  }
  func.func @transform_8(%arg0: i32) -> (i32, i32) {
    %c0_i32 = arith.constant 0 : i32
    %c0_i32_0 = arith.constant 0 : i32
    %c0_i32_1 = arith.constant 0 : i32
    return %c0_i32, %c0_i32_0 : i32, i32
  }
  func.func @transform_9(%arg0: i32) -> (i32, i32) {
    %c0_i32 = arith.constant 0 : i32
    %c0_i32_0 = arith.constant 0 : i32
    %c0_i32_1 = arith.constant 0 : i32
    return %c0_i32, %c0_i32_0 : i32, i32
  }
  func.func @transform_10(%arg0: i32) -> (i32, i32) {
    %c0_i32 = arith.constant 0 : i32
    %c0_i32_0 = arith.constant 0 : i32
    %c0_i32_1 = arith.constant 0 : i32
    return %c0_i32, %c0_i32_0 : i32, i32
  }
  func.func @transform_11(%arg0: i32) -> (i32, i32) {
    %c0_i32 = arith.constant 0 : i32
    %c0_i32_0 = arith.constant 0 : i32
    %c0_i32_1 = arith.constant 0 : i32
    return %c0_i32, %c0_i32_0 : i32, i32
  }
  func.func @transform_12(%arg0: i32) -> (i32, i32) {
    %c0_i32 = arith.constant 0 : i32
    %c0_i32_0 = arith.constant 0 : i32
    %c0_i32_1 = arith.constant 0 : i32
    return %c0_i32, %c0_i32_0 : i32, i32
  }
  func.func @transform_14(%arg0: i32) -> (i32, i32, i32) {
    %c0_i32 = arith.constant 0 : i32
    %c0_i32_0 = arith.constant 0 : i32
    %c0_i32_1 = arith.constant 0 : i32
    return %arg0, %c0_i32, %c0_i32_0 : i32, i32, i32
  }
}

module attributes {stable_mosaic.version = 11 : i64} {
  func.func @_decoder_kernel(%arg0: i32, %arg1: memref<2x8x32xf32, #tpu.memory_space<vmem>>, %arg2: memref<32x128xbf16, #tpu.memory_space<vmem>>, %arg3: memref<1x128xf32, #tpu.memory_space<vmem>>, %arg4: memref<128x7xbf16, #tpu.memory_space<vmem>>, %arg5: memref<1x7xf32, #tpu.memory_space<vmem>>, %arg6: memref<2x7xf32, #tpu.memory_space<vmem>>) attributes {dimension_semantics = [#tpu.dimension_semantics<parallel>], iteration_bounds = array<i64: 1>, scalar_prefetch = 0 : i64, scratch_operands = 0 : i64, tpu.core_type = #tpu.core_type<tc>, window_params = [{transform_indices = @transform_0, window_bounds = array<i64: 2, 8, 32>}, {pipeline_mode = #tpu.pipeline_mode<synchronous>, transform_indices = @transform_1, window_bounds = array<i64: 32, 128>}, {pipeline_mode = #tpu.pipeline_mode<synchronous>, transform_indices = @transform_2, window_bounds = array<i64: 1, 128>}, {pipeline_mode = #tpu.pipeline_mode<synchronous>, transform_indices = @transform_3, window_bounds = array<i64: 128, 7>}, {pipeline_mode = #tpu.pipeline_mode<synchronous>, transform_indices = @transform_4, window_bounds = array<i64: 1, 7>}, {transform_indices = @transform_5, window_bounds = array<i64: 2, 7>}]} {
    %c0 = arith.constant 0 : index
    %c0_0 = arith.constant 0 : index
    %c0_1 = arith.constant 0 : index
    %0 = vector.load %arg1[%c0, %c0_0, %c0_1] : memref<2x8x32xf32, #tpu.memory_space<vmem>>, vector<2x8x32xf32>
    %cst = arith.constant dense<0.000000e+00> : vector<2x32xf32>
    %1 = vector.multi_reduction <add>, %0, %cst [1] : vector<2x8x32xf32> to vector<2x32xf32>
    %cst_2 = arith.constant 8.000000e+00 : f32
    %2 = vector.broadcast %cst_2 : f32 to vector<2x32xf32>
    %3 = arith.divf %1, %2 : vector<2x32xf32>
    %cst_3 = arith.constant dense<0xFF800000> : vector<2x32xf32>
    %4 = vector.multi_reduction <maximumf>, %0, %cst_3 [1] : vector<2x8x32xf32> to vector<2x32xf32>
    %5 = arith.addf %3, %4 : vector<2x32xf32>
    %c0_4 = arith.constant 0 : index
    %c0_5 = arith.constant 0 : index
    %6 = vector.load %arg2[%c0_4, %c0_5] : memref<32x128xbf16, #tpu.memory_space<vmem>>, vector<32x128xbf16>
    %7 = arith.truncf %5 : vector<2x32xf32> to vector<2x32xbf16>
    %cst_6 = arith.constant dense<0.000000e+00> : vector<2x128xf32>
    %8 = tpu.matmul %7, %6, %cst_6 {dimension_numbers = #tpu.dot_dimension_numbers<[1], [0], [0], [1], [0, 0, 1, 1], [], []>} : vector<2x32xbf16>, vector<32x128xbf16>, vector<2x128xf32> -> vector<2x128xf32>
    %c0_7 = arith.constant 0 : index
    %c0_8 = arith.constant 0 : index
    %9 = vector.load %arg3[%c0_7, %c0_8] : memref<1x128xf32, #tpu.memory_space<vmem>>, vector<1x128xf32>
    %10 = vector.broadcast %9 : vector<1x128xf32> to vector<2x128xf32>
    %11 = arith.addf %8, %10 : vector<2x128xf32>
    %12 = arith.negf %11 : vector<2x128xf32>
    %13 = math.exp %12 : vector<2x128xf32>
    %cst_9 = arith.constant 1.000000e+00 : f32
    %14 = vector.broadcast %cst_9 : f32 to vector<2x128xf32>
    %15 = arith.addf %14, %13 : vector<2x128xf32>
    %16 = arith.divf %14, %15 : vector<2x128xf32>
    %17 = arith.mulf %11, %16 : vector<2x128xf32>
    %c0_10 = arith.constant 0 : index
    %c0_11 = arith.constant 0 : index
    %18 = vector.load %arg4[%c0_10, %c0_11] : memref<128x7xbf16, #tpu.memory_space<vmem>>, vector<128x7xbf16>
    %19 = arith.truncf %17 : vector<2x128xf32> to vector<2x128xbf16>
    %cst_12 = arith.constant dense<0.000000e+00> : vector<2x7xf32>
    %20 = tpu.matmul %19, %18, %cst_12 {dimension_numbers = #tpu.dot_dimension_numbers<[1], [0], [0], [1], [0, 0, 1, 1], [], []>} : vector<2x128xbf16>, vector<128x7xbf16>, vector<2x7xf32> -> vector<2x7xf32>
    %c0_13 = arith.constant 0 : index
    %c0_14 = arith.constant 0 : index
    %21 = vector.load %arg5[%c0_13, %c0_14] : memref<1x7xf32, #tpu.memory_space<vmem>>, vector<1x7xf32>
    %22 = vector.broadcast %21 : vector<1x7xf32> to vector<2x7xf32>
    %23 = arith.addf %20, %22 : vector<2x7xf32>
    %c0_15 = arith.constant 0 : index
    %c0_16 = arith.constant 0 : index
    %24 = vector.load %arg6[%c0_15, %c0_16] : memref<2x7xf32, #tpu.memory_space<vmem>>, vector<2x7xf32>
    tpu.vector_store %arg6[%c0_15, %c0_16], %23 {strides = array<i32>} : memref<2x7xf32, #tpu.memory_space<vmem>>, vector<2x7xf32>,
    return
  }
  func.func @transform_0(%arg0: i32) -> (i32, i32, i32) {
    %c0_i32 = arith.constant 0 : i32
    %c0_i32_0 = arith.constant 0 : i32
    %c0_i32_1 = arith.constant 0 : i32
    return %arg0, %c0_i32, %c0_i32_0 : i32, i32, i32
  }
  func.func @transform_1(%arg0: i32) -> (i32, i32) {
    %c0_i32 = arith.constant 0 : i32
    %c0_i32_0 = arith.constant 0 : i32
    %c0_i32_1 = arith.constant 0 : i32
    return %c0_i32, %c0_i32_0 : i32, i32
  }
  func.func @transform_2(%arg0: i32) -> (i32, i32) {
    %c0_i32 = arith.constant 0 : i32
    %c0_i32_0 = arith.constant 0 : i32
    %c0_i32_1 = arith.constant 0 : i32
    return %c0_i32, %c0_i32_0 : i32, i32
  }
  func.func @transform_3(%arg0: i32) -> (i32, i32) {
    %c0_i32 = arith.constant 0 : i32
    %c0_i32_0 = arith.constant 0 : i32
    %c0_i32_1 = arith.constant 0 : i32
    return %c0_i32, %c0_i32_0 : i32, i32
  }
  func.func @transform_4(%arg0: i32) -> (i32, i32) {
    %c0_i32 = arith.constant 0 : i32
    %c0_i32_0 = arith.constant 0 : i32
    %c0_i32_1 = arith.constant 0 : i32
    return %c0_i32, %c0_i32_0 : i32, i32
  }
  func.func @transform_5(%arg0: i32) -> (i32, i32) {
    %c0_i32 = arith.constant 0 : i32
    %c0_i32_0 = arith.constant 0 : i32
    return %arg0, %c0_i32 : i32, i32
  }
}

</mosaic_0001>

<llo_original>
// kernel: hierarchical_temporal_net.4
$region0: #{hierarchical_temporal_net.4}
  #allocation0 [shape = 'u32[]', space=smem, size = 0x4, offset = 0x4, fixed_abs, tag = 'smem constant byte address 0x4 - core index']
  #allocation1 [shape = 'u32[72,128]{1,0:T(1,128)}', space=vmem, size = 0x9000, scoped, tag = 'internal scratch']
  %s0 = inlined_call_operand.vmem [shape: f32[16,4], index: 0, kind: input, shape index: {}]
  %s1 = inlined_call_operand.vmem [shape: bf16[4,32], index: 1, kind: input, shape index: {}]
  %s2 = inlined_call_operand.vmem [shape: f32[1,32], index: 2, kind: input, shape index: {}]
  %s3 = inlined_call_operand.vmem [shape: f32[1,32], index: 3, kind: input, shape index: {}]
  %s4 = inlined_call_operand.vmem [shape: f32[1,32], index: 4, kind: input, shape index: {}]
  %s5 = inlined_call_operand.vmem [shape: bf16[32,32], index: 5, kind: input, shape index: {}]
  %s6 = inlined_call_operand.vmem [shape: f32[1,32], index: 6, kind: input, shape index: {}]
  %s7 = inlined_call_operand.vmem [shape: f32[16,32], index: 7, kind: output, shape index: {}]
  %s8 = sld [smem:[#allocation0]]
  $region38: #{hierarchical_temporal_net.4} parent=0
    _
  %s10 = ssub.s32 1, %s8
  %s11 = scalar_select 0, %s10, %s8
  // Predicated region
  $region2: #{hierarchical_temporal_net.4} parent=0 // pred_check
    _
  $region3: #{hierarchical_temporal_net.4} parent=0 // pred_check_branch
    %13 = sbr.rel (0) target = $region5
  $region4: #{hierarchical_temporal_net.4} parent=0 // pred_region
    _
  $region5: #{hierarchical_temporal_net.4} parent=0 // pred_fallthru
    _
  // Predicated region
  $region6: #{hierarchical_temporal_net.4} parent=0 // pred_check
    _
  $region7: #{hierarchical_temporal_net.4} parent=0 // pred_check_branch
    %15 = sbr.rel (0) target = $region9
  $region8: #{hierarchical_temporal_net.4} parent=0 // pred_region
    _
  $region9: #{hierarchical_temporal_net.4} parent=0 // pred_fallthru
    _
  // Predicated region
  $region10: #{hierarchical_temporal_net.4} parent=0 // pred_check
    _
  $region11: #{hierarchical_temporal_net.4} parent=0 // pred_check_branch
    %17 = sbr.rel (0) target = $region13
  $region12: #{hierarchical_temporal_net.4} parent=0 // pred_region
    _
  $region13: #{hierarchical_temporal_net.4} parent=0 // pred_fallthru
    _
  // Predicated region
  $region14: #{hierarchical_temporal_net.4} parent=0 // pred_check
    _
  $region15: #{hierarchical_temporal_net.4} parent=0 // pred_check_branch
    %19 = sbr.rel (0) target = $region17
  $region16: #{hierarchical_temporal_net.4} parent=0 // pred_region
    _
  $region17: #{hierarchical_temporal_net.4} parent=0 // pred_fallthru
    _
  // Predicated region
  $region18: #{hierarchical_temporal_net.4} parent=0 // pred_check
    _
  $region19: #{hierarchical_temporal_net.4} parent=0 // pred_check_branch
    %21 = sbr.rel (0) target = $region21
  $region20: #{hierarchical_temporal_net.4} parent=0 // pred_region
    _
  $region21: #{hierarchical_temporal_net.4} parent=0 // pred_fallthru
    _
  // Predicated region
  $region22: #{hierarchical_temporal_net.4} parent=0 // pred_check
    _
  $region23: #{hierarchical_temporal_net.4} parent=0 // pred_check_branch
    %23 = sbr.rel (0) target = $region25
  $region24: #{hierarchical_temporal_net.4} parent=0 // pred_region
    _
  $region25: #{hierarchical_temporal_net.4} parent=0 // pred_fallthru
    _
  // Predicated region
  $region26: #{hierarchical_temporal_net.4} parent=0 // pred_check
    _
  $region27: #{hierarchical_temporal_net.4} parent=0 // pred_check_branch
    %25 = sbr.rel (0) target = $region29
  $region28: #{hierarchical_temporal_net.4} parent=0 // pred_region
    _
  $region29: #{hierarchical_temporal_net.4} parent=0 // pred_fallthru
    _
  %v27 = vld [vmem:[%s0] sm:$0xff]
  %v28 = vld [vmem:[%s0 + $0x8] sm:$0xff]
  %v29 = vld [vmem:[%s1] sm:$0x3]
  %v30 = vpack.c.bf16 %v28, %v27
  %v31 = vld [vmem:[%s2] sm:$0x1]
  %v33 = vperm.slane %v31, 0
  %vm35 = vcmask 31744
  %v37 = vsel %vm35, %v30, 0
  %vm39 = vcmask 1041408
  %v41 = vsel %vm39, %v29, 0
  %43 = vmatpush.bf16.msra.mxu0 0
  %44 = vmatpush.bf16.msra.mxu0 0
  %45 = vmatpush.bf16.msra.mxu0 0
  %46 = vmatpush.bf16.msra.mxu0 0
  %47 = vmatpush.bf16.msra.mxu0 0
  %48 = vmatpush.bf16.msra.mxu0 0
  %49 = vmatpush.bf16.msra.mxu0 0
  %50 = vmatpush.bf16.msra.mxu0 %v41
  %51 = vmatmul.bf16.gmra.mxu0 %v37
  %v52 = vpop.f32.mrf.mxu0
  %v53 = vadd.f32 %v33, %v52
  %v54 = vpop.f32.mrf.mxu0
  %v55 = vadd.f32 %v33, %v54
  %56 = vdwg.mxu0
  %v57 = vld [vmem:[%s3] sm:$0x1]
  %v58 = vld [vmem:[%s4] sm:$0x1]
  %vm59 = vcmask 261120
  %v60 = vsel %vm59, %v53, 0.0
  %61 = vadd.xlane.f32.xlu0 %v60
  %v62 = vpop.xlane.xlu0 %61
  %v63 = vsel %vm59, %v55, 0.0
  %64 = vadd.xlane.f32.xlu0 %v63
  %v65 = vpop.xlane.xlu0 %64
  %v66 = vrcp.pop 32.0
  %v67 = vmul.f32 32.0, %v66
  %v68 = vsub.f32 1.0, %v67
  %v69 = vmul.f32 %v66, %v68
  %v70 = vadd.f32 %v66, %v69
  %vm71 = vweird.f32 %v66
  %v72 = vsel %vm71, %v66, %v70
  %v73 = vmul.f32 %v62, %v72
  %v74 = vmul.f32 %v65, %v72
  %v75 = vsub.f32 %v53, %v73
  %v76 = vsub.f32 %v55, %v74
  %v77 = vmul.f32 %v75, %v75
  %v78 = vmul.f32 %v76, %v76
  %v79 = vsel %vm59, %v77, 0.0
  %80 = vadd.xlane.f32.xlu0 %v79
  %v81 = vpop.xlane.xlu0 %80
  %v82 = vsel %vm59, %v78, 0.0
  %83 = vadd.xlane.f32.xlu0 %v82
  %v84 = vpop.xlane.xlu0 %83
  %v85 = vmul.f32 %v81, %v72
  %v86 = vmul.f32 %v84, %v72
  %v87 = vadd.f32 %v85, 1e-05
  %v88 = vadd.f32 %v86, 1e-05
  %v89 = vrsqrt.pop %v87
  %v90 = vmul.f32 %v89, %v87
  %v91 = vmul.f32 %v90, %v89
  %v92 = vmul.f32 0.5, %v91
  %v93 = vsub.f32 1.5, %v92
  %v94 = vmul.f32 %v89, %v93
  %vm95 = vweird.f32 %v87
  %vm96 = vweird.f32 %v89
  %vm97 = vmor %vm95, %vm96
  %v98 = vsel %vm97, %v89, %v94
  %v99 = vrsqrt.pop %v88
  %v100 = vmul.f32 %v99, %v88
  %v101 = vmul.f32 %v100, %v99
  %v102 = vmul.f32 0.5, %v101
  %v103 = vsub.f32 1.5, %v102
  %v104 = vmul.f32 %v99, %v103
  %vm105 = vweird.f32 %v88
  %vm106 = vweird.f32 %v99
  %vm107 = vmor %vm105, %vm106
  %v108 = vsel %vm107, %v99, %v104
  %v109 = vmul.f32 %v75, %v98
  %v110 = vmul.f32 %v76, %v108
  %v112 = vperm.slane %v57, 0
  %v114 = vmul.f32 %v109, %v112
  %v115 = vmul.f32 %v110, %v112
  %v117 = vperm.slane %v58, 0
  %v119 = vadd.f32 %v114, %v117
  %v120 = vadd.f32 %v115, %v117
  %v121 = vmul.f32 %v119, 0.5
  %v122 = vmul.f32 %v120, 0.5
  %v123 = vmul.f32 %v119, 0.70710677
  %v124 = vmul.f32 %v120, 0.70710677
  %vm125 = vcmp.ge.f32.partialorder %v123, 0.0
  %vm126 = vcmp.ge.f32.partialorder %v124, 0.0
  %v127 = vsel %vm125, 1.0, -1.0
  %v128 = vsel %vm126, 1.0, -1.0
  %v129 = vand.u32 2147483647, %v123
  %v130 = vand.u32 2147483647, %v124
  %v131 = vmul.f32 %v129, 0.3275911
  %v132 = vmul.f32 %v130, 0.3275911
  %v133 = vadd.f32 %v131, 1.0
  %v134 = vadd.f32 %v132, 1.0
  %v135 = vrcp.pop %v133
  %v136 = vmul.f32 %v133, %v135
  %v137 = vsub.f32 1.0, %v136
  %v138 = vmul.f32 %v135, %v137
  %v139 = vadd.f32 %v135, %v138
  %vm140 = vweird.f32 %v133
  %vm141 = vweird.f32 %v135
  %vm142 = vmor %vm140, %vm141
  %v143 = vsel %vm142, %v135, %v139
  %v144 = vand.u32 2147483647, %v133
  %vm145 = vcmp.eq.f32.partialorder %v144, 8.507059e+37
  %v146 = vand.u32 %v133, 2147483648
  %v147 = vor.u32 1.1754944e-38, %v146
  %v148 = vsel %vm145, %v147, %v143
  %v149 = vmul.f32 1.0, %v148
  %v150 = vrcp.pop %v134
  %v151 = vmul.f32 %v134, %v150
  %v152 = vsub.f32 1.0, %v151
  %v153 = vmul.f32 %v150, %v152
  %v154 = vadd.f32 %v150, %v153
  %vm155 = vweird.f32 %v134
  %vm156 = vweird.f32 %v150
  %vm157 = vmor %vm155, %vm156
  %v158 = vsel %vm157, %v150, %v154
  %v159 = vand.u32 2147483647, %v134
  %vm160 = vcmp.eq.f32.partialorder %v159, 8.507059e+37
  %v161 = vand.u32 %v134, 2147483648
  %v162 = vor.u32 1.1754944e-38, %v161
  %v163 = vsel %vm160, %v162, %v158
  %v164 = vmul.f32 1.0, %v163
  %v165 = vmul.f32 %v149, 1.0614054
  %v166 = vmul.f32 %v164, 1.0614054
  %v167 = vadd.f32 %v165, -1.4531521
  %v168 = vadd.f32 %v166, -1.4531521
  %v169 = vmul.f32 %v167, %v149
  %v170 = vmul.f32 %v168, %v164
  %v171 = vadd.f32 %v169, 1.4214138
  %v172 = vadd.f32 %v170, 1.4214138
  %v173 = vmul.f32 %v171, %v149
  %v174 = vmul.f32 %v172, %v164
  %v175 = vadd.f32 %v173, -0.28449672
  %v176 = vadd.f32 %v174, -0.28449672
  %v177 = vmul.f32 %v175, %v149
  %v178 = vmul.f32 %v176, %v164
  %v179 = vadd.f32 %v177, 0.2548296
  %v180 = vadd.f32 %v178, 0.2548296
  %v181 = vmul.f32 %v179, %v149
  %v182 = vmul.f32 %v180, %v164
  %v183 = vsub.f32 0.0, %v129
  %v184 = vsub.f32 0.0, %v130
  %v185 = vmul.f32 %v183, %v129
  %v186 = vmul.f32 %v184, %v130
  %v187 = vmul.f32 %v185, 1.442695
  %v188 = vpow.pop %v187
  %v189 = vmul.f32 %v186, 1.442695
  %v190 = vpow.pop %v189
  %v191 = vmul.f32 %v181, %v188
  %v192 = vmul.f32 %v182, %v190
  %v193 = vsub.f32 1.0, %v191
  %v194 = vsub.f32 1.0, %v192
  %v195 = vmul.f32 %v127, %v193
  %v196 = vmul.f32 %v128, %v194
  %v197 = vadd.f32 %v195, 1.0
  %v198 = vadd.f32 %v196, 1.0
  %v199 = vmul.f32 %v121, %v197
  %v200 = vmul.f32 %v122, %v198
  %v201 = vld [vmem:[%s5] sm:$0xf]
  %v202 = vld [vmem:[%s5 + $0x4] sm:$0xf]
  %v203 = vld [vmem:[%s5 + $0x8] sm:$0xf]
  %v204 = vld [vmem:[%s5 + $0xc] sm:$0xf]
  %v205 = vpack.c.bf16 %v200, %v199
  %v206 = vld [vmem:[%s6] sm:$0x1]
  %v208 = vperm.slane %v206, 0
  %v214 = vunpack.c.l.b16 %v201
  %v215 = vunpack.c.l.b16 %v202
  %v216 = vunpack.c.l.b16 %v203
  %v217 = vunpack.c.l.b16 %v204
  %v218 = vpack.c.b16 %v215, %v214
  %v219 = vpack.c.b16 %v217, %v216
  %v223 = vsel %vm59, %v205, 0
  %225 = vmatpush.bf16.msra.mxu0 0
  %226 = vmatpush.bf16.msra.mxu0 0
  %227 = vmatpush.bf16.msra.mxu0 0
  %228 = vmatpush.bf16.msra.mxu0 0
  %229 = vmatpush.bf16.msra.mxu0 0
  %230 = vmatpush.bf16.msra.mxu0 0
  %231 = vmatpush.bf16.msra.mxu0 %v219
  %232 = vmatpush.bf16.msra.mxu0 %v218
  %233 = vmatmul.bf16.gmra.mxu0 %v223
  %v234 = vpop.f32.mrf.mxu0
  %v235 = vadd.f32 %v208, %v234
  %v236 = vpop.f32.mrf.mxu0
  %v237 = vadd.f32 %v208, %v236
  %238 = vdwg.mxu0
  %239 = vst.msk [vmem:[%s7] sm:$0xff] %vm59, %v235
  %240 = vst.msk [vmem:[%s7 + $0x8] sm:$0xff] %vm59, %v237
  // Predicated region
  $region30: #{hierarchical_temporal_net.4} parent=0 // pred_check
    _
  $region31: #{hierarchical_temporal_net.4} parent=0 // pred_check_branch
    %242 = sbr.rel (0) target = $region33
  $region32: #{hierarchical_temporal_net.4} parent=0 // pred_region
    _
  $region33: #{hierarchical_temporal_net.4} parent=0 // pred_fallthru
    _
  // Predicated region
  $region34: #{hierarchical_temporal_net.4} parent=0 // pred_check
    _
  $region35: #{hierarchical_temporal_net.4} parent=0 // pred_check_branch
    %244 = sbr.rel (0) target = $region37
  $region36: #{hierarchical_temporal_net.4} parent=0 // pred_region
    _
  $region37: #{hierarchical_temporal_net.4} parent=0 // pred_fallthru
    _

// kernel: hierarchical_temporal_net.7
$region0: #{hierarchical_temporal_net.7}
  #allocation0 [shape = 'u32[]', space=smem, size = 0x4, offset = 0x4, fixed_abs, tag = 'smem constant byte address 0x4 - core index']
  #allocation1 [shape = 'u32[72,128]{1,0:T(1,128)}', space=vmem, size = 0x9000, scoped, tag = 'internal scratch']
  %s0 = inlined_call_operand.vmem [shape: f32[2,8,32], index: 0, kind: input, shape index: {}]
  %s1 = inlined_call_operand.vmem [shape: bf16[32,128], index: 1, kind: input, shape index: {}]
  %s2 = inlined_call_operand.vmem [shape: f32[1,128], index: 2, kind: input, shape index: {}]
  %s3 = inlined_call_operand.vmem [shape: bf16[128,7], index: 3, kind: input, shape index: {}]
  %s4 = inlined_call_operand.vmem [shape: f32[1,7], index: 4, kind: input, shape index: {}]
  %s5 = inlined_call_operand.hbm [shape: f32[2,7], index: 5, kind: output, shape index: {}]
  %s6 = sld [smem:[#allocation0]]
  $region30: #{hierarchical_temporal_net.7} parent=0
    _
  %s8 = ssub.s32 1, %s6
  %s9 = scalar_select 0, %s8, %s6
  $region1: #{hierarchical_temporal_net.7} parent=0
    #allocation2 [shape = 'u8[1024]{0}', space=vmem, size = 0x400, scoped, tag = 'output window, operand 0, single buffered']
    #allocation3 [shape = 's32[1]{0}', space=sflag, size = 0x4, scoped, tag = 'scoped memory for hierarchical_temporal_net.7']
    %10 = vsyncpa [#allocation3], 0
    // Predicated region
    $region2: #{hierarchical_temporal_net.7} parent=1 // pred_check
      _
    $region3: #{hierarchical_temporal_net.7} parent=1 // pred_check_branch
      %12 = sbr.rel (0) target = $region5
    $region4: #{hierarchical_temporal_net.7} parent=1 // pred_region
      _
    $region5: #{hierarchical_temporal_net.7} parent=1 // pred_fallthru
      _
    // Predicated region
    $region6: #{hierarchical_temporal_net.7} parent=1 // pred_check
      _
    $region7: #{hierarchical_temporal_net.7} parent=1 // pred_check_branch
      %14 = sbr.rel (0) target = $region9
    $region8: #{hierarchical_temporal_net.7} parent=1 // pred_region
      _
    $region9: #{hierarchical_temporal_net.7} parent=1 // pred_fallthru
      _
    // Predicated region
    $region10: #{hierarchical_temporal_net.7} parent=1 // pred_check
      _
    $region11: #{hierarchical_temporal_net.7} parent=1 // pred_check_branch
      %16 = sbr.rel (0) target = $region13
    $region12: #{hierarchical_temporal_net.7} parent=1 // pred_region
      _
    $region13: #{hierarchical_temporal_net.7} parent=1 // pred_fallthru
      _
    // Predicated region
    $region14: #{hierarchical_temporal_net.7} parent=1 // pred_check
      _
    $region15: #{hierarchical_temporal_net.7} parent=1 // pred_check_branch
      %18 = sbr.rel (0) target = $region17
    $region16: #{hierarchical_temporal_net.7} parent=1 // pred_region
      _
    $region17: #{hierarchical_temporal_net.7} parent=1 // pred_fallthru
      _
    // Predicated region
    $region18: #{hierarchical_temporal_net.7} parent=1 // pred_check
      _
    $region19: #{hierarchical_temporal_net.7} parent=1 // pred_check_branch
      %20 = sbr.rel (0) target = $region21
    $region20: #{hierarchical_temporal_net.7} parent=1 // pred_region
      _
    $region21: #{hierarchical_temporal_net.7} parent=1 // pred_fallthru
      _
    %v22 = vld [vmem:[%s0] sm:$0xff]
    %v23 = vld [vmem:[%s0 + $0x8] sm:$0xff]
    %vm24 = vcmask 261120
    %v25 = vsel %vm24, %v22, 0.0
    %v26 = vrot.slane %v25, 4
    %v27 = vadd.f32 %v25, %v26
    %v28 = vrot.slane %v27, 2
    %v29 = vadd.f32 %v27, %v28
    %v30 = vrot.slane %v29, 1
    %v31 = vadd.f32 %v29, %v30
    %v32 = vsel %vm24, %v23, 0.0
    %v33 = vrot.slane %v32, 4
    %v34 = vadd.f32 %v32, %v33
    %v35 = vrot.slane %v34, 2
    %v36 = vadd.f32 %v34, %v35
    %v37 = vrot.slane %v36, 1
    %v38 = vadd.f32 %v36, %v37
    %v39 = vrcp.pop 8.0
    %v40 = vmul.f32 8.0, %v39
    %v41 = vsub.f32 1.0, %v40
    %v42 = vmul.f32 %v39, %v41
    %v43 = vadd.f32 %v39, %v42
    %vm44 = vweird.f32 %v39
    %v45 = vsel %vm44, %v39, %v43
    %v46 = vmul.f32 %v31, %v45
    %v47 = vmul.f32 %v38, %v45
    %v48 = vsel %vm24, %v22, -inf
    %v49 = vrot.slane %v48, 4
    %v50 = vmax.f32 %v48, %v49
    %v51 = vrot.slane %v50, 2
    %v52 = vmax.f32 %v50, %v51
    %v53 = vrot.slane %v52, 1
    %v54 = vmax.f32 %v52, %v53
    %v55 = vsel %vm24, %v23, -inf
    %v56 = vrot.slane %v55, 4
    %v57 = vmax.f32 %v55, %v56
    %v58 = vrot.slane %v57, 2
    %v59 = vmax.f32 %v57, %v58
    %v60 = vrot.slane %v59, 1
    %v61 = vmax.f32 %v59, %v60
    %v62 = vadd.f32 %v46, %v54
    %v63 = vadd.f32 %v47, %v61
    %v64 = vld [vmem:[%s1] sm:$0xf]
    %v65 = vld [vmem:[%s1 + $0x4] sm:$0xf]
    %v66 = vld [vmem:[%s1 + $0x8] sm:$0xf]
    %v67 = vld [vmem:[%s1 + $0xc] sm:$0xf]
    %v68 = vpack.c.bf16 %v62, %v62
    %v69 = vpack.c.bf16 %v63, %v63
    %v70 = vld [vmem:[%s2] sm:$0x1]
    %v72 = vperm.slane %v70, 0
    %v76 = vunpack.c.l.b16 %v68
    %v77 = vunpack.c.l.b16 %v69
    %vm78 = vcmask 1041409
    %v79 = vsel %vm78, %v77, %v76
    %v80 = vpack.c.b16 %v79, %v79
    %v85 = vunpack.c.l.b16 %v64
    %v86 = vunpack.c.l.b16 %v65
    %v87 = vunpack.c.l.b16 %v66
    %v88 = vunpack.c.l.b16 %v67
    %v89 = vpack.c.b16 %v86, %v85
    %v90 = vpack.c.b16 %v88, %v87
    %v94 = vsel %vm24, %v80, 0
    %96 = vmatpush.bf16.msra.mxu0 0
    %97 = vmatpush.bf16.msra.mxu0 0
    %98 = vmatpush.bf16.msra.mxu0 0
    %99 = vmatpush.bf16.msra.mxu0 0
    %100 = vmatpush.bf16.msra.mxu0 0
    %101 = vmatpush.bf16.msra.mxu0 0
    %102 = vmatpush.bf16.msra.mxu0 %v90
    %103 = vmatpush.bf16.msra.mxu0 %v89
    %104 = vmatmul.bf16.gmra.mxu0 %v94
    %v105 = vpop.f32.mrf.mxu0
    %v106 = vadd.f32 %v72, %v105
    %v107 = vpop.f32.mrf.mxu0
    %108 = vdwg.mxu0
    %v109 = vxor.u32 %v106, 2147483648
    %v110 = vmul.f32 %v109, 1.442695
    %v111 = vpow.pop %v110
    %v112 = vadd.f32 %v111, 1.0
    %v113 = vrcp.pop %v112
    %v114 = vmul.f32 %v112, %v113
    %v115 = vsub.f32 1.0, %v114
    %v116 = vmul.f32 %v113, %v115
    %v117 = vadd.f32 %v113, %v116
    %vm118 = vweird.f32 %v112
    %vm119 = vweird.f32 %v113
    %vm120 = vmor %vm118, %vm119
    %v121 = vsel %vm120, %v113, %v117
    %v122 = vand.u32 2147483647, %v112
    %vm123 = vcmp.eq.f32.partialorder %v122, 8.507059e+37
    %v124 = vand.u32 %v112, 2147483648
    %v125 = vor.u32 1.1754944e-38, %v124
    %v126 = vsel %vm123, %v125, %v121
    %v127 = vmul.f32 1.0, %v126
    %v128 = vmul.f32 %v106, %v127
    %v129 = vld [vmem:[%s3] sm:$0xf]
    %v130 = vld [vmem:[%s3 + $0x4] sm:$0xf]
    %v131 = vld [vmem:[%s3 + $0x8] sm:$0xf]
    %v132 = vld [vmem:[%s3 + $0xc] sm:$0xf]
    %v133 = vld [vmem:[%s3 + $0x10] sm:$0xf]
    %v134 = vld [vmem:[%s3 + $0x14] sm:$0xf]
    %v135 = vld [vmem:[%s3 + $0x18] sm:$0xf]
    %v136 = vld [vmem:[%s3 + $0x1c] sm:$0xf]
    %v137 = vld [vmem:[%s3 + $0x20] sm:$0xf]
    %v138 = vld [vmem:[%s3 + $0x24] sm:$0xf]
    %v139 = vld [vmem:[%s3 + $0x28] sm:$0xf]
    %v140 = vld [vmem:[%s3 + $0x2c] sm:$0xf]
    %v141 = vld [vmem:[%s3 + $0x30] sm:$0xf]
    %v142 = vld [vmem:[%s3 + $0x34] sm:$0xf]
    %v143 = vld [vmem:[%s3 + $0x38] sm:$0xf]
    %v144 = vld [vmem:[%s3 + $0x3c] sm:$0xf]
    %v145 = vpack.c.bf16 %v128, %v128
    %v146 = vld [vmem:[%s4] sm:$0x1]
    %v148 = vperm.slane %v146, 0
    %v166 = vunpack.c.l.b16 %v129
    %v167 = vunpack.c.l.b16 %v130
    %v168 = vunpack.c.l.b16 %v131
    %v169 = vunpack.c.l.b16 %v132
    %v170 = vunpack.c.l.b16 %v133
    %v171 = vunpack.c.l.b16 %v134
    %v172 = vunpack.c.l.b16 %v135
    %v173 = vunpack.c.l.b16 %v136
    %v174 = vunpack.c.l.b16 %v137
    %v175 = vunpack.c.l.b16 %v138
    %v176 = vunpack.c.l.b16 %v139
    %v177 = vunpack.c.l.b16 %v140
    %v178 = vunpack.c.l.b16 %v141
    %v179 = vunpack.c.l.b16 %v142
    %v180 = vunpack.c.l.b16 %v143
    %v181 = vunpack.c.l.b16 %v144
    %v182 = vpack.c.b16 %v167, %v166
    %v183 = vpack.c.b16 %v169, %v168
    %v184 = vpack.c.b16 %v171, %v170
    %v185 = vpack.c.b16 %v173, %v172
    %v186 = vpack.c.b16 %v175, %v174
    %v187 = vpack.c.b16 %v177, %v176
    %v188 = vpack.c.b16 %v179, %v178
    %v189 = vpack.c.b16 %v181, %v180
    %198 = vmatpush.bf16.msra.mxu0 %v189
    %199 = vmatpush.bf16.msra.mxu0 %v188
    %200 = vmatpush.bf16.msra.mxu0 %v187
    %201 = vmatpush.bf16.msra.mxu0 %v186
    %202 = vmatpush.bf16.msra.mxu0 %v185
    %203 = vmatpush.bf16.msra.mxu0 %v184
    %204 = vmatpush.bf16.msra.mxu0 %v183
    %205 = vmatpush.bf16.msra.mxu0 %v182
    %206 = vmatmul.bf16.gmra.mxu0 %v145
    %v207 = vpop.f32.mrf.mxu0
    %v208 = vadd.f32 %v148, %v207
    %v209 = vpop.f32.mrf.mxu0
    %210 = vdwg.mxu0
    %vm211 = vcmask 50176
    %212 = vst.msk [vmem:[#allocation2] sm:$0x3] %vm211, %v208
    // Predicated region
    $region22: #{hierarchical_temporal_net.7} parent=1 // pred_check
      _
    $region23: #{hierarchical_temporal_net.7} parent=1 // pred_check_branch
      %214 = sbr.rel (0) target = $region25
    $region24: #{hierarchical_temporal_net.7} parent=1 // pred_region
      %216 = vsyncadd [#allocation3], 0
      %s218 = sshll.u32 [#allocation2], 4
      %s219 = int_to_ptr.vmem [resolvable:$true] %s218
      %s220 = sshll.u32 %s5, 4
      %s221 = int_to_ptr.hbm [resolvable:$true] %s220
      %223 = dma.vmem_to_hbm [thread:$0]  %s219, 32, %s221, [#allocation3]
    $region25: #{hierarchical_temporal_net.7} parent=1 // pred_fallthru
      _
    // Predicated region
    $region26: #{hierarchical_temporal_net.7} parent=1 // pred_check
      _
    $region27: #{hierarchical_temporal_net.7} parent=1 // pred_check_branch
      %225 = sbr.rel (0) target = $region29
    $region28: #{hierarchical_temporal_net.7} parent=1 // pred_region
      %227 = dma.done [#allocation3], 32
    $region29: #{hierarchical_temporal_net.7} parent=1 // pred_fallthru
      _
    %228 = vsyncpa [#allocation3], 1

// kernel: hierarchical_temporal_net.6
$region0: #{hierarchical_temporal_net.6}
  #allocation0 [shape = 'u32[]', space=smem, size = 0x4, offset = 0x4, fixed_abs, tag = 'smem constant byte address 0x4 - core index']
  #allocation1 [shape = 'u32[72,128]{1,0:T(1,128)}', space=vmem, size = 0x9000, scoped, tag = 'internal scratch']
  #allocation2 [shape = 'f32[2,8,8]{2,1,0:T(8,128)}', space=vmem, size = 0x2000, scoped, tag = 'scratch operand']
  #allocation3 [shape = 's32[2]{0}', space=sflag, size = 0x8, scoped, tag = 'scratch operand']
  #allocation21 [shape = 's32[]', space=sflag, size = 0x4, offset = 0, fixed_abs, tag = 'sflag constant byte address 0x0 - dummy sync flag']
  #allocation22 [shape = 's32[]', space=sflag, size = 0x4, offset = 0, fixed_abs, tag = 'sflag constant byte address 0x0 - dummy sync flag']
  #allocation23 [shape = 'u32[]', space=smem, size = 0x4, offset = 0x44, fixed_abs, tag = 'smem constant byte address 0x44 - assertion arg 0']
  #allocation24 [shape = 'u32[]', space=smem, size = 0x4, offset = 0x48, fixed_abs, tag = 'smem constant byte address 0x48 - assertion arg 1']
  #allocation25 [shape = 's32[]', space=sflag, size = 0x4, offset = 0, fixed_abs, tag = 'sflag constant byte address 0x0 - dummy sync flag']
  #allocation26 [shape = 's32[]', space=sflag, size = 0x4, offset = 0, fixed_abs, tag = 'sflag constant byte address 0x0 - dummy sync flag']
  #allocation27 [shape = 's32[]', space=sflag, size = 0x4, offset = 0, fixed_abs, tag = 'sflag constant byte address 0x0 - dummy sync flag']
  #allocation28 [shape = 's32[]', space=sflag, size = 0x4, offset = 0, fixed_abs, tag = 'sflag constant byte address 0x0 - dummy sync flag']
  #allocation29 [shape = 's32[]', space=sflag, size = 0x4, offset = 0, fixed_abs, tag = 'sflag constant byte address 0x0 - dummy sync flag']
  #allocation30 [shape = 's32[]', space=sflag, size = 0x4, offset = 0, fixed_abs, tag = 'sflag constant byte address 0x0 - dummy sync flag']
  #allocation31 [shape = 's32[]', space=sflag, size = 0x4, offset = 0, fixed_abs, tag = 'sflag constant byte address 0x0 - dummy sync flag']
  #allocation32 [shape = 's32[]', space=sflag, size = 0x4, offset = 0, fixed_abs, tag = 'sflag constant byte address 0x0 - dummy sync flag']
  #allocation33 [shape = 's32[]', space=sflag, size = 0x4, offset = 0, fixed_abs, tag = 'sflag constant byte address 0x0 - dummy sync flag']
  #allocation34 [shape = 's32[]', space=sflag, size = 0x4, offset = 0, fixed_abs, tag = 'sflag constant byte address 0x0 - dummy sync flag']
  #allocation35 [shape = 's32[]', space=sflag, size = 0x4, offset = 0, fixed_abs, tag = 'sflag constant byte address 0x0 - dummy sync flag']
  #allocation36 [shape = 's32[]', space=sflag, size = 0x4, offset = 0, fixed_abs, tag = 'sflag constant byte address 0x0 - dummy sync flag']
  #allocation37 [shape = 's32[]', space=sflag, size = 0x4, offset = 0, fixed_abs, tag = 'sflag constant byte address 0x0 - dummy sync flag']
  #allocation38 [shape = 's32[]', space=sflag, size = 0x4, offset = 0, fixed_abs, tag = 'sflag constant byte address 0x0 - dummy sync flag']
  %s0 = inlined_call_operand.vmem [shape: f32[2,8,32], index: 0, kind: input, shape index: {}]
  %s1 = inlined_call_operand.vmem [shape: f32[3,4,32], index: 1, kind: input, shape index: {}]
  %s2 = inlined_call_operand.hbm [shape: f32[4,32], index: 2, kind: input, shape index: {}]
  %s3 = inlined_call_operand.hbm [shape: f32[4,32], index: 3, kind: input, shape index: {}]
  %s4 = inlined_call_operand.hbm [shape: f32[4,32], index: 4, kind: input, shape index: {}]
  %s5 = inlined_call_operand.hbm [shape: bf16[4,32,32], index: 5, kind: input, shape index: {}]
  %s6 = inlined_call_operand.hbm [shape: f32[1,32], index: 6, kind: input, shape index: {}]
  %s7 = inlined_call_operand.hbm [shape: f32[1,32], index: 7, kind: input, shape index: {}]
  %s8 = inlined_call_operand.hbm [shape: f32[1,32], index: 8, kind: input, shape index: {}]
  %s9 = inlined_call_operand.hbm [shape: bf16[32,128], index: 9, kind: input, shape index: {}]
  %s10 = inlined_call_operand.hbm [shape: f32[1,128], index: 10, kind: input, shape index: {}]
  %s11 = inlined_call_operand.hbm [shape: bf16[32,32], index: 11, kind: input, shape index: {}]
  %s12 = inlined_call_operand.hbm [shape: f32[1,32], index: 12, kind: input, shape index: {}]
  %s13 = inlined_call_operand.hbm [shape: f32[8,8,8], index: 13, kind: input, shape index: {}]
  %s14 = inlined_call_operand.vmem [shape: f32[2,8,32], index: 14, kind: output, shape index: {}]
  %s15 = sld [smem:[#allocation0]]
  $region161: #{hierarchical_temporal_net.6} parent=0
    _
  %s17 = ssub.s32 1, %s15
  %s18 = scalar_select 0, %s17, %s15
  $region1: #{hierarchical_temporal_net.6} parent=0
    #allocation4 [shape = 'u8[2048]{0}', space=vmem, size = 0x800, scoped, tag = 'input window, operand 2, single buffered']
    #allocation5 [shape = 's32[2]{0}', space=sflag, size = 0x8, scoped, tag = 'scoped memory for hierarchical_temporal_net.6']
    #allocation6 [shape = 'u8[2048]{0}', space=vmem, size = 0x800, scoped, tag = 'input window, operand 3, single buffered']
    #allocation7 [shape = 's32[1]{0}', space=sflag, size = 0x4, scoped, tag = 'scoped memory for hierarchical_temporal_net.6']
    #allocation8 [shape = 'u8[2048]{0}', space=vmem, size = 0x800, scoped, tag = 'input window, operand 4, single buffered']
    #allocation9 [shape = 'u8[32768]{0}', space=vmem, size = 0x8000, scoped, tag = 'input window, operand 5, single buffered']
    #allocation10 [shape = 's32[1]{0}', space=sflag, size = 0x4, scoped, tag = 'scoped memory for hierarchical_temporal_net.6']
    #allocation11 [shape = 'u8[512]{0}', space=vmem, size = 0x400, scoped, tag = 'input window, operand 6, single buffered']
    #allocation12 [shape = 'u8[512]{0}', space=vmem, size = 0x400, scoped, tag = 'input window, operand 7, single buffered']
    #allocation13 [shape = 's32[1]{0}', space=sflag, size = 0x4, scoped, tag = 'scoped memory for hierarchical_temporal_net.6']
    #allocation14 [shape = 'u8[512]{0}', space=vmem, size = 0x400, scoped, tag = 'input window, operand 8, single buffered']
    #allocation15 [shape = 'u8[8192]{0}', space=vmem, size = 0x2000, scoped, tag = 'input window, operand 9, single buffered']
    #allocation16 [shape = 's32[1]{0}', space=sflag, size = 0x4, scoped, tag = 'scoped memory for hierarchical_temporal_net.6']
    #allocation17 [shape = 'u8[512]{0}', space=vmem, size = 0x400, scoped, tag = 'input window, operand 10, single buffered']
    #allocation18 [shape = 'u8[8192]{0}', space=vmem, size = 0x2000, scoped, tag = 'input window, operand 11, single buffered']
    #allocation19 [shape = 's32[1]{0}', space=sflag, size = 0x4, scoped, tag = 'scoped memory for hierarchical_temporal_net.6']
    #allocation20 [shape = 'u8[512]{0}', space=vmem, size = 0x400, scoped, tag = 'input window, operand 12, single buffered']
    %19 = vsyncpa [#allocation5], 0
    %20 = vsyncpa [#allocation7], 0
    %21 = vsyncpa [#allocation10], 0
    %22 = vsyncpa [#allocation13], 0
    %23 = vsyncpa [#allocation16], 0
    %24 = vsyncpa [#allocation19], 0
    loop: start=0, step=1, limit=4
    $region2: #{hierarchical_temporal_net.6} parent=1 // loop_pre_header
      _
    $region3: #{hierarchical_temporal_net.6} parent=1 // loop_header
      %s26 = sphi 0, %s30
      %p27 = scmp.ge.s32.totalorder %s26, 4
      %s36 = sphi 0, %s38
      %s39 = sphi 0, %s36
      %s40 = sphi 0, %s39
      %s56 = sphi 0, %s40
      %s60 = sphi 0, %s60
      %s62 = sphi 0, %s60
      %s63 = sphi 0, %s62
      %s77 = sphi 0, %s63
      %s81 = sphi 0, %s81
      %s83 = sphi 0, %s81
      %s84 = sphi 0, %s83
      %s98 = sphi 0, %s84
      %s102 = sphi 0, %s102
      %s104 = sphi 0, %s102
      %s105 = sphi 0, %s104
      %s119 = sphi 0, %s105
      %s123 = sphi 0, %s123
      %s125 = sphi 0, %s123
      %s126 = sphi 0, %s125
      %s140 = sphi 0, %s126
      %s144 = sphi 0, %s144
      %s146 = sphi 0, %s144
      %s147 = sphi 0, %s146
      %s161 = sphi 0, %s147
      %s165 = sphi 0, %s165
      %s167 = sphi 0, %s165
      %s168 = sphi 0, %s167
      %s182 = sphi 0, %s168
      %s186 = sphi 0, %s186
      %s188 = sphi 0, %s186
      %s189 = sphi 0, %s188
      %s203 = sphi 0, %s189
      %s207 = sphi 0, %s207
      %s209 = sphi 0, %s207
      %s210 = sphi 0, %s209
      %s224 = sphi 0, %s210
      %s228 = sphi 0, %s228
      %s230 = sphi 0, %s228
      %s231 = sphi 0, %s230
      %s245 = sphi 0, %s231
      %s249 = sphi 0, %s249
      %s251 = sphi 0, %s249
      %s252 = sphi 0, %s251
      %s266 = sphi 0, %s252
      %s270 = sphi 0, %s270
      %s272 = sphi 0, %s270
      %s273 = sphi 0, %s272
      %s287 = sphi 0, %s273
      %s291 = sphi 0, %s291
      %s293 = sphi 0, %s291
      %s294 = sphi 0, %s293
      %s308 = sphi 0, %s294
      %s314 = sphi 0, %s316
      %s317 = sphi 0, %s314
      %s318 = sphi 0, %s317
      %s334 = sphi 0, %s318
    $region4: #{hierarchical_temporal_net.6} parent=1 // loop_header_branch
      %29 = sbr.rel (%p27) target = $region8
    $region5: #{hierarchical_temporal_net.6} parent=1 // loop_body
      %s31 = ssub.s32 %s26, 1
      %s32 = ssub.s32 %s26, 2
      %s33 = sadd.s32 %s26, 1
      %s34 = ssub.s32 %s26, %s33
      %p35 = scmp.eq.s32.totalorder %s34, 0
      %s37 = sadd.s32 %s36, 1
      %s38 = scalar_select %p35, %s36, %s37
      %p41 = pneg %p35
      %p42 = scmp.eq.s32.totalorder %s26, 1
      %p43 = por %p41, %p42
      %p44 = scmp.ne.s32.totalorder %s36, %s39
      %p45 = scmp.eq.s32.totalorder %s26, 0
      %p46 = por %p44, %p45
      %p47 = scmp.ne.s32.totalorder %s36, %s39
      %p48 = scmp.eq.s32.totalorder %s31, 1
      %p49 = por %p47, %p48
      %p50 = scmp.ne.s32.totalorder %s39, %s40
      %p51 = scmp.eq.s32.totalorder %s31, 0
      %p52 = por %p50, %p51
      %p53 = scmp.ne.s32.totalorder %s39, %s40
      %p54 = scmp.eq.s32.totalorder %s32, 1
      %p55 = por %p53, %p54
      %p57 = scmp.ne.s32.totalorder %s40, %s56
      %p58 = scmp.eq.s32.totalorder %s32, 0
      %p59 = por %p57, %p58
      %s61 = sadd.s32 %s60, 1
      %p64 = scmp.eq.s32.totalorder %s26, 1
      %p65 = scmp.ne.s32.totalorder %s60, %s62
      %p66 = scmp.eq.s32.totalorder %s26, 0
      %p67 = por %p65, %p66
      %p68 = scmp.ne.s32.totalorder %s60, %s62
      %p69 = scmp.eq.s32.totalorder %s31, 1
      %p70 = por %p68, %p69
      %p71 = scmp.ne.s32.totalorder %s62, %s63
      %p72 = scmp.eq.s32.totalorder %s31, 0
      %p73 = por %p71, %p72
      %p74 = scmp.ne.s32.totalorder %s62, %s63
      %p75 = scmp.eq.s32.totalorder %s32, 1
      %p76 = por %p74, %p75
      %p78 = scmp.ne.s32.totalorder %s63, %s77
      %p79 = scmp.eq.s32.totalorder %s32, 0
      %p80 = por %p78, %p79
      %s82 = sadd.s32 %s81, 1
      %p85 = scmp.eq.s32.totalorder %s26, 1
      %p86 = scmp.ne.s32.totalorder %s81, %s83
      %p87 = scmp.eq.s32.totalorder %s26, 0
      %p88 = por %p86, %p87
      %p89 = scmp.ne.s32.totalorder %s81, %s83
      %p90 = scmp.eq.s32.totalorder %s31, 1
      %p91 = por %p89, %p90
      %p92 = scmp.ne.s32.totalorder %s83, %s84
      %p93 = scmp.eq.s32.totalorder %s31, 0
      %p94 = por %p92, %p93
      %p95 = scmp.ne.s32.totalorder %s83, %s84
      %p96 = scmp.eq.s32.totalorder %s32, 1
      %p97 = por %p95, %p96
      %p99 = scmp.ne.s32.totalorder %s84, %s98
      %p100 = scmp.eq.s32.totalorder %s32, 0
      %p101 = por %p99, %p100
      %s103 = sadd.s32 %s102, 1
      %p106 = scmp.eq.s32.totalorder %s26, 1
      %p107 = scmp.ne.s32.totalorder %s102, %s104
      %p108 = scmp.eq.s32.totalorder %s26, 0
      %p109 = por %p107, %p108
      %p110 = scmp.ne.s32.totalorder %s102, %s104
      %p111 = scmp.eq.s32.totalorder %s31, 1
      %p112 = por %p110, %p111
      %p113 = scmp.ne.s32.totalorder %s104, %s105
      %p114 = scmp.eq.s32.totalorder %s31, 0
      %p115 = por %p113, %p114
      %p116 = scmp.ne.s32.totalorder %s104, %s105
      %p117 = scmp.eq.s32.totalorder %s32, 1
      %p118 = por %p116, %p117
      %p120 = scmp.ne.s32.totalorder %s105, %s119
      %p121 = scmp.eq.s32.totalorder %s32, 0
      %p122 = por %p120, %p121
      %s124 = sadd.s32 %s123, 1
      %p127 = scmp.eq.s32.totalorder %s26, 1
      %p128 = scmp.ne.s32.totalorder %s123, %s125
      %p129 = scmp.eq.s32.totalorder %s26, 0
      %p130 = por %p128, %p129
      %p131 = scmp.ne.s32.totalorder %s123, %s125
      %p132 = scmp.eq.s32.totalorder %s31, 1
      %p133 = por %p131, %p132
      %p134 = scmp.ne.s32.totalorder %s125, %s126
      %p135 = scmp.eq.s32.totalorder %s31, 0
      %p136 = por %p134, %p135
      %p137 = scmp.ne.s32.totalorder %s125, %s126
      %p138 = scmp.eq.s32.totalorder %s32, 1
      %p139 = por %p137, %p138
      %p141 = scmp.ne.s32.totalorder %s126, %s140
      %p142 = scmp.eq.s32.totalorder %s32, 0
      %p143 = por %p141, %p142
      %s145 = sadd.s32 %s144, 1
      %p148 = scmp.eq.s32.totalorder %s26, 1
      %p149 = scmp.ne.s32.totalorder %s144, %s146
      %p150 = scmp.eq.s32.totalorder %s26, 0
      %p151 = por %p149, %p150
      %p152 = scmp.ne.s32.totalorder %s144, %s146
      %p153 = scmp.eq.s32.totalorder %s31, 1
      %p154 = por %p152, %p153
      %p155 = scmp.ne.s32.totalorder %s146, %s147
      %p156 = scmp.eq.s32.totalorder %s31, 0
      %p157 = por %p155, %p156
      %p158 = scmp.ne.s32.totalorder %s146, %s147
      %p159 = scmp.eq.s32.totalorder %s32, 1
      %p160 = por %p158, %p159
      %p162 = scmp.ne.s32.totalorder %s147, %s161
      %p163 = scmp.eq.s32.totalorder %s32, 0
      %p164 = por %p162, %p163
      %s166 = sadd.s32 %s165, 1
      %p169 = scmp.eq.s32.totalorder %s26, 1
      %p170 = scmp.ne.s32.totalorder %s165, %s167
      %p171 = scmp.eq.s32.totalorder %s26, 0
      %p172 = por %p170, %p171
      %p173 = scmp.ne.s32.totalorder %s165, %s167
      %p174 = scmp.eq.s32.totalorder %s31, 1
      %p175 = por %p173, %p174
      %p176 = scmp.ne.s32.totalorder %s167, %s168
      %p177 = scmp.eq.s32.totalorder %s31, 0
      %p178 = por %p176, %p177
      %p179 = scmp.ne.s32.totalorder %s167, %s168
      %p180 = scmp.eq.s32.totalorder %s32, 1
      %p181 = por %p179, %p180
      %p183 = scmp.ne.s32.totalorder %s168, %s182
      %p184 = scmp.eq.s32.totalorder %s32, 0
      %p185 = por %p183, %p184
      %s187 = sadd.s32 %s186, 1
      %p190 = scmp.eq.s32.totalorder %s26, 1
      %p191 = scmp.ne.s32.totalorder %s186, %s188
      %p192 = scmp.eq.s32.totalorder %s26, 0
      %p193 = por %p191, %p192
      %p194 = scmp.ne.s32.totalorder %s186, %s188
      %p195 = scmp.eq.s32.totalorder %s31, 1
      %p196 = por %p194, %p195
      %p197 = scmp.ne.s32.totalorder %s188, %s189
      %p198 = scmp.eq.s32.totalorder %s31, 0
      %p199 = por %p197, %p198
      %p200 = scmp.ne.s32.totalorder %s188, %s189
      %p201 = scmp.eq.s32.totalorder %s32, 1
      %p202 = por %p200, %p201
      %p204 = scmp.ne.s32.totalorder %s189, %s203
      %p205 = scmp.eq.s32.totalorder %s32, 0
      %p206 = por %p204, %p205
      %s208 = sadd.s32 %s207, 1
      %p211 = scmp.eq.s32.totalorder %s26, 1
      %p212 = scmp.ne.s32.totalorder %s207, %s209
      %p213 = scmp.eq.s32.totalorder %s26, 0
      %p214 = por %p212, %p213
      %p215 = scmp.ne.s32.totalorder %s207, %s209
      %p216 = scmp.eq.s32.totalorder %s31, 1
      %p217 = por %p215, %p216
      %p218 = scmp.ne.s32.totalorder %s209, %s210
      %p219 = scmp.eq.s32.totalorder %s31, 0
      %p220 = por %p218, %p219
      %p221 = scmp.ne.s32.totalorder %s209, %s210
      %p222 = scmp.eq.s32.totalorder %s32, 1
      %p223 = por %p221, %p222
      %p225 = scmp.ne.s32.totalorder %s210, %s224
      %p226 = scmp.eq.s32.totalorder %s32, 0
      %p227 = por %p225, %p226
      %s229 = sadd.s32 %s228, 1
      %p232 = scmp.eq.s32.totalorder %s26, 1
      %p233 = scmp.ne.s32.totalorder %s228, %s230
      %p234 = scmp.eq.s32.totalorder %s26, 0
      %p235 = por %p233, %p234
      %p236 = scmp.ne.s32.totalorder %s228, %s230
      %p237 = scmp.eq.s32.totalorder %s31, 1
      %p238 = por %p236, %p237
      %p239 = scmp.ne.s32.totalorder %s230, %s231
      %p240 = scmp.eq.s32.totalorder %s31, 0
      %p241 = por %p239, %p240
      %p242 = scmp.ne.s32.totalorder %s230, %s231
      %p243 = scmp.eq.s32.totalorder %s32, 1
      %p244 = por %p242, %p243
      %p246 = scmp.ne.s32.totalorder %s231, %s245
      %p247 = scmp.eq.s32.totalorder %s32, 0
      %p248 = por %p246, %p247
      %s250 = sadd.s32 %s249, 1
      %p253 = scmp.eq.s32.totalorder %s26, 1
      %p254 = scmp.ne.s32.totalorder %s249, %s251
      %p255 = scmp.eq.s32.totalorder %s26, 0
      %p256 = por %p254, %p255
      %p257 = scmp.ne.s32.totalorder %s249, %s251
      %p258 = scmp.eq.s32.totalorder %s31, 1
      %p259 = por %p257, %p258
      %p260 = scmp.ne.s32.totalorder %s251, %s252
      %p261 = scmp.eq.s32.totalorder %s31, 0
      %p262 = por %p260, %p261
      %p263 = scmp.ne.s32.totalorder %s251, %s252
      %p264 = scmp.eq.s32.totalorder %s32, 1
      %p265 = por %p263, %p264
      %p267 = scmp.ne.s32.totalorder %s252, %s266
      %p268 = scmp.eq.s32.totalorder %s32, 0
      %p269 = por %p267, %p268
      %s271 = sadd.s32 %s270, 1
      %p274 = scmp.eq.s32.totalorder %s26, 1
      %p275 = scmp.ne.s32.totalorder %s270, %s272
      %p276 = scmp.eq.s32.totalorder %s26, 0
      %p277 = por %p275, %p276
      %p278 = scmp.ne.s32.totalorder %s270, %s272
      %p279 = scmp.eq.s32.totalorder %s31, 1
      %p280 = por %p278, %p279
      %p281 = scmp.ne.s32.totalorder %s272, %s273
      %p282 = scmp.eq.s32.totalorder %s31, 0
      %p283 = por %p281, %p282
      %p284 = scmp.ne.s32.totalorder %s272, %s273
      %p285 = scmp.eq.s32.totalorder %s32, 1
      %p286 = por %p284, %p285
      %p288 = scmp.ne.s32.totalorder %s273, %s287
      %p289 = scmp.eq.s32.totalorder %s32, 0
      %p290 = por %p288, %p289
      %s292 = sadd.s32 %s291, 1
      %p295 = scmp.eq.s32.totalorder %s26, 1
      %p296 = scmp.ne.s32.totalorder %s291, %s293
      %p297 = scmp.eq.s32.totalorder %s26, 0
      %p298 = por %p296, %p297
      %p299 = scmp.ne.s32.totalorder %s291, %s293
      %p300 = scmp.eq.s32.totalorder %s31, 1
      %p301 = por %p299, %p300
      %p302 = scmp.ne.s32.totalorder %s293, %s294
      %p303 = scmp.eq.s32.totalorder %s31, 0
      %p304 = por %p302, %p303
      %p305 = scmp.ne.s32.totalorder %s293, %s294
      %p306 = scmp.eq.s32.totalorder %s32, 1
      %p307 = por %p305, %p306
      %p309 = scmp.ne.s32.totalorder %s294, %s308
      %p310 = scmp.eq.s32.totalorder %s32, 0
      %p311 = por %p309, %p310
      %s312 = ssub.s32 %s26, %s33
      %p313 = scmp.eq.s32.totalorder %s312, 0
      %s315 = sadd.s32 %s314, 1
      %s316 = scalar_select %p313, %s314, %s315
      %p319 = pneg %p313
      %p320 = scmp.eq.s32.totalorder %s26, 1
      %p321 = por %p319, %p320
      %p322 = scmp.ne.s32.totalorder %s314, %s317
      %p323 = scmp.eq.s32.totalorder %s26, 0
      %p324 = por %p322, %p323
      %p325 = scmp.ne.s32.totalorder %s314, %s317
      %p326 = scmp.eq.s32.totalorder %s31, 1
      %p327 = por %p325, %p326
      %p328 = scmp.ne.s32.totalorder %s317, %s318
      %p329 = scmp.eq.s32.totalorder %s31, 0
      %p330 = por %p328, %p329
      %p331 = scmp.ne.s32.totalorder %s317, %s318
      %p332 = scmp.eq.s32.totalorder %s32, 1
      %p333 = por %p331, %p332
      %p335 = scmp.ne.s32.totalorder %s318, %s334
      %p336 = scmp.eq.s32.totalorder %s32, 0
      %p337 = por %p335, %p336
      %p338 = scmp.le.s32.totalorder 1, %s26
      %p339 = scmp.lt.s32.totalorder %s26, 3
      %p340 = pnand %p338, %p339
      %p341 = pneg %p340
      // Predicated region
      $region9: #{hierarchical_temporal_net.6} parent=5 // pred_check
        _
      $region10: #{hierarchical_temporal_net.6} parent=5 // pred_check_branch
        %343 = sbr.rel (%p340) target = $region12
      $region11: #{hierarchical_temporal_net.6} parent=5 // pred_region
        %s344 = ssub.s32 %s26, 1
        // Predicated region
        $region13: #{hierarchical_temporal_net.6} parent=11 // pred_check
          %p345 = pneg %p73
        $region14: #{hierarchical_temporal_net.6} parent=11 // pred_check_branch
          %347 = sbr.rel (%p345) target = $region16
        $region15: #{hierarchical_temporal_net.6} parent=11 // pred_region
          _
        $region16: #{hierarchical_temporal_net.6} parent=11 // pred_fallthru
          _
        // Predicated region
        $region17: #{hierarchical_temporal_net.6} parent=11 // pred_check
          %p348 = pneg %p94
        $region18: #{hierarchical_temporal_net.6} parent=11 // pred_check_branch
          %350 = sbr.rel (%p348) target = $region20
        $region19: #{hierarchical_temporal_net.6} parent=11 // pred_region
          %352 = vsyncadd [#allocation5], 0
          %s354 = sshll.u32 %s2, 4
          %s355 = int_to_ptr.hbm [resolvable:$true] %s354
          %s356 = sshll.u32 [#allocation4], 4
          %s357 = int_to_ptr.vmem [resolvable:$true] %s356
          %359 = dma.hbm_to_vmem [thread:$0]  %s355, 64, %s357, [#allocation5]
        $region20: #{hierarchical_temporal_net.6} parent=11 // pred_fallthru
          _
        // Predicated region
        $region21: #{hierarchical_temporal_net.6} parent=11 // pred_check
          %p360 = pneg %p115
        $region22: #{hierarchical_temporal_net.6} parent=11 // pred_check_branch
          %362 = sbr.rel (%p360) target = $region24
        $region23: #{hierarchical_temporal_net.6} parent=11 // pred_region
          %364 = vsyncadd [#allocation7], 0
          %s366 = sshll.u32 %s3, 4
          %s367 = int_to_ptr.hbm [resolvable:$true] %s366
          %s368 = sshll.u32 [#allocation6], 4
          %s369 = int_to_ptr.vmem [resolvable:$true] %s368
          %371 = dma.hbm_to_vmem [thread:$0]  %s367, 64, %s369, [#allocation7]
        $region24: #{hierarchical_temporal_net.6} parent=11 // pred_fallthru
          _
        // Predicated region
        $region25: #{hierarchical_temporal_net.6} parent=11 // pred_check
          %p372 = pneg %p136
        $region26: #{hierarchical_temporal_net.6} parent=11 // pred_check_branch
          %374 = sbr.rel (%p372) target = $region28
        $region27: #{hierarchical_temporal_net.6} parent=11 // pred_region
          %376 = vsyncadd [#allocation7], 0
          %s378 = sshll.u32 %s4, 4
          %s379 = int_to_ptr.hbm [resolvable:$true] %s378
          %s380 = sshll.u32 [#allocation8], 4
          %s381 = int_to_ptr.vmem [resolvable:$true] %s380
          %383 = dma.hbm_to_vmem [thread:$0]  %s379, 64, %s381, [#allocation7]
        $region28: #{hierarchical_temporal_net.6} parent=11 // pred_fallthru
          _
        // Predicated region
        $region29: #{hierarchical_temporal_net.6} parent=11 // pred_check
          %p384 = pneg %p157
        $region30: #{hierarchical_temporal_net.6} parent=11 // pred_check_branch
          %386 = sbr.rel (%p384) target = $region32
        $region31: #{hierarchical_temporal_net.6} parent=11 // pred_region
          %388 = vsyncadd [#allocation10], 0
          %s389 = sshll.u32 %s5, 4
          %s390 = int_to_ptr.hbm [resolvable:$true] %s389
          %s391 = sshll.u32 [#allocation9], 4
          %s392 = int_to_ptr.vmem [resolvable:$true] %s391
          %397 = dma.hbm_to_vmem [thread:$0]  %s390, 1024, %s392, [#allocation10], 64, 64, 4
        $region32: #{hierarchical_temporal_net.6} parent=11 // pred_fallthru
          _
        // Predicated region
        $region33: #{hierarchical_temporal_net.6} parent=11 // pred_check
          %p398 = pneg %p178
        $region34: #{hierarchical_temporal_net.6} parent=11 // pred_check_branch
          %400 = sbr.rel (%p398) target = $region36
        $region35: #{hierarchical_temporal_net.6} parent=11 // pred_region
          %402 = vsyncadd [#allocation10], 0
          %s404 = sshll.u32 %s6, 4
          %s405 = int_to_ptr.hbm [resolvable:$true] %s404
          %s406 = sshll.u32 [#allocation11], 4
          %s407 = int_to_ptr.vmem [resolvable:$true] %s406
          %409 = dma.hbm_to_vmem [thread:$0]  %s405, 16, %s407, [#allocation10]
        $region36: #{hierarchical_temporal_net.6} parent=11 // pred_fallthru
          _
        // Predicated region
        $region37: #{hierarchical_temporal_net.6} parent=11 // pred_check
          %p410 = pneg %p199
        $region38: #{hierarchical_temporal_net.6} parent=11 // pred_check_branch
          %412 = sbr.rel (%p410) target = $region40
        $region39: #{hierarchical_temporal_net.6} parent=11 // pred_region
          %414 = vsyncadd [#allocation13], 0
          %s416 = sshll.u32 %s7, 4
          %s417 = int_to_ptr.hbm [resolvable:$true] %s416
          %s418 = sshll.u32 [#allocation12], 4
          %s419 = int_to_ptr.vmem [resolvable:$true] %s418
          %421 = dma.hbm_to_vmem [thread:$0]  %s417, 16, %s419, [#allocation13]
        $region40: #{hierarchical_temporal_net.6} parent=11 // pred_fallthru
          _
        // Predicated region
        $region41: #{hierarchical_temporal_net.6} parent=11 // pred_check
          %p422 = pneg %p220
        $region42: #{hierarchical_temporal_net.6} parent=11 // pred_check_branch
          %424 = sbr.rel (%p422) target = $region44
        $region43: #{hierarchical_temporal_net.6} parent=11 // pred_region
          %426 = vsyncadd [#allocation13], 0
          %s428 = sshll.u32 %s8, 4
          %s429 = int_to_ptr.hbm [resolvable:$true] %s428
          %s430 = sshll.u32 [#allocation14], 4
          %s431 = int_to_ptr.vmem [resolvable:$true] %s430
          %433 = dma.hbm_to_vmem [thread:$0]  %s429, 16, %s431, [#allocation13]
        $region44: #{hierarchical_temporal_net.6} parent=11 // pred_fallthru
          _
        // Predicated region
        $region45: #{hierarchical_temporal_net.6} parent=11 // pred_check
          %p434 = pneg %p241
        $region46: #{hierarchical_temporal_net.6} parent=11 // pred_check_branch
          %436 = sbr.rel (%p434) target = $region48
        $region47: #{hierarchical_temporal_net.6} parent=11 // pred_region
          %438 = vsyncadd [#allocation16], 0
          %s439 = sshll.u32 %s9, 4
          %s440 = int_to_ptr.hbm [resolvable:$true] %s439
          %s441 = sshll.u32 [#allocation15], 4
          %s442 = int_to_ptr.vmem [resolvable:$true] %s441
          %447 = dma.hbm_to_vmem [thread:$0]  %s440, 256, %s442, [#allocation16], 64, 64, 4
        $region48: #{hierarchical_temporal_net.6} parent=11 // pred_fallthru
          _
        // Predicated region
        $region49: #{hierarchical_temporal_net.6} parent=11 // pred_check
          %p448 = pneg %p262
        $region50: #{hierarchical_temporal_net.6} parent=11 // pred_check_branch
          %450 = sbr.rel (%p448) target = $region52
        $region51: #{hierarchical_temporal_net.6} parent=11 // pred_region
          %452 = vsyncadd [#allocation16], 0
          %s454 = sshll.u32 %s10, 4
          %s455 = int_to_ptr.hbm [resolvable:$true] %s454
          %s456 = sshll.u32 [#allocation17], 4
          %s457 = int_to_ptr.vmem [resolvable:$true] %s456
          %459 = dma.hbm_to_vmem [thread:$0]  %s455, 16, %s457, [#allocation16]
        $region52: #{hierarchical_temporal_net.6} parent=11 // pred_fallthru
          _
        // Predicated region
        $region53: #{hierarchical_temporal_net.6} parent=11 // pred_check
          %p460 = pneg %p283
        $region54: #{hierarchical_temporal_net.6} parent=11 // pred_check_branch
          %462 = sbr.rel (%p460) target = $region56
        $region55: #{hierarchical_temporal_net.6} parent=11 // pred_region
          %464 = vsyncadd [#allocation19], 0
          %s465 = sshll.u32 %s11, 4
          %s466 = int_to_ptr.hbm [resolvable:$true] %s465
          %s467 = sshll.u32 [#allocation18], 4
          %s468 = int_to_ptr.vmem [resolvable:$true] %s467
          %473 = dma.hbm_to_vmem [thread:$0]  %s466, 256, %s468, [#allocation19], 64, 64, 4
        $region56: #{hierarchical_temporal_net.6} parent=11 // pred_fallthru
          _
        // Predicated region
        $region57: #{hierarchical_temporal_net.6} parent=11 // pred_check
          %p474 = pneg %p304
        $region58: #{hierarchical_temporal_net.6} parent=11 // pred_check_branch
          %476 = sbr.rel (%p474) target = $region60
        $region59: #{hierarchical_temporal_net.6} parent=11 // pred_region
          %478 = vsyncadd [#allocation19], 0
          %s480 = sshll.u32 %s12, 4
          %s481 = int_to_ptr.hbm [resolvable:$true] %s480
          %s482 = sshll.u32 [#allocation20], 4
          %s483 = int_to_ptr.vmem [resolvable:$true] %s482
          %485 = dma.hbm_to_vmem [thread:$0]  %s481, 16, %s483, [#allocation19]
        $region60: #{hierarchical_temporal_net.6} parent=11 // pred_fallthru
          _
      $region12: #{hierarchical_temporal_net.6} parent=5 // pred_fallthru
        _
      %p486 = scmp.lt.s32.totalorder %s26, 2
      // Predicated region
      $region61: #{hierarchical_temporal_net.6} parent=5 // pred_check
        %p487 = pneg %p486
      $region62: #{hierarchical_temporal_net.6} parent=5 // pred_check_branch
        %489 = sbr.rel (%p487) target = $region64
      $region63: #{hierarchical_temporal_net.6} parent=5 // pred_region
        // Predicated region
        $region65: #{hierarchical_temporal_net.6} parent=63 // pred_check
          %p490 = pneg %p46
        $region66: #{hierarchical_temporal_net.6} parent=63 // pred_check_branch
          %492 = sbr.rel (%p490) target = $region68
        $region67: #{hierarchical_temporal_net.6} parent=63 // pred_region
          %p493 = scmp.lt.s32.totalorder %s26, 1
          %s494 = scalar_select %p493, %s26, 1
          %s495 = smul.addr %s494, 8
          %s496 = scalar_lea.vmem %s0, %s495
        $region68: #{hierarchical_temporal_net.6} parent=63 // pred_fallthru
          _
      $region64: #{hierarchical_temporal_net.6} parent=5 // pred_fallthru
        _
      %p497 = scmp.le.s32.totalorder 1, %s26
      %p498 = scmp.lt.s32.totalorder %s26, 3
      %p499 = pnand %p497, %p498
      %p500 = pneg %p499
      // Predicated region
      $region69: #{hierarchical_temporal_net.6} parent=5 // pred_check
        _
      $region70: #{hierarchical_temporal_net.6} parent=5 // pred_check_branch
        %502 = sbr.rel (%p499) target = $region72
      $region71: #{hierarchical_temporal_net.6} parent=5 // pred_region
        %s503 = ssub.s32 %s26, 1
        // Predicated region
        $region73: #{hierarchical_temporal_net.6} parent=71 // pred_check
          %p504 = pneg %p94
        $region74: #{hierarchical_temporal_net.6} parent=71 // pred_check_branch
          %506 = sbr.rel (%p504) target = $region76
        $region75: #{hierarchical_temporal_net.6} parent=71 // pred_region
          %508 = dma.done [#allocation5], 64
        $region76: #{hierarchical_temporal_net.6} parent=71 // pred_fallthru
          _
        // Predicated region
        $region77: #{hierarchical_temporal_net.6} parent=71 // pred_check
          %p509 = pneg %p115
        $region78: #{hierarchical_temporal_net.6} parent=71 // pred_check_branch
          %511 = sbr.rel (%p509) target = $region80
        $region79: #{hierarchical_temporal_net.6} parent=71 // pred_region
          %513 = dma.done [#allocation7], 64
        $region80: #{hierarchical_temporal_net.6} parent=71 // pred_fallthru
          _
        // Predicated region
        $region81: #{hierarchical_temporal_net.6} parent=71 // pred_check
          %p514 = pneg %p136
        $region82: #{hierarchical_temporal_net.6} parent=71 // pred_check_branch
          %516 = sbr.rel (%p514) target = $region84
        $region83: #{hierarchical_temporal_net.6} parent=71 // pred_region
          %518 = dma.done [#allocation7], 64
        $region84: #{hierarchical_temporal_net.6} parent=71 // pred_fallthru
          _
        // Predicated region
        $region85: #{hierarchical_temporal_net.6} parent=71 // pred_check
          %p519 = pneg %p157
        $region86: #{hierarchical_temporal_net.6} parent=71 // pred_check_branch
          %521 = sbr.rel (%p519) target = $region88
        $region87: #{hierarchical_temporal_net.6} parent=71 // pred_region
          %523 = dma.done [#allocation10], 1024
        $region88: #{hierarchical_temporal_net.6} parent=71 // pred_fallthru
          _
        // Predicated region
        $region89: #{hierarchical_temporal_net.6} parent=71 // pred_check
          %p524 = pneg %p178
        $region90: #{hierarchical_temporal_net.6} parent=71 // pred_check_branch
          %526 = sbr.rel (%p524) target = $region92
        $region91: #{hierarchical_temporal_net.6} parent=71 // pred_region
          %528 = dma.done [#allocation10], 16
        $region92: #{hierarchical_temporal_net.6} parent=71 // pred_fallthru
          _
        // Predicated region
        $region93: #{hierarchical_temporal_net.6} parent=71 // pred_check
          %p529 = pneg %p199
        $region94: #{hierarchical_temporal_net.6} parent=71 // pred_check_branch
          %531 = sbr.rel (%p529) target = $region96
        $region95: #{hierarchical_temporal_net.6} parent=71 // pred_region
          %533 = dma.done [#allocation13], 16
        $region96: #{hierarchical_temporal_net.6} parent=71 // pred_fallthru
          _
        // Predicated region
        $region97: #{hierarchical_temporal_net.6} parent=71 // pred_check
          %p534 = pneg %p220
        $region98: #{hierarchical_temporal_net.6} parent=71 // pred_check_branch
          %536 = sbr.rel (%p534) target = $region100
        $region99: #{hierarchical_temporal_net.6} parent=71 // pred_region
          %538 = dma.done [#allocation13], 16
        $region100: #{hierarchical_temporal_net.6} parent=71 // pred_fallthru
          _
        // Predicated region
        $region101: #{hierarchical_temporal_net.6} parent=71 // pred_check
          %p539 = pneg %p241
        $region102: #{hierarchical_temporal_net.6} parent=71 // pred_check_branch
          %541 = sbr.rel (%p539) target = $region104
        $region103: #{hierarchical_temporal_net.6} parent=71 // pred_region
          %543 = dma.done [#allocation16], 256
        $region104: #{hierarchical_temporal_net.6} parent=71 // pred_fallthru
          _
        // Predicated region
        $region105: #{hierarchical_temporal_net.6} parent=71 // pred_check
          %p544 = pneg %p262
        $region106: #{hierarchical_temporal_net.6} parent=71 // pred_check_branch
          %546 = sbr.rel (%p544) target = $region108
        $region107: #{hierarchical_temporal_net.6} parent=71 // pred_region
          %548 = dma.done [#allocation16], 16
        $region108: #{hierarchical_temporal_net.6} parent=71 // pred_fallthru
          _
        // Predicated region
        $region109: #{hierarchical_temporal_net.6} parent=71 // pred_check
          %p549 = pneg %p283
        $region110: #{hierarchical_temporal_net.6} parent=71 // pred_check_branch
          %551 = sbr.rel (%p549) target = $region112
        $region111: #{hierarchical_temporal_net.6} parent=71 // pred_region
          %553 = dma.done [#allocation19], 256
        $region112: #{hierarchical_temporal_net.6} parent=71 // pred_fallthru
          _
        // Predicated region
        $region113: #{hierarchical_temporal_net.6} parent=71 // pred_check
          %p554 = pneg %p304
        $region114: #{hierarchical_temporal_net.6} parent=71 // pred_check_branch
          %556 = sbr.rel (%p554) target = $region116
        $region115: #{hierarchical_temporal_net.6} parent=71 // pred_region
          %558 = dma.done [#allocation19], 16
        $region116: #{hierarchical_temporal_net.6} parent=71 // pred_fallthru
          _
        %p559 = scmp.lt.s32.totalorder %s31, 1
        %s560 = scalar_select %p559, %s31, 1
        %s561 = smul.addr %s560, 8
        %s562 = scalar_lea.vmem %s0, %s561
        %p563 = pneg %p52
        %p564 = pneg %p49
        %p565 = pneg %p73
        %p566 = pneg %p70
        %p567 = pneg %p94
        %p568 = pneg %p91
        %p569 = pneg %p115
        %p570 = pneg %p112
        %p571 = pneg %p136
        %p572 = pneg %p133
        %p573 = pneg %p157
        %p574 = pneg %p154
        %p575 = pneg %p178
        %p576 = pneg %p175
        %p577 = pneg %p199
        %p578 = pneg %p196
        %p579 = pneg %p220
        %p580 = pneg %p217
        %p581 = pneg %p241
        %p582 = pneg %p238
        %p583 = pneg %p262
        %p584 = pneg %p259
        %p585 = pneg %p283
        %p586 = pneg %p280
        %p587 = pneg %p304
        %p588 = pneg %p301
        %p589 = pneg %p330
        %p590 = pneg %p327
        %p591 = scmp.lt.s32.totalorder %s31, 1
        %s592 = scalar_select %p591, %s31, 1
        %s593 = smul.addr %s592, 8
        %s594 = scalar_lea.vmem %s14, %s593
        %p595 = scmp.lt.s32.totalorder %s31, 1
        %s596 = scalar_select %p595, %s31, 1
        %s597 = smul.addr %s596, 8
        %s598 = scalar_lea.vmem %s0, %s597
        %p599 = scmp.lt.s32.totalorder %s31, 1
        %s600 = scalar_select %p599, %s31, 1
        %s601 = smul.addr %s600, 8
        %s602 = scalar_lea.vmem %s14, %s601
        %v604 = vld [vmem:[%s598] sm:$0xff]
        // Predicated region
        $region117: #{hierarchical_temporal_net.6} parent=71 // pred_check
          _
        $region118: #{hierarchical_temporal_net.6} parent=71 // pred_check_branch
          %606 = sbr.rel target = $region120
        $region119: #{hierarchical_temporal_net.6} parent=71 // pred_region
          %607 = sst [smem:[#allocation23]] [#allocation22]
          %608 = sst [smem:[#allocation24]] [#allocation21]
        $region120: #{hierarchical_temporal_net.6} parent=71 // pred_fallthru
          _
        %610 = shalt.err (0)
        %s612 = sshll.u32 %s13, 4
        %s613 = int_to_ptr.hbm [resolvable:$true] %s612
        %s614 = sshll.u32 [#allocation2], 4
        %s615 = int_to_ptr.vmem [resolvable:$true] %s614
        %617 = dma.hbm_to_vmem [thread:$0]  %s613, 128, %s615, [#allocation3]
        %v618 = vld [vmem:[#allocation12] sm:$0x1]
        %v619 = vld [vmem:[#allocation14] sm:$0x1]
        %vm620 = vcmask 261120
        %v621 = vsel %vm620, %v604, 0.0
        %622 = vadd.xlane.f32.xlu0 %v621
        %v623 = vpop.xlane.xlu0 %622
        %v624 = vrcp.pop 32.0
        %v625 = vmul.f32 32.0, %v624
        %v626 = vsub.f32 1.0, %v625
        %v627 = vmul.f32 %v624, %v626
        %v628 = vadd.f32 %v624, %v627
        %vm629 = vweird.f32 %v624
        %v630 = vsel %vm629, %v624, %v628
        %v631 = vmul.f32 %v623, %v630
        %v632 = vsub.f32 %v604, %v631
        %v633 = vmul.f32 %v632, %v632
        %v634 = vsel %vm620, %v633, 0.0
        %635 = vadd.xlane.f32.xlu0 %v634
        %v636 = vpop.xlane.xlu0 %635
        %v637 = vmul.f32 %v636, %v630
        %v638 = vadd.f32 %v637, 1e-05
        %v639 = vrsqrt.pop %v638
        %v640 = vmul.f32 %v639, %v638
        %v641 = vmul.f32 %v640, %v639
        %v642 = vmul.f32 0.5, %v641
        %v643 = vsub.f32 1.5, %v642
        %v644 = vmul.f32 %v639, %v643
        %vm645 = vweird.f32 %v638
        %vm646 = vweird.f32 %v639
        %vm647 = vmor %vm645, %vm646
        %v648 = vsel %vm647, %v639, %v644
        %v649 = vmul.f32 %v632, %v648
        %v651 = vperm.slane %v618, 0
        %v653 = vmul.f32 %v649, %v651
        %v655 = vperm.slane %v619, 0
        %v657 = vadd.f32 %v653, %v655
        %v658 = vld [vmem:[#allocation15] sm:$0xf]
        %v659 = vld [vmem:[#allocation15 + $0x4] sm:$0xf]
        %v660 = vld [vmem:[#allocation15 + $0x8] sm:$0xf]
        %v661 = vld [vmem:[#allocation15 + $0xc] sm:$0xf]
        %v662 = vpack.c.bf16 %v657, %v657
        %v663 = vld [vmem:[#allocation17] sm:$0x1]
        %v665 = vperm.slane %v663, 0
        %v671 = vunpack.c.l.b16 %v658
        %v672 = vunpack.c.l.b16 %v659
        %v673 = vunpack.c.l.b16 %v660
        %v674 = vunpack.c.l.b16 %v661
        %v675 = vpack.c.b16 %v672, %v671
        %v676 = vpack.c.b16 %v674, %v673
        %v680 = vsel %vm620, %v662, 0
        %682 = vmatpush.bf16.msra.mxu0 0
        %683 = vmatpush.bf16.msra.mxu0 0
        %684 = vmatpush.bf16.msra.mxu0 0
        %685 = vmatpush.bf16.msra.mxu0 0
        %686 = vmatpush.bf16.msra.mxu0 0
        %687 = vmatpush.bf16.msra.mxu0 0
        %688 = vmatpush.bf16.msra.mxu0 %v676
        %689 = vmatpush.bf16.msra.mxu0 %v675
        %690 = vmatmul.bf16.gmra.mxu0 %v680
        %v691 = vpop.f32.mrf.mxu0
        %v692 = vadd.f32 %v665, %v691
        %v693 = vpop.f32.mrf.mxu0
        %694 = vdwg.mxu0
        %v695 = vxor.u32 %v692, 2147483648
        %v696 = vmul.f32 %v695, 1.442695
        %v697 = vpow.pop %v696
        %v698 = vadd.f32 %v697, 1.0
        %v699 = vrcp.pop %v698
        %v700 = vmul.f32 %v698, %v699
        %v701 = vsub.f32 1.0, %v700
        %v702 = vmul.f32 %v699, %v701
        %v703 = vadd.f32 %v699, %v702
        %vm704 = vweird.f32 %v698
        %vm705 = vweird.f32 %v699
        %vm706 = vmor %vm704, %vm705
        %v707 = vsel %vm706, %v699, %v703
        %v708 = vand.u32 2147483647, %v698
        %vm709 = vcmp.eq.f32.partialorder %v708, 8.507059e+37
        %v710 = vand.u32 %v698, 2147483648
        %v711 = vor.u32 1.1754944e-38, %v710
        %v712 = vsel %vm709, %v711, %v707
        %v713 = vmul.f32 1.0, %v712
        %v714 = vmul.f32 %v692, 0.5
        %v715 = vpack.c.bf16 %v714, %v714
        %v716 = vpack.c.bf16 %v692, %v692
        %s717 = smul.u32 8, 1
        %s718 = sshll.u32 %s717, 4
        %719 = dma.done [#allocation3], %s718
        %s720 = scalar_lea.hbm %s13, 8
        %s721 = scalar_lea.vmem [#allocation2], 8
        %s722 = scalar_lea.sflag [#allocation3], 1
        // Predicated region
        $region121: #{hierarchical_temporal_net.6} parent=71 // pred_check
          _
        $region122: #{hierarchical_temporal_net.6} parent=71 // pred_check_branch
          %724 = sbr.rel target = $region124
        $region123: #{hierarchical_temporal_net.6} parent=71 // pred_region
          %725 = sst [smem:[#allocation23]] [#allocation26]
          %726 = sst [smem:[#allocation24]] [#allocation25]
        $region124: #{hierarchical_temporal_net.6} parent=71 // pred_fallthru
          _
        %728 = shalt.err (0)
        %s730 = sshll.u32 %s720, 4
        %s731 = int_to_ptr.hbm [resolvable:$true] %s730
        %s732 = sshll.u32 %s721, 4
        %s733 = int_to_ptr.vmem [resolvable:$true] %s732
        %735 = dma.hbm_to_vmem [thread:$0]  %s731, 128, %s733, %s722
        %v736 = vld [vmem:[#allocation2] sm:$0xff]
        %v738 = vunpack.c.l.b16 %v716
        %v739 = vpack.c.b16 %v738, %v738
        %740 = vrot.lane.b32.xlu0 %v739, 96
        %v741 = vpop.permute.xlu0 %740
        %vm742 = vcmask 31744
        %v744 = vsel %vm742, %v715, 0
        %v747 = vsel %vm742, %v741, 0
        %749 = vmatpush.bf16.xpose.msra.mxu0 0
        %750 = vmatpush.bf16.xpose.msra.mxu0 0
        %751 = vmatpush.bf16.xpose.msra.mxu0 0
        %752 = vmatpush.bf16.xpose.msra.mxu0 0
        %753 = vmatpush.bf16.xpose.msra.mxu0 0
        %754 = vmatpush.bf16.xpose.msra.mxu0 0
        %755 = vmatpush.bf16.xpose.msra.mxu0 0
        %756 = vmatpush.bf16.xpose.msra.mxu0 %v747
        %757 = vmatmul.bf16.gmra.mxu0 %v744
        %v758 = vpop.f32.mrf.mxu0
        %v759 = vadd.f32 %v736, %v758
        %v760 = vpop.f32.mrf.mxu0
        %761 = vdwg.mxu0
        %vm762 = vcmask 64512
        %v763 = vsel %vm762, %v759, -inf
        %764 = vmax.xlane.f32.xlu0 %v763
        %v765 = vpop.xlane.xlu0 %764
        %v766 = vsub.f32 %v759, %v765
        %v767 = vmul.f32 %v766, 1.442695
        %v768 = vpow.pop %v767
        %v769 = vsel %vm762, %v768, 0.0
        %770 = vadd.xlane.f32.xlu0 %v769
        %v771 = vpop.xlane.xlu0 %770
        %v772 = vrcp.pop %v771
        %v773 = vmul.f32 %v768, %v772
        %v774 = vpack.c.bf16 %v773, %v773
        %775 = vrot.lane.b32.xlu0 %v739, 64
        %v776 = vpop.permute.xlu0 %775
        %v778 = vsel %vm762, %v774, 0
        %vm780 = vcmask 1043456
        %v782 = vsel %vm780, %v776, 0
        %784 = vmatpush.bf16.msra.mxu0 0
        %785 = vmatpush.bf16.msra.mxu0 0
        %786 = vmatpush.bf16.msra.mxu0 0
        %787 = vmatpush.bf16.msra.mxu0 0
        %788 = vmatpush.bf16.msra.mxu0 0
        %789 = vmatpush.bf16.msra.mxu0 0
        %790 = vmatpush.bf16.msra.mxu0 0
        %791 = vmatpush.bf16.msra.mxu0 %v782
        %792 = vmatmul.bf16.gmra.mxu0 %v778
        %v793 = vpop.f32.mrf.mxu0
        %v794 = vadd.f32 0.0, %v793
        %v795 = vpop.f32.mrf.mxu0
        %796 = vdwg.mxu0
        %798 = vrot.lane.b32.xlu0 %v713, 32
        %v799 = vpop.permute.xlu0 %798
        %v801 = vmul.f32 %v794, %v799
        %s802 = sshll.u32 %s717, 4
        %803 = dma.done %s722, %s802
        %s804 = scalar_lea.hbm %s13, 16
        // Predicated region
        $region125: #{hierarchical_temporal_net.6} parent=71 // pred_check
          _
        $region126: #{hierarchical_temporal_net.6} parent=71 // pred_check_branch
          %806 = sbr.rel target = $region128
        $region127: #{hierarchical_temporal_net.6} parent=71 // pred_region
          %807 = sst [smem:[#allocation23]] [#allocation28]
          %808 = sst [smem:[#allocation24]] [#allocation27]
        $region128: #{hierarchical_temporal_net.6} parent=71 // pred_fallthru
          _
        %810 = shalt.err (0)
        %s812 = sshll.u32 %s804, 4
        %s813 = int_to_ptr.hbm [resolvable:$true] %s812
        %s814 = sshll.u32 [#allocation2], 4
        %s815 = int_to_ptr.vmem [resolvable:$true] %s814
        %817 = dma.hbm_to_vmem [thread:$0]  %s813, 128, %s815, [#allocation3]
        %v818 = vld [vmem:[%s721] sm:$0xff]
        %v820 = vunpack.c.l.b16 %v715
        %v821 = vpack.c.b16 %v820, %v820
        %822 = vrot.lane.b32.xlu0 %v821, 124
        %v823 = vpop.permute.xlu0 %822
        %824 = vrot.lane.b32.xlu0 %v739, 92
        %v825 = vpop.permute.xlu0 %824
        %v827 = vsel %vm742, %v823, 0
        %v830 = vsel %vm742, %v825, 0
        %832 = vmatpush.bf16.xpose.msra.mxu0 0
        %833 = vmatpush.bf16.xpose.msra.mxu0 0
        %834 = vmatpush.bf16.xpose.msra.mxu0 0
        %835 = vmatpush.bf16.xpose.msra.mxu0 0
        %836 = vmatpush.bf16.xpose.msra.mxu0 0
        %837 = vmatpush.bf16.xpose.msra.mxu0 0
        %838 = vmatpush.bf16.xpose.msra.mxu0 0
        %839 = vmatpush.bf16.xpose.msra.mxu0 %v830
        %840 = vmatmul.bf16.gmra.mxu0 %v827
        %v841 = vpop.f32.mrf.mxu0
        %v842 = vadd.f32 %v818, %v841
        %v843 = vpop.f32.mrf.mxu0
        %844 = vdwg.mxu0
        %v845 = vsel %vm762, %v842, -inf
        %846 = vmax.xlane.f32.xlu0 %v845
        %v847 = vpop.xlane.xlu0 %846
        %v848 = vsub.f32 %v842, %v847
        %v849 = vmul.f32 %v848, 1.442695
        %v850 = vpow.pop %v849
        %v851 = vsel %vm762, %v850, 0.0
        %852 = vadd.xlane.f32.xlu0 %v851
        %v853 = vpop.xlane.xlu0 %852
        %v854 = vrcp.pop %v853
        %v855 = vmul.f32 %v850, %v854
        %v856 = vpack.c.bf16 %v855, %v855
        %857 = vrot.lane.b32.xlu0 %v739, 60
        %v858 = vpop.permute.xlu0 %857
        %v860 = vsel %vm762, %v856, 0
        %v863 = vsel %vm780, %v858, 0
        %865 = vmatpush.bf16.msra.mxu0 0
        %866 = vmatpush.bf16.msra.mxu0 0
        %867 = vmatpush.bf16.msra.mxu0 0
        %868 = vmatpush.bf16.msra.mxu0 0
        %869 = vmatpush.bf16.msra.mxu0 0
        %870 = vmatpush.bf16.msra.mxu0 0
        %871 = vmatpush.bf16.msra.mxu0 0
        %872 = vmatpush.bf16.msra.mxu0 %v863
        %873 = vmatmul.bf16.gmra.mxu0 %v860
        %v874 = vpop.f32.mrf.mxu0
        %v875 = vadd.f32 0.0, %v874
        %v876 = vpop.f32.mrf.mxu0
        %877 = vdwg.mxu0
        %878 = vrot.lane.b32.xlu0 %v713, 28
        %v879 = vpop.permute.xlu0 %878
        %v881 = vmul.f32 %v875, %v879
        %s882 = sshll.u32 %s717, 4
        %883 = dma.done [#allocation3], %s882
        %s884 = scalar_lea.hbm %s13, 24
        // Predicated region
        $region129: #{hierarchical_temporal_net.6} parent=71 // pred_check
          _
        $region130: #{hierarchical_temporal_net.6} parent=71 // pred_check_branch
          %886 = sbr.rel target = $region132
        $region131: #{hierarchical_temporal_net.6} parent=71 // pred_region
          %887 = sst [smem:[#allocation23]] [#allocation30]
          %888 = sst [smem:[#allocation24]] [#allocation29]
        $region132: #{hierarchical_temporal_net.6} parent=71 // pred_fallthru
          _
        %890 = shalt.err (0)
        %s892 = sshll.u32 %s884, 4
        %s893 = int_to_ptr.hbm [resolvable:$true] %s892
        %s894 = sshll.u32 %s721, 4
        %s895 = int_to_ptr.vmem [resolvable:$true] %s894
        %897 = dma.hbm_to_vmem [thread:$0]  %s893, 128, %s895, %s722
        %v898 = vld [vmem:[#allocation2] sm:$0xff]
        %899 = vrot.lane.b32.xlu0 %v821, 120
        %v900 = vpop.permute.xlu0 %899
        %901 = vrot.lane.b32.xlu0 %v739, 88
        %v902 = vpop.permute.xlu0 %901
        %v904 = vsel %vm742, %v900, 0
        %v907 = vsel %vm742, %v902, 0
        %909 = vmatpush.bf16.xpose.msra.mxu0 0
        %910 = vmatpush.bf16.xpose.msra.mxu0 0
        %911 = vmatpush.bf16.xpose.msra.mxu0 0
        %912 = vmatpush.bf16.xpose.msra.mxu0 0
        %913 = vmatpush.bf16.xpose.msra.mxu0 0
        %914 = vmatpush.bf16.xpose.msra.mxu0 0
        %915 = vmatpush.bf16.xpose.msra.mxu0 0
        %916 = vmatpush.bf16.xpose.msra.mxu0 %v907
        %917 = vmatmul.bf16.gmra.mxu0 %v904
        %v918 = vpop.f32.mrf.mxu0
        %v919 = vadd.f32 %v898, %v918
        %v920 = vpop.f32.mrf.mxu0
        %921 = vdwg.mxu0
        %v922 = vsel %vm762, %v919, -inf
        %923 = vmax.xlane.f32.xlu0 %v922
        %v924 = vpop.xlane.xlu0 %923
        %v925 = vsub.f32 %v919, %v924
        %v926 = vmul.f32 %v925, 1.442695
        %v927 = vpow.pop %v926
        %v928 = vsel %vm762, %v927, 0.0
        %929 = vadd.xlane.f32.xlu0 %v928
        %v930 = vpop.xlane.xlu0 %929
        %v931 = vrcp.pop %v930
        %v932 = vmul.f32 %v927, %v931
        %v933 = vpack.c.bf16 %v932, %v932
        %934 = vrot.lane.b32.xlu0 %v739, 56
        %v935 = vpop.permute.xlu0 %934
        %v937 = vsel %vm762, %v933, 0
        %v940 = vsel %vm780, %v935, 0
        %942 = vmatpush.bf16.msra.mxu0 0
        %943 = vmatpush.bf16.msra.mxu0 0
        %944 = vmatpush.bf16.msra.mxu0 0
        %945 = vmatpush.bf16.msra.mxu0 0
        %946 = vmatpush.bf16.msra.mxu0 0
        %947 = vmatpush.bf16.msra.mxu0 0
        %948 = vmatpush.bf16.msra.mxu0 0
        %949 = vmatpush.bf16.msra.mxu0 %v940
        %950 = vmatmul.bf16.gmra.mxu0 %v937
        %v951 = vpop.f32.mrf.mxu0
        %v952 = vadd.f32 0.0, %v951
        %v953 = vpop.f32.mrf.mxu0
        %954 = vdwg.mxu0
        %955 = vrot.lane.b32.xlu0 %v713, 24
        %v956 = vpop.permute.xlu0 %955
        %v958 = vmul.f32 %v952, %v956
        %s959 = sshll.u32 %s717, 4
        %960 = dma.done %s722, %s959
        %s961 = scalar_lea.hbm %s13, 32
        // Predicated region
        $region133: #{hierarchical_temporal_net.6} parent=71 // pred_check
          _
        $region134: #{hierarchical_temporal_net.6} parent=71 // pred_check_branch
          %963 = sbr.rel target = $region136
        $region135: #{hierarchical_temporal_net.6} parent=71 // pred_region
          %964 = sst [smem:[#allocation23]] [#allocation32]
          %965 = sst [smem:[#allocation24]] [#allocation31]
        $region136: #{hierarchical_temporal_net.6} parent=71 // pred_fallthru
          _
        %967 = shalt.err (0)
        %s969 = sshll.u32 %s961, 4
        %s970 = int_to_ptr.hbm [resolvable:$true] %s969
        %s971 = sshll.u32 [#allocation2], 4
        %s972 = int_to_ptr.vmem [resolvable:$true] %s971
        %974 = dma.hbm_to_vmem [thread:$0]  %s970, 128, %s972, [#allocation3]
        %v975 = vld [vmem:[%s721] sm:$0xff]
        %976 = vrot.lane.b32.xlu0 %v821, 116
        %v977 = vpop.permute.xlu0 %976
        %978 = vrot.lane.b32.xlu0 %v739, 84
        %v979 = vpop.permute.xlu0 %978
        %v981 = vsel %vm742, %v977, 0
        %v984 = vsel %vm742, %v979, 0
        %986 = vmatpush.bf16.xpose.msra.mxu0 0
        %987 = vmatpush.bf16.xpose.msra.mxu0 0
        %988 = vmatpush.bf16.xpose.msra.mxu0 0
        %989 = vmatpush.bf16.xpose.msra.mxu0 0
        %990 = vmatpush.bf16.xpose.msra.mxu0 0
        %991 = vmatpush.bf16.xpose.msra.mxu0 0
        %992 = vmatpush.bf16.xpose.msra.mxu0 0
        %993 = vmatpush.bf16.xpose.msra.mxu0 %v984
        %994 = vmatmul.bf16.gmra.mxu0 %v981
        %v995 = vpop.f32.mrf.mxu0
        %v996 = vadd.f32 %v975, %v995
        %v997 = vpop.f32.mrf.mxu0
        %998 = vdwg.mxu0
        %v999 = vsel %vm762, %v996, -inf
        %1000 = vmax.xlane.f32.xlu0 %v999
        %v1001 = vpop.xlane.xlu0 %1000
        %v1002 = vsub.f32 %v996, %v1001
        %v1003 = vmul.f32 %v1002, 1.442695
        %v1004 = vpow.pop %v1003
        %v1005 = vsel %vm762, %v1004, 0.0
        %1006 = vadd.xlane.f32.xlu0 %v1005
        %v1007 = vpop.xlane.xlu0 %1006
        %v1008 = vrcp.pop %v1007
        %v1009 = vmul.f32 %v1004, %v1008
        %v1010 = vpack.c.bf16 %v1009, %v1009
        %1011 = vrot.lane.b32.xlu0 %v739, 52
        %v1012 = vpop.permute.xlu0 %1011
        %v1014 = vsel %vm762, %v1010, 0
        %v1017 = vsel %vm780, %v1012, 0
        %1019 = vmatpush.bf16.msra.mxu0 0
        %1020 = vmatpush.bf16.msra.mxu0 0
        %1021 = vmatpush.bf16.msra.mxu0 0
        %1022 = vmatpush.bf16.msra.mxu0 0
        %1023 = vmatpush.bf16.msra.mxu0 0
        %1024 = vmatpush.bf16.msra.mxu0 0
        %1025 = vmatpush.bf16.msra.mxu0 0
        %1026 = vmatpush.bf16.msra.mxu0 %v1017
        %1027 = vmatmul.bf16.gmra.mxu0 %v1014
        %v1028 = vpop.f32.mrf.mxu0
        %v1029 = vadd.f32 0.0, %v1028
        %v1030 = vpop.f32.mrf.mxu0
        %1031 = vdwg.mxu0
        %1032 = vrot.lane.b32.xlu0 %v713, 20
        %v1033 = vpop.permute.xlu0 %1032
        %v1035 = vmul.f32 %v1029, %v1033
        %s1036 = sshll.u32 %s717, 4
        %1037 = dma.done [#allocation3], %s1036
        %s1038 = scalar_lea.hbm %s13, 40
        // Predicated region
        $region137: #{hierarchical_temporal_net.6} parent=71 // pred_check
          _
        $region138: #{hierarchical_temporal_net.6} parent=71 // pred_check_branch
          %1040 = sbr.rel target = $region140
        $region139: #{hierarchical_temporal_net.6} parent=71 // pred_region
          %1041 = sst [smem:[#allocation23]] [#allocation34]
          %1042 = sst [smem:[#allocation24]] [#allocation33]
        $region140: #{hierarchical_temporal_net.6} parent=71 // pred_fallthru
          _
        %1044 = shalt.err (0)
        %s1046 = sshll.u32 %s1038, 4
        %s1047 = int_to_ptr.hbm [resolvable:$true] %s1046
        %s1048 = sshll.u32 %s721, 4
        %s1049 = int_to_ptr.vmem [resolvable:$true] %s1048
        %1051 = dma.hbm_to_vmem [thread:$0]  %s1047, 128, %s1049, %s722
        %v1052 = vld [vmem:[#allocation2] sm:$0xff]
        %1053 = vrot.lane.b32.xlu0 %v821, 112
        %v1054 = vpop.permute.xlu0 %1053
        %1055 = vrot.lane.b32.xlu0 %v739, 80
        %v1056 = vpop.permute.xlu0 %1055
        %v1058 = vsel %vm742, %v1054, 0
        %v1061 = vsel %vm742, %v1056, 0
        %1063 = vmatpush.bf16.xpose.msra.mxu0 0
        %1064 = vmatpush.bf16.xpose.msra.mxu0 0
        %1065 = vmatpush.bf16.xpose.msra.mxu0 0
        %1066 = vmatpush.bf16.xpose.msra.mxu0 0
        %1067 = vmatpush.bf16.xpose.msra.mxu0 0
        %1068 = vmatpush.bf16.xpose.msra.mxu0 0
        %1069 = vmatpush.bf16.xpose.msra.mxu0 0
        %1070 = vmatpush.bf16.xpose.msra.mxu0 %v1061
        %1071 = vmatmul.bf16.gmra.mxu0 %v1058
        %v1072 = vpop.f32.mrf.mxu0
        %v1073 = vadd.f32 %v1052, %v1072
        %v1074 = vpop.f32.mrf.mxu0
        %1075 = vdwg.mxu0
        %v1076 = vsel %vm762, %v1073, -inf
        %1077 = vmax.xlane.f32.xlu0 %v1076
        %v1078 = vpop.xlane.xlu0 %1077
        %v1079 = vsub.f32 %v1073, %v1078
        %v1080 = vmul.f32 %v1079, 1.442695
        %v1081 = vpow.pop %v1080
        %v1082 = vsel %vm762, %v1081, 0.0
        %1083 = vadd.xlane.f32.xlu0 %v1082
        %v1084 = vpop.xlane.xlu0 %1083
        %v1085 = vrcp.pop %v1084
        %v1086 = vmul.f32 %v1081, %v1085
        %v1087 = vpack.c.bf16 %v1086, %v1086
        %1088 = vrot.lane.b32.xlu0 %v739, 48
        %v1089 = vpop.permute.xlu0 %1088
        %v1091 = vsel %vm762, %v1087, 0
        %v1094 = vsel %vm780, %v1089, 0
        %1096 = vmatpush.bf16.msra.mxu0 0
        %1097 = vmatpush.bf16.msra.mxu0 0
        %1098 = vmatpush.bf16.msra.mxu0 0
        %1099 = vmatpush.bf16.msra.mxu0 0
        %1100 = vmatpush.bf16.msra.mxu0 0
        %1101 = vmatpush.bf16.msra.mxu0 0
        %1102 = vmatpush.bf16.msra.mxu0 0
        %1103 = vmatpush.bf16.msra.mxu0 %v1094
        %1104 = vmatmul.bf16.gmra.mxu0 %v1091
        %v1105 = vpop.f32.mrf.mxu0
        %v1106 = vadd.f32 0.0, %v1105
        %v1107 = vpop.f32.mrf.mxu0
        %1108 = vdwg.mxu0
        %1109 = vrot.lane.b32.xlu0 %v713, 16
        %v1110 = vpop.permute.xlu0 %1109
        %v1112 = vmul.f32 %v1106, %v1110
        %s1113 = sshll.u32 %s717, 4
        %1114 = dma.done %s722, %s1113
        %s1115 = scalar_lea.hbm %s13, 48
        // Predicated region
        $region141: #{hierarchical_temporal_net.6} parent=71 // pred_check
          _
        $region142: #{hierarchical_temporal_net.6} parent=71 // pred_check_branch
          %1117 = sbr.rel target = $region144
        $region143: #{hierarchical_temporal_net.6} parent=71 // pred_region
          %1118 = sst [smem:[#allocation23]] [#allocation36]
          %1119 = sst [smem:[#allocation24]] [#allocation35]
        $region144: #{hierarchical_temporal_net.6} parent=71 // pred_fallthru
          _
        %1121 = shalt.err (0)
        %s1123 = sshll.u32 %s1115, 4
        %s1124 = int_to_ptr.hbm [resolvable:$true] %s1123
        %s1125 = sshll.u32 [#allocation2], 4
        %s1126 = int_to_ptr.vmem [resolvable:$true] %s1125
        %1128 = dma.hbm_to_vmem [thread:$0]  %s1124, 128, %s1126, [#allocation3]
        %v1129 = vld [vmem:[%s721] sm:$0xff]
        %1130 = vrot.lane.b32.xlu0 %v821, 108
        %v1131 = vpop.permute.xlu0 %1130
        %1132 = vrot.lane.b32.xlu0 %v739, 76
        %v1133 = vpop.permute.xlu0 %1132
        %v1135 = vsel %vm742, %v1131, 0
        %v1138 = vsel %vm742, %v1133, 0
        %1140 = vmatpush.bf16.xpose.msra.mxu0 0
        %1141 = vmatpush.bf16.xpose.msra.mxu0 0
        %1142 = vmatpush.bf16.xpose.msra.mxu0 0
        %1143 = vmatpush.bf16.xpose.msra.mxu0 0
        %1144 = vmatpush.bf16.xpose.msra.mxu0 0
        %1145 = vmatpush.bf16.xpose.msra.mxu0 0
        %1146 = vmatpush.bf16.xpose.msra.mxu0 0
        %1147 = vmatpush.bf16.xpose.msra.mxu0 %v1138
        %1148 = vmatmul.bf16.gmra.mxu0 %v1135
        %v1149 = vpop.f32.mrf.mxu0
        %v1150 = vadd.f32 %v1129, %v1149
        %v1151 = vpop.f32.mrf.mxu0
        %1152 = vdwg.mxu0
        %v1153 = vsel %vm762, %v1150, -inf
        %1154 = vmax.xlane.f32.xlu0 %v1153
        %v1155 = vpop.xlane.xlu0 %1154
        %v1156 = vsub.f32 %v1150, %v1155
        %v1157 = vmul.f32 %v1156, 1.442695
        %v1158 = vpow.pop %v1157
        %v1159 = vsel %vm762, %v1158, 0.0
        %1160 = vadd.xlane.f32.xlu0 %v1159
        %v1161 = vpop.xlane.xlu0 %1160
        %v1162 = vrcp.pop %v1161
        %v1163 = vmul.f32 %v1158, %v1162
        %v1164 = vpack.c.bf16 %v1163, %v1163
        %1165 = vrot.lane.b32.xlu0 %v739, 44
        %v1166 = vpop.permute.xlu0 %1165
        %v1168 = vsel %vm762, %v1164, 0
        %v1171 = vsel %vm780, %v1166, 0
        %1173 = vmatpush.bf16.msra.mxu0 0
        %1174 = vmatpush.bf16.msra.mxu0 0
        %1175 = vmatpush.bf16.msra.mxu0 0
        %1176 = vmatpush.bf16.msra.mxu0 0
        %1177 = vmatpush.bf16.msra.mxu0 0
        %1178 = vmatpush.bf16.msra.mxu0 0
        %1179 = vmatpush.bf16.msra.mxu0 0
        %1180 = vmatpush.bf16.msra.mxu0 %v1171
        %1181 = vmatmul.bf16.gmra.mxu0 %v1168
        %v1182 = vpop.f32.mrf.mxu0
        %v1183 = vadd.f32 0.0, %v1182
        %v1184 = vpop.f32.mrf.mxu0
        %1185 = vdwg.mxu0
        %1186 = vrot.lane.b32.xlu0 %v713, 12
        %v1187 = vpop.permute.xlu0 %1186
        %v1189 = vmul.f32 %v1183, %v1187
        %s1190 = sshll.u32 %s717, 4
        %1191 = dma.done [#allocation3], %s1190
        %s1192 = scalar_lea.hbm %s13, 56
        // Predicated region
        $region145: #{hierarchical_temporal_net.6} parent=71 // pred_check
          _
        $region146: #{hierarchical_temporal_net.6} parent=71 // pred_check_branch
          %1194 = sbr.rel target = $region148
        $region147: #{hierarchical_temporal_net.6} parent=71 // pred_region
          %1195 = sst [smem:[#allocation23]] [#allocation38]
          %1196 = sst [smem:[#allocation24]] [#allocation37]
        $region148: #{hierarchical_temporal_net.6} parent=71 // pred_fallthru
          _
        %1198 = shalt.err (0)
        %s1200 = sshll.u32 %s1192, 4
        %s1201 = int_to_ptr.hbm [resolvable:$true] %s1200
        %s1202 = sshll.u32 %s721, 4
        %s1203 = int_to_ptr.vmem [resolvable:$true] %s1202
        %1205 = dma.hbm_to_vmem [thread:$0]  %s1201, 128, %s1203, %s722
        %v1206 = vld [vmem:[#allocation2] sm:$0xff]
        %1207 = vrot.lane.b32.xlu0 %v821, 104
        %v1208 = vpop.permute.xlu0 %1207
        %1209 = vrot.lane.b32.xlu0 %v739, 72
        %v1210 = vpop.permute.xlu0 %1209
        %v1212 = vsel %vm742, %v1208, 0
        %v1215 = vsel %vm742, %v1210, 0
        %1217 = vmatpush.bf16.xpose.msra.mxu0 0
        %1218 = vmatpush.bf16.xpose.msra.mxu0 0
        %1219 = vmatpush.bf16.xpose.msra.mxu0 0
        %1220 = vmatpush.bf16.xpose.msra.mxu0 0
        %1221 = vmatpush.bf16.xpose.msra.mxu0 0
        %1222 = vmatpush.bf16.xpose.msra.mxu0 0
        %1223 = vmatpush.bf16.xpose.msra.mxu0 0
        %1224 = vmatpush.bf16.xpose.msra.mxu0 %v1215
        %1225 = vmatmul.bf16.gmra.mxu0 %v1212
        %v1226 = vpop.f32.mrf.mxu0
        %v1227 = vadd.f32 %v1206, %v1226
        %v1228 = vpop.f32.mrf.mxu0
        %1229 = vdwg.mxu0
        %v1230 = vsel %vm762, %v1227, -inf
        %1231 = vmax.xlane.f32.xlu0 %v1230
        %v1232 = vpop.xlane.xlu0 %1231
        %v1233 = vsub.f32 %v1227, %v1232
        %v1234 = vmul.f32 %v1233, 1.442695
        %v1235 = vpow.pop %v1234
        %v1236 = vsel %vm762, %v1235, 0.0
        %1237 = vadd.xlane.f32.xlu0 %v1236
        %v1238 = vpop.xlane.xlu0 %1237
        %v1239 = vrcp.pop %v1238
        %v1240 = vmul.f32 %v1235, %v1239
        %v1241 = vpack.c.bf16 %v1240, %v1240
        %1242 = vrot.lane.b32.xlu0 %v739, 40
        %v1243 = vpop.permute.xlu0 %1242
        %v1245 = vsel %vm762, %v1241, 0
        %v1248 = vsel %vm780, %v1243, 0
        %1250 = vmatpush.bf16.msra.mxu0 0
        %1251 = vmatpush.bf16.msra.mxu0 0
        %1252 = vmatpush.bf16.msra.mxu0 0
        %1253 = vmatpush.bf16.msra.mxu0 0
        %1254 = vmatpush.bf16.msra.mxu0 0
        %1255 = vmatpush.bf16.msra.mxu0 0
        %1256 = vmatpush.bf16.msra.mxu0 0
        %1257 = vmatpush.bf16.msra.mxu0 %v1248
        %1258 = vmatmul.bf16.gmra.mxu0 %v1245
        %v1259 = vpop.f32.mrf.mxu0
        %v1260 = vadd.f32 0.0, %v1259
        %v1261 = vpop.f32.mrf.mxu0
        %1262 = vdwg.mxu0
        %1263 = vrot.lane.b32.xlu0 %v713, 8
        %v1264 = vpop.permute.xlu0 %1263
        %v1266 = vmul.f32 %v1260, %v1264
        %s1267 = sshll.u32 %s717, 4
        %1268 = dma.done %s722, %s1267
        %v1269 = vld [vmem:[%s721] sm:$0xff]
        %1270 = vrot.lane.b32.xlu0 %v821, 100
        %v1271 = vpop.permute.xlu0 %1270
        %1272 = vrot.lane.b32.xlu0 %v739, 68
        %v1273 = vpop.permute.xlu0 %1272
        %v1275 = vsel %vm742, %v1271, 0
        %v1278 = vsel %vm742, %v1273, 0
        %1280 = vmatpush.bf16.xpose.msra.mxu0 0
        %1281 = vmatpush.bf16.xpose.msra.mxu0 0
        %1282 = vmatpush.bf16.xpose.msra.mxu0 0
        %1283 = vmatpush.bf16.xpose.msra.mxu0 0
        %1284 = vmatpush.bf16.xpose.msra.mxu0 0
        %1285 = vmatpush.bf16.xpose.msra.mxu0 0
        %1286 = vmatpush.bf16.xpose.msra.mxu0 0
        %1287 = vmatpush.bf16.xpose.msra.mxu0 %v1278
        %1288 = vmatmul.bf16.gmra.mxu0 %v1275
        %v1289 = vpop.f32.mrf.mxu0
        %v1290 = vadd.f32 %v1269, %v1289
        %v1291 = vpop.f32.mrf.mxu0
        %1292 = vdwg.mxu0
        %v1293 = vsel %vm762, %v1290, -inf
        %1294 = vmax.xlane.f32.xlu0 %v1293
        %v1295 = vpop.xlane.xlu0 %1294
        %v1296 = vsub.f32 %v1290, %v1295
        %v1297 = vmul.f32 %v1296, 1.442695
        %v1298 = vpow.pop %v1297
        %v1299 = vsel %vm762, %v1298, 0.0
        %1300 = vadd.xlane.f32.xlu0 %v1299
        %v1301 = vpop.xlane.xlu0 %1300
        %v1302 = vrcp.pop %v1301
        %v1303 = vmul.f32 %v1298, %v1302
        %v1304 = vpack.c.bf16 %v1303, %v1303
        %1305 = vrot.lane.b32.xlu0 %v739, 36
        %v1306 = vpop.permute.xlu0 %1305
        %v1308 = vsel %vm762, %v1304, 0
        %v1311 = vsel %vm780, %v1306, 0
        %1313 = vmatpush.bf16.msra.mxu0 0
        %1314 = vmatpush.bf16.msra.mxu0 0
        %1315 = vmatpush.bf16.msra.mxu0 0
        %1316 = vmatpush.bf16.msra.mxu0 0
        %1317 = vmatpush.bf16.msra.mxu0 0
        %1318 = vmatpush.bf16.msra.mxu0 0
        %1319 = vmatpush.bf16.msra.mxu0 0
        %1320 = vmatpush.bf16.msra.mxu0 %v1311
        %1321 = vmatmul.bf16.gmra.mxu0 %v1308
        %v1322 = vpop.f32.mrf.mxu0
        %v1323 = vadd.f32 0.0, %v1322
        %v1324 = vpop.f32.mrf.mxu0
        %1325 = vdwg.mxu0
        %1326 = vrot.lane.b32.xlu0 %v713, 4
        %v1327 = vpop.permute.xlu0 %1326
        %v1329 = vmul.f32 %v1323, %v1327
        %1331 = vrot.lane.b32.xlu0 %v881, 4
        %v1332 = vpop.permute.xlu0 %1331
        %1335 = vrot.lane.b32.xlu0 %v958, 8
        %v1336 = vpop.permute.xlu0 %1335
        %1339 = vrot.lane.b32.xlu0 %v1035, 12
        %v1340 = vpop.permute.xlu0 %1339
        %1343 = vrot.lane.b32.xlu0 %v1112, 16
        %v1344 = vpop.permute.xlu0 %1343
        %1347 = vrot.lane.b32.xlu0 %v1189, 20
        %v1348 = vpop.permute.xlu0 %1347
        %1351 = vrot.lane.b32.xlu0 %v1266, 24
        %v1352 = vpop.permute.xlu0 %1351
        %1355 = vrot.lane.b32.xlu0 %v1329, 28
        %v1356 = vpop.permute.xlu0 %1355
        %v1358 = vsel %vm742, %v801, %v1332
        %v1359 = vsel %vm762, %v1358, %v1336
        %vm1360 = vcmask 97280
        %v1361 = vsel %vm1360, %v1359, %v1340
        %vm1362 = vcmask 130048
        %v1363 = vsel %vm1362, %v1361, %v1344
        %vm1364 = vcmask 162816
        %v1365 = vsel %vm1364, %v1363, %v1348
        %vm1366 = vcmask 195584
        %v1367 = vsel %vm1366, %v1365, %v1352
        %vm1368 = vcmask 228352
        %v1369 = vsel %vm1368, %v1367, %v1356
        %v1370 = vld [vmem:[#allocation18] sm:$0xf]
        %v1371 = vld [vmem:[#allocation18 + $0x4] sm:$0xf]
        %v1372 = vld [vmem:[#allocation18 + $0x8] sm:$0xf]
        %v1373 = vld [vmem:[#allocation18 + $0xc] sm:$0xf]
        %v1374 = vpack.c.bf16 %v1369, %v1369
        %v1375 = vld [vmem:[#allocation20] sm:$0x1]
        %v1377 = vperm.slane %v1375, 0
        %v1383 = vunpack.c.l.b16 %v1370
        %v1384 = vunpack.c.l.b16 %v1371
        %v1385 = vunpack.c.l.b16 %v1372
        %v1386 = vunpack.c.l.b16 %v1373
        %v1387 = vpack.c.b16 %v1384, %v1383
        %v1388 = vpack.c.b16 %v1386, %v1385
        %v1392 = vsel %vm620, %v1374, 0
        %1394 = vmatpush.bf16.msra.mxu0 0
        %1395 = vmatpush.bf16.msra.mxu0 0
        %1396 = vmatpush.bf16.msra.mxu0 0
        %1397 = vmatpush.bf16.msra.mxu0 0
        %1398 = vmatpush.bf16.msra.mxu0 0
        %1399 = vmatpush.bf16.msra.mxu0 0
        %1400 = vmatpush.bf16.msra.mxu0 %v1388
        %1401 = vmatpush.bf16.msra.mxu0 %v1387
        %1402 = vmatmul.bf16.gmra.mxu0 %v1392
        %v1403 = vpop.f32.mrf.mxu0
        %v1404 = vadd.f32 %v1377, %v1403
        %v1405 = vpop.f32.mrf.mxu0
        %1406 = vdwg.mxu0
        %v1407 = vlaneseq
        %v1408 = vshrl.u32 %v1407, 7
        %vm1409 = vcmp.ge.s32.totalorder %v1408, 1
        %v1410 = vrot.slane %v604, 7
        %v1411 = vsel %vm1409, %v1410, 0.0
        %vm1412 = vcmp.lt.s32.totalorder %v1408, 7
        %v1413 = vrot.slane %v604, 1
        %v1414 = vsel %vm1412, %v1413, 0.0
        %v1415 = vld [vmem:[%s1] sm:$0xf]
        %v1416 = vld [vmem:[%s1 + $0x4] sm:$0xf]
        %v1417 = vld [vmem:[%s1 + $0x8] sm:$0xf]
        %v1418 = vld [vmem:[#allocation4] sm:$0xf]
        %v1419 = vld [vmem:[#allocation6] sm:$0xf]
        %v1420 = vld [vmem:[#allocation8] sm:$0xf]
        %v1421 = vperm.slane %v1415, 0
        %v1422 = vmul.f32 %v1411, %v1421
        %v1423 = vperm.slane %v1418, 0
        %v1424 = vadd.f32 %v1423, %v1422
        %v1425 = vperm.slane %v1416, 0
        %v1426 = vmul.f32 %v604, %v1425
        %v1427 = vadd.f32 %v1424, %v1426
        %v1428 = vperm.slane %v1417, 0
        %v1429 = vmul.f32 %v1414, %v1428
        %v1430 = vadd.f32 %v1427, %v1429
        %v1431 = vsel %vm620, %v1430, 0.0
        %1432 = vadd.xlane.f32.xlu0 %v1431
        %v1433 = vpop.xlane.xlu0 %1432
        %v1434 = vadd.f32 %v1433, 0.0
        %v1435 = vmul.f32 %v1430, %v1430
        %v1436 = vsel %vm620, %v1435, 0.0
        %1437 = vadd.xlane.f32.xlu0 %v1436
        %v1438 = vpop.xlane.xlu0 %1437
        %v1439 = vadd.f32 %v1438, 0.0
        %v1440 = vperm.slane %v1415, 1
        %v1441 = vmul.f32 %v1411, %v1440
        %v1442 = vperm.slane %v1418, 1
        %v1443 = vadd.f32 %v1442, %v1441
        %v1444 = vperm.slane %v1416, 1
        %v1445 = vmul.f32 %v604, %v1444
        %v1446 = vadd.f32 %v1443, %v1445
        %v1447 = vperm.slane %v1417, 1
        %v1448 = vmul.f32 %v1414, %v1447
        %v1449 = vadd.f32 %v1446, %v1448
        %v1450 = vsel %vm620, %v1449, 0.0
        %1451 = vadd.xlane.f32.xlu0 %v1450
        %v1452 = vpop.xlane.xlu0 %1451
        %v1453 = vadd.f32 %v1434, %v1452
        %v1454 = vmul.f32 %v1449, %v1449
        %v1455 = vsel %vm620, %v1454, 0.0
        %1456 = vadd.xlane.f32.xlu0 %v1455
        %v1457 = vpop.xlane.xlu0 %1456
        %v1458 = vadd.f32 %v1439, %v1457
        %v1459 = vperm.slane %v1415, 2
        %v1460 = vmul.f32 %v1411, %v1459
        %v1461 = vperm.slane %v1418, 2
        %v1462 = vadd.f32 %v1461, %v1460
        %v1463 = vperm.slane %v1416, 2
        %v1464 = vmul.f32 %v604, %v1463
        %v1465 = vadd.f32 %v1462, %v1464
        %v1466 = vperm.slane %v1417, 2
        %v1467 = vmul.f32 %v1414, %v1466
        %v1468 = vadd.f32 %v1465, %v1467
        %v1469 = vsel %vm620, %v1468, 0.0
        %1470 = vadd.xlane.f32.xlu0 %v1469
        %v1471 = vpop.xlane.xlu0 %1470
        %v1472 = vadd.f32 %v1453, %v1471
        %v1473 = vmul.f32 %v1468, %v1468
        %v1474 = vsel %vm620, %v1473, 0.0
        %1475 = vadd.xlane.f32.xlu0 %v1474
        %v1476 = vpop.xlane.xlu0 %1475
        %v1477 = vadd.f32 %v1458, %v1476
        %v1478 = vperm.slane %v1415, 3
        %v1479 = vmul.f32 %v1411, %v1478
        %v1480 = vperm.slane %v1418, 3
        %v1481 = vadd.f32 %v1480, %v1479
        %v1482 = vperm.slane %v1416, 3
        %v1483 = vmul.f32 %v604, %v1482
        %v1484 = vadd.f32 %v1481, %v1483
        %v1485 = vperm.slane %v1417, 3
        %v1486 = vmul.f32 %v1414, %v1485
        %v1487 = vadd.f32 %v1484, %v1486
        %v1488 = vsel %vm620, %v1487, 0.0
        %1489 = vadd.xlane.f32.xlu0 %v1488
        %v1490 = vpop.xlane.xlu0 %1489
        %v1491 = vadd.f32 %v1472, %v1490
        %v1492 = vmul.f32 %v1487, %v1487
        %v1493 = vsel %vm620, %v1492, 0.0
        %1494 = vadd.xlane.f32.xlu0 %v1493
        %v1495 = vpop.xlane.xlu0 %1494
        %v1496 = vadd.f32 %v1477, %v1495
        %v1497 = vrcp.pop 128.0
        %v1498 = vmul.f32 128.0, %v1497
        %v1499 = vsub.f32 1.0, %v1498
        %v1500 = vmul.f32 %v1497, %v1499
        %v1501 = vadd.f32 %v1497, %v1500
        %vm1502 = vweird.f32 %v1497
        %v1503 = vsel %vm1502, %v1497, %v1501
        %v1504 = vmul.f32 %v1491, %v1503
        %v1505 = vmul.f32 %v1496, %v1503
        %v1506 = vmul.f32 %v1504, %v1504
        %v1507 = vsub.f32 %v1505, %v1506
        %v1508 = vmax.f32 %v1507, 0.0
        %v1509 = vadd.f32 %v1508, 1e-05
        %v1510 = vrsqrt.pop %v1509
        %v1511 = vmul.f32 %v1510, %v1509
        %v1512 = vmul.f32 %v1511, %v1510
        %v1513 = vmul.f32 0.5, %v1512
        %v1514 = vsub.f32 1.5, %v1513
        %v1515 = vmul.f32 %v1510, %v1514
        %vm1516 = vweird.f32 %v1509
        %vm1517 = vweird.f32 %v1510
        %vm1518 = vmor %vm1516, %vm1517
        %v1519 = vsel %vm1518, %v1510, %v1515
        %v1520 = vsub.f32 %v1430, %v1504
        %v1521 = vmul.f32 %v1520, %v1519
        %v1522 = vperm.slane %v1419, 0
        %v1523 = vmul.f32 %v1521, %v1522
        %v1524 = vperm.slane %v1420, 0
        %v1525 = vadd.f32 %v1523, %v1524
        %v1526 = vmul.f32 %v1525, 0.5
        %v1527 = vmul.f32 %v1525, 0.70710677
        %vm1528 = vcmp.ge.f32.partialorder %v1527, 0.0
        %v1529 = vsel %vm1528, 1.0, -1.0
        %v1530 = vand.u32 2147483647, %v1527
        %v1531 = vmul.f32 %v1530, 0.3275911
        %v1532 = vadd.f32 %v1531, 1.0
        %v1533 = vrcp.pop %v1532
        %v1534 = vmul.f32 %v1532, %v1533
        %v1535 = vsub.f32 1.0, %v1534
        %v1536 = vmul.f32 %v1533, %v1535
        %v1537 = vadd.f32 %v1533, %v1536
        %vm1538 = vweird.f32 %v1532
        %vm1539 = vweird.f32 %v1533
        %vm1540 = vmor %vm1538, %vm1539
        %v1541 = vsel %vm1540, %v1533, %v1537
        %v1542 = vand.u32 2147483647, %v1532
        %vm1543 = vcmp.eq.f32.partialorder %v1542, 8.507059e+37
        %v1544 = vand.u32 %v1532, 2147483648
        %v1545 = vor.u32 1.1754944e-38, %v1544
        %v1546 = vsel %vm1543, %v1545, %v1541
        %v1547 = vmul.f32 1.0, %v1546
        %v1548 = vmul.f32 %v1547, 1.0614054
        %v1549 = vadd.f32 %v1548, -1.4531521
        %v1550 = vmul.f32 %v1549, %v1547
        %v1551 = vadd.f32 %v1550, 1.4214138
        %v1552 = vmul.f32 %v1551, %v1547
        %v1553 = vadd.f32 %v1552, -0.28449672
        %v1554 = vmul.f32 %v1553, %v1547
        %v1555 = vadd.f32 %v1554, 0.2548296
        %v1556 = vmul.f32 %v1555, %v1547
        %v1557 = vsub.f32 0.0, %v1530
        %v1558 = vmul.f32 %v1557, %v1530
        %v1559 = vmul.f32 %v1558, 1.442695
        %v1560 = vpow.pop %v1559
        %v1561 = vmul.f32 %v1556, %v1560
        %v1562 = vsub.f32 1.0, %v1561
        %v1563 = vmul.f32 %v1529, %v1562
        %v1564 = vadd.f32 %v1563, 1.0
        %v1565 = vmul.f32 %v1526, %v1564
        %v1566 = vld [vmem:[#allocation9] sm:$0xf]
        %v1567 = vld [vmem:[#allocation9 + $0x4] sm:$0xf]
        %v1568 = vld [vmem:[#allocation9 + $0x8] sm:$0xf]
        %v1569 = vld [vmem:[#allocation9 + $0xc] sm:$0xf]
        %v1570 = vpack.c.bf16 %v1565, %v1565
        %v1571 = vsub.f32 %v1449, %v1504
        %v1572 = vmul.f32 %v1571, %v1519
        %v1573 = vperm.slane %v1419, 1
        %v1574 = vmul.f32 %v1572, %v1573
        %v1575 = vperm.slane %v1420, 1
        %v1576 = vadd.f32 %v1574, %v1575
        %v1577 = vmul.f32 %v1576, 0.5
        %v1578 = vmul.f32 %v1576, 0.70710677
        %vm1579 = vcmp.ge.f32.partialorder %v1578, 0.0
        %v1580 = vsel %vm1579, 1.0, -1.0
        %v1581 = vand.u32 2147483647, %v1578
        %v1582 = vmul.f32 %v1581, 0.3275911
        %v1583 = vadd.f32 %v1582, 1.0
        %v1584 = vrcp.pop %v1583
        %v1585 = vmul.f32 %v1583, %v1584
        %v1586 = vsub.f32 1.0, %v1585
        %v1587 = vmul.f32 %v1584, %v1586
        %v1588 = vadd.f32 %v1584, %v1587
        %vm1589 = vweird.f32 %v1583
        %vm1590 = vweird.f32 %v1584
        %vm1591 = vmor %vm1589, %vm1590
        %v1592 = vsel %vm1591, %v1584, %v1588
        %v1593 = vand.u32 2147483647, %v1583
        %vm1594 = vcmp.eq.f32.partialorder %v1593, 8.507059e+37
        %v1595 = vand.u32 %v1583, 2147483648
        %v1596 = vor.u32 1.1754944e-38, %v1595
        %v1597 = vsel %vm1594, %v1596, %v1592
        %v1598 = vmul.f32 1.0, %v1597
        %v1599 = vmul.f32 %v1598, 1.0614054
        %v1600 = vadd.f32 %v1599, -1.4531521
        %v1601 = vmul.f32 %v1600, %v1598
        %v1602 = vadd.f32 %v1601, 1.4214138
        %v1603 = vmul.f32 %v1602, %v1598
        %v1604 = vadd.f32 %v1603, -0.28449672
        %v1605 = vmul.f32 %v1604, %v1598
        %v1606 = vadd.f32 %v1605, 0.2548296
        %v1607 = vmul.f32 %v1606, %v1598
        %v1608 = vsub.f32 0.0, %v1581
        %v1609 = vmul.f32 %v1608, %v1581
        %v1610 = vmul.f32 %v1609, 1.442695
        %v1611 = vpow.pop %v1610
        %v1612 = vmul.f32 %v1607, %v1611
        %v1613 = vsub.f32 1.0, %v1612
        %v1614 = vmul.f32 %v1580, %v1613
        %v1615 = vadd.f32 %v1614, 1.0
        %v1616 = vmul.f32 %v1577, %v1615
        %s1617 = scalar_lea.vmem [#allocation9], 16
        %v1618 = vld [vmem:[%s1617] sm:$0xf]
        %v1619 = vld [vmem:[%s1617 + $0x4] sm:$0xf]
        %v1620 = vld [vmem:[%s1617 + $0x8] sm:$0xf]
        %v1621 = vld [vmem:[%s1617 + $0xc] sm:$0xf]
        %v1622 = vpack.c.bf16 %v1616, %v1616
        %v1627 = vunpack.c.l.b16 %v1618
        %v1628 = vunpack.c.l.b16 %v1619
        %v1629 = vunpack.c.l.b16 %v1620
        %v1630 = vunpack.c.l.b16 %v1621
        %v1631 = vpack.c.b16 %v1628, %v1627
        %v1632 = vpack.c.b16 %v1630, %v1629
        %v1636 = vsel %vm620, %v1622, 0
        %1638 = vmatpush.bf16.msra.mxu0 0
        %1639 = vmatpush.bf16.msra.mxu0 0
        %1640 = vmatpush.bf16.msra.mxu0 0
        %1641 = vmatpush.bf16.msra.mxu0 0
        %1642 = vmatpush.bf16.msra.mxu0 0
        %1643 = vmatpush.bf16.msra.mxu0 0
        %1644 = vmatpush.bf16.msra.mxu0 %v1632
        %1645 = vmatpush.bf16.msra.mxu0 %v1631
        %1646 = vmatmul.bf16.gmra.mxu0 %v1636
        %v1647 = vpop.f32.mrf.mxu0
        %v1648 = vadd.f32 0.0, %v1647
        %v1649 = vpop.f32.mrf.mxu0
        %1650 = vdwg.mxu0
        %v1655 = vunpack.c.l.b16 %v1566
        %v1656 = vunpack.c.l.b16 %v1567
        %v1657 = vunpack.c.l.b16 %v1568
        %v1658 = vunpack.c.l.b16 %v1569
        %v1659 = vpack.c.b16 %v1656, %v1655
        %v1660 = vpack.c.b16 %v1658, %v1657
        %v1664 = vsel %vm620, %v1570, 0
        %1666 = vmatpush.bf16.msra.mxu0 0
        %1667 = vmatpush.bf16.msra.mxu0 0
        %1668 = vmatpush.bf16.msra.mxu0 0
        %1669 = vmatpush.bf16.msra.mxu0 0
        %1670 = vmatpush.bf16.msra.mxu0 0
        %1671 = vmatpush.bf16.msra.mxu0 0
        %1672 = vmatpush.bf16.msra.mxu0 %v1660
        %1673 = vmatpush.bf16.msra.mxu0 %v1659
        %1674 = vmatmul.bf16.gmra.mxu0 %v1664
        %v1675 = vpop.f32.mrf.mxu0
        %v1676 = vadd.f32 %v1648, %v1675
        %v1677 = vpop.f32.mrf.mxu0
        %1678 = vdwg.mxu0
        %v1679 = vsub.f32 %v1468, %v1504
        %v1680 = vmul.f32 %v1679, %v1519
        %v1681 = vperm.slane %v1419, 2
        %v1682 = vmul.f32 %v1680, %v1681
        %v1683 = vperm.slane %v1420, 2
        %v1684 = vadd.f32 %v1682, %v1683
        %v1685 = vmul.f32 %v1684, 0.5
        %v1686 = vmul.f32 %v1684, 0.70710677
        %vm1687 = vcmp.ge.f32.partialorder %v1686, 0.0
        %v1688 = vsel %vm1687, 1.0, -1.0
        %v1689 = vand.u32 2147483647, %v1686
        %v1690 = vmul.f32 %v1689, 0.3275911
        %v1691 = vadd.f32 %v1690, 1.0
        %v1692 = vrcp.pop %v1691
        %v1693 = vmul.f32 %v1691, %v1692
        %v1694 = vsub.f32 1.0, %v1693
        %v1695 = vmul.f32 %v1692, %v1694
        %v1696 = vadd.f32 %v1692, %v1695
        %vm1697 = vweird.f32 %v1691
        %vm1698 = vweird.f32 %v1692
        %vm1699 = vmor %vm1697, %vm1698
        %v1700 = vsel %vm1699, %v1692, %v1696
        %v1701 = vand.u32 2147483647, %v1691
        %vm1702 = vcmp.eq.f32.partialorder %v1701, 8.507059e+37
        %v1703 = vand.u32 %v1691, 2147483648
        %v1704 = vor.u32 1.1754944e-38, %v1703
        %v1705 = vsel %vm1702, %v1704, %v1700
        %v1706 = vmul.f32 1.0, %v1705
        %v1707 = vmul.f32 %v1706, 1.0614054
        %v1708 = vadd.f32 %v1707, -1.4531521
        %v1709 = vmul.f32 %v1708, %v1706
        %v1710 = vadd.f32 %v1709, 1.4214138
        %v1711 = vmul.f32 %v1710, %v1706
        %v1712 = vadd.f32 %v1711, -0.28449672
        %v1713 = vmul.f32 %v1712, %v1706
        %v1714 = vadd.f32 %v1713, 0.2548296
        %v1715 = vmul.f32 %v1714, %v1706
        %v1716 = vsub.f32 0.0, %v1689
        %v1717 = vmul.f32 %v1716, %v1689
        %v1718 = vmul.f32 %v1717, 1.442695
        %v1719 = vpow.pop %v1718
        %v1720 = vmul.f32 %v1715, %v1719
        %v1721 = vsub.f32 1.0, %v1720
        %v1722 = vmul.f32 %v1688, %v1721
        %v1723 = vadd.f32 %v1722, 1.0
        %v1724 = vmul.f32 %v1685, %v1723
        %s1725 = scalar_lea.vmem [#allocation9], 32
        %v1726 = vld [vmem:[%s1725] sm:$0xf]
        %v1727 = vld [vmem:[%s1725 + $0x4] sm:$0xf]
        %v1728 = vld [vmem:[%s1725 + $0x8] sm:$0xf]
        %v1729 = vld [vmem:[%s1725 + $0xc] sm:$0xf]
        %v1730 = vpack.c.bf16 %v1724, %v1724
        %v1735 = vunpack.c.l.b16 %v1726
        %v1736 = vunpack.c.l.b16 %v1727
        %v1737 = vunpack.c.l.b16 %v1728
        %v1738 = vunpack.c.l.b16 %v1729
        %v1739 = vpack.c.b16 %v1736, %v1735
        %v1740 = vpack.c.b16 %v1738, %v1737
        %v1744 = vsel %vm620, %v1730, 0
        %1746 = vmatpush.bf16.msra.mxu0 0
        %1747 = vmatpush.bf16.msra.mxu0 0
        %1748 = vmatpush.bf16.msra.mxu0 0
        %1749 = vmatpush.bf16.msra.mxu0 0
        %1750 = vmatpush.bf16.msra.mxu0 0
        %1751 = vmatpush.bf16.msra.mxu0 0
        %1752 = vmatpush.bf16.msra.mxu0 %v1740
        %1753 = vmatpush.bf16.msra.mxu0 %v1739
        %1754 = vmatmul.bf16.gmra.mxu0 %v1744
        %v1755 = vpop.f32.mrf.mxu0
        %v1756 = vadd.f32 0.0, %v1755
        %v1757 = vpop.f32.mrf.mxu0
        %1758 = vdwg.mxu0
        %v1759 = vadd.f32 %v1676, %v1756
        %v1760 = vsub.f32 %v1487, %v1504
        %v1761 = vmul.f32 %v1760, %v1519
        %v1762 = vperm.slane %v1419, 3
        %v1763 = vmul.f32 %v1761, %v1762
        %v1764 = vperm.slane %v1420, 3
        %v1765 = vadd.f32 %v1763, %v1764
        %v1766 = vmul.f32 %v1765, 0.5
        %v1767 = vmul.f32 %v1765, 0.70710677
        %vm1768 = vcmp.ge.f32.partialorder %v1767, 0.0
        %v1769 = vsel %vm1768, 1.0, -1.0
        %v1770 = vand.u32 2147483647, %v1767
        %v1771 = vmul.f32 %v1770, 0.3275911
        %v1772 = vadd.f32 %v1771, 1.0
        %v1773 = vrcp.pop %v1772
        %v1774 = vmul.f32 %v1772, %v1773
        %v1775 = vsub.f32 1.0, %v1774
        %v1776 = vmul.f32 %v1773, %v1775
        %v1777 = vadd.f32 %v1773, %v1776
        %vm1778 = vweird.f32 %v1772
        %vm1779 = vweird.f32 %v1773
        %vm1780 = vmor %vm1778, %vm1779
        %v1781 = vsel %vm1780, %v1773, %v1777
        %v1782 = vand.u32 2147483647, %v1772
        %vm1783 = vcmp.eq.f32.partialorder %v1782, 8.507059e+37
        %v1784 = vand.u32 %v1772, 2147483648
        %v1785 = vor.u32 1.1754944e-38, %v1784
        %v1786 = vsel %vm1783, %v1785, %v1781
        %v1787 = vmul.f32 1.0, %v1786
        %v1788 = vmul.f32 %v1787, 1.0614054
        %v1789 = vadd.f32 %v1788, -1.4531521
        %v1790 = vmul.f32 %v1789, %v1787
        %v1791 = vadd.f32 %v1790, 1.4214138
        %v1792 = vmul.f32 %v1791, %v1787
        %v1793 = vadd.f32 %v1792, -0.28449672
        %v1794 = vmul.f32 %v1793, %v1787
        %v1795 = vadd.f32 %v1794, 0.2548296
        %v1796 = vmul.f32 %v1795, %v1787
        %v1797 = vsub.f32 0.0, %v1770
        %v1798 = vmul.f32 %v1797, %v1770
        %v1799 = vmul.f32 %v1798, 1.442695
        %v1800 = vpow.pop %v1799
        %v1801 = vmul.f32 %v1796, %v1800
        %v1802 = vsub.f32 1.0, %v1801
        %v1803 = vmul.f32 %v1769, %v1802
        %v1804 = vadd.f32 %v1803, 1.0
        %v1805 = vmul.f32 %v1766, %v1804
        %s1806 = scalar_lea.vmem [#allocation9], 48
        %v1807 = vld [vmem:[%s1806] sm:$0xf]
        %v1808 = vld [vmem:[%s1806 + $0x4] sm:$0xf]
        %v1809 = vld [vmem:[%s1806 + $0x8] sm:$0xf]
        %v1810 = vld [vmem:[%s1806 + $0xc] sm:$0xf]
        %v1811 = vpack.c.bf16 %v1805, %v1805
        %v1816 = vunpack.c.l.b16 %v1807
        %v1817 = vunpack.c.l.b16 %v1808
        %v1818 = vunpack.c.l.b16 %v1809
        %v1819 = vunpack.c.l.b16 %v1810
        %v1820 = vpack.c.b16 %v1817, %v1816
        %v1821 = vpack.c.b16 %v1819, %v1818
        %v1825 = vsel %vm620, %v1811, 0
        %1827 = vmatpush.bf16.msra.mxu0 0
        %1828 = vmatpush.bf16.msra.mxu0 0
        %1829 = vmatpush.bf16.msra.mxu0 0
        %1830 = vmatpush.bf16.msra.mxu0 0
        %1831 = vmatpush.bf16.msra.mxu0 0
        %1832 = vmatpush.bf16.msra.mxu0 0
        %1833 = vmatpush.bf16.msra.mxu0 %v1821
        %1834 = vmatpush.bf16.msra.mxu0 %v1820
        %1835 = vmatmul.bf16.gmra.mxu0 %v1825
        %v1836 = vpop.f32.mrf.mxu0
        %v1837 = vadd.f32 0.0, %v1836
        %v1838 = vpop.f32.mrf.mxu0
        %1839 = vdwg.mxu0
        %v1840 = vadd.f32 %v1759, %v1837
        %v1841 = vld [vmem:[#allocation11] sm:$0x1]
        %v1843 = vperm.slane %v1841, 0
        %v1845 = vadd.f32 %v1840, %v1843
        %v1846 = vadd.f32 %v1845, %v1404
        %v1847 = vadd.f32 %v1846, %v604
        %1848 = vst.msk [vmem:[%s602] sm:$0xff] %vm620, %v1847
        %p1849 = scmp.lt.s32.totalorder %s31, 1
        %s1850 = scalar_select %p1849, %s31, 1
        %s1851 = smul.addr %s1850, 8
        %s1852 = scalar_lea.vmem %s14, %s1851
        // Predicated region
        $region149: #{hierarchical_temporal_net.6} parent=71 // pred_check
          %p1853 = pneg %p327
        $region150: #{hierarchical_temporal_net.6} parent=71 // pred_check_branch
          %1855 = sbr.rel (%p1853) target = $region152
        $region151: #{hierarchical_temporal_net.6} parent=71 // pred_region
          _
        $region152: #{hierarchical_temporal_net.6} parent=71 // pred_fallthru
          _
      $region72: #{hierarchical_temporal_net.6} parent=5 // pred_fallthru
        _
      %p1856 = scmp.le.s32.totalorder 2, %s26
      // Predicated region
      $region153: #{hierarchical_temporal_net.6} parent=5 // pred_check
        %p1857 = pneg %p1856
      $region154: #{hierarchical_temporal_net.6} parent=5 // pred_check_branch
        %1859 = sbr.rel (%p1857) target = $region156
      $region155: #{hierarchical_temporal_net.6} parent=5 // pred_region
        %s1860 = ssub.s32 %s26, 2
        // Predicated region
        $region157: #{hierarchical_temporal_net.6} parent=155 // pred_check
          %p1861 = pneg %p333
        $region158: #{hierarchical_temporal_net.6} parent=155 // pred_check_branch
          %1863 = sbr.rel (%p1861) target = $region160
        $region159: #{hierarchical_temporal_net.6} parent=155 // pred_region
          %p1864 = scmp.lt.s32.totalorder %s32, 1
          %s1865 = scalar_select %p1864, %s32, 1
          %s1866 = smul.addr %s1865, 8
          %s1867 = scalar_lea.vmem %s14, %s1866
        $region160: #{hierarchical_temporal_net.6} parent=155 // pred_fallthru
          _
      $region156: #{hierarchical_temporal_net.6} parent=5 // pred_fallthru
        _
    $region6: #{hierarchical_temporal_net.6} parent=1 // loop_footer
      %s30 = sadd.s32 1, %s26
    $region7: #{hierarchical_temporal_net.6} parent=1 // loop_footer_branch
      %25 = sbr.rel target = $region3
    $region8: #{hierarchical_temporal_net.6} parent=1 // loop_exit
      _
    %1868 = vsyncpa [#allocation5], 1
    %s1869 = scalar_lea.sflag [#allocation5], 1
    %1870 = vsyncpa %s1869, 1
    %1871 = vsyncpa [#allocation7], 1
    %1872 = vsyncpa [#allocation10], 1
    %1873 = vsyncpa [#allocation13], 1
    %1874 = vsyncpa [#allocation16], 1
    %1875 = vsyncpa [#allocation19], 1
  %1876 = vsyncmov [#allocation3]
  %s1877 = vpop.sfrf %1876
  %p1878 = scmp.eq.s32.totalorder %s1877, 0
  %p1879 = pneg %p1878
  %1881 = shalt.err (%p1879)
  %s1882 = scalar_lea.sflag [#allocation3], 1
  %1883 = vsyncmov %s1882
  %s1884 = vpop.sfrf %1883
  %p1885 = scmp.eq.s32.totalorder %s1884, 0
  %p1886 = pneg %p1885
  %1888 = shalt.err (%p1886)

// kernel: hierarchical_temporal_net.5
$region0: #{hierarchical_temporal_net.5}
  #allocation0 [shape = 'u32[]', space=smem, size = 0x4, offset = 0x4, fixed_abs, tag = 'smem constant byte address 0x4 - core index']
  #allocation1 [shape = 'u32[72,128]{1,0:T(1,128)}', space=vmem, size = 0x9000, scoped, tag = 'internal scratch']
  #allocation2 [shape = 'f32[2,8,8]{2,1,0:T(8,128)}', space=vmem, size = 0x2000, scoped, tag = 'scratch operand']
  #allocation3 [shape = 's32[2]{0}', space=sflag, size = 0x8, scoped, tag = 'scratch operand']
  #allocation21 [shape = 's32[]', space=sflag, size = 0x4, offset = 0, fixed_abs, tag = 'sflag constant byte address 0x0 - dummy sync flag']
  #allocation22 [shape = 's32[]', space=sflag, size = 0x4, offset = 0, fixed_abs, tag = 'sflag constant byte address 0x0 - dummy sync flag']
  #allocation23 [shape = 'u32[]', space=smem, size = 0x4, offset = 0x44, fixed_abs, tag = 'smem constant byte address 0x44 - assertion arg 0']
  #allocation24 [shape = 'u32[]', space=smem, size = 0x4, offset = 0x48, fixed_abs, tag = 'smem constant byte address 0x48 - assertion arg 1']
  #allocation25 [shape = 's32[]', space=sflag, size = 0x4, offset = 0, fixed_abs, tag = 'sflag constant byte address 0x0 - dummy sync flag']
  #allocation26 [shape = 's32[]', space=sflag, size = 0x4, offset = 0, fixed_abs, tag = 'sflag constant byte address 0x0 - dummy sync flag']
  #allocation27 [shape = 's32[]', space=sflag, size = 0x4, offset = 0, fixed_abs, tag = 'sflag constant byte address 0x0 - dummy sync flag']
  #allocation28 [shape = 's32[]', space=sflag, size = 0x4, offset = 0, fixed_abs, tag = 'sflag constant byte address 0x0 - dummy sync flag']
  #allocation29 [shape = 's32[]', space=sflag, size = 0x4, offset = 0, fixed_abs, tag = 'sflag constant byte address 0x0 - dummy sync flag']
  #allocation30 [shape = 's32[]', space=sflag, size = 0x4, offset = 0, fixed_abs, tag = 'sflag constant byte address 0x0 - dummy sync flag']
  #allocation31 [shape = 's32[]', space=sflag, size = 0x4, offset = 0, fixed_abs, tag = 'sflag constant byte address 0x0 - dummy sync flag']
  #allocation32 [shape = 's32[]', space=sflag, size = 0x4, offset = 0, fixed_abs, tag = 'sflag constant byte address 0x0 - dummy sync flag']
  #allocation33 [shape = 's32[]', space=sflag, size = 0x4, offset = 0, fixed_abs, tag = 'sflag constant byte address 0x0 - dummy sync flag']
  #allocation34 [shape = 's32[]', space=sflag, size = 0x4, offset = 0, fixed_abs, tag = 'sflag constant byte address 0x0 - dummy sync flag']
  #allocation35 [shape = 's32[]', space=sflag, size = 0x4, offset = 0, fixed_abs, tag = 'sflag constant byte address 0x0 - dummy sync flag']
  #allocation36 [shape = 's32[]', space=sflag, size = 0x4, offset = 0, fixed_abs, tag = 'sflag constant byte address 0x0 - dummy sync flag']
  #allocation37 [shape = 's32[]', space=sflag, size = 0x4, offset = 0, fixed_abs, tag = 'sflag constant byte address 0x0 - dummy sync flag']
  #allocation38 [shape = 's32[]', space=sflag, size = 0x4, offset = 0, fixed_abs, tag = 'sflag constant byte address 0x0 - dummy sync flag']
  %s0 = inlined_call_operand.vmem [shape: f32[2,8,32], index: 0, kind: input, shape index: {}]
  %s1 = inlined_call_operand.hbm [shape: f32[3,4,32], index: 1, kind: input, shape index: {}]
  %s2 = inlined_call_operand.hbm [shape: f32[4,32], index: 2, kind: input, shape index: {}]
  %s3 = inlined_call_operand.hbm [shape: f32[4,32], index: 3, kind: input, shape index: {}]
  %s4 = inlined_call_operand.hbm [shape: f32[4,32], index: 4, kind: input, shape index: {}]
  %s5 = inlined_call_operand.hbm [shape: bf16[4,32,32], index: 5, kind: input, shape index: {}]
  %s6 = inlined_call_operand.hbm [shape: f32[1,32], index: 6, kind: input, shape index: {}]
  %s7 = inlined_call_operand.hbm [shape: f32[1,32], index: 7, kind: input, shape index: {}]
  %s8 = inlined_call_operand.hbm [shape: f32[1,32], index: 8, kind: input, shape index: {}]
  %s9 = inlined_call_operand.vmem [shape: bf16[32,128], index: 9, kind: input, shape index: {}]
  %s10 = inlined_call_operand.hbm [shape: f32[1,128], index: 10, kind: input, shape index: {}]
  %s11 = inlined_call_operand.hbm [shape: bf16[32,32], index: 11, kind: input, shape index: {}]
  %s12 = inlined_call_operand.hbm [shape: f32[1,32], index: 12, kind: input, shape index: {}]
  %s13 = inlined_call_operand.hbm [shape: f32[8,8,8], index: 13, kind: input, shape index: {}]
  %s14 = inlined_call_operand.vmem [shape: f32[2,8,32], index: 14, kind: output, shape index: {}]
  %s15 = sld [smem:[#allocation0]]
  $region161: #{hierarchical_temporal_net.5} parent=0
    _
  %s17 = ssub.s32 1, %s15
  %s18 = scalar_select 0, %s17, %s15
  $region1: #{hierarchical_temporal_net.5} parent=0
    #allocation4 [shape = 'u8[6144]{0}', space=vmem, size = 0x1800, scoped, tag = 'input window, operand 1, single buffered']
    #allocation5 [shape = 's32[2]{0}', space=sflag, size = 0x8, scoped, tag = 'scoped memory for hierarchical_temporal_net.5']
    #allocation6 [shape = 'u8[2048]{0}', space=vmem, size = 0x800, scoped, tag = 'input window, operand 2, single buffered']
    #allocation7 [shape = 's32[1]{0}', space=sflag, size = 0x4, scoped, tag = 'scoped memory for hierarchical_temporal_net.5']
    #allocation8 [shape = 'u8[2048]{0}', space=vmem, size = 0x800, scoped, tag = 'input window, operand 3, single buffered']
    #allocation9 [shape = 'u8[2048]{0}', space=vmem, size = 0x800, scoped, tag = 'input window, operand 4, single buffered']
    #allocation10 [shape = 's32[1]{0}', space=sflag, size = 0x4, scoped, tag = 'scoped memory for hierarchical_temporal_net.5']
    #allocation11 [shape = 'u8[32768]{0}', space=vmem, size = 0x8000, scoped, tag = 'input window, operand 5, single buffered']
    #allocation12 [shape = 'u8[512]{0}', space=vmem, size = 0x400, scoped, tag = 'input window, operand 6, single buffered']
    #allocation13 [shape = 's32[1]{0}', space=sflag, size = 0x4, scoped, tag = 'scoped memory for hierarchical_temporal_net.5']
    #allocation14 [shape = 'u8[512]{0}', space=vmem, size = 0x400, scoped, tag = 'input window, operand 7, single buffered']
    #allocation15 [shape = 'u8[512]{0}', space=vmem, size = 0x400, scoped, tag = 'input window, operand 8, single buffered']
    #allocation16 [shape = 's32[1]{0}', space=sflag, size = 0x4, scoped, tag = 'scoped memory for hierarchical_temporal_net.5']
    #allocation17 [shape = 'u8[512]{0}', space=vmem, size = 0x400, scoped, tag = 'input window, operand 10, single buffered']
    #allocation18 [shape = 'u8[8192]{0}', space=vmem, size = 0x2000, scoped, tag = 'input window, operand 11, single buffered']
    #allocation19 [shape = 's32[1]{0}', space=sflag, size = 0x4, scoped, tag = 'scoped memory for hierarchical_temporal_net.5']
    #allocation20 [shape = 'u8[512]{0}', space=vmem, size = 0x400, scoped, tag = 'input window, operand 12, single buffered']
    %19 = vsyncpa [#allocation5], 0
    %20 = vsyncpa [#allocation7], 0
    %21 = vsyncpa [#allocation10], 0
    %22 = vsyncpa [#allocation13], 0
    %23 = vsyncpa [#allocation16], 0
    %24 = vsyncpa [#allocation19], 0
    loop: start=0, step=1, limit=4
    $region2: #{hierarchical_temporal_net.5} parent=1 // loop_pre_header
      _
    $region3: #{hierarchical_temporal_net.5} parent=1 // loop_header
      %s26 = sphi 0, %s30
      %p27 = scmp.ge.s32.totalorder %s26, 4
      %s36 = sphi 0, %s38
      %s39 = sphi 0, %s36
      %s40 = sphi 0, %s39
      %s56 = sphi 0, %s40
      %s60 = sphi 0, %s60
      %s62 = sphi 0, %s60
      %s63 = sphi 0, %s62
      %s77 = sphi 0, %s63
      %s81 = sphi 0, %s81
      %s83 = sphi 0, %s81
      %s84 = sphi 0, %s83
      %s98 = sphi 0, %s84
      %s102 = sphi 0, %s102
      %s104 = sphi 0, %s102
      %s105 = sphi 0, %s104
      %s119 = sphi 0, %s105
      %s123 = sphi 0, %s123
      %s125 = sphi 0, %s123
      %s126 = sphi 0, %s125
      %s140 = sphi 0, %s126
      %s144 = sphi 0, %s144
      %s146 = sphi 0, %s144
      %s147 = sphi 0, %s146
      %s161 = sphi 0, %s147
      %s165 = sphi 0, %s165
      %s167 = sphi 0, %s165
      %s168 = sphi 0, %s167
      %s182 = sphi 0, %s168
      %s186 = sphi 0, %s186
      %s188 = sphi 0, %s186
      %s189 = sphi 0, %s188
      %s203 = sphi 0, %s189
      %s207 = sphi 0, %s207
      %s209 = sphi 0, %s207
      %s210 = sphi 0, %s209
      %s224 = sphi 0, %s210
      %s228 = sphi 0, %s228
      %s230 = sphi 0, %s228
      %s231 = sphi 0, %s230
      %s245 = sphi 0, %s231
      %s249 = sphi 0, %s249
      %s251 = sphi 0, %s249
      %s252 = sphi 0, %s251
      %s266 = sphi 0, %s252
      %s270 = sphi 0, %s270
      %s272 = sphi 0, %s270
      %s273 = sphi 0, %s272
      %s287 = sphi 0, %s273
      %s291 = sphi 0, %s291
      %s293 = sphi 0, %s291
      %s294 = sphi 0, %s293
      %s308 = sphi 0, %s294
      %s314 = sphi 0, %s316
      %s317 = sphi 0, %s314
      %s318 = sphi 0, %s317
      %s334 = sphi 0, %s318
    $region4: #{hierarchical_temporal_net.5} parent=1 // loop_header_branch
      %29 = sbr.rel (%p27) target = $region8
    $region5: #{hierarchical_temporal_net.5} parent=1 // loop_body
      %s31 = ssub.s32 %s26, 1
      %s32 = ssub.s32 %s26, 2
      %s33 = sadd.s32 %s26, 1
      %s34 = ssub.s32 %s26, %s33
      %p35 = scmp.eq.s32.totalorder %s34, 0
      %s37 = sadd.s32 %s36, 1
      %s38 = scalar_select %p35, %s36, %s37
      %p41 = pneg %p35
      %p42 = scmp.eq.s32.totalorder %s26, 1
      %p43 = por %p41, %p42
      %p44 = scmp.ne.s32.totalorder %s36, %s39
      %p45 = scmp.eq.s32.totalorder %s26, 0
      %p46 = por %p44, %p45
      %p47 = scmp.ne.s32.totalorder %s36, %s39
      %p48 = scmp.eq.s32.totalorder %s31, 1
      %p49 = por %p47, %p48
      %p50 = scmp.ne.s32.totalorder %s39, %s40
      %p51 = scmp.eq.s32.totalorder %s31, 0
      %p52 = por %p50, %p51
      %p53 = scmp.ne.s32.totalorder %s39, %s40
      %p54 = scmp.eq.s32.totalorder %s32, 1
      %p55 = por %p53, %p54
      %p57 = scmp.ne.s32.totalorder %s40, %s56
      %p58 = scmp.eq.s32.totalorder %s32, 0
      %p59 = por %p57, %p58
      %s61 = sadd.s32 %s60, 1
      %p64 = scmp.eq.s32.totalorder %s26, 1
      %p65 = scmp.ne.s32.totalorder %s60, %s62
      %p66 = scmp.eq.s32.totalorder %s26, 0
      %p67 = por %p65, %p66
      %p68 = scmp.ne.s32.totalorder %s60, %s62
      %p69 = scmp.eq.s32.totalorder %s31, 1
      %p70 = por %p68, %p69
      %p71 = scmp.ne.s32.totalorder %s62, %s63
      %p72 = scmp.eq.s32.totalorder %s31, 0
      %p73 = por %p71, %p72
      %p74 = scmp.ne.s32.totalorder %s62, %s63
      %p75 = scmp.eq.s32.totalorder %s32, 1
      %p76 = por %p74, %p75
      %p78 = scmp.ne.s32.totalorder %s63, %s77
      %p79 = scmp.eq.s32.totalorder %s32, 0
      %p80 = por %p78, %p79
      %s82 = sadd.s32 %s81, 1
      %p85 = scmp.eq.s32.totalorder %s26, 1
      %p86 = scmp.ne.s32.totalorder %s81, %s83
      %p87 = scmp.eq.s32.totalorder %s26, 0
      %p88 = por %p86, %p87
      %p89 = scmp.ne.s32.totalorder %s81, %s83
      %p90 = scmp.eq.s32.totalorder %s31, 1
      %p91 = por %p89, %p90
      %p92 = scmp.ne.s32.totalorder %s83, %s84
      %p93 = scmp.eq.s32.totalorder %s31, 0
      %p94 = por %p92, %p93
      %p95 = scmp.ne.s32.totalorder %s83, %s84
      %p96 = scmp.eq.s32.totalorder %s32, 1
      %p97 = por %p95, %p96
      %p99 = scmp.ne.s32.totalorder %s84, %s98
      %p100 = scmp.eq.s32.totalorder %s32, 0
      %p101 = por %p99, %p100
      %s103 = sadd.s32 %s102, 1
      %p106 = scmp.eq.s32.totalorder %s26, 1
      %p107 = scmp.ne.s32.totalorder %s102, %s104
      %p108 = scmp.eq.s32.totalorder %s26, 0
      %p109 = por %p107, %p108
      %p110 = scmp.ne.s32.totalorder %s102, %s104
      %p111 = scmp.eq.s32.totalorder %s31, 1
      %p112 = por %p110, %p111
      %p113 = scmp.ne.s32.totalorder %s104, %s105
      %p114 = scmp.eq.s32.totalorder %s31, 0
      %p115 = por %p113, %p114
      %p116 = scmp.ne.s32.totalorder %s104, %s105
      %p117 = scmp.eq.s32.totalorder %s32, 1
      %p118 = por %p116, %p117
      %p120 = scmp.ne.s32.totalorder %s105, %s119
      %p121 = scmp.eq.s32.totalorder %s32, 0
      %p122 = por %p120, %p121
      %s124 = sadd.s32 %s123, 1
      %p127 = scmp.eq.s32.totalorder %s26, 1
      %p128 = scmp.ne.s32.totalorder %s123, %s125
      %p129 = scmp.eq.s32.totalorder %s26, 0
      %p130 = por %p128, %p129
      %p131 = scmp.ne.s32.totalorder %s123, %s125
      %p132 = scmp.eq.s32.totalorder %s31, 1
      %p133 = por %p131, %p132
      %p134 = scmp.ne.s32.totalorder %s125, %s126
      %p135 = scmp.eq.s32.totalorder %s31, 0
      %p136 = por %p134, %p135
      %p137 = scmp.ne.s32.totalorder %s125, %s126
      %p138 = scmp.eq.s32.totalorder %s32, 1
      %p139 = por %p137, %p138
      %p141 = scmp.ne.s32.totalorder %s126, %s140
      %p142 = scmp.eq.s32.totalorder %s32, 0
      %p143 = por %p141, %p142
      %s145 = sadd.s32 %s144, 1
      %p148 = scmp.eq.s32.totalorder %s26, 1
      %p149 = scmp.ne.s32.totalorder %s144, %s146
      %p150 = scmp.eq.s32.totalorder %s26, 0
      %p151 = por %p149, %p150
      %p152 = scmp.ne.s32.totalorder %s144, %s146
      %p153 = scmp.eq.s32.totalorder %s31, 1
      %p154 = por %p152, %p153
      %p155 = scmp.ne.s32.totalorder %s146, %s147
      %p156 = scmp.eq.s32.totalorder %s31, 0
      %p157 = por %p155, %p156
      %p158 = scmp.ne.s32.totalorder %s146, %s147
      %p159 = scmp.eq.s32.totalorder %s32, 1
      %p160 = por %p158, %p159
      %p162 = scmp.ne.s32.totalorder %s147, %s161
      %p163 = scmp.eq.s32.totalorder %s32, 0
      %p164 = por %p162, %p163
      %s166 = sadd.s32 %s165, 1
      %p169 = scmp.eq.s32.totalorder %s26, 1
      %p170 = scmp.ne.s32.totalorder %s165, %s167
      %p171 = scmp.eq.s32.totalorder %s26, 0
      %p172 = por %p170, %p171
      %p173 = scmp.ne.s32.totalorder %s165, %s167
      %p174 = scmp.eq.s32.totalorder %s31, 1
      %p175 = por %p173, %p174
      %p176 = scmp.ne.s32.totalorder %s167, %s168
      %p177 = scmp.eq.s32.totalorder %s31, 0
      %p178 = por %p176, %p177
      %p179 = scmp.ne.s32.totalorder %s167, %s168
      %p180 = scmp.eq.s32.totalorder %s32, 1
      %p181 = por %p179, %p180
      %p183 = scmp.ne.s32.totalorder %s168, %s182
      %p184 = scmp.eq.s32.totalorder %s32, 0
      %p185 = por %p183, %p184
      %s187 = sadd.s32 %s186, 1
      %p190 = scmp.eq.s32.totalorder %s26, 1
      %p191 = scmp.ne.s32.totalorder %s186, %s188
      %p192 = scmp.eq.s32.totalorder %s26, 0
      %p193 = por %p191, %p192
      %p194 = scmp.ne.s32.totalorder %s186, %s188
      %p195 = scmp.eq.s32.totalorder %s31, 1
      %p196 = por %p194, %p195
      %p197 = scmp.ne.s32.totalorder %s188, %s189
      %p198 = scmp.eq.s32.totalorder %s31, 0
      %p199 = por %p197, %p198
      %p200 = scmp.ne.s32.totalorder %s188, %s189
      %p201 = scmp.eq.s32.totalorder %s32, 1
      %p202 = por %p200, %p201
      %p204 = scmp.ne.s32.totalorder %s189, %s203
      %p205 = scmp.eq.s32.totalorder %s32, 0
      %p206 = por %p204, %p205
      %s208 = sadd.s32 %s207, 1
      %p211 = scmp.eq.s32.totalorder %s26, 1
      %p212 = scmp.ne.s32.totalorder %s207, %s209
      %p213 = scmp.eq.s32.totalorder %s26, 0
      %p214 = por %p212, %p213
      %p215 = scmp.ne.s32.totalorder %s207, %s209
      %p216 = scmp.eq.s32.totalorder %s31, 1
      %p217 = por %p215, %p216
      %p218 = scmp.ne.s32.totalorder %s209, %s210
      %p219 = scmp.eq.s32.totalorder %s31, 0
      %p220 = por %p218, %p219
      %p221 = scmp.ne.s32.totalorder %s209, %s210
      %p222 = scmp.eq.s32.totalorder %s32, 1
      %p223 = por %p221, %p222
      %p225 = scmp.ne.s32.totalorder %s210, %s224
      %p226 = scmp.eq.s32.totalorder %s32, 0
      %p227 = por %p225, %p226
      %s229 = sadd.s32 %s228, 1
      %p232 = scmp.eq.s32.totalorder %s26, 1
      %p233 = scmp.ne.s32.totalorder %s228, %s230
      %p234 = scmp.eq.s32.totalorder %s26, 0
      %p235 = por %p233, %p234
      %p236 = scmp.ne.s32.totalorder %s228, %s230
      %p237 = scmp.eq.s32.totalorder %s31, 1
      %p238 = por %p236, %p237
      %p239 = scmp.ne.s32.totalorder %s230, %s231
      %p240 = scmp.eq.s32.totalorder %s31, 0
      %p241 = por %p239, %p240
      %p242 = scmp.ne.s32.totalorder %s230, %s231
      %p243 = scmp.eq.s32.totalorder %s32, 1
      %p244 = por %p242, %p243
      %p246 = scmp.ne.s32.totalorder %s231, %s245
      %p247 = scmp.eq.s32.totalorder %s32, 0
      %p248 = por %p246, %p247
      %s250 = sadd.s32 %s249, 1
      %p253 = scmp.eq.s32.totalorder %s26, 1
      %p254 = scmp.ne.s32.totalorder %s249, %s251
      %p255 = scmp.eq.s32.totalorder %s26, 0
      %p256 = por %p254, %p255
      %p257 = scmp.ne.s32.totalorder %s249, %s251
      %p258 = scmp.eq.s32.totalorder %s31, 1
      %p259 = por %p257, %p258
      %p260 = scmp.ne.s32.totalorder %s251, %s252
      %p261 = scmp.eq.s32.totalorder %s31, 0
      %p262 = por %p260, %p261
      %p263 = scmp.ne.s32.totalorder %s251, %s252
      %p264 = scmp.eq.s32.totalorder %s32, 1
      %p265 = por %p263, %p264
      %p267 = scmp.ne.s32.totalorder %s252, %s266
      %p268 = scmp.eq.s32.totalorder %s32, 0
      %p269 = por %p267, %p268
      %s271 = sadd.s32 %s270, 1
      %p274 = scmp.eq.s32.totalorder %s26, 1
      %p275 = scmp.ne.s32.totalorder %s270, %s272
      %p276 = scmp.eq.s32.totalorder %s26, 0
      %p277 = por %p275, %p276
      %p278 = scmp.ne.s32.totalorder %s270, %s272
      %p279 = scmp.eq.s32.totalorder %s31, 1
      %p280 = por %p278, %p279
      %p281 = scmp.ne.s32.totalorder %s272, %s273
      %p282 = scmp.eq.s32.totalorder %s31, 0
      %p283 = por %p281, %p282
      %p284 = scmp.ne.s32.totalorder %s272, %s273
      %p285 = scmp.eq.s32.totalorder %s32, 1
      %p286 = por %p284, %p285
      %p288 = scmp.ne.s32.totalorder %s273, %s287
      %p289 = scmp.eq.s32.totalorder %s32, 0
      %p290 = por %p288, %p289
      %s292 = sadd.s32 %s291, 1
      %p295 = scmp.eq.s32.totalorder %s26, 1
      %p296 = scmp.ne.s32.totalorder %s291, %s293
      %p297 = scmp.eq.s32.totalorder %s26, 0
      %p298 = por %p296, %p297
      %p299 = scmp.ne.s32.totalorder %s291, %s293
      %p300 = scmp.eq.s32.totalorder %s31, 1
      %p301 = por %p299, %p300
      %p302 = scmp.ne.s32.totalorder %s293, %s294
      %p303 = scmp.eq.s32.totalorder %s31, 0
      %p304 = por %p302, %p303
      %p305 = scmp.ne.s32.totalorder %s293, %s294
      %p306 = scmp.eq.s32.totalorder %s32, 1
      %p307 = por %p305, %p306
      %p309 = scmp.ne.s32.totalorder %s294, %s308
      %p310 = scmp.eq.s32.totalorder %s32, 0
      %p311 = por %p309, %p310
      %s312 = ssub.s32 %s26, %s33
      %p313 = scmp.eq.s32.totalorder %s312, 0
      %s315 = sadd.s32 %s314, 1
      %s316 = scalar_select %p313, %s314, %s315
      %p319 = pneg %p313
      %p320 = scmp.eq.s32.totalorder %s26, 1
      %p321 = por %p319, %p320
      %p322 = scmp.ne.s32.totalorder %s314, %s317
      %p323 = scmp.eq.s32.totalorder %s26, 0
      %p324 = por %p322, %p323
      %p325 = scmp.ne.s32.totalorder %s314, %s317
      %p326 = scmp.eq.s32.totalorder %s31, 1
      %p327 = por %p325, %p326
      %p328 = scmp.ne.s32.totalorder %s317, %s318
      %p329 = scmp.eq.s32.totalorder %s31, 0
      %p330 = por %p328, %p329
      %p331 = scmp.ne.s32.totalorder %s317, %s318
      %p332 = scmp.eq.s32.totalorder %s32, 1
      %p333 = por %p331, %p332
      %p335 = scmp.ne.s32.totalorder %s318, %s334
      %p336 = scmp.eq.s32.totalorder %s32, 0
      %p337 = por %p335, %p336
      %p338 = scmp.le.s32.totalorder 1, %s26
      %p339 = scmp.lt.s32.totalorder %s26, 3
      %p340 = pnand %p338, %p339
      %p341 = pneg %p340
      // Predicated region
      $region9: #{hierarchical_temporal_net.5} parent=5 // pred_check
        _
      $region10: #{hierarchical_temporal_net.5} parent=5 // pred_check_branch
        %343 = sbr.rel (%p340) target = $region12
      $region11: #{hierarchical_temporal_net.5} parent=5 // pred_region
        %s344 = ssub.s32 %s26, 1
        // Predicated region
        $region13: #{hierarchical_temporal_net.5} parent=11 // pred_check
          %p345 = pneg %p73
        $region14: #{hierarchical_temporal_net.5} parent=11 // pred_check_branch
          %347 = sbr.rel (%p345) target = $region16
        $region15: #{hierarchical_temporal_net.5} parent=11 // pred_region
          %349 = vsyncadd [#allocation5], 0
          %s350 = sshll.u32 %s1, 4
          %s351 = int_to_ptr.hbm [resolvable:$true] %s350
          %s352 = sshll.u32 [#allocation4], 4
          %s353 = int_to_ptr.vmem [resolvable:$true] %s352
          %358 = dma.hbm_to_vmem [thread:$0]  %s351, 192, %s353, [#allocation5], 64, 64, 4
        $region16: #{hierarchical_temporal_net.5} parent=11 // pred_fallthru
          _
        // Predicated region
        $region17: #{hierarchical_temporal_net.5} parent=11 // pred_check
          %p359 = pneg %p94
        $region18: #{hierarchical_temporal_net.5} parent=11 // pred_check_branch
          %361 = sbr.rel (%p359) target = $region20
        $region19: #{hierarchical_temporal_net.5} parent=11 // pred_region
          %363 = vsyncadd [#allocation7], 0
          %s365 = sshll.u32 %s2, 4
          %s366 = int_to_ptr.hbm [resolvable:$true] %s365
          %s367 = sshll.u32 [#allocation6], 4
          %s368 = int_to_ptr.vmem [resolvable:$true] %s367
          %370 = dma.hbm_to_vmem [thread:$0]  %s366, 64, %s368, [#allocation7]
        $region20: #{hierarchical_temporal_net.5} parent=11 // pred_fallthru
          _
        // Predicated region
        $region21: #{hierarchical_temporal_net.5} parent=11 // pred_check
          %p371 = pneg %p115
        $region22: #{hierarchical_temporal_net.5} parent=11 // pred_check_branch
          %373 = sbr.rel (%p371) target = $region24
        $region23: #{hierarchical_temporal_net.5} parent=11 // pred_region
          %375 = vsyncadd [#allocation7], 0
          %s377 = sshll.u32 %s3, 4
          %s378 = int_to_ptr.hbm [resolvable:$true] %s377
          %s379 = sshll.u32 [#allocation8], 4
          %s380 = int_to_ptr.vmem [resolvable:$true] %s379
          %382 = dma.hbm_to_vmem [thread:$0]  %s378, 64, %s380, [#allocation7]
        $region24: #{hierarchical_temporal_net.5} parent=11 // pred_fallthru
          _
        // Predicated region
        $region25: #{hierarchical_temporal_net.5} parent=11 // pred_check
          %p383 = pneg %p136
        $region26: #{hierarchical_temporal_net.5} parent=11 // pred_check_branch
          %385 = sbr.rel (%p383) target = $region28
        $region27: #{hierarchical_temporal_net.5} parent=11 // pred_region
          %387 = vsyncadd [#allocation10], 0
          %s389 = sshll.u32 %s4, 4
          %s390 = int_to_ptr.hbm [resolvable:$true] %s389
          %s391 = sshll.u32 [#allocation9], 4
          %s392 = int_to_ptr.vmem [resolvable:$true] %s391
          %394 = dma.hbm_to_vmem [thread:$0]  %s390, 64, %s392, [#allocation10]
        $region28: #{hierarchical_temporal_net.5} parent=11 // pred_fallthru
          _
        // Predicated region
        $region29: #{hierarchical_temporal_net.5} parent=11 // pred_check
          %p395 = pneg %p157
        $region30: #{hierarchical_temporal_net.5} parent=11 // pred_check_branch
          %397 = sbr.rel (%p395) target = $region32
        $region31: #{hierarchical_temporal_net.5} parent=11 // pred_region
          %399 = vsyncadd [#allocation10], 0
          %s400 = sshll.u32 %s5, 4
          %s401 = int_to_ptr.hbm [resolvable:$true] %s400
          %s402 = sshll.u32 [#allocation11], 4
          %s403 = int_to_ptr.vmem [resolvable:$true] %s402
          %408 = dma.hbm_to_vmem [thread:$0]  %s401, 1024, %s403, [#allocation10], 64, 64, 4
        $region32: #{hierarchical_temporal_net.5} parent=11 // pred_fallthru
          _
        // Predicated region
        $region33: #{hierarchical_temporal_net.5} parent=11 // pred_check
          %p409 = pneg %p178
        $region34: #{hierarchical_temporal_net.5} parent=11 // pred_check_branch
          %411 = sbr.rel (%p409) target = $region36
        $region35: #{hierarchical_temporal_net.5} parent=11 // pred_region
          %413 = vsyncadd [#allocation13], 0
          %s415 = sshll.u32 %s6, 4
          %s416 = int_to_ptr.hbm [resolvable:$true] %s415
          %s417 = sshll.u32 [#allocation12], 4
          %s418 = int_to_ptr.vmem [resolvable:$true] %s417
          %420 = dma.hbm_to_vmem [thread:$0]  %s416, 16, %s418, [#allocation13]
        $region36: #{hierarchical_temporal_net.5} parent=11 // pred_fallthru
          _
        // Predicated region
        $region37: #{hierarchical_temporal_net.5} parent=11 // pred_check
          %p421 = pneg %p199
        $region38: #{hierarchical_temporal_net.5} parent=11 // pred_check_branch
          %423 = sbr.rel (%p421) target = $region40
        $region39: #{hierarchical_temporal_net.5} parent=11 // pred_region
          %425 = vsyncadd [#allocation13], 0
          %s427 = sshll.u32 %s7, 4
          %s428 = int_to_ptr.hbm [resolvable:$true] %s427
          %s429 = sshll.u32 [#allocation14], 4
          %s430 = int_to_ptr.vmem [resolvable:$true] %s429
          %432 = dma.hbm_to_vmem [thread:$0]  %s428, 16, %s430, [#allocation13]
        $region40: #{hierarchical_temporal_net.5} parent=11 // pred_fallthru
          _
        // Predicated region
        $region41: #{hierarchical_temporal_net.5} parent=11 // pred_check
          %p433 = pneg %p220
        $region42: #{hierarchical_temporal_net.5} parent=11 // pred_check_branch
          %435 = sbr.rel (%p433) target = $region44
        $region43: #{hierarchical_temporal_net.5} parent=11 // pred_region
          %437 = vsyncadd [#allocation16], 0
          %s439 = sshll.u32 %s8, 4
          %s440 = int_to_ptr.hbm [resolvable:$true] %s439
          %s441 = sshll.u32 [#allocation15], 4
          %s442 = int_to_ptr.vmem [resolvable:$true] %s441
          %444 = dma.hbm_to_vmem [thread:$0]  %s440, 16, %s442, [#allocation16]
        $region44: #{hierarchical_temporal_net.5} parent=11 // pred_fallthru
          _
        // Predicated region
        $region45: #{hierarchical_temporal_net.5} parent=11 // pred_check
          %p445 = pneg %p241
        $region46: #{hierarchical_temporal_net.5} parent=11 // pred_check_branch
          %447 = sbr.rel (%p445) target = $region48
        $region47: #{hierarchical_temporal_net.5} parent=11 // pred_region
          _
        $region48: #{hierarchical_temporal_net.5} parent=11 // pred_fallthru
          _
        // Predicated region
        $region49: #{hierarchical_temporal_net.5} parent=11 // pred_check
          %p448 = pneg %p262
        $region50: #{hierarchical_temporal_net.5} parent=11 // pred_check_branch
          %450 = sbr.rel (%p448) target = $region52
        $region51: #{hierarchical_temporal_net.5} parent=11 // pred_region
          %452 = vsyncadd [#allocation16], 0
          %s454 = sshll.u32 %s10, 4
          %s455 = int_to_ptr.hbm [resolvable:$true] %s454
          %s456 = sshll.u32 [#allocation17], 4
          %s457 = int_to_ptr.vmem [resolvable:$true] %s456
          %459 = dma.hbm_to_vmem [thread:$0]  %s455, 16, %s457, [#allocation16]
        $region52: #{hierarchical_temporal_net.5} parent=11 // pred_fallthru
          _
        // Predicated region
        $region53: #{hierarchical_temporal_net.5} parent=11 // pred_check
          %p460 = pneg %p283
        $region54: #{hierarchical_temporal_net.5} parent=11 // pred_check_branch
          %462 = sbr.rel (%p460) target = $region56
        $region55: #{hierarchical_temporal_net.5} parent=11 // pred_region
          %464 = vsyncadd [#allocation19], 0
          %s465 = sshll.u32 %s11, 4
          %s466 = int_to_ptr.hbm [resolvable:$true] %s465
          %s467 = sshll.u32 [#allocation18], 4
          %s468 = int_to_ptr.vmem [resolvable:$true] %s467
          %473 = dma.hbm_to_vmem [thread:$0]  %s466, 256, %s468, [#allocation19], 64, 64, 4
        $region56: #{hierarchical_temporal_net.5} parent=11 // pred_fallthru
          _
        // Predicated region
        $region57: #{hierarchical_temporal_net.5} parent=11 // pred_check
          %p474 = pneg %p304
        $region58: #{hierarchical_temporal_net.5} parent=11 // pred_check_branch
          %476 = sbr.rel (%p474) target = $region60
        $region59: #{hierarchical_temporal_net.5} parent=11 // pred_region
          %478 = vsyncadd [#allocation19], 0
          %s480 = sshll.u32 %s12, 4
          %s481 = int_to_ptr.hbm [resolvable:$true] %s480
          %s482 = sshll.u32 [#allocation20], 4
          %s483 = int_to_ptr.vmem [resolvable:$true] %s482
          %485 = dma.hbm_to_vmem [thread:$0]  %s481, 16, %s483, [#allocation19]
        $region60: #{hierarchical_temporal_net.5} parent=11 // pred_fallthru
          _
      $region12: #{hierarchical_temporal_net.5} parent=5 // pred_fallthru
        _
      %p486 = scmp.lt.s32.totalorder %s26, 2
      // Predicated region
      $region61: #{hierarchical_temporal_net.5} parent=5 // pred_check
        %p487 = pneg %p486
      $region62: #{hierarchical_temporal_net.5} parent=5 // pred_check_branch
        %489 = sbr.rel (%p487) target = $region64
      $region63: #{hierarchical_temporal_net.5} parent=5 // pred_region
        // Predicated region
        $region65: #{hierarchical_temporal_net.5} parent=63 // pred_check
          %p490 = pneg %p46
        $region66: #{hierarchical_temporal_net.5} parent=63 // pred_check_branch
          %492 = sbr.rel (%p490) target = $region68
        $region67: #{hierarchical_temporal_net.5} parent=63 // pred_region
          %p493 = scmp.lt.s32.totalorder %s26, 1
          %s494 = scalar_select %p493, %s26, 1
          %s495 = smul.addr %s494, 8
          %s496 = scalar_lea.vmem %s0, %s495
        $region68: #{hierarchical_temporal_net.5} parent=63 // pred_fallthru
          _
      $region64: #{hierarchical_temporal_net.5} parent=5 // pred_fallthru
        _
      %p497 = scmp.le.s32.totalorder 1, %s26
      %p498 = scmp.lt.s32.totalorder %s26, 3
      %p499 = pnand %p497, %p498
      %p500 = pneg %p499
      // Predicated region
      $region69: #{hierarchical_temporal_net.5} parent=5 // pred_check
        _
      $region70: #{hierarchical_temporal_net.5} parent=5 // pred_check_branch
        %502 = sbr.rel (%p499) target = $region72
      $region71: #{hierarchical_temporal_net.5} parent=5 // pred_region
        %s503 = ssub.s32 %s26, 1
        // Predicated region
        $region73: #{hierarchical_temporal_net.5} parent=71 // pred_check
          %p504 = pneg %p73
        $region74: #{hierarchical_temporal_net.5} parent=71 // pred_check_branch
          %506 = sbr.rel (%p504) target = $region76
        $region75: #{hierarchical_temporal_net.5} parent=71 // pred_region
          %508 = dma.done [#allocation5], 192
        $region76: #{hierarchical_temporal_net.5} parent=71 // pred_fallthru
          _
        // Predicated region
        $region77: #{hierarchical_temporal_net.5} parent=71 // pred_check
          %p509 = pneg %p94
        $region78: #{hierarchical_temporal_net.5} parent=71 // pred_check_branch
          %511 = sbr.rel (%p509) target = $region80
        $region79: #{hierarchical_temporal_net.5} parent=71 // pred_region
          %513 = dma.done [#allocation7], 64
        $region80: #{hierarchical_temporal_net.5} parent=71 // pred_fallthru
          _
        // Predicated region
        $region81: #{hierarchical_temporal_net.5} parent=71 // pred_check
          %p514 = pneg %p115
        $region82: #{hierarchical_temporal_net.5} parent=71 // pred_check_branch
          %516 = sbr.rel (%p514) target = $region84
        $region83: #{hierarchical_temporal_net.5} parent=71 // pred_region
          %518 = dma.done [#allocation7], 64
        $region84: #{hierarchical_temporal_net.5} parent=71 // pred_fallthru
          _
        // Predicated region
        $region85: #{hierarchical_temporal_net.5} parent=71 // pred_check
          %p519 = pneg %p136
        $region86: #{hierarchical_temporal_net.5} parent=71 // pred_check_branch
          %521 = sbr.rel (%p519) target = $region88
        $region87: #{hierarchical_temporal_net.5} parent=71 // pred_region
          %523 = dma.done [#allocation10], 64
        $region88: #{hierarchical_temporal_net.5} parent=71 // pred_fallthru
          _
        // Predicated region
        $region89: #{hierarchical_temporal_net.5} parent=71 // pred_check
          %p524 = pneg %p157
        $region90: #{hierarchical_temporal_net.5} parent=71 // pred_check_branch
          %526 = sbr.rel (%p524) target = $region92
        $region91: #{hierarchical_temporal_net.5} parent=71 // pred_region
          %528 = dma.done [#allocation10], 1024
        $region92: #{hierarchical_temporal_net.5} parent=71 // pred_fallthru
          _
        // Predicated region
        $region93: #{hierarchical_temporal_net.5} parent=71 // pred_check
          %p529 = pneg %p178
        $region94: #{hierarchical_temporal_net.5} parent=71 // pred_check_branch
          %531 = sbr.rel (%p529) target = $region96
        $region95: #{hierarchical_temporal_net.5} parent=71 // pred_region
          %533 = dma.done [#allocation13], 16
        $region96: #{hierarchical_temporal_net.5} parent=71 // pred_fallthru
          _
        // Predicated region
        $region97: #{hierarchical_temporal_net.5} parent=71 // pred_check
          %p534 = pneg %p199
        $region98: #{hierarchical_temporal_net.5} parent=71 // pred_check_branch
          %536 = sbr.rel (%p534) target = $region100
        $region99: #{hierarchical_temporal_net.5} parent=71 // pred_region
          %538 = dma.done [#allocation13], 16
        $region100: #{hierarchical_temporal_net.5} parent=71 // pred_fallthru
          _
        // Predicated region
        $region101: #{hierarchical_temporal_net.5} parent=71 // pred_check
          %p539 = pneg %p220
        $region102: #{hierarchical_temporal_net.5} parent=71 // pred_check_branch
          %541 = sbr.rel (%p539) target = $region104
        $region103: #{hierarchical_temporal_net.5} parent=71 // pred_region
          %543 = dma.done [#allocation16], 16
        $region104: #{hierarchical_temporal_net.5} parent=71 // pred_fallthru
          _
        // Predicated region
        $region105: #{hierarchical_temporal_net.5} parent=71 // pred_check
          %p544 = pneg %p262
        $region106: #{hierarchical_temporal_net.5} parent=71 // pred_check_branch
          %546 = sbr.rel (%p544) target = $region108
        $region107: #{hierarchical_temporal_net.5} parent=71 // pred_region
          %548 = dma.done [#allocation16], 16
        $region108: #{hierarchical_temporal_net.5} parent=71 // pred_fallthru
          _
        // Predicated region
        $region109: #{hierarchical_temporal_net.5} parent=71 // pred_check
          %p549 = pneg %p283
        $region110: #{hierarchical_temporal_net.5} parent=71 // pred_check_branch
          %551 = sbr.rel (%p549) target = $region112
        $region111: #{hierarchical_temporal_net.5} parent=71 // pred_region
          %553 = dma.done [#allocation19], 256
        $region112: #{hierarchical_temporal_net.5} parent=71 // pred_fallthru
          _
        // Predicated region
        $region113: #{hierarchical_temporal_net.5} parent=71 // pred_check
          %p554 = pneg %p304
        $region114: #{hierarchical_temporal_net.5} parent=71 // pred_check_branch
          %556 = sbr.rel (%p554) target = $region116
        $region115: #{hierarchical_temporal_net.5} parent=71 // pred_region
          %558 = dma.done [#allocation19], 16
        $region116: #{hierarchical_temporal_net.5} parent=71 // pred_fallthru
          _
        %p559 = scmp.lt.s32.totalorder %s31, 1
        %s560 = scalar_select %p559, %s31, 1
        %s561 = smul.addr %s560, 8
        %s562 = scalar_lea.vmem %s0, %s561
        %p563 = pneg %p52
        %p564 = pneg %p49
        %p565 = pneg %p73
        %p566 = pneg %p70
        %p567 = pneg %p94
        %p568 = pneg %p91
        %p569 = pneg %p115
        %p570 = pneg %p112
        %p571 = pneg %p136
        %p572 = pneg %p133
        %p573 = pneg %p157
        %p574 = pneg %p154
        %p575 = pneg %p178
        %p576 = pneg %p175
        %p577 = pneg %p199
        %p578 = pneg %p196
        %p579 = pneg %p220
        %p580 = pneg %p217
        %p581 = pneg %p241
        %p582 = pneg %p238
        %p583 = pneg %p262
        %p584 = pneg %p259
        %p585 = pneg %p283
        %p586 = pneg %p280
        %p587 = pneg %p304
        %p588 = pneg %p301
        %p589 = pneg %p330
        %p590 = pneg %p327
        %p591 = scmp.lt.s32.totalorder %s31, 1
        %s592 = scalar_select %p591, %s31, 1
        %s593 = smul.addr %s592, 8
        %s594 = scalar_lea.vmem %s14, %s593
        %p595 = scmp.lt.s32.totalorder %s31, 1
        %s596 = scalar_select %p595, %s31, 1
        %s597 = smul.addr %s596, 8
        %s598 = scalar_lea.vmem %s0, %s597
        %p599 = scmp.lt.s32.totalorder %s31, 1
        %s600 = scalar_select %p599, %s31, 1
        %s601 = smul.addr %s600, 8
        %s602 = scalar_lea.vmem %s14, %s601
        %v604 = vld [vmem:[%s598] sm:$0xff]
        // Predicated region
        $region117: #{hierarchical_temporal_net.5} parent=71 // pred_check
          _
        $region118: #{hierarchical_temporal_net.5} parent=71 // pred_check_branch
          %606 = sbr.rel target = $region120
        $region119: #{hierarchical_temporal_net.5} parent=71 // pred_region
          %607 = sst [smem:[#allocation23]] [#allocation22]
          %608 = sst [smem:[#allocation24]] [#allocation21]
        $region120: #{hierarchical_temporal_net.5} parent=71 // pred_fallthru
          _
        %610 = shalt.err (0)
        %s612 = sshll.u32 %s13, 4
        %s613 = int_to_ptr.hbm [resolvable:$true] %s612
        %s614 = sshll.u32 [#allocation2], 4
        %s615 = int_to_ptr.vmem [resolvable:$true] %s614
        %617 = dma.hbm_to_vmem [thread:$0]  %s613, 128, %s615, [#allocation3]
        %v618 = vld [vmem:[#allocation14] sm:$0x1]
        %v619 = vld [vmem:[#allocation15] sm:$0x1]
        %vm620 = vcmask 261120
        %v621 = vsel %vm620, %v604, 0.0
        %622 = vadd.xlane.f32.xlu0 %v621
        %v623 = vpop.xlane.xlu0 %622
        %v624 = vrcp.pop 32.0
        %v625 = vmul.f32 32.0, %v624
        %v626 = vsub.f32 1.0, %v625
        %v627 = vmul.f32 %v624, %v626
        %v628 = vadd.f32 %v624, %v627
        %vm629 = vweird.f32 %v624
        %v630 = vsel %vm629, %v624, %v628
        %v631 = vmul.f32 %v623, %v630
        %v632 = vsub.f32 %v604, %v631
        %v633 = vmul.f32 %v632, %v632
        %v634 = vsel %vm620, %v633, 0.0
        %635 = vadd.xlane.f32.xlu0 %v634
        %v636 = vpop.xlane.xlu0 %635
        %v637 = vmul.f32 %v636, %v630
        %v638 = vadd.f32 %v637, 1e-05
        %v639 = vrsqrt.pop %v638
        %v640 = vmul.f32 %v639, %v638
        %v641 = vmul.f32 %v640, %v639
        %v642 = vmul.f32 0.5, %v641
        %v643 = vsub.f32 1.5, %v642
        %v644 = vmul.f32 %v639, %v643
        %vm645 = vweird.f32 %v638
        %vm646 = vweird.f32 %v639
        %vm647 = vmor %vm645, %vm646
        %v648 = vsel %vm647, %v639, %v644
        %v649 = vmul.f32 %v632, %v648
        %v651 = vperm.slane %v618, 0
        %v653 = vmul.f32 %v649, %v651
        %v655 = vperm.slane %v619, 0
        %v657 = vadd.f32 %v653, %v655
        %v658 = vld [vmem:[%s9] sm:$0xf]
        %v659 = vld [vmem:[%s9 + $0x4] sm:$0xf]
        %v660 = vld [vmem:[%s9 + $0x8] sm:$0xf]
        %v661 = vld [vmem:[%s9 + $0xc] sm:$0xf]
        %v662 = vpack.c.bf16 %v657, %v657
        %v663 = vld [vmem:[#allocation17] sm:$0x1]
        %v665 = vperm.slane %v663, 0
        %v671 = vunpack.c.l.b16 %v658
        %v672 = vunpack.c.l.b16 %v659
        %v673 = vunpack.c.l.b16 %v660
        %v674 = vunpack.c.l.b16 %v661
        %v675 = vpack.c.b16 %v672, %v671
        %v676 = vpack.c.b16 %v674, %v673
        %v680 = vsel %vm620, %v662, 0
        %682 = vmatpush.bf16.msra.mxu0 0
        %683 = vmatpush.bf16.msra.mxu0 0
        %684 = vmatpush.bf16.msra.mxu0 0
        %685 = vmatpush.bf16.msra.mxu0 0
        %686 = vmatpush.bf16.msra.mxu0 0
        %687 = vmatpush.bf16.msra.mxu0 0
        %688 = vmatpush.bf16.msra.mxu0 %v676
        %689 = vmatpush.bf16.msra.mxu0 %v675
        %690 = vmatmul.bf16.gmra.mxu0 %v680
        %v691 = vpop.f32.mrf.mxu0
        %v692 = vadd.f32 %v665, %v691
        %v693 = vpop.f32.mrf.mxu0
        %694 = vdwg.mxu0
        %v695 = vxor.u32 %v692, 2147483648
        %v696 = vmul.f32 %v695, 1.442695
        %v697 = vpow.pop %v696
        %v698 = vadd.f32 %v697, 1.0
        %v699 = vrcp.pop %v698
        %v700 = vmul.f32 %v698, %v699
        %v701 = vsub.f32 1.0, %v700
        %v702 = vmul.f32 %v699, %v701
        %v703 = vadd.f32 %v699, %v702
        %vm704 = vweird.f32 %v698
        %vm705 = vweird.f32 %v699
        %vm706 = vmor %vm704, %vm705
        %v707 = vsel %vm706, %v699, %v703
        %v708 = vand.u32 2147483647, %v698
        %vm709 = vcmp.eq.f32.partialorder %v708, 8.507059e+37
        %v710 = vand.u32 %v698, 2147483648
        %v711 = vor.u32 1.1754944e-38, %v710
        %v712 = vsel %vm709, %v711, %v707
        %v713 = vmul.f32 1.0, %v712
        %v714 = vmul.f32 %v692, 0.5
        %v715 = vpack.c.bf16 %v714, %v714
        %v716 = vpack.c.bf16 %v692, %v692
        %s717 = smul.u32 8, 1
        %s718 = sshll.u32 %s717, 4
        %719 = dma.done [#allocation3], %s718
        %s720 = scalar_lea.hbm %s13, 8
        %s721 = scalar_lea.vmem [#allocation2], 8
        %s722 = scalar_lea.sflag [#allocation3], 1
        // Predicated region
        $region121: #{hierarchical_temporal_net.5} parent=71 // pred_check
          _
        $region122: #{hierarchical_temporal_net.5} parent=71 // pred_check_branch
          %724 = sbr.rel target = $region124
        $region123: #{hierarchical_temporal_net.5} parent=71 // pred_region
          %725 = sst [smem:[#allocation23]] [#allocation26]
          %726 = sst [smem:[#allocation24]] [#allocation25]
        $region124: #{hierarchical_temporal_net.5} parent=71 // pred_fallthru
          _
        %728 = shalt.err (0)
        %s730 = sshll.u32 %s720, 4
        %s731 = int_to_ptr.hbm [resolvable:$true] %s730
        %s732 = sshll.u32 %s721, 4
        %s733 = int_to_ptr.vmem [resolvable:$true] %s732
        %735 = dma.hbm_to_vmem [thread:$0]  %s731, 128, %s733, %s722
        %v736 = vld [vmem:[#allocation2] sm:$0xff]
        %v738 = vunpack.c.l.b16 %v716
        %v739 = vpack.c.b16 %v738, %v738
        %740 = vrot.lane.b32.xlu0 %v739, 96
        %v741 = vpop.permute.xlu0 %740
        %vm742 = vcmask 31744
        %v744 = vsel %vm742, %v715, 0
        %v747 = vsel %vm742, %v741, 0
        %749 = vmatpush.bf16.xpose.msra.mxu0 0
        %750 = vmatpush.bf16.xpose.msra.mxu0 0
        %751 = vmatpush.bf16.xpose.msra.mxu0 0
        %752 = vmatpush.bf16.xpose.msra.mxu0 0
        %753 = vmatpush.bf16.xpose.msra.mxu0 0
        %754 = vmatpush.bf16.xpose.msra.mxu0 0
        %755 = vmatpush.bf16.xpose.msra.mxu0 0
        %756 = vmatpush.bf16.xpose.msra.mxu0 %v747
        %757 = vmatmul.bf16.gmra.mxu0 %v744
        %v758 = vpop.f32.mrf.mxu0
        %v759 = vadd.f32 %v736, %v758
        %v760 = vpop.f32.mrf.mxu0
        %761 = vdwg.mxu0
        %vm762 = vcmask 64512
        %v763 = vsel %vm762, %v759, -inf
        %764 = vmax.xlane.f32.xlu0 %v763
        %v765 = vpop.xlane.xlu0 %764
        %v766 = vsub.f32 %v759, %v765
        %v767 = vmul.f32 %v766, 1.442695
        %v768 = vpow.pop %v767
        %v769 = vsel %vm762, %v768, 0.0
        %770 = vadd.xlane.f32.xlu0 %v769
        %v771 = vpop.xlane.xlu0 %770
        %v772 = vrcp.pop %v771
        %v773 = vmul.f32 %v768, %v772
        %v774 = vpack.c.bf16 %v773, %v773
        %775 = vrot.lane.b32.xlu0 %v739, 64
        %v776 = vpop.permute.xlu0 %775
        %v778 = vsel %vm762, %v774, 0
        %vm780 = vcmask 1043456
        %v782 = vsel %vm780, %v776, 0
        %784 = vmatpush.bf16.msra.mxu0 0
        %785 = vmatpush.bf16.msra.mxu0 0
        %786 = vmatpush.bf16.msra.mxu0 0
        %787 = vmatpush.bf16.msra.mxu0 0
        %788 = vmatpush.bf16.msra.mxu0 0
        %789 = vmatpush.bf16.msra.mxu0 0
        %790 = vmatpush.bf16.msra.mxu0 0
        %791 = vmatpush.bf16.msra.mxu0 %v782
        %792 = vmatmul.bf16.gmra.mxu0 %v778
        %v793 = vpop.f32.mrf.mxu0
        %v794 = vadd.f32 0.0, %v793
        %v795 = vpop.f32.mrf.mxu0
        %796 = vdwg.mxu0
        %798 = vrot.lane.b32.xlu0 %v713, 32
        %v799 = vpop.permute.xlu0 %798
        %v801 = vmul.f32 %v794, %v799
        %s802 = sshll.u32 %s717, 4
        %803 = dma.done %s722, %s802
        %s804 = scalar_lea.hbm %s13, 16
        // Predicated region
        $region125: #{hierarchical_temporal_net.5} parent=71 // pred_check
          _
        $region126: #{hierarchical_temporal_net.5} parent=71 // pred_check_branch
          %806 = sbr.rel target = $region128
        $region127: #{hierarchical_temporal_net.5} parent=71 // pred_region
          %807 = sst [smem:[#allocation23]] [#allocation28]
          %808 = sst [smem:[#allocation24]] [#allocation27]
        $region128: #{hierarchical_temporal_net.5} parent=71 // pred_fallthru
          _
        %810 = shalt.err (0)
        %s812 = sshll.u32 %s804, 4
        %s813 = int_to_ptr.hbm [resolvable:$true] %s812
        %s814 = sshll.u32 [#allocation2], 4
        %s815 = int_to_ptr.vmem [resolvable:$true] %s814
        %817 = dma.hbm_to_vmem [thread:$0]  %s813, 128, %s815, [#allocation3]
        %v818 = vld [vmem:[%s721] sm:$0xff]
        %v820 = vunpack.c.l.b16 %v715
        %v821 = vpack.c.b16 %v820, %v820
        %822 = vrot.lane.b32.xlu0 %v821, 124
        %v823 = vpop.permute.xlu0 %822
        %824 = vrot.lane.b32.xlu0 %v739, 92
        %v825 = vpop.permute.xlu0 %824
        %v827 = vsel %vm742, %v823, 0
        %v830 = vsel %vm742, %v825, 0
        %832 = vmatpush.bf16.xpose.msra.mxu0 0
        %833 = vmatpush.bf16.xpose.msra.mxu0 0
        %834 = vmatpush.bf16.xpose.msra.mxu0 0
        %835 = vmatpush.bf16.xpose.msra.mxu0 0
        %836 = vmatpush.bf16.xpose.msra.mxu0 0
        %837 = vmatpush.bf16.xpose.msra.mxu0 0
        %838 = vmatpush.bf16.xpose.msra.mxu0 0
        %839 = vmatpush.bf16.xpose.msra.mxu0 %v830
        %840 = vmatmul.bf16.gmra.mxu0 %v827
        %v841 = vpop.f32.mrf.mxu0
        %v842 = vadd.f32 %v818, %v841
        %v843 = vpop.f32.mrf.mxu0
        %844 = vdwg.mxu0
        %v845 = vsel %vm762, %v842, -inf
        %846 = vmax.xlane.f32.xlu0 %v845
        %v847 = vpop.xlane.xlu0 %846
        %v848 = vsub.f32 %v842, %v847
        %v849 = vmul.f32 %v848, 1.442695
        %v850 = vpow.pop %v849
        %v851 = vsel %vm762, %v850, 0.0
        %852 = vadd.xlane.f32.xlu0 %v851
        %v853 = vpop.xlane.xlu0 %852
        %v854 = vrcp.pop %v853
        %v855 = vmul.f32 %v850, %v854
        %v856 = vpack.c.bf16 %v855, %v855
        %857 = vrot.lane.b32.xlu0 %v739, 60
        %v858 = vpop.permute.xlu0 %857
        %v860 = vsel %vm762, %v856, 0
        %v863 = vsel %vm780, %v858, 0
        %865 = vmatpush.bf16.msra.mxu0 0
        %866 = vmatpush.bf16.msra.mxu0 0
        %867 = vmatpush.bf16.msra.mxu0 0
        %868 = vmatpush.bf16.msra.mxu0 0
        %869 = vmatpush.bf16.msra.mxu0 0
        %870 = vmatpush.bf16.msra.mxu0 0
        %871 = vmatpush.bf16.msra.mxu0 0
        %872 = vmatpush.bf16.msra.mxu0 %v863
        %873 = vmatmul.bf16.gmra.mxu0 %v860
        %v874 = vpop.f32.mrf.mxu0
        %v875 = vadd.f32 0.0, %v874
        %v876 = vpop.f32.mrf.mxu0
        %877 = vdwg.mxu0
        %878 = vrot.lane.b32.xlu0 %v713, 28
        %v879 = vpop.permute.xlu0 %878
        %v881 = vmul.f32 %v875, %v879
        %s882 = sshll.u32 %s717, 4
        %883 = dma.done [#allocation3], %s882
        %s884 = scalar_lea.hbm %s13, 24
        // Predicated region
        $region129: #{hierarchical_temporal_net.5} parent=71 // pred_check
          _
        $region130: #{hierarchical_temporal_net.5} parent=71 // pred_check_branch
          %886 = sbr.rel target = $region132
        $region131: #{hierarchical_temporal_net.5} parent=71 // pred_region
          %887 = sst [smem:[#allocation23]] [#allocation30]
          %888 = sst [smem:[#allocation24]] [#allocation29]
        $region132: #{hierarchical_temporal_net.5} parent=71 // pred_fallthru
          _
        %890 = shalt.err (0)
        %s892 = sshll.u32 %s884, 4
        %s893 = int_to_ptr.hbm [resolvable:$true] %s892
        %s894 = sshll.u32 %s721, 4
        %s895 = int_to_ptr.vmem [resolvable:$true] %s894
        %897 = dma.hbm_to_vmem [thread:$0]  %s893, 128, %s895, %s722
        %v898 = vld [vmem:[#allocation2] sm:$0xff]
        %899 = vrot.lane.b32.xlu0 %v821, 120
        %v900 = vpop.permute.xlu0 %899
        %901 = vrot.lane.b32.xlu0 %v739, 88
        %v902 = vpop.permute.xlu0 %901
        %v904 = vsel %vm742, %v900, 0
        %v907 = vsel %vm742, %v902, 0
        %909 = vmatpush.bf16.xpose.msra.mxu0 0
        %910 = vmatpush.bf16.xpose.msra.mxu0 0
        %911 = vmatpush.bf16.xpose.msra.mxu0 0
        %912 = vmatpush.bf16.xpose.msra.mxu0 0
        %913 = vmatpush.bf16.xpose.msra.mxu0 0
        %914 = vmatpush.bf16.xpose.msra.mxu0 0
        %915 = vmatpush.bf16.xpose.msra.mxu0 0
        %916 = vmatpush.bf16.xpose.msra.mxu0 %v907
        %917 = vmatmul.bf16.gmra.mxu0 %v904
        %v918 = vpop.f32.mrf.mxu0
        %v919 = vadd.f32 %v898, %v918
        %v920 = vpop.f32.mrf.mxu0
        %921 = vdwg.mxu0
        %v922 = vsel %vm762, %v919, -inf
        %923 = vmax.xlane.f32.xlu0 %v922
        %v924 = vpop.xlane.xlu0 %923
        %v925 = vsub.f32 %v919, %v924
        %v926 = vmul.f32 %v925, 1.442695
        %v927 = vpow.pop %v926
        %v928 = vsel %vm762, %v927, 0.0
        %929 = vadd.xlane.f32.xlu0 %v928
        %v930 = vpop.xlane.xlu0 %929
        %v931 = vrcp.pop %v930
        %v932 = vmul.f32 %v927, %v931
        %v933 = vpack.c.bf16 %v932, %v932
        %934 = vrot.lane.b32.xlu0 %v739, 56
        %v935 = vpop.permute.xlu0 %934
        %v937 = vsel %vm762, %v933, 0
        %v940 = vsel %vm780, %v935, 0
        %942 = vmatpush.bf16.msra.mxu0 0
        %943 = vmatpush.bf16.msra.mxu0 0
        %944 = vmatpush.bf16.msra.mxu0 0
        %945 = vmatpush.bf16.msra.mxu0 0
        %946 = vmatpush.bf16.msra.mxu0 0
        %947 = vmatpush.bf16.msra.mxu0 0
        %948 = vmatpush.bf16.msra.mxu0 0
        %949 = vmatpush.bf16.msra.mxu0 %v940
        %950 = vmatmul.bf16.gmra.mxu0 %v937
        %v951 = vpop.f32.mrf.mxu0
        %v952 = vadd.f32 0.0, %v951
        %v953 = vpop.f32.mrf.mxu0
        %954 = vdwg.mxu0
        %955 = vrot.lane.b32.xlu0 %v713, 24
        %v956 = vpop.permute.xlu0 %955
        %v958 = vmul.f32 %v952, %v956
        %s959 = sshll.u32 %s717, 4
        %960 = dma.done %s722, %s959
        %s961 = scalar_lea.hbm %s13, 32
        // Predicated region
        $region133: #{hierarchical_temporal_net.5} parent=71 // pred_check
          _
        $region134: #{hierarchical_temporal_net.5} parent=71 // pred_check_branch
          %963 = sbr.rel target = $region136
        $region135: #{hierarchical_temporal_net.5} parent=71 // pred_region
          %964 = sst [smem:[#allocation23]] [#allocation32]
          %965 = sst [smem:[#allocation24]] [#allocation31]
        $region136: #{hierarchical_temporal_net.5} parent=71 // pred_fallthru
          _
        %967 = shalt.err (0)
        %s969 = sshll.u32 %s961, 4
        %s970 = int_to_ptr.hbm [resolvable:$true] %s969
        %s971 = sshll.u32 [#allocation2], 4
        %s972 = int_to_ptr.vmem [resolvable:$true] %s971
        %974 = dma.hbm_to_vmem [thread:$0]  %s970, 128, %s972, [#allocation3]
        %v975 = vld [vmem:[%s721] sm:$0xff]
        %976 = vrot.lane.b32.xlu0 %v821, 116
        %v977 = vpop.permute.xlu0 %976
        %978 = vrot.lane.b32.xlu0 %v739, 84
        %v979 = vpop.permute.xlu0 %978
        %v981 = vsel %vm742, %v977, 0
        %v984 = vsel %vm742, %v979, 0
        %986 = vmatpush.bf16.xpose.msra.mxu0 0
        %987 = vmatpush.bf16.xpose.msra.mxu0 0
        %988 = vmatpush.bf16.xpose.msra.mxu0 0
        %989 = vmatpush.bf16.xpose.msra.mxu0 0
        %990 = vmatpush.bf16.xpose.msra.mxu0 0
        %991 = vmatpush.bf16.xpose.msra.mxu0 0
        %992 = vmatpush.bf16.xpose.msra.mxu0 0
        %993 = vmatpush.bf16.xpose.msra.mxu0 %v984
        %994 = vmatmul.bf16.gmra.mxu0 %v981
        %v995 = vpop.f32.mrf.mxu0
        %v996 = vadd.f32 %v975, %v995
        %v997 = vpop.f32.mrf.mxu0
        %998 = vdwg.mxu0
        %v999 = vsel %vm762, %v996, -inf
        %1000 = vmax.xlane.f32.xlu0 %v999
        %v1001 = vpop.xlane.xlu0 %1000
        %v1002 = vsub.f32 %v996, %v1001
        %v1003 = vmul.f32 %v1002, 1.442695
        %v1004 = vpow.pop %v1003
        %v1005 = vsel %vm762, %v1004, 0.0
        %1006 = vadd.xlane.f32.xlu0 %v1005
        %v1007 = vpop.xlane.xlu0 %1006
        %v1008 = vrcp.pop %v1007
        %v1009 = vmul.f32 %v1004, %v1008
        %v1010 = vpack.c.bf16 %v1009, %v1009
        %1011 = vrot.lane.b32.xlu0 %v739, 52
        %v1012 = vpop.permute.xlu0 %1011
        %v1014 = vsel %vm762, %v1010, 0
        %v1017 = vsel %vm780, %v1012, 0
        %1019 = vmatpush.bf16.msra.mxu0 0
        %1020 = vmatpush.bf16.msra.mxu0 0
        %1021 = vmatpush.bf16.msra.mxu0 0
        %1022 = vmatpush.bf16.msra.mxu0 0
        %1023 = vmatpush.bf16.msra.mxu0 0
        %1024 = vmatpush.bf16.msra.mxu0 0
        %1025 = vmatpush.bf16.msra.mxu0 0
        %1026 = vmatpush.bf16.msra.mxu0 %v1017
        %1027 = vmatmul.bf16.gmra.mxu0 %v1014
        %v1028 = vpop.f32.mrf.mxu0
        %v1029 = vadd.f32 0.0, %v1028
        %v1030 = vpop.f32.mrf.mxu0
        %1031 = vdwg.mxu0
        %1032 = vrot.lane.b32.xlu0 %v713, 20
        %v1033 = vpop.permute.xlu0 %1032
        %v1035 = vmul.f32 %v1029, %v1033
        %s1036 = sshll.u32 %s717, 4
        %1037 = dma.done [#allocation3], %s1036
        %s1038 = scalar_lea.hbm %s13, 40
        // Predicated region
        $region137: #{hierarchical_temporal_net.5} parent=71 // pred_check
          _
        $region138: #{hierarchical_temporal_net.5} parent=71 // pred_check_branch
          %1040 = sbr.rel target = $region140
        $region139: #{hierarchical_temporal_net.5} parent=71 // pred_region
          %1041 = sst [smem:[#allocation23]] [#allocation34]
          %1042 = sst [smem:[#allocation24]] [#allocation33]
        $region140: #{hierarchical_temporal_net.5} parent=71 // pred_fallthru
          _
        %1044 = shalt.err (0)
        %s1046 = sshll.u32 %s1038, 4
        %s1047 = int_to_ptr.hbm [resolvable:$true] %s1046
        %s1048 = sshll.u32 %s721, 4
        %s1049 = int_to_ptr.vmem [resolvable:$true] %s1048
        %1051 = dma.hbm_to_vmem [thread:$0]  %s1047, 128, %s1049, %s722
        %v1052 = vld [vmem:[#allocation2] sm:$0xff]
        %1053 = vrot.lane.b32.xlu0 %v821, 112
        %v1054 = vpop.permute.xlu0 %1053
        %1055 = vrot.lane.b32.xlu0 %v739, 80
        %v1056 = vpop.permute.xlu0 %1055
        %v1058 = vsel %vm742, %v1054, 0
        %v1061 = vsel %vm742, %v1056, 0
        %1063 = vmatpush.bf16.xpose.msra.mxu0 0
        %1064 = vmatpush.bf16.xpose.msra.mxu0 0
        %1065 = vmatpush.bf16.xpose.msra.mxu0 0
        %1066 = vmatpush.bf16.xpose.msra.mxu0 0
        %1067 = vmatpush.bf16.xpose.msra.mxu0 0
        %1068 = vmatpush.bf16.xpose.msra.mxu0 0
        %1069 = vmatpush.bf16.xpose.msra.mxu0 0
        %1070 = vmatpush.bf16.xpose.msra.mxu0 %v1061
        %1071 = vmatmul.bf16.gmra.mxu0 %v1058
        %v1072 = vpop.f32.mrf.mxu0
        %v1073 = vadd.f32 %v1052, %v1072
        %v1074 = vpop.f32.mrf.mxu0
        %1075 = vdwg.mxu0
        %v1076 = vsel %vm762, %v1073, -inf
        %1077 = vmax.xlane.f32.xlu0 %v1076
        %v1078 = vpop.xlane.xlu0 %1077
        %v1079 = vsub.f32 %v1073, %v1078
        %v1080 = vmul.f32 %v1079, 1.442695
        %v1081 = vpow.pop %v1080
        %v1082 = vsel %vm762, %v1081, 0.0
        %1083 = vadd.xlane.f32.xlu0 %v1082
        %v1084 = vpop.xlane.xlu0 %1083
        %v1085 = vrcp.pop %v1084
        %v1086 = vmul.f32 %v1081, %v1085
        %v1087 = vpack.c.bf16 %v1086, %v1086
        %1088 = vrot.lane.b32.xlu0 %v739, 48
        %v1089 = vpop.permute.xlu0 %1088
        %v1091 = vsel %vm762, %v1087, 0
        %v1094 = vsel %vm780, %v1089, 0
        %1096 = vmatpush.bf16.msra.mxu0 0
        %1097 = vmatpush.bf16.msra.mxu0 0
        %1098 = vmatpush.bf16.msra.mxu0 0
        %1099 = vmatpush.bf16.msra.mxu0 0
        %1100 = vmatpush.bf16.msra.mxu0 0
        %1101 = vmatpush.bf16.msra.mxu0 0
        %1102 = vmatpush.bf16.msra.mxu0 0
        %1103 = vmatpush.bf16.msra.mxu0 %v1094
        %1104 = vmatmul.bf16.gmra.mxu0 %v1091
        %v1105 = vpop.f32.mrf.mxu0
        %v1106 = vadd.f32 0.0, %v1105
        %v1107 = vpop.f32.mrf.mxu0
        %1108 = vdwg.mxu0
        %1109 = vrot.lane.b32.xlu0 %v713, 16
        %v1110 = vpop.permute.xlu0 %1109
        %v1112 = vmul.f32 %v1106, %v1110
        %s1113 = sshll.u32 %s717, 4
        %1114 = dma.done %s722, %s1113
        %s1115 = scalar_lea.hbm %s13, 48
        // Predicated region
        $region141: #{hierarchical_temporal_net.5} parent=71 // pred_check
          _
        $region142: #{hierarchical_temporal_net.5} parent=71 // pred_check_branch
          %1117 = sbr.rel target = $region144
        $region143: #{hierarchical_temporal_net.5} parent=71 // pred_region
          %1118 = sst [smem:[#allocation23]] [#allocation36]
          %1119 = sst [smem:[#allocation24]] [#allocation35]
        $region144: #{hierarchical_temporal_net.5} parent=71 // pred_fallthru
          _
        %1121 = shalt.err (0)
        %s1123 = sshll.u32 %s1115, 4
        %s1124 = int_to_ptr.hbm [resolvable:$true] %s1123
        %s1125 = sshll.u32 [#allocation2], 4
        %s1126 = int_to_ptr.vmem [resolvable:$true] %s1125
        %1128 = dma.hbm_to_vmem [thread:$0]  %s1124, 128, %s1126, [#allocation3]
        %v1129 = vld [vmem:[%s721] sm:$0xff]
        %1130 = vrot.lane.b32.xlu0 %v821, 108
        %v1131 = vpop.permute.xlu0 %1130
        %1132 = vrot.lane.b32.xlu0 %v739, 76
        %v1133 = vpop.permute.xlu0 %1132
        %v1135 = vsel %vm742, %v1131, 0
        %v1138 = vsel %vm742, %v1133, 0
        %1140 = vmatpush.bf16.xpose.msra.mxu0 0
        %1141 = vmatpush.bf16.xpose.msra.mxu0 0
        %1142 = vmatpush.bf16.xpose.msra.mxu0 0
        %1143 = vmatpush.bf16.xpose.msra.mxu0 0
        %1144 = vmatpush.bf16.xpose.msra.mxu0 0
        %1145 = vmatpush.bf16.xpose.msra.mxu0 0
        %1146 = vmatpush.bf16.xpose.msra.mxu0 0
        %1147 = vmatpush.bf16.xpose.msra.mxu0 %v1138
        %1148 = vmatmul.bf16.gmra.mxu0 %v1135
        %v1149 = vpop.f32.mrf.mxu0
        %v1150 = vadd.f32 %v1129, %v1149
        %v1151 = vpop.f32.mrf.mxu0
        %1152 = vdwg.mxu0
        %v1153 = vsel %vm762, %v1150, -inf
        %1154 = vmax.xlane.f32.xlu0 %v1153
        %v1155 = vpop.xlane.xlu0 %1154
        %v1156 = vsub.f32 %v1150, %v1155
        %v1157 = vmul.f32 %v1156, 1.442695
        %v1158 = vpow.pop %v1157
        %v1159 = vsel %vm762, %v1158, 0.0
        %1160 = vadd.xlane.f32.xlu0 %v1159
        %v1161 = vpop.xlane.xlu0 %1160
        %v1162 = vrcp.pop %v1161
        %v1163 = vmul.f32 %v1158, %v1162
        %v1164 = vpack.c.bf16 %v1163, %v1163
        %1165 = vrot.lane.b32.xlu0 %v739, 44
        %v1166 = vpop.permute.xlu0 %1165
        %v1168 = vsel %vm762, %v1164, 0
        %v1171 = vsel %vm780, %v1166, 0
        %1173 = vmatpush.bf16.msra.mxu0 0
        %1174 = vmatpush.bf16.msra.mxu0 0
        %1175 = vmatpush.bf16.msra.mxu0 0
        %1176 = vmatpush.bf16.msra.mxu0 0
        %1177 = vmatpush.bf16.msra.mxu0 0
        %1178 = vmatpush.bf16.msra.mxu0 0
        %1179 = vmatpush.bf16.msra.mxu0 0
        %1180 = vmatpush.bf16.msra.mxu0 %v1171
        %1181 = vmatmul.bf16.gmra.mxu0 %v1168
        %v1182 = vpop.f32.mrf.mxu0
        %v1183 = vadd.f32 0.0, %v1182
        %v1184 = vpop.f32.mrf.mxu0
        %1185 = vdwg.mxu0
        %1186 = vrot.lane.b32.xlu0 %v713, 12
        %v1187 = vpop.permute.xlu0 %1186
        %v1189 = vmul.f32 %v1183, %v1187
        %s1190 = sshll.u32 %s717, 4
        %1191 = dma.done [#allocation3], %s1190
        %s1192 = scalar_lea.hbm %s13, 56
        // Predicated region
        $region145: #{hierarchical_temporal_net.5} parent=71 // pred_check
          _
        $region146: #{hierarchical_temporal_net.5} parent=71 // pred_check_branch
          %1194 = sbr.rel target = $region148
        $region147: #{hierarchical_temporal_net.5} parent=71 // pred_region
          %1195 = sst [smem:[#allocation23]] [#allocation38]
          %1196 = sst [smem:[#allocation24]] [#allocation37]
        $region148: #{hierarchical_temporal_net.5} parent=71 // pred_fallthru
          _
        %1198 = shalt.err (0)
        %s1200 = sshll.u32 %s1192, 4
        %s1201 = int_to_ptr.hbm [resolvable:$true] %s1200
        %s1202 = sshll.u32 %s721, 4
        %s1203 = int_to_ptr.vmem [resolvable:$true] %s1202
        %1205 = dma.hbm_to_vmem [thread:$0]  %s1201, 128, %s1203, %s722
        %v1206 = vld [vmem:[#allocation2] sm:$0xff]
        %1207 = vrot.lane.b32.xlu0 %v821, 104
        %v1208 = vpop.permute.xlu0 %1207
        %1209 = vrot.lane.b32.xlu0 %v739, 72
        %v1210 = vpop.permute.xlu0 %1209
        %v1212 = vsel %vm742, %v1208, 0
        %v1215 = vsel %vm742, %v1210, 0
        %1217 = vmatpush.bf16.xpose.msra.mxu0 0
        %1218 = vmatpush.bf16.xpose.msra.mxu0 0
        %1219 = vmatpush.bf16.xpose.msra.mxu0 0
        %1220 = vmatpush.bf16.xpose.msra.mxu0 0
        %1221 = vmatpush.bf16.xpose.msra.mxu0 0
        %1222 = vmatpush.bf16.xpose.msra.mxu0 0
        %1223 = vmatpush.bf16.xpose.msra.mxu0 0
        %1224 = vmatpush.bf16.xpose.msra.mxu0 %v1215
        %1225 = vmatmul.bf16.gmra.mxu0 %v1212
        %v1226 = vpop.f32.mrf.mxu0
        %v1227 = vadd.f32 %v1206, %v1226
        %v1228 = vpop.f32.mrf.mxu0
        %1229 = vdwg.mxu0
        %v1230 = vsel %vm762, %v1227, -inf
        %1231 = vmax.xlane.f32.xlu0 %v1230
        %v1232 = vpop.xlane.xlu0 %1231
        %v1233 = vsub.f32 %v1227, %v1232
        %v1234 = vmul.f32 %v1233, 1.442695
        %v1235 = vpow.pop %v1234
        %v1236 = vsel %vm762, %v1235, 0.0
        %1237 = vadd.xlane.f32.xlu0 %v1236
        %v1238 = vpop.xlane.xlu0 %1237
        %v1239 = vrcp.pop %v1238
        %v1240 = vmul.f32 %v1235, %v1239
        %v1241 = vpack.c.bf16 %v1240, %v1240
        %1242 = vrot.lane.b32.xlu0 %v739, 40
        %v1243 = vpop.permute.xlu0 %1242
        %v1245 = vsel %vm762, %v1241, 0
        %v1248 = vsel %vm780, %v1243, 0
        %1250 = vmatpush.bf16.msra.mxu0 0
        %1251 = vmatpush.bf16.msra.mxu0 0
        %1252 = vmatpush.bf16.msra.mxu0 0
        %1253 = vmatpush.bf16.msra.mxu0 0
        %1254 = vmatpush.bf16.msra.mxu0 0
        %1255 = vmatpush.bf16.msra.mxu0 0
        %1256 = vmatpush.bf16.msra.mxu0 0
        %1257 = vmatpush.bf16.msra.mxu0 %v1248
        %1258 = vmatmul.bf16.gmra.mxu0 %v1245
        %v1259 = vpop.f32.mrf.mxu0
        %v1260 = vadd.f32 0.0, %v1259
        %v1261 = vpop.f32.mrf.mxu0
        %1262 = vdwg.mxu0
        %1263 = vrot.lane.b32.xlu0 %v713, 8
        %v1264 = vpop.permute.xlu0 %1263
        %v1266 = vmul.f32 %v1260, %v1264
        %s1267 = sshll.u32 %s717, 4
        %1268 = dma.done %s722, %s1267
        %v1269 = vld [vmem:[%s721] sm:$0xff]
        %1270 = vrot.lane.b32.xlu0 %v821, 100
        %v1271 = vpop.permute.xlu0 %1270
        %1272 = vrot.lane.b32.xlu0 %v739, 68
        %v1273 = vpop.permute.xlu0 %1272
        %v1275 = vsel %vm742, %v1271, 0
        %v1278 = vsel %vm742, %v1273, 0
        %1280 = vmatpush.bf16.xpose.msra.mxu0 0
        %1281 = vmatpush.bf16.xpose.msra.mxu0 0
        %1282 = vmatpush.bf16.xpose.msra.mxu0 0
        %1283 = vmatpush.bf16.xpose.msra.mxu0 0
        %1284 = vmatpush.bf16.xpose.msra.mxu0 0
        %1285 = vmatpush.bf16.xpose.msra.mxu0 0
        %1286 = vmatpush.bf16.xpose.msra.mxu0 0
        %1287 = vmatpush.bf16.xpose.msra.mxu0 %v1278
        %1288 = vmatmul.bf16.gmra.mxu0 %v1275
        %v1289 = vpop.f32.mrf.mxu0
        %v1290 = vadd.f32 %v1269, %v1289
        %v1291 = vpop.f32.mrf.mxu0
        %1292 = vdwg.mxu0
        %v1293 = vsel %vm762, %v1290, -inf
        %1294 = vmax.xlane.f32.xlu0 %v1293
        %v1295 = vpop.xlane.xlu0 %1294
        %v1296 = vsub.f32 %v1290, %v1295
        %v1297 = vmul.f32 %v1296, 1.442695
        %v1298 = vpow.pop %v1297
        %v1299 = vsel %vm762, %v1298, 0.0
        %1300 = vadd.xlane.f32.xlu0 %v1299
        %v1301 = vpop.xlane.xlu0 %1300
        %v1302 = vrcp.pop %v1301
        %v1303 = vmul.f32 %v1298, %v1302
        %v1304 = vpack.c.bf16 %v1303, %v1303
        %1305 = vrot.lane.b32.xlu0 %v739, 36
        %v1306 = vpop.permute.xlu0 %1305
        %v1308 = vsel %vm762, %v1304, 0
        %v1311 = vsel %vm780, %v1306, 0
        %1313 = vmatpush.bf16.msra.mxu0 0
        %1314 = vmatpush.bf16.msra.mxu0 0
        %1315 = vmatpush.bf16.msra.mxu0 0
        %1316 = vmatpush.bf16.msra.mxu0 0
        %1317 = vmatpush.bf16.msra.mxu0 0
        %1318 = vmatpush.bf16.msra.mxu0 0
        %1319 = vmatpush.bf16.msra.mxu0 0
        %1320 = vmatpush.bf16.msra.mxu0 %v1311
        %1321 = vmatmul.bf16.gmra.mxu0 %v1308
        %v1322 = vpop.f32.mrf.mxu0
        %v1323 = vadd.f32 0.0, %v1322
        %v1324 = vpop.f32.mrf.mxu0
        %1325 = vdwg.mxu0
        %1326 = vrot.lane.b32.xlu0 %v713, 4
        %v1327 = vpop.permute.xlu0 %1326
        %v1329 = vmul.f32 %v1323, %v1327
        %1331 = vrot.lane.b32.xlu0 %v881, 4
        %v1332 = vpop.permute.xlu0 %1331
        %1335 = vrot.lane.b32.xlu0 %v958, 8
        %v1336 = vpop.permute.xlu0 %1335
        %1339 = vrot.lane.b32.xlu0 %v1035, 12
        %v1340 = vpop.permute.xlu0 %1339
        %1343 = vrot.lane.b32.xlu0 %v1112, 16
        %v1344 = vpop.permute.xlu0 %1343
        %1347 = vrot.lane.b32.xlu0 %v1189, 20
        %v1348 = vpop.permute.xlu0 %1347
        %1351 = vrot.lane.b32.xlu0 %v1266, 24
        %v1352 = vpop.permute.xlu0 %1351
        %1355 = vrot.lane.b32.xlu0 %v1329, 28
        %v1356 = vpop.permute.xlu0 %1355
        %v1358 = vsel %vm742, %v801, %v1332
        %v1359 = vsel %vm762, %v1358, %v1336
        %vm1360 = vcmask 97280
        %v1361 = vsel %vm1360, %v1359, %v1340
        %vm1362 = vcmask 130048
        %v1363 = vsel %vm1362, %v1361, %v1344
        %vm1364 = vcmask 162816
        %v1365 = vsel %vm1364, %v1363, %v1348
        %vm1366 = vcmask 195584
        %v1367 = vsel %vm1366, %v1365, %v1352
        %vm1368 = vcmask 228352
        %v1369 = vsel %vm1368, %v1367, %v1356
        %v1370 = vld [vmem:[#allocation18] sm:$0xf]
        %v1371 = vld [vmem:[#allocation18 + $0x4] sm:$0xf]
        %v1372 = vld [vmem:[#allocation18 + $0x8] sm:$0xf]
        %v1373 = vld [vmem:[#allocation18 + $0xc] sm:$0xf]
        %v1374 = vpack.c.bf16 %v1369, %v1369
        %v1375 = vld [vmem:[#allocation20] sm:$0x1]
        %v1377 = vperm.slane %v1375, 0
        %v1383 = vunpack.c.l.b16 %v1370
        %v1384 = vunpack.c.l.b16 %v1371
        %v1385 = vunpack.c.l.b16 %v1372
        %v1386 = vunpack.c.l.b16 %v1373
        %v1387 = vpack.c.b16 %v1384, %v1383
        %v1388 = vpack.c.b16 %v1386, %v1385
        %v1392 = vsel %vm620, %v1374, 0
        %1394 = vmatpush.bf16.msra.mxu0 0
        %1395 = vmatpush.bf16.msra.mxu0 0
        %1396 = vmatpush.bf16.msra.mxu0 0
        %1397 = vmatpush.bf16.msra.mxu0 0
        %1398 = vmatpush.bf16.msra.mxu0 0
        %1399 = vmatpush.bf16.msra.mxu0 0
        %1400 = vmatpush.bf16.msra.mxu0 %v1388
        %1401 = vmatpush.bf16.msra.mxu0 %v1387
        %1402 = vmatmul.bf16.gmra.mxu0 %v1392
        %v1403 = vpop.f32.mrf.mxu0
        %v1404 = vadd.f32 %v1377, %v1403
        %v1405 = vpop.f32.mrf.mxu0
        %1406 = vdwg.mxu0
        %v1407 = vlaneseq
        %v1408 = vshrl.u32 %v1407, 7
        %vm1409 = vcmp.ge.s32.totalorder %v1408, 1
        %v1410 = vrot.slane %v604, 7
        %v1411 = vsel %vm1409, %v1410, 0.0
        %vm1412 = vcmp.lt.s32.totalorder %v1408, 7
        %v1413 = vrot.slane %v604, 1
        %v1414 = vsel %vm1412, %v1413, 0.0
        %v1415 = vld [vmem:[#allocation4] sm:$0xf]
        %v1416 = vld [vmem:[#allocation4 + $0x4] sm:$0xf]
        %v1417 = vld [vmem:[#allocation4 + $0x8] sm:$0xf]
        %v1418 = vld [vmem:[#allocation6] sm:$0xf]
        %v1419 = vld [vmem:[#allocation8] sm:$0xf]
        %v1420 = vld [vmem:[#allocation9] sm:$0xf]
        %v1421 = vperm.slane %v1415, 0
        %v1422 = vmul.f32 %v1411, %v1421
        %v1423 = vperm.slane %v1418, 0
        %v1424 = vadd.f32 %v1423, %v1422
        %v1425 = vperm.slane %v1416, 0
        %v1426 = vmul.f32 %v604, %v1425
        %v1427 = vadd.f32 %v1424, %v1426
        %v1428 = vperm.slane %v1417, 0
        %v1429 = vmul.f32 %v1414, %v1428
        %v1430 = vadd.f32 %v1427, %v1429
        %v1431 = vsel %vm620, %v1430, 0.0
        %1432 = vadd.xlane.f32.xlu0 %v1431
        %v1433 = vpop.xlane.xlu0 %1432
        %v1434 = vadd.f32 %v1433, 0.0
        %v1435 = vmul.f32 %v1430, %v1430
        %v1436 = vsel %vm620, %v1435, 0.0
        %1437 = vadd.xlane.f32.xlu0 %v1436
        %v1438 = vpop.xlane.xlu0 %1437
        %v1439 = vadd.f32 %v1438, 0.0
        %v1440 = vperm.slane %v1415, 1
        %v1441 = vmul.f32 %v1411, %v1440
        %v1442 = vperm.slane %v1418, 1
        %v1443 = vadd.f32 %v1442, %v1441
        %v1444 = vperm.slane %v1416, 1
        %v1445 = vmul.f32 %v604, %v1444
        %v1446 = vadd.f32 %v1443, %v1445
        %v1447 = vperm.slane %v1417, 1
        %v1448 = vmul.f32 %v1414, %v1447
        %v1449 = vadd.f32 %v1446, %v1448
        %v1450 = vsel %vm620, %v1449, 0.0
        %1451 = vadd.xlane.f32.xlu0 %v1450
        %v1452 = vpop.xlane.xlu0 %1451
        %v1453 = vadd.f32 %v1434, %v1452
        %v1454 = vmul.f32 %v1449, %v1449
        %v1455 = vsel %vm620, %v1454, 0.0
        %1456 = vadd.xlane.f32.xlu0 %v1455
        %v1457 = vpop.xlane.xlu0 %1456
        %v1458 = vadd.f32 %v1439, %v1457
        %v1459 = vperm.slane %v1415, 2
        %v1460 = vmul.f32 %v1411, %v1459
        %v1461 = vperm.slane %v1418, 2
        %v1462 = vadd.f32 %v1461, %v1460
        %v1463 = vperm.slane %v1416, 2
        %v1464 = vmul.f32 %v604, %v1463
        %v1465 = vadd.f32 %v1462, %v1464
        %v1466 = vperm.slane %v1417, 2
        %v1467 = vmul.f32 %v1414, %v1466
        %v1468 = vadd.f32 %v1465, %v1467
        %v1469 = vsel %vm620, %v1468, 0.0
        %1470 = vadd.xlane.f32.xlu0 %v1469
        %v1471 = vpop.xlane.xlu0 %1470
        %v1472 = vadd.f32 %v1453, %v1471
        %v1473 = vmul.f32 %v1468, %v1468
        %v1474 = vsel %vm620, %v1473, 0.0
        %1475 = vadd.xlane.f32.xlu0 %v1474
        %v1476 = vpop.xlane.xlu0 %1475
        %v1477 = vadd.f32 %v1458, %v1476
        %v1478 = vperm.slane %v1415, 3
        %v1479 = vmul.f32 %v1411, %v1478
        %v1480 = vperm.slane %v1418, 3
        %v1481 = vadd.f32 %v1480, %v1479
        %v1482 = vperm.slane %v1416, 3
        %v1483 = vmul.f32 %v604, %v1482
        %v1484 = vadd.f32 %v1481, %v1483
        %v1485 = vperm.slane %v1417, 3
        %v1486 = vmul.f32 %v1414, %v1485
        %v1487 = vadd.f32 %v1484, %v1486
        %v1488 = vsel %vm620, %v1487, 0.0
        %1489 = vadd.xlane.f32.xlu0 %v1488
        %v1490 = vpop.xlane.xlu0 %1489
        %v1491 = vadd.f32 %v1472, %v1490
        %v1492 = vmul.f32 %v1487, %v1487
        %v1493 = vsel %vm620, %v1492, 0.0
        %1494 = vadd.xlane.f32.xlu0 %v1493
        %v1495 = vpop.xlane.xlu0 %1494
        %v1496 = vadd.f32 %v1477, %v1495
        %v1497 = vrcp.pop 128.0
        %v1498 = vmul.f32 128.0, %v1497
        %v1499 = vsub.f32 1.0, %v1498
        %v1500 = vmul.f32 %v1497, %v1499
        %v1501 = vadd.f32 %v1497, %v1500
        %vm1502 = vweird.f32 %v1497
        %v1503 = vsel %vm1502, %v1497, %v1501
        %v1504 = vmul.f32 %v1491, %v1503
        %v1505 = vmul.f32 %v1496, %v1503
        %v1506 = vmul.f32 %v1504, %v1504
        %v1507 = vsub.f32 %v1505, %v1506
        %v1508 = vmax.f32 %v1507, 0.0
        %v1509 = vadd.f32 %v1508, 1e-05
        %v1510 = vrsqrt.pop %v1509
        %v1511 = vmul.f32 %v1510, %v1509
        %v1512 = vmul.f32 %v1511, %v1510
        %v1513 = vmul.f32 0.5, %v1512
        %v1514 = vsub.f32 1.5, %v1513
        %v1515 = vmul.f32 %v1510, %v1514
        %vm1516 = vweird.f32 %v1509
        %vm1517 = vweird.f32 %v1510
        %vm1518 = vmor %vm1516, %vm1517
        %v1519 = vsel %vm1518, %v1510, %v1515
        %v1520 = vsub.f32 %v1430, %v1504
        %v1521 = vmul.f32 %v1520, %v1519
        %v1522 = vperm.slane %v1419, 0
        %v1523 = vmul.f32 %v1521, %v1522
        %v1524 = vperm.slane %v1420, 0
        %v1525 = vadd.f32 %v1523, %v1524
        %v1526 = vmul.f32 %v1525, 0.5
        %v1527 = vmul.f32 %v1525, 0.70710677
        %vm1528 = vcmp.ge.f32.partialorder %v1527, 0.0
        %v1529 = vsel %vm1528, 1.0, -1.0
        %v1530 = vand.u32 2147483647, %v1527
        %v1531 = vmul.f32 %v1530, 0.3275911
        %v1532 = vadd.f32 %v1531, 1.0
        %v1533 = vrcp.pop %v1532
        %v1534 = vmul.f32 %v1532, %v1533
        %v1535 = vsub.f32 1.0, %v1534
        %v1536 = vmul.f32 %v1533, %v1535
        %v1537 = vadd.f32 %v1533, %v1536
        %vm1538 = vweird.f32 %v1532
        %vm1539 = vweird.f32 %v1533
        %vm1540 = vmor %vm1538, %vm1539
        %v1541 = vsel %vm1540, %v1533, %v1537
        %v1542 = vand.u32 2147483647, %v1532
        %vm1543 = vcmp.eq.f32.partialorder %v1542, 8.507059e+37
        %v1544 = vand.u32 %v1532, 2147483648
        %v1545 = vor.u32 1.1754944e-38, %v1544
        %v1546 = vsel %vm1543, %v1545, %v1541
        %v1547 = vmul.f32 1.0, %v1546
        %v1548 = vmul.f32 %v1547, 1.0614054
        %v1549 = vadd.f32 %v1548, -1.4531521
        %v1550 = vmul.f32 %v1549, %v1547
        %v1551 = vadd.f32 %v1550, 1.4214138
        %v1552 = vmul.f32 %v1551, %v1547
        %v1553 = vadd.f32 %v1552, -0.28449672
        %v1554 = vmul.f32 %v1553, %v1547
        %v1555 = vadd.f32 %v1554, 0.2548296
        %v1556 = vmul.f32 %v1555, %v1547
        %v1557 = vsub.f32 0.0, %v1530
        %v1558 = vmul.f32 %v1557, %v1530
        %v1559 = vmul.f32 %v1558, 1.442695
        %v1560 = vpow.pop %v1559
        %v1561 = vmul.f32 %v1556, %v1560
        %v1562 = vsub.f32 1.0, %v1561
        %v1563 = vmul.f32 %v1529, %v1562
        %v1564 = vadd.f32 %v1563, 1.0
        %v1565 = vmul.f32 %v1526, %v1564
        %v1566 = vld [vmem:[#allocation11] sm:$0xf]
        %v1567 = vld [vmem:[#allocation11 + $0x4] sm:$0xf]
        %v1568 = vld [vmem:[#allocation11 + $0x8] sm:$0xf]
        %v1569 = vld [vmem:[#allocation11 + $0xc] sm:$0xf]
        %v1570 = vpack.c.bf16 %v1565, %v1565
        %v1571 = vsub.f32 %v1449, %v1504
        %v1572 = vmul.f32 %v1571, %v1519
        %v1573 = vperm.slane %v1419, 1
        %v1574 = vmul.f32 %v1572, %v1573
        %v1575 = vperm.slane %v1420, 1
        %v1576 = vadd.f32 %v1574, %v1575
        %v1577 = vmul.f32 %v1576, 0.5
        %v1578 = vmul.f32 %v1576, 0.70710677
        %vm1579 = vcmp.ge.f32.partialorder %v1578, 0.0
        %v1580 = vsel %vm1579, 1.0, -1.0
        %v1581 = vand.u32 2147483647, %v1578
        %v1582 = vmul.f32 %v1581, 0.3275911
        %v1583 = vadd.f32 %v1582, 1.0
        %v1584 = vrcp.pop %v1583
        %v1585 = vmul.f32 %v1583, %v1584
        %v1586 = vsub.f32 1.0, %v1585
        %v1587 = vmul.f32 %v1584, %v1586
        %v1588 = vadd.f32 %v1584, %v1587
        %vm1589 = vweird.f32 %v1583
        %vm1590 = vweird.f32 %v1584
        %vm1591 = vmor %vm1589, %vm1590
        %v1592 = vsel %vm1591, %v1584, %v1588
        %v1593 = vand.u32 2147483647, %v1583
        %vm1594 = vcmp.eq.f32.partialorder %v1593, 8.507059e+37
        %v1595 = vand.u32 %v1583, 2147483648
        %v1596 = vor.u32 1.1754944e-38, %v1595
        %v1597 = vsel %vm1594, %v1596, %v1592
        %v1598 = vmul.f32 1.0, %v1597
        %v1599 = vmul.f32 %v1598, 1.0614054
        %v1600 = vadd.f32 %v1599, -1.4531521
        %v1601 = vmul.f32 %v1600, %v1598
        %v1602 = vadd.f32 %v1601, 1.4214138
        %v1603 = vmul.f32 %v1602, %v1598
        %v1604 = vadd.f32 %v1603, -0.28449672
        %v1605 = vmul.f32 %v1604, %v1598
        %v1606 = vadd.f32 %v1605, 0.2548296
        %v1607 = vmul.f32 %v1606, %v1598
        %v1608 = vsub.f32 0.0, %v1581
        %v1609 = vmul.f32 %v1608, %v1581
        %v1610 = vmul.f32 %v1609, 1.442695
        %v1611 = vpow.pop %v1610
        %v1612 = vmul.f32 %v1607, %v1611
        %v1613 = vsub.f32 1.0, %v1612
        %v1614 = vmul.f32 %v1580, %v1613
        %v1615 = vadd.f32 %v1614, 1.0
        %v1616 = vmul.f32 %v1577, %v1615
        %s1617 = scalar_lea.vmem [#allocation11], 16
        %v1618 = vld [vmem:[%s1617] sm:$0xf]
        %v1619 = vld [vmem:[%s1617 + $0x4] sm:$0xf]
        %v1620 = vld [vmem:[%s1617 + $0x8] sm:$0xf]
        %v1621 = vld [vmem:[%s1617 + $0xc] sm:$0xf]
        %v1622 = vpack.c.bf16 %v1616, %v1616
        %v1627 = vunpack.c.l.b16 %v1618
        %v1628 = vunpack.c.l.b16 %v1619
        %v1629 = vunpack.c.l.b16 %v1620
        %v1630 = vunpack.c.l.b16 %v1621
        %v1631 = vpack.c.b16 %v1628, %v1627
        %v1632 = vpack.c.b16 %v1630, %v1629
        %v1636 = vsel %vm620, %v1622, 0
        %1638 = vmatpush.bf16.msra.mxu0 0
        %1639 = vmatpush.bf16.msra.mxu0 0
        %1640 = vmatpush.bf16.msra.mxu0 0
        %1641 = vmatpush.bf16.msra.mxu0 0
        %1642 = vmatpush.bf16.msra.mxu0 0
        %1643 = vmatpush.bf16.msra.mxu0 0
        %1644 = vmatpush.bf16.msra.mxu0 %v1632
        %1645 = vmatpush.bf16.msra.mxu0 %v1631
        %1646 = vmatmul.bf16.gmra.mxu0 %v1636
        %v1647 = vpop.f32.mrf.mxu0
        %v1648 = vadd.f32 0.0, %v1647
        %v1649 = vpop.f32.mrf.mxu0
        %1650 = vdwg.mxu0
        %v1655 = vunpack.c.l.b16 %v1566
        %v1656 = vunpack.c.l.b16 %v1567
        %v1657 = vunpack.c.l.b16 %v1568
        %v1658 = vunpack.c.l.b16 %v1569
        %v1659 = vpack.c.b16 %v1656, %v1655
        %v1660 = vpack.c.b16 %v1658, %v1657
        %v1664 = vsel %vm620, %v1570, 0
        %1666 = vmatpush.bf16.msra.mxu0 0
        %1667 = vmatpush.bf16.msra.mxu0 0
        %1668 = vmatpush.bf16.msra.mxu0 0
        %1669 = vmatpush.bf16.msra.mxu0 0
        %1670 = vmatpush.bf16.msra.mxu0 0
        %1671 = vmatpush.bf16.msra.mxu0 0
        %1672 = vmatpush.bf16.msra.mxu0 %v1660
        %1673 = vmatpush.bf16.msra.mxu0 %v1659
        %1674 = vmatmul.bf16.gmra.mxu0 %v1664
        %v1675 = vpop.f32.mrf.mxu0
        %v1676 = vadd.f32 %v1648, %v1675
        %v1677 = vpop.f32.mrf.mxu0
        %1678 = vdwg.mxu0
        %v1679 = vsub.f32 %v1468, %v1504
        %v1680 = vmul.f32 %v1679, %v1519
        %v1681 = vperm.slane %v1419, 2
        %v1682 = vmul.f32 %v1680, %v1681
        %v1683 = vperm.slane %v1420, 2
        %v1684 = vadd.f32 %v1682, %v1683
        %v1685 = vmul.f32 %v1684, 0.5
        %v1686 = vmul.f32 %v1684, 0.70710677
        %vm1687 = vcmp.ge.f32.partialorder %v1686, 0.0
        %v1688 = vsel %vm1687, 1.0, -1.0
        %v1689 = vand.u32 2147483647, %v1686
        %v1690 = vmul.f32 %v1689, 0.3275911
        %v1691 = vadd.f32 %v1690, 1.0
        %v1692 = vrcp.pop %v1691
        %v1693 = vmul.f32 %v1691, %v1692
        %v1694 = vsub.f32 1.0, %v1693
        %v1695 = vmul.f32 %v1692, %v1694
        %v1696 = vadd.f32 %v1692, %v1695
        %vm1697 = vweird.f32 %v1691
        %vm1698 = vweird.f32 %v1692
        %vm1699 = vmor %vm1697, %vm1698
        %v1700 = vsel %vm1699, %v1692, %v1696
        %v1701 = vand.u32 2147483647, %v1691
        %vm1702 = vcmp.eq.f32.partialorder %v1701, 8.507059e+37
        %v1703 = vand.u32 %v1691, 2147483648
        %v1704 = vor.u32 1.1754944e-38, %v1703
        %v1705 = vsel %vm1702, %v1704, %v1700
        %v1706 = vmul.f32 1.0, %v1705
        %v1707 = vmul.f32 %v1706, 1.0614054
        %v1708 = vadd.f32 %v1707, -1.4531521
        %v1709 = vmul.f32 %v1708, %v1706
        %v1710 = vadd.f32 %v1709, 1.4214138
        %v1711 = vmul.f32 %v1710, %v1706
        %v1712 = vadd.f32 %v1711, -0.28449672
        %v1713 = vmul.f32 %v1712, %v1706
        %v1714 = vadd.f32 %v1713, 0.2548296
        %v1715 = vmul.f32 %v1714, %v1706
        %v1716 = vsub.f32 0.0, %v1689
        %v1717 = vmul.f32 %v1716, %v1689
        %v1718 = vmul.f32 %v1717, 1.442695
        %v1719 = vpow.pop %v1718
        %v1720 = vmul.f32 %v1715, %v1719
        %v1721 = vsub.f32 1.0, %v1720
        %v1722 = vmul.f32 %v1688, %v1721
        %v1723 = vadd.f32 %v1722, 1.0
        %v1724 = vmul.f32 %v1685, %v1723
        %s1725 = scalar_lea.vmem [#allocation11], 32
        %v1726 = vld [vmem:[%s1725] sm:$0xf]
        %v1727 = vld [vmem:[%s1725 + $0x4] sm:$0xf]
        %v1728 = vld [vmem:[%s1725 + $0x8] sm:$0xf]
        %v1729 = vld [vmem:[%s1725 + $0xc] sm:$0xf]
        %v1730 = vpack.c.bf16 %v1724, %v1724
        %v1735 = vunpack.c.l.b16 %v1726
        %v1736 = vunpack.c.l.b16 %v1727
        %v1737 = vunpack.c.l.b16 %v1728
        %v1738 = vunpack.c.l.b16 %v1729
        %v1739 = vpack.c.b16 %v1736, %v1735
        %v1740 = vpack.c.b16 %v1738, %v1737
        %v1744 = vsel %vm620, %v1730, 0
        %1746 = vmatpush.bf16.msra.mxu0 0
        %1747 = vmatpush.bf16.msra.mxu0 0
        %1748 = vmatpush.bf16.msra.mxu0 0
        %1749 = vmatpush.bf16.msra.mxu0 0
        %1750 = vmatpush.bf16.msra.mxu0 0
        %1751 = vmatpush.bf16.msra.mxu0 0
        %1752 = vmatpush.bf16.msra.mxu0 %v1740
        %1753 = vmatpush.bf16.msra.mxu0 %v1739
        %1754 = vmatmul.bf16.gmra.mxu0 %v1744
        %v1755 = vpop.f32.mrf.mxu0
        %v1756 = vadd.f32 0.0, %v1755
        %v1757 = vpop.f32.mrf.mxu0
        %1758 = vdwg.mxu0
        %v1759 = vadd.f32 %v1676, %v1756
        %v1760 = vsub.f32 %v1487, %v1504
        %v1761 = vmul.f32 %v1760, %v1519
        %v1762 = vperm.slane %v1419, 3
        %v1763 = vmul.f32 %v1761, %v1762
        %v1764 = vperm.slane %v1420, 3
        %v1765 = vadd.f32 %v1763, %v1764
        %v1766 = vmul.f32 %v1765, 0.5
        %v1767 = vmul.f32 %v1765, 0.70710677
        %vm1768 = vcmp.ge.f32.partialorder %v1767, 0.0
        %v1769 = vsel %vm1768, 1.0, -1.0
        %v1770 = vand.u32 2147483647, %v1767
        %v1771 = vmul.f32 %v1770, 0.3275911
        %v1772 = vadd.f32 %v1771, 1.0
        %v1773 = vrcp.pop %v1772
        %v1774 = vmul.f32 %v1772, %v1773
        %v1775 = vsub.f32 1.0, %v1774
        %v1776 = vmul.f32 %v1773, %v1775
        %v1777 = vadd.f32 %v1773, %v1776
        %vm1778 = vweird.f32 %v1772
        %vm1779 = vweird.f32 %v1773
        %vm1780 = vmor %vm1778, %vm1779
        %v1781 = vsel %vm1780, %v1773, %v1777
        %v1782 = vand.u32 2147483647, %v1772
        %vm1783 = vcmp.eq.f32.partialorder %v1782, 8.507059e+37
        %v1784 = vand.u32 %v1772, 2147483648
        %v1785 = vor.u32 1.1754944e-38, %v1784
        %v1786 = vsel %vm1783, %v1785, %v1781
        %v1787 = vmul.f32 1.0, %v1786
        %v1788 = vmul.f32 %v1787, 1.0614054
        %v1789 = vadd.f32 %v1788, -1.4531521
        %v1790 = vmul.f32 %v1789, %v1787
        %v1791 = vadd.f32 %v1790, 1.4214138
        %v1792 = vmul.f32 %v1791, %v1787
        %v1793 = vadd.f32 %v1792, -0.28449672
        %v1794 = vmul.f32 %v1793, %v1787
        %v1795 = vadd.f32 %v1794, 0.2548296
        %v1796 = vmul.f32 %v1795, %v1787
        %v1797 = vsub.f32 0.0, %v1770
        %v1798 = vmul.f32 %v1797, %v1770
        %v1799 = vmul.f32 %v1798, 1.442695
        %v1800 = vpow.pop %v1799
        %v1801 = vmul.f32 %v1796, %v1800
        %v1802 = vsub.f32 1.0, %v1801
        %v1803 = vmul.f32 %v1769, %v1802
        %v1804 = vadd.f32 %v1803, 1.0
        %v1805 = vmul.f32 %v1766, %v1804
        %s1806 = scalar_lea.vmem [#allocation11], 48
        %v1807 = vld [vmem:[%s1806] sm:$0xf]
        %v1808 = vld [vmem:[%s1806 + $0x4] sm:$0xf]
        %v1809 = vld [vmem:[%s1806 + $0x8] sm:$0xf]
        %v1810 = vld [vmem:[%s1806 + $0xc] sm:$0xf]
        %v1811 = vpack.c.bf16 %v1805, %v1805
        %v1816 = vunpack.c.l.b16 %v1807
        %v1817 = vunpack.c.l.b16 %v1808
        %v1818 = vunpack.c.l.b16 %v1809
        %v1819 = vunpack.c.l.b16 %v1810
        %v1820 = vpack.c.b16 %v1817, %v1816
        %v1821 = vpack.c.b16 %v1819, %v1818
        %v1825 = vsel %vm620, %v1811, 0
        %1827 = vmatpush.bf16.msra.mxu0 0
        %1828 = vmatpush.bf16.msra.mxu0 0
        %1829 = vmatpush.bf16.msra.mxu0 0
        %1830 = vmatpush.bf16.msra.mxu0 0
        %1831 = vmatpush.bf16.msra.mxu0 0
        %1832 = vmatpush.bf16.msra.mxu0 0
        %1833 = vmatpush.bf16.msra.mxu0 %v1821
        %1834 = vmatpush.bf16.msra.mxu0 %v1820
        %1835 = vmatmul.bf16.gmra.mxu0 %v1825
        %v1836 = vpop.f32.mrf.mxu0
        %v1837 = vadd.f32 0.0, %v1836
        %v1838 = vpop.f32.mrf.mxu0
        %1839 = vdwg.mxu0
        %v1840 = vadd.f32 %v1759, %v1837
        %v1841 = vld [vmem:[#allocation12] sm:$0x1]
        %v1843 = vperm.slane %v1841, 0
        %v1845 = vadd.f32 %v1840, %v1843
        %v1846 = vadd.f32 %v1845, %v1404
        %v1847 = vadd.f32 %v1846, %v604
        %1848 = vst.msk [vmem:[%s602] sm:$0xff] %vm620, %v1847
        %p1849 = scmp.lt.s32.totalorder %s31, 1
        %s1850 = scalar_select %p1849, %s31, 1
        %s1851 = smul.addr %s1850, 8
        %s1852 = scalar_lea.vmem %s14, %s1851
        // Predicated region
        $region149: #{hierarchical_temporal_net.5} parent=71 // pred_check
          %p1853 = pneg %p327
        $region150: #{hierarchical_temporal_net.5} parent=71 // pred_check_branch
          %1855 = sbr.rel (%p1853) target = $region152
        $region151: #{hierarchical_temporal_net.5} parent=71 // pred_region
          _
        $region152: #{hierarchical_temporal_net.5} parent=71 // pred_fallthru
          _
      $region72: #{hierarchical_temporal_net.5} parent=5 // pred_fallthru
        _
      %p1856 = scmp.le.s32.totalorder 2, %s26
      // Predicated region
      $region153: #{hierarchical_temporal_net.5} parent=5 // pred_check
        %p1857 = pneg %p1856
      $region154: #{hierarchical_temporal_net.5} parent=5 // pred_check_branch
        %1859 = sbr.rel (%p1857) target = $region156
      $region155: #{hierarchical_temporal_net.5} parent=5 // pred_region
        %s1860 = ssub.s32 %s26, 2
        // Predicated region
        $region157: #{hierarchical_temporal_net.5} parent=155 // pred_check
          %p1861 = pneg %p333
        $region158: #{hierarchical_temporal_net.5} parent=155 // pred_check_branch
          %1863 = sbr.rel (%p1861) target = $region160
        $region159: #{hierarchical_temporal_net.5} parent=155 // pred_region
          %p1864 = scmp.lt.s32.totalorder %s32, 1
          %s1865 = scalar_select %p1864, %s32, 1
          %s1866 = smul.addr %s1865, 8
          %s1867 = scalar_lea.vmem %s14, %s1866
        $region160: #{hierarchical_temporal_net.5} parent=155 // pred_fallthru
          _
      $region156: #{hierarchical_temporal_net.5} parent=5 // pred_fallthru
        _
    $region6: #{hierarchical_temporal_net.5} parent=1 // loop_footer
      %s30 = sadd.s32 1, %s26
    $region7: #{hierarchical_temporal_net.5} parent=1 // loop_footer_branch
      %25 = sbr.rel target = $region3
    $region8: #{hierarchical_temporal_net.5} parent=1 // loop_exit
      _
    %1868 = vsyncpa [#allocation5], 1
    %s1869 = scalar_lea.sflag [#allocation5], 1
    %1870 = vsyncpa %s1869, 1
    %1871 = vsyncpa [#allocation7], 1
    %1872 = vsyncpa [#allocation10], 1
    %1873 = vsyncpa [#allocation13], 1
    %1874 = vsyncpa [#allocation16], 1
    %1875 = vsyncpa [#allocation19], 1
  %1876 = vsyncmov [#allocation3]
  %s1877 = vpop.sfrf %1876
  %p1878 = scmp.eq.s32.totalorder %s1877, 0
  %p1879 = pneg %p1878
  %1881 = shalt.err (%p1879)
  %s1882 = scalar_lea.sflag [#allocation3], 1
  %1883 = vsyncmov %s1882
  %s1884 = vpop.sfrf %1883
  %p1885 = scmp.eq.s32.totalorder %s1884, 0
  %p1886 = pneg %p1885
  %1888 = shalt.err (%p1886)

</llo_original>
